<compile_context>
chip_gen: v7x
topology: tpu7x:2x2x1
jax: 0.10.0
libtpu: 0.0.40
codegen_flags: <defaults>
</compile_context>

<pallas_src>
import functools

import jax
import jax.numpy as jnp
from jax import lax
from jax.experimental import pallas as pl
from jax.experimental.pallas import tpu as pltpu


# ----------------------------------------------------------------------------
# In-kernel helpers (pure jnp, traced inside Pallas bodies; fp32 math)
# ----------------------------------------------------------------------------
def _ln(x, g, b, eps):
    mu = jnp.mean(x, axis=-1, keepdims=True)
    xc = x - mu
    var = jnp.mean(xc * xc, axis=-1, keepdims=True)
    return xc * lax.rsqrt(var + eps) * g + b


def _gelu(x):
    # TODO(synk): PyTorch nn.GELU default is exact erf; tanh approximation is used
    # here (EUP-friendly) — small systematic deviation.
    return 0.5 * x * (1.0 + jnp.tanh(0.7978845608028654 * (x + 0.044715 * x * x * x)))


# ----------------------------------------------------------------------------
# Kernel 1: patch-embed matmul (Conv2d(kernel=p, stride=p) == row matmul)
# ----------------------------------------------------------------------------
def _patch_embed_kernel(p_ref, w_ref, b_ref, o_ref):
    o_ref[...] = jnp.dot(p_ref[...].astype(jnp.bfloat16), w_ref[...],
                         preferred_element_type=jnp.float32) + b_ref[...]


def pallas_patch_embed(patches, pw, pb):
    """patches: (M, C*p*p) -> x_embed (M, D)."""
    M = patches.shape[0]
    D = pw.shape[1]
    return pl.pallas_call(
        _patch_embed_kernel,
        out_shape=jax.ShapeDtypeStruct((M, D), jnp.float32),
    )(patches.astype(jnp.float32), pw.astype(jnp.bfloat16),
      pb.reshape(1, D).astype(jnp.float32))


# ----------------------------------------------------------------------------
# Kernel 2: fully fused pre-norm ViT *stack* (all layers), grid over depth
# ----------------------------------------------------------------------------
def _stack_block_kernel(x_ref, ln1g, ln1b, qkvw, qkvb, projw, projb,
                        ln2g, ln2b, fc1w, fc1b, fc2w, fc2b,
                        o_ref, acc_ref,
                        *, batch, seq_pad, seq_real, num_heads, eps):
    layer = pl.program_id(0)
    depth = pl.num_programs(0)

    @pl.when(layer == 0)
    def _():
        acc_ref[...] = x_ref[...]          # residual stream stays resident in VMEM

    x = acc_ref[...]                        # (B*Lp, D) fp32
    D = x.shape[-1]
    H = num_heads
    Dh = D // H
    Lp = seq_pad

    # key-padding bias for the zero-padded rows (static shapes; hoisted out of loops)
    if seq_real < Lp:
        col = lax.broadcasted_iota(jnp.int32, (Lp, Lp), 1)
        key_bias = jnp.where(col < seq_real, 0.0, -1e30)
    else:
        key_bias = None

    # ---- attention: LN1 -> QKV (batch-folded, bf16 MXU) -> per-(b,head) softmax(QK^T)V
    h = _ln(x, ln1g[0], ln1b[0], eps)
    qkv = jnp.dot(h.astype(jnp.bfloat16), qkvw[0],
                  preferred_element_type=jnp.float32) + qkvb[0]          # (B*Lp, 3D)

    attn_rows = []
    for b in range(batch):                                               # static unroll
        qkv_b = qkv[b * Lp:(b + 1) * Lp, :]                              # (Lp, 3D) sublane slice
        qkv_bT = qkv_b.T                                                 # (3D, Lp): heads on sublanes
        head_outs = []
        for hd in range(H):                                              # static unroll
            q = qkv_b[:, hd * Dh:(hd + 1) * Dh]                          # (Lp, Dh); 1/sqrt(Dh) pre-folded
            kT = qkv_bT[D + hd * Dh:D + (hd + 1) * Dh, :]                # (Dh, Lp) sublane slice
            vT = qkv_bT[2 * D + hd * Dh:2 * D + (hd + 1) * Dh, :]        # (Dh, Lp)
            s = jnp.dot(q.astype(jnp.bfloat16), kT.astype(jnp.bfloat16),
                        preferred_element_type=jnp.float32)              # (Lp, Lp)
            if key_bias is not None:
                s = s + key_bias
            m = jnp.max(s, axis=-1, keepdims=True)
            p = jnp.exp(s - m)
            p = p * pl.reciprocal(jnp.sum(p, axis=-1, keepdims=True), approx=True)
            # (p @ v)^T == v^T @ p^T  -> rhs-dim-1 contraction, output (Dh, Lp)
            head_outs.append(lax.dot_general(
                vT.astype(jnp.bfloat16), p.astype(jnp.bfloat16),
                (((1,), (1,)), ((), ())), preferred_element_type=jnp.float32))
        attn_rows.append(jnp.concatenate(head_outs, axis=0).T)           # (Lp, D)
    attn = jnp.concatenate(attn_rows, axis=0)                            # (B*Lp, D)

    a = jnp.dot(attn.astype(jnp.bfloat16), projw[0],
                preferred_element_type=jnp.float32) + projb[0]
    x = x + a

    # ---- MLP: LN2 -> FC1 -> GELU -> FC2 -> residual
    h2 = _ln(x, ln2g[0], ln2b[0], eps)
    h2 = _gelu(jnp.dot(h2.astype(jnp.bfloat16), fc1w[0],
                       preferred_element_type=jnp.float32) + fc1b[0])
    h2 = jnp.dot(h2.astype(jnp.bfloat16), fc2w[0],
                 preferred_element_type=jnp.float32) + fc2b[0]
    x = x + h2

    acc_ref[...] = x

    @pl.when(layer == depth - 1)
    def _():
        o_ref[...] = x                      # single HBM writeback for the whole stack


_STACK_KEYS = ("ln1_g", "ln1_b", "qkv_w", "qkv_b", "proj_w", "proj_b",
               "ln2_g", "ln2_b", "fc1_w", "fc1_b", "fc2_w", "fc2_b")
_BF16_KEYS = frozenset({"qkv_w", "proj_w", "fc1_w", "fc2_w"})


def pallas_transformer_stack(x_pad, sp, *, num_heads, seq_real, eps=1e-5):
    """x_pad: (B, Lp, D) with rows >= seq_real zero-padded; sp: stacked (depth,...) params.

    One pallas_call for the whole stack: grid=(depth,) marked "arbitrary", per-layer
    weights streamed per grid step, activation resident in a VMEM scratch."""
    B, Lp, D = x_pad.shape
    depth = sp["qkv_w"].shape[0]
    Dh = D // num_heads
    M = B * Lp

    # fold the 1/sqrt(Dh) attention scale into the q columns of the QKV projection
    qscale = jnp.concatenate([jnp.full((D,), Dh ** -0.5, jnp.float32),
                              jnp.ones((2 * D,), jnp.float32)])

    ins = []
    in_specs = [pl.BlockSpec((M, D), lambda d: (0, 0))]
    for k in _STACK_KEYS:
        a = sp[k]
        if k in ("qkv_w", "qkv_b"):
            a = a * qscale
        a = a.astype(jnp.bfloat16) if k in _BF16_KEYS else a.astype(jnp.float32)
        ins.append(a)
        in_specs.append(pl.BlockSpec((1,) + a.shape[1:], lambda d: (d, 0, 0)))

    # TODO(synk): at production dims, single-buffer the constant-index x input
    # (pipeline_mode) and set vmem_limit_bytes explicitly for v7x's 64 MiB VMEM.
    out = pl.pallas_call(
        functools.partial(_stack_block_kernel, batch=B, seq_pad=Lp,
                          seq_real=seq_real, num_heads=num_heads, eps=eps),
        grid=(depth,),
        in_specs=in_specs,
        out_specs=pl.BlockSpec((M, D), lambda d: (0, 0)),
        out_shape=jax.ShapeDtypeStruct((M, D), jnp.float32),
        scratch_shapes=[pltpu.VMEM((M, D), jnp.float32)],
        compiler_params=pltpu.CompilerParams(dimension_semantics=("arbitrary",)),
    )(x_pad.reshape(M, D).astype(jnp.float32), *ins)
    return out.reshape(B, Lp, D)


# ----------------------------------------------------------------------------
# Kernel 3: fused LayerNorm + Linear (emits both LN output and projection)
# ----------------------------------------------------------------------------
def _ln_linear_kernel(x_ref, g_ref, b_ref, w_ref, bias_ref, ln_ref, y_ref, *, eps):
    h = _ln(x_ref[...], g_ref[...], b_ref[...], eps)
    ln_ref[...] = h
    y_ref[...] = jnp.dot(h.astype(jnp.bfloat16), w_ref[...],
                         preferred_element_type=jnp.float32) + bias_ref[...]


def pallas_ln_linear(x, g, b, w, bias, eps=1e-5):
    """x: (M, D) -> (LN(x) (M, D), LN(x) @ w + bias (M, N))."""
    M, D = x.shape
    N = w.shape[1]
    return pl.pallas_call(
        functools.partial(_ln_linear_kernel, eps=eps),
        out_shape=(jax.ShapeDtypeStruct((M, D), jnp.float32),
                   jax.ShapeDtypeStruct((M, N), jnp.float32)),
    )(x.astype(jnp.float32), g.reshape(1, D).astype(jnp.float32),
      b.reshape(1, D).astype(jnp.float32), w.astype(jnp.bfloat16),
      bias.reshape(1, N).astype(jnp.float32))


# ----------------------------------------------------------------------------
# Kernel 4: masked-MSE reconstruction loss
# TODO(synk): at production B*N*P this should be gridded over B/N tiles with a
# pl.when-finalized accumulator; a single full block is fine at this toy scale.
# ----------------------------------------------------------------------------
def _masked_mse_kernel(pred_ref, tgt_ref, keep_ref, o_ref):
    d = pred_ref[...] - tgt_ref[...]                  # (B, N, P)
    per_patch = jnp.mean(d * d, axis=-1)              # (B, N)
    w = 1.0 - keep_ref[...]                           # masked (~mask) => 1.0
    num = jnp.sum(jnp.sum(per_patch * w, axis=1, keepdims=True), axis=0, keepdims=True)
    den = jnp.sum(jnp.sum(w, axis=1, keepdims=True), axis=0, keepdims=True)
    o_ref[...] = num / jnp.maximum(den, 1.0)


def pallas_masked_mse(pred, target, keep_f):
    out = pl.pallas_call(
        _masked_mse_kernel,
        out_shape=jax.ShapeDtypeStruct((1, 1), jnp.float32),
    )(pred.astype(jnp.float32), target.astype(jnp.float32), keep_f.astype(jnp.float32))
    return out[0, 0]


# ----------------------------------------------------------------------------
# Parameter init (deterministic, synthetic — no checkpoint load)
# ----------------------------------------------------------------------------
def _init_stack(key, depth, D, hidden):
    ks = jax.random.split(key, 4)
    z = jnp.zeros
    return dict(
        ln1_g=jnp.ones((depth, 1, D), jnp.float32), ln1_b=z((depth, 1, D), jnp.float32),
        qkv_w=jax.random.normal(ks[0], (depth, D, 3 * D), jnp.float32) * 0.02,
        qkv_b=z((depth, 1, 3 * D), jnp.float32),
        proj_w=jax.random.normal(ks[1], (depth, D, D), jnp.float32) * 0.02,
        proj_b=z((depth, 1, D), jnp.float32),
        ln2_g=jnp.ones((depth, 1, D), jnp.float32), ln2_b=z((depth, 1, D), jnp.float32),
        fc1_w=jax.random.normal(ks[2], (depth, D, hidden), jnp.float32) * 0.02,
        fc1_b=z((depth, 1, hidden), jnp.float32),
        fc2_w=jax.random.normal(ks[3], (depth, hidden, D), jnp.float32) * 0.02,
        fc2_b=z((depth, 1, D), jnp.float32),
    )


def init_params(key, *, img_size, patch_size, in_chans, embed_dim, depth,
                decoder_embed_dim, decoder_depth, mlp_ratio):
    h = img_size // patch_size
    N = h * h
    patch_dim = in_chans * patch_size * patch_size
    hidden = int(embed_dim * mlp_ratio)
    dec_hidden = int(decoder_embed_dim * mlp_ratio)
    keys = jax.random.split(key, 10)
    z = jnp.zeros
    # TODO(synk): the reference initializes pos embeds with 2D sin-cos via
    # initialize_weights(); that method is never invoked in forward, so a
    # deterministic gaussian init is used here instead.
    return dict(
        patch_w=jax.random.normal(keys[0], (patch_dim, embed_dim), jnp.float32) * 0.02,
        patch_b=z((embed_dim,), jnp.float32),
        pos_embed=jax.random.normal(keys[1], (1, N + 1, embed_dim), jnp.float32) * 0.02,
        cls_token=jax.random.normal(keys[2], (1, 1, embed_dim), jnp.float32) * 0.02,
        mask_score_w=jax.random.normal(keys[3], (embed_dim, 1), jnp.float32) * 0.02,
        mask_score_b=z((1,), jnp.float32),
        enc_norm_g=jnp.ones((embed_dim,), jnp.float32), enc_norm_b=z((embed_dim,), jnp.float32),
        dec_embed_w=jax.random.normal(keys[4], (embed_dim, decoder_embed_dim), jnp.float32) * 0.02,
        dec_embed_b=z((decoder_embed_dim,), jnp.float32),
        mask_token=jax.random.normal(keys[5], (1, 1, decoder_embed_dim), jnp.float32) * 0.02,
        decoder_pos_embed=jax.random.normal(keys[6], (1, N + 1, decoder_embed_dim), jnp.float32) * 0.02,
        dec_norm_g=jnp.ones((decoder_embed_dim,), jnp.float32), dec_norm_b=z((decoder_embed_dim,), jnp.float32),
        dec_pred_w=jax.random.normal(keys[7], (decoder_embed_dim, patch_dim), jnp.float32) * 0.02,
        dec_pred_b=z((patch_dim,), jnp.float32),
        enc_stack=_init_stack(keys[8], depth, embed_dim, hidden),
        dec_stack=_init_stack(keys[9], decoder_depth, decoder_embed_dim, dec_hidden),
    )


# ----------------------------------------------------------------------------
# CMUIM forward (train_mask=False path): returns (loss, latent)
# ----------------------------------------------------------------------------
def cmuim_forward(params, x, *, patch_size, num_heads, decoder_num_heads, mask_ratio=0.75):
    B, C, H, W = x.shape
    p = patch_size
    h = H // p
    w = W // p
    N = h * w
    x = x.astype(jnp.float32)
    D = params["patch_w"].shape[1]
    Dd = params["dec_embed_w"].shape[1]

    # --- patch_embed (Conv2d(kernel=p, stride=p) over (c,p1,p2) patch rows)
    patches_cpp = (x.reshape(B, C, h, p, w, p)
                    .transpose(0, 2, 4, 1, 3, 5)
                    .reshape(B * N, C * p * p))
    x_embed = pallas_patch_embed(patches_cpp, params["patch_w"],
                                 params["patch_b"]).reshape(B, N, D)

    # masking-net score: trivial matvec kept in XLA (avoids a lane-masked (M,1) store)
    scores = (x_embed @ params["mask_score_w"])[..., 0] + params["mask_score_b"][0]
    # TODO(synk): S3UM MaskingNet internals (SSM depth/d_state/d_conv) are not in the
    # reference; a deterministic linear-score top-k keep mask with the same (B, N)
    # boolean interface stands in for masking_net.get_binary_mask().
    len_keep = int(N * (1.0 - mask_ratio))
    top_idx = jnp.argsort(-scores, axis=1)[:, :len_keep]
    mask = jnp.zeros((B, N), dtype=bool).at[jnp.arange(B)[:, None], top_idx].set(True)  # True = kept

    # --- forward_encoder
    # TODO(synk): visible-token gather / decoder scatter stay in XLA glue at this toy
    # scale; at production N/D they would move into Pallas via PrefetchScalarGridSpec.
    pos_embed = params["pos_embed"]                                   # (1, N+1, D)
    x_pe = x_embed + pos_embed[:, 1:, :]
    keep_order = jnp.argsort(jnp.where(mask, 0, 1), axis=1, stable=True)[:, :len_keep]
    x_visible = jnp.take_along_axis(x_pe, keep_order[:, :, None], axis=1)
    cls_tok = params["cls_token"] + pos_embed[:, :1, :]
    cls_tokens = jnp.broadcast_to(cls_tok, (B, 1, D))
    xe = jnp.concatenate([cls_tokens, x_visible], axis=1)             # (B, 1+len_keep, D)
    L_enc = xe.shape[1]
    Lp_enc = ((L_enc + 7) // 8) * 8                                   # pad seq to sublane multiple
    xe = jnp.pad(xe, ((0, 0), (0, Lp_enc - L_enc), (0, 0)))

    xe = pallas_transformer_stack(xe, params["enc_stack"],
                                  num_heads=num_heads, seq_real=L_enc)

    # fused: encoder final LayerNorm + decoder_embed (pad rows computed then dropped)
    latent_pad, xd_pad = pallas_ln_linear(xe.reshape(B * Lp_enc, D),
                                          params["enc_norm_g"], params["enc_norm_b"],
                                          params["dec_embed_w"], params["dec_embed_b"])
    latent = latent_pad.reshape(B, Lp_enc, D)[:, :L_enc, :]
    xd = xd_pad.reshape(B, Lp_enc, Dd)[:, :L_enc, :]

    # --- forward_decoder (token placement reproduces the reference's scatter order:
    #     visible tokens go to contiguous slots 1..len_keep, mask tokens to the
    #     original masked positions (+1), possibly overwriting visible slots)
    cls_dec = xd[:, 0, :]
    x_vis_dec = xd[:, 1:, :]
    dec_in = jnp.zeros((B, N + 1, Dd), jnp.float32)
    dec_in = dec_in.at[:, 0, :].set(cls_dec)
    dec_in = dec_in.at[:, 1:1 + len_keep, :].set(x_vis_dec)
    masked_full = jnp.concatenate([jnp.zeros((B, 1), bool), jnp.logical_not(mask)], axis=1)
    dec_in = jnp.where(masked_full[:, :, None], params["mask_token"], dec_in)
    dec_in = dec_in + params["decoder_pos_embed"]
    L_dec = N + 1
    Lp_dec = ((L_dec + 7) // 8) * 8
    dec_in = jnp.pad(dec_in, ((0, 0), (0, Lp_dec - L_dec), (0, 0)))

    dec_out = pallas_transformer_stack(dec_in, params["dec_stack"],
                                       num_heads=decoder_num_heads, seq_real=L_dec)

    # fused: decoder final LayerNorm + decoder_pred (LN is per-row, so computing the
    # cls/pad rows too and slicing afterwards matches the reference's order)
    _, pred_pad = pallas_ln_linear(dec_out.reshape(B * Lp_dec, Dd),
                                   params["dec_norm_g"], params["dec_norm_b"],
                                   params["dec_pred_w"], params["dec_pred_b"])
    pred = pred_pad.reshape(B, Lp_dec, C * p * p)[:, 1:N + 1, :]

    # --- forward_loss (norm_pix_loss=False): MSE on masked patches only
    target = (x.reshape(B, C, h, p, w, p)
               .transpose(0, 2, 4, 3, 5, 1)
               .reshape(B, N, p * p * C))                             # 'b (h w) (p1 p2 c)'
    loss = pallas_masked_mse(pred, target, mask.astype(jnp.float32))
    return loss, latent


# ----------------------------------------------------------------------------
if __name__ == "__main__":
    # Small config consistent with the module (img/patch/chans + encoder/decoder dims)
    cfg = dict(img_size=16, patch_size=4, in_chans=3, embed_dim=32, depth=2,
               decoder_embed_dim=32, decoder_depth=2, mlp_ratio=4.0)
    num_heads = 4
    decoder_num_heads = 4

    key = jax.random.PRNGKey(0)
    pkey, xkey = jax.random.split(key)
    params = init_params(pkey, **cfg)
    x = jax.random.normal(xkey, (2, cfg["in_chans"], cfg["img_size"], cfg["img_size"]),
                          jnp.float32)

    fwd = jax.jit(functools.partial(cmuim_forward,
                                    patch_size=cfg["patch_size"],
                                    num_heads=num_heads,
                                    decoder_num_heads=decoder_num_heads,
                                    mask_ratio=0.75))
    loss, latent = fwd(params, x)
    jax.block_until_ready((loss, latent))
    assert latent.shape == (2, 1 + int(16 * 0.25), cfg["embed_dim"])
    assert loss.shape == ()
    assert bool(jnp.isfinite(loss))
    print("KERNEL_OK")
</pallas_src>

<mosaic_0001>
module attributes {stable_mosaic.version = 11 : i64} {
  func.func @_patch_embed_kernel(%arg0: memref<32x48xf32, #tpu.memory_space<vmem>>, %arg1: memref<48x32xbf16, #tpu.memory_space<vmem>>, %arg2: memref<1x32xf32, #tpu.memory_space<vmem>>, %arg3: memref<32x32xf32, #tpu.memory_space<vmem>>) attributes {dimension_semantics = [], scalar_prefetch = 0 : i64, scratch_operands = 0 : i64, tpu.core_type = #tpu.core_type<tc>} {
    %c0 = arith.constant 0 : index
    %c0_0 = arith.constant 0 : index
    %0 = vector.load %arg0[%c0, %c0_0] : memref<32x48xf32, #tpu.memory_space<vmem>>, vector<32x48xf32>
    %1 = arith.truncf %0 : vector<32x48xf32> to vector<32x48xbf16>
    %c0_1 = arith.constant 0 : index
    %c0_2 = arith.constant 0 : index
    %2 = vector.load %arg1[%c0_1, %c0_2] : memref<48x32xbf16, #tpu.memory_space<vmem>>, vector<48x32xbf16>
    %cst = arith.constant dense<0.000000e+00> : vector<32x32xf32>
    %3 = tpu.matmul %1, %2, %cst {dimension_numbers = #tpu.dot_dimension_numbers<[1], [0], [0], [1], [0, 0, 1, 1], [], []>} : vector<32x48xbf16>, vector<48x32xbf16>, vector<32x32xf32> -> vector<32x32xf32>
    %c0_3 = arith.constant 0 : index
    %c0_4 = arith.constant 0 : index
    %4 = vector.load %arg2[%c0_3, %c0_4] : memref<1x32xf32, #tpu.memory_space<vmem>>, vector<1x32xf32>
    %5 = vector.broadcast %4 : vector<1x32xf32> to vector<32x32xf32>
    %6 = arith.addf %3, %5 : vector<32x32xf32>
    %c0_5 = arith.constant 0 : index
    %c0_6 = arith.constant 0 : index
    %7 = vector.load %arg3[%c0_5, %c0_6] : memref<32x32xf32, #tpu.memory_space<vmem>>, vector<32x32xf32>
    tpu.vector_store %arg3[%c0_5, %c0_6], %6 {strides = array<i32>} : memref<32x32xf32, #tpu.memory_space<vmem>>, vector<32x32xf32>,
    return
  }
}

module attributes {stable_mosaic.version = 11 : i64} {
  func.func @_stack_block_kernel(%arg0: i32, %arg1: memref<16x32xf32, #tpu.memory_space<vmem>>, %arg2: memref<1x1x32xf32, #tpu.memory_space<vmem>>, %arg3: memref<1x1x32xf32, #tpu.memory_space<vmem>>, %arg4: memref<1x32x96xbf16, #tpu.memory_space<vmem>>, %arg5: memref<1x1x96xf32, #tpu.memory_space<vmem>>, %arg6: memref<1x32x32xbf16, #tpu.memory_space<vmem>>, %arg7: memref<1x1x32xf32, #tpu.memory_space<vmem>>, %arg8: memref<1x1x32xf32, #tpu.memory_space<vmem>>, %arg9: memref<1x1x32xf32, #tpu.memory_space<vmem>>, %arg10: memref<1x32x128xbf16, #tpu.memory_space<vmem>>, %arg11: memref<1x1x128xf32, #tpu.memory_space<vmem>>, %arg12: memref<1x128x32xbf16, #tpu.memory_space<vmem>>, %arg13: memref<1x1x32xf32, #tpu.memory_space<vmem>>, %arg14: memref<16x32xf32, #tpu.memory_space<vmem>>, %arg15: memref<16x32xf32, #tpu.memory_space<vmem>>) attributes {dimension_semantics = [#tpu.dimension_semantics<arbitrary>], iteration_bounds = array<i64: 2>, scalar_prefetch = 0 : i64, scratch_operands = 1 : i64, tpu.core_type = #tpu.core_type<tc>, window_params = [{pipeline_mode = #tpu.pipeline_mode<synchronous>, transform_indices = @transform_0, window_bounds = array<i64: 16, 32>}, {transform_indices = @transform_1, window_bounds = array<i64: 1, 1, 32>}, {transform_indices = @transform_2, window_bounds = array<i64: 1, 1, 32>}, {transform_indices = @transform_3, window_bounds = array<i64: 1, 32, 96>}, {transform_indices = @transform_4, window_bounds = array<i64: 1, 1, 96>}, {transform_indices = @transform_5, window_bounds = array<i64: 1, 32, 32>}, {transform_indices = @transform_6, window_bounds = array<i64: 1, 1, 32>}, {transform_indices = @transform_7, window_bounds = array<i64: 1, 1, 32>}, {transform_indices = @transform_8, window_bounds = array<i64: 1, 1, 32>}, {transform_indices = @transform_9, window_bounds = array<i64: 1, 32, 128>}, {transform_indices = @transform_10, window_bounds = array<i64: 1, 1, 128>}, {transform_indices = @transform_11, window_bounds = array<i64: 1, 128, 32>}, {transform_indices = @transform_12, window_bounds = array<i64: 1, 1, 32>}, {pipeline_mode = #tpu.pipeline_mode<synchronous>, transform_indices = @transform_13, window_bounds = array<i64: 16, 32>}]} {
    %c0_i32 = arith.constant 0 : i32
    %0 = arith.cmpi eq, %arg0, %c0_i32 : i32
    %1 = arith.extui %0 : i1 to i32
    %c0_i32_0 = arith.constant 0 : i32
    %2 = arith.cmpi ne, %1, %c0_i32_0 : i32
    scf.if %2 {
      %c0_92 = arith.constant 0 : index
      %c0_93 = arith.constant 0 : index
      %278 = vector.load %arg1[%c0_92, %c0_93] : memref<16x32xf32, #tpu.memory_space<vmem>>, vector<16x32xf32>
      %c0_94 = arith.constant 0 : index
      %c0_95 = arith.constant 0 : index
      %279 = vector.load %arg15[%c0_94, %c0_95] : memref<16x32xf32, #tpu.memory_space<vmem>>, vector<16x32xf32>
      tpu.vector_store %arg15[%c0_94, %c0_95], %278 {strides = array<i32>} : memref<16x32xf32, #tpu.memory_space<vmem>>, vector<16x32xf32>,
    } else {
    }
    %c0 = arith.constant 0 : index
    %c0_1 = arith.constant 0 : index
    %3 = vector.load %arg15[%c0, %c0_1] : memref<16x32xf32, #tpu.memory_space<vmem>>, vector<16x32xf32>
    %4 = tpu.iota {dimensions = array<i32: 1>} : vector<8x8xi32>
    %c5_i32 = arith.constant 5 : i32
    %5 = vector.broadcast %c5_i32 : i32 to vector<8x8xi32>
    %6 = arith.cmpi slt, %4, %5 : vector<8x8xi32>
    %cst = arith.constant 0.000000e+00 : f32
    %cst_2 = arith.constant -1.000000e+30 : f32
    %7 = vector.broadcast %cst : f32 to vector<8x8xf32>
    %8 = vector.broadcast %cst_2 : f32 to vector<8x8xf32>
    %9 = arith.select %6, %7, %8 : vector<8x8xi1>, vector<8x8xf32>
    %c0_3 = arith.constant 0 : index
    %c0_4 = arith.constant 0 : index
    %c0_5 = arith.constant 0 : index
    %10 = vector.load %arg2[%c0_3, %c0_4, %c0_5] : memref<1x1x32xf32, #tpu.memory_space<vmem>>, vector<1x1x32xf32>
    %11 = vector.shape_cast %10 : vector<1x1x32xf32> to vector<1x32xf32>
    %c0_6 = arith.constant 0 : index
    %c0_7 = arith.constant 0 : index
    %c0_8 = arith.constant 0 : index
    %12 = vector.load %arg3[%c0_6, %c0_7, %c0_8] : memref<1x1x32xf32, #tpu.memory_space<vmem>>, vector<1x1x32xf32>
    %13 = vector.shape_cast %12 : vector<1x1x32xf32> to vector<1x32xf32>
    %cst_9 = arith.constant dense<0.000000e+00> : vector<16xf32>
    %14 = vector.multi_reduction <add>, %3, %cst_9 [1] : vector<16x32xf32> to vector<16xf32>
    %15 = vector.shape_cast %14 : vector<16xf32> to vector<16x1xf32>
    %cst_10 = arith.constant 3.200000e+01 : f32
    %16 = vector.broadcast %cst_10 : f32 to vector<16x1xf32>
    %17 = arith.divf %15, %16 : vector<16x1xf32>
    %18 = vector.broadcast %17 : vector<16x1xf32> to vector<16x32xf32>
    %19 = arith.subf %3, %18 : vector<16x32xf32>
    %20 = arith.mulf %19, %19 : vector<16x32xf32>
    %cst_11 = arith.constant dense<0.000000e+00> : vector<16xf32>
    %21 = vector.multi_reduction <add>, %20, %cst_11 [1] : vector<16x32xf32> to vector<16xf32>
    %22 = vector.shape_cast %21 : vector<16xf32> to vector<16x1xf32>
    %cst_12 = arith.constant 3.200000e+01 : f32
    %23 = vector.broadcast %cst_12 : f32 to vector<16x1xf32>
    %24 = arith.divf %22, %23 : vector<16x1xf32>
    %cst_13 = arith.constant 9.99999974E-6 : f32
    %25 = vector.broadcast %cst_13 : f32 to vector<16x1xf32>
    %26 = arith.addf %24, %25 : vector<16x1xf32>
    %27 = math.rsqrt %26 : vector<16x1xf32>
    %28 = vector.broadcast %27 : vector<16x1xf32> to vector<16x32xf32>
    %29 = arith.mulf %19, %28 : vector<16x32xf32>
    %30 = vector.broadcast %11 : vector<1x32xf32> to vector<16x32xf32>
    %31 = arith.mulf %29, %30 : vector<16x32xf32>
    %32 = vector.broadcast %13 : vector<1x32xf32> to vector<16x32xf32>
    %33 = arith.addf %31, %32 : vector<16x32xf32>
    %34 = arith.truncf %33 : vector<16x32xf32> to vector<16x32xbf16>
    %c0_14 = arith.constant 0 : index
    %c0_15 = arith.constant 0 : index
    %c0_16 = arith.constant 0 : index
    %35 = vector.load %arg4[%c0_14, %c0_15, %c0_16] : memref<1x32x96xbf16, #tpu.memory_space<vmem>>, vector<1x32x96xbf16>
    %36 = vector.shape_cast %35 : vector<1x32x96xbf16> to vector<32x96xbf16>
    %cst_17 = arith.constant dense<0.000000e+00> : vector<16x96xf32>
    %37 = tpu.matmul %34, %36, %cst_17 {dimension_numbers = #tpu.dot_dimension_numbers<[1], [0], [0], [1], [0, 0, 1, 1], [], []>} : vector<16x32xbf16>, vector<32x96xbf16>, vector<16x96xf32> -> vector<16x96xf32>
    %c0_18 = arith.constant 0 : index
    %c0_19 = arith.constant 0 : index
    %c0_20 = arith.constant 0 : index
    %38 = vector.load %arg5[%c0_18, %c0_19, %c0_20] : memref<1x1x96xf32, #tpu.memory_space<vmem>>, vector<1x1x96xf32>
    %39 = vector.shape_cast %38 : vector<1x1x96xf32> to vector<1x96xf32>
    %40 = vector.broadcast %39 : vector<1x96xf32> to vector<16x96xf32>
    %41 = arith.addf %37, %40 : vector<16x96xf32>
    %42 = vector.extract_strided_slice %41 {offsets = [0, 0], sizes = [8, 96], strides = [1, 1]} : vector<16x96xf32> to vector<8x96xf32>
    %43 = tpu.transpose %42, [1, 0] : vector<8x96xf32> -> vector<96x8xf32>
    %44 = vector.extract_strided_slice %42 {offsets = [0, 0], sizes = [8, 8], strides = [1, 1]} : vector<8x96xf32> to vector<8x8xf32>
    %45 = vector.extract_strided_slice %43 {offsets = [32, 0], sizes = [8, 8], strides = [1, 1]} : vector<96x8xf32> to vector<8x8xf32>
    %46 = vector.extract_strided_slice %43 {offsets = [64, 0], sizes = [8, 8], strides = [1, 1]} : vector<96x8xf32> to vector<8x8xf32>
    %47 = arith.truncf %44 : vector<8x8xf32> to vector<8x8xbf16>
    %48 = arith.truncf %45 : vector<8x8xf32> to vector<8x8xbf16>
    %cst_21 = arith.constant dense<0.000000e+00> : vector<8x8xf32>
    %49 = tpu.matmul %47, %48, %cst_21 {dimension_numbers = #tpu.dot_dimension_numbers<[1], [0], [0], [1], [0, 0, 1, 1], [], []>} : vector<8x8xbf16>, vector<8x8xbf16>, vector<8x8xf32> -> vector<8x8xf32>
    %50 = arith.addf %49, %9 : vector<8x8xf32>
    %cst_22 = arith.constant dense<0xFF800000> : vector<8xf32>
    %51 = vector.multi_reduction <maximumf>, %50, %cst_22 [1] : vector<8x8xf32> to vector<8xf32>
    %52 = vector.shape_cast %51 : vector<8xf32> to vector<8x1xf32>
    %53 = vector.broadcast %52 : vector<8x1xf32> to vector<8x8xf32>
    %54 = arith.subf %50, %53 : vector<8x8xf32>
    %55 = math.exp %54 : vector<8x8xf32>
    %cst_23 = arith.constant dense<0.000000e+00> : vector<8xf32>
    %56 = vector.multi_reduction <add>, %55, %cst_23 [1] : vector<8x8xf32> to vector<8xf32>
    %57 = vector.shape_cast %56 : vector<8xf32> to vector<8x1xf32>
    %58 = tpu.reciprocal %57 {approx = true} : vector<8x1xf32> -> vector<8x1xf32>
    %59 = vector.broadcast %58 : vector<8x1xf32> to vector<8x8xf32>
    %60 = arith.mulf %55, %59 : vector<8x8xf32>
    %61 = arith.truncf %46 : vector<8x8xf32> to vector<8x8xbf16>
    %62 = arith.truncf %60 : vector<8x8xf32> to vector<8x8xbf16>
    %cst_24 = arith.constant dense<0.000000e+00> : vector<8x8xf32>
    %63 = tpu.matmul %61, %62, %cst_24 {dimension_numbers = #tpu.dot_dimension_numbers<[1], [1], [0], [0], [0, 0, 1, 0], [], []>} : vector<8x8xbf16>, vector<8x8xbf16>, vector<8x8xf32> -> vector<8x8xf32>
    %64 = vector.extract_strided_slice %42 {offsets = [0, 8], sizes = [8, 8], strides = [1, 1]} : vector<8x96xf32> to vector<8x8xf32>
    %65 = vector.extract_strided_slice %43 {offsets = [40, 0], sizes = [8, 8], strides = [1, 1]} : vector<96x8xf32> to vector<8x8xf32>
    %66 = vector.extract_strided_slice %43 {offsets = [72, 0], sizes = [8, 8], strides = [1, 1]} : vector<96x8xf32> to vector<8x8xf32>
    %67 = arith.truncf %64 : vector<8x8xf32> to vector<8x8xbf16>
    %68 = arith.truncf %65 : vector<8x8xf32> to vector<8x8xbf16>
    %cst_25 = arith.constant dense<0.000000e+00> : vector<8x8xf32>
    %69 = tpu.matmul %67, %68, %cst_25 {dimension_numbers = #tpu.dot_dimension_numbers<[1], [0], [0], [1], [0, 0, 1, 1], [], []>} : vector<8x8xbf16>, vector<8x8xbf16>, vector<8x8xf32> -> vector<8x8xf32>
    %70 = arith.addf %69, %9 : vector<8x8xf32>
    %cst_26 = arith.constant dense<0xFF800000> : vector<8xf32>
    %71 = vector.multi_reduction <maximumf>, %70, %cst_26 [1] : vector<8x8xf32> to vector<8xf32>
    %72 = vector.shape_cast %71 : vector<8xf32> to vector<8x1xf32>
    %73 = vector.broadcast %72 : vector<8x1xf32> to vector<8x8xf32>
    %74 = arith.subf %70, %73 : vector<8x8xf32>
    %75 = math.exp %74 : vector<8x8xf32>
    %cst_27 = arith.constant dense<0.000000e+00> : vector<8xf32>
    %76 = vector.multi_reduction <add>, %75, %cst_27 [1] : vector<8x8xf32> to vector<8xf32>
    %77 = vector.shape_cast %76 : vector<8xf32> to vector<8x1xf32>
    %78 = tpu.reciprocal %77 {approx = true} : vector<8x1xf32> -> vector<8x1xf32>
    %79 = vector.broadcast %78 : vector<8x1xf32> to vector<8x8xf32>
    %80 = arith.mulf %75, %79 : vector<8x8xf32>
    %81 = arith.truncf %66 : vector<8x8xf32> to vector<8x8xbf16>
    %82 = arith.truncf %80 : vector<8x8xf32> to vector<8x8xbf16>
    %cst_28 = arith.constant dense<0.000000e+00> : vector<8x8xf32>
    %83 = tpu.matmul %81, %82, %cst_28 {dimension_numbers = #tpu.dot_dimension_numbers<[1], [1], [0], [0], [0, 0, 1, 0], [], []>} : vector<8x8xbf16>, vector<8x8xbf16>, vector<8x8xf32> -> vector<8x8xf32>
    %84 = vector.extract_strided_slice %42 {offsets = [0, 16], sizes = [8, 8], strides = [1, 1]} : vector<8x96xf32> to vector<8x8xf32>
    %85 = vector.extract_strided_slice %43 {offsets = [48, 0], sizes = [8, 8], strides = [1, 1]} : vector<96x8xf32> to vector<8x8xf32>
    %86 = vector.extract_strided_slice %43 {offsets = [80, 0], sizes = [8, 8], strides = [1, 1]} : vector<96x8xf32> to vector<8x8xf32>
    %87 = arith.truncf %84 : vector<8x8xf32> to vector<8x8xbf16>
    %88 = arith.truncf %85 : vector<8x8xf32> to vector<8x8xbf16>
    %cst_29 = arith.constant dense<0.000000e+00> : vector<8x8xf32>
    %89 = tpu.matmul %87, %88, %cst_29 {dimension_numbers = #tpu.dot_dimension_numbers<[1], [0], [0], [1], [0, 0, 1, 1], [], []>} : vector<8x8xbf16>, vector<8x8xbf16>, vector<8x8xf32> -> vector<8x8xf32>
    %90 = arith.addf %89, %9 : vector<8x8xf32>
    %cst_30 = arith.constant dense<0xFF800000> : vector<8xf32>
    %91 = vector.multi_reduction <maximumf>, %90, %cst_30 [1] : vector<8x8xf32> to vector<8xf32>
    %92 = vector.shape_cast %91 : vector<8xf32> to vector<8x1xf32>
    %93 = vector.broadcast %92 : vector<8x1xf32> to vector<8x8xf32>
    %94 = arith.subf %90, %93 : vector<8x8xf32>
    %95 = math.exp %94 : vector<8x8xf32>
    %cst_31 = arith.constant dense<0.000000e+00> : vector<8xf32>
    %96 = vector.multi_reduction <add>, %95, %cst_31 [1] : vector<8x8xf32> to vector<8xf32>
    %97 = vector.shape_cast %96 : vector<8xf32> to vector<8x1xf32>
    %98 = tpu.reciprocal %97 {approx = true} : vector<8x1xf32> -> vector<8x1xf32>
    %99 = vector.broadcast %98 : vector<8x1xf32> to vector<8x8xf32>
    %100 = arith.mulf %95, %99 : vector<8x8xf32>
    %101 = arith.truncf %86 : vector<8x8xf32> to vector<8x8xbf16>
    %102 = arith.truncf %100 : vector<8x8xf32> to vector<8x8xbf16>
    %cst_32 = arith.constant dense<0.000000e+00> : vector<8x8xf32>
    %103 = tpu.matmul %101, %102, %cst_32 {dimension_numbers = #tpu.dot_dimension_numbers<[1], [1], [0], [0], [0, 0, 1, 0], [], []>} : vector<8x8xbf16>, vector<8x8xbf16>, vector<8x8xf32> -> vector<8x8xf32>
    %104 = vector.extract_strided_slice %42 {offsets = [0, 24], sizes = [8, 8], strides = [1, 1]} : vector<8x96xf32> to vector<8x8xf32>
    %105 = vector.extract_strided_slice %43 {offsets = [56, 0], sizes = [8, 8], strides = [1, 1]} : vector<96x8xf32> to vector<8x8xf32>
    %106 = vector.extract_strided_slice %43 {offsets = [88, 0], sizes = [8, 8], strides = [1, 1]} : vector<96x8xf32> to vector<8x8xf32>
    %107 = arith.truncf %104 : vector<8x8xf32> to vector<8x8xbf16>
    %108 = arith.truncf %105 : vector<8x8xf32> to vector<8x8xbf16>
    %cst_33 = arith.constant dense<0.000000e+00> : vector<8x8xf32>
    %109 = tpu.matmul %107, %108, %cst_33 {dimension_numbers = #tpu.dot_dimension_numbers<[1], [0], [0], [1], [0, 0, 1, 1], [], []>} : vector<8x8xbf16>, vector<8x8xbf16>, vector<8x8xf32> -> vector<8x8xf32>
    %110 = arith.addf %109, %9 : vector<8x8xf32>
    %cst_34 = arith.constant dense<0xFF800000> : vector<8xf32>
    %111 = vector.multi_reduction <maximumf>, %110, %cst_34 [1] : vector<8x8xf32> to vector<8xf32>
    %112 = vector.shape_cast %111 : vector<8xf32> to vector<8x1xf32>
    %113 = vector.broadcast %112 : vector<8x1xf32> to vector<8x8xf32>
    %114 = arith.subf %110, %113 : vector<8x8xf32>
    %115 = math.exp %114 : vector<8x8xf32>
    %cst_35 = arith.constant dense<0.000000e+00> : vector<8xf32>
    %116 = vector.multi_reduction <add>, %115, %cst_35 [1] : vector<8x8xf32> to vector<8xf32>
    %117 = vector.shape_cast %116 : vector<8xf32> to vector<8x1xf32>
    %118 = tpu.reciprocal %117 {approx = true} : vector<8x1xf32> -> vector<8x1xf32>
    %119 = vector.broadcast %118 : vector<8x1xf32> to vector<8x8xf32>
    %120 = arith.mulf %115, %119 : vector<8x8xf32>
    %121 = arith.truncf %106 : vector<8x8xf32> to vector<8x8xbf16>
    %122 = arith.truncf %120 : vector<8x8xf32> to vector<8x8xbf16>
    %cst_36 = arith.constant dense<0.000000e+00> : vector<8x8xf32>
    %123 = tpu.matmul %121, %122, %cst_36 {dimension_numbers = #tpu.dot_dimension_numbers<[1], [1], [0], [0], [0, 0, 1, 0], [], []>} : vector<8x8xbf16>, vector<8x8xbf16>, vector<8x8xf32> -> vector<8x8xf32>
    %124 = tpu.concatenate %63, %83, %103, %123 in 0 : vector<8x8xf32>, vector<8x8xf32>, vector<8x8xf32>, vector<8x8xf32> -> vector<32x8xf32>
    %125 = tpu.transpose %124, [1, 0] : vector<32x8xf32> -> vector<8x32xf32>
    %126 = vector.extract_strided_slice %41 {offsets = [8, 0], sizes = [8, 96], strides = [1, 1]} : vector<16x96xf32> to vector<8x96xf32>
    %127 = tpu.transpose %126, [1, 0] : vector<8x96xf32> -> vector<96x8xf32>
    %128 = vector.extract_strided_slice %126 {offsets = [0, 0], sizes = [8, 8], strides = [1, 1]} : vector<8x96xf32> to vector<8x8xf32>
    %129 = vector.extract_strided_slice %127 {offsets = [32, 0], sizes = [8, 8], strides = [1, 1]} : vector<96x8xf32> to vector<8x8xf32>
    %130 = vector.extract_strided_slice %127 {offsets = [64, 0], sizes = [8, 8], strides = [1, 1]} : vector<96x8xf32> to vector<8x8xf32>
    %131 = arith.truncf %128 : vector<8x8xf32> to vector<8x8xbf16>
    %132 = arith.truncf %129 : vector<8x8xf32> to vector<8x8xbf16>
    %cst_37 = arith.constant dense<0.000000e+00> : vector<8x8xf32>
    %133 = tpu.matmul %131, %132, %cst_37 {dimension_numbers = #tpu.dot_dimension_numbers<[1], [0], [0], [1], [0, 0, 1, 1], [], []>} : vector<8x8xbf16>, vector<8x8xbf16>, vector<8x8xf32> -> vector<8x8xf32>
    %134 = arith.addf %133, %9 : vector<8x8xf32>
    %cst_38 = arith.constant dense<0xFF800000> : vector<8xf32>
    %135 = vector.multi_reduction <maximumf>, %134, %cst_38 [1] : vector<8x8xf32> to vector<8xf32>
    %136 = vector.shape_cast %135 : vector<8xf32> to vector<8x1xf32>
    %137 = vector.broadcast %136 : vector<8x1xf32> to vector<8x8xf32>
    %138 = arith.subf %134, %137 : vector<8x8xf32>
    %139 = math.exp %138 : vector<8x8xf32>
    %cst_39 = arith.constant dense<0.000000e+00> : vector<8xf32>
    %140 = vector.multi_reduction <add>, %139, %cst_39 [1] : vector<8x8xf32> to vector<8xf32>
    %141 = vector.shape_cast %140 : vector<8xf32> to vector<8x1xf32>
    %142 = tpu.reciprocal %141 {approx = true} : vector<8x1xf32> -> vector<8x1xf32>
    %143 = vector.broadcast %142 : vector<8x1xf32> to vector<8x8xf32>
    %144 = arith.mulf %139, %143 : vector<8x8xf32>
    %145 = arith.truncf %130 : vector<8x8xf32> to vector<8x8xbf16>
    %146 = arith.truncf %144 : vector<8x8xf32> to vector<8x8xbf16>
    %cst_40 = arith.constant dense<0.000000e+00> : vector<8x8xf32>
    %147 = tpu.matmul %145, %146, %cst_40 {dimension_numbers = #tpu.dot_dimension_numbers<[1], [1], [0], [0], [0, 0, 1, 0], [], []>} : vector<8x8xbf16>, vector<8x8xbf16>, vector<8x8xf32> -> vector<8x8xf32>
    %148 = vector.extract_strided_slice %126 {offsets = [0, 8], sizes = [8, 8], strides = [1, 1]} : vector<8x96xf32> to vector<8x8xf32>
    %149 = vector.extract_strided_slice %127 {offsets = [40, 0], sizes = [8, 8], strides = [1, 1]} : vector<96x8xf32> to vector<8x8xf32>
    %150 = vector.extract_strided_slice %127 {offsets = [72, 0], sizes = [8, 8], strides = [1, 1]} : vector<96x8xf32> to vector<8x8xf32>
    %151 = arith.truncf %148 : vector<8x8xf32> to vector<8x8xbf16>
    %152 = arith.truncf %149 : vector<8x8xf32> to vector<8x8xbf16>
    %cst_41 = arith.constant dense<0.000000e+00> : vector<8x8xf32>
    %153 = tpu.matmul %151, %152, %cst_41 {dimension_numbers = #tpu.dot_dimension_numbers<[1], [0], [0], [1], [0, 0, 1, 1], [], []>} : vector<8x8xbf16>, vector<8x8xbf16>, vector<8x8xf32> -> vector<8x8xf32>
    %154 = arith.addf %153, %9 : vector<8x8xf32>
    %cst_42 = arith.constant dense<0xFF800000> : vector<8xf32>
    %155 = vector.multi_reduction <maximumf>, %154, %cst_42 [1] : vector<8x8xf32> to vector<8xf32>
    %156 = vector.shape_cast %155 : vector<8xf32> to vector<8x1xf32>
    %157 = vector.broadcast %156 : vector<8x1xf32> to vector<8x8xf32>
    %158 = arith.subf %154, %157 : vector<8x8xf32>
    %159 = math.exp %158 : vector<8x8xf32>
    %cst_43 = arith.constant dense<0.000000e+00> : vector<8xf32>
    %160 = vector.multi_reduction <add>, %159, %cst_43 [1] : vector<8x8xf32> to vector<8xf32>
    %161 = vector.shape_cast %160 : vector<8xf32> to vector<8x1xf32>
    %162 = tpu.reciprocal %161 {approx = true} : vector<8x1xf32> -> vector<8x1xf32>
    %163 = vector.broadcast %162 : vector<8x1xf32> to vector<8x8xf32>
    %164 = arith.mulf %159, %163 : vector<8x8xf32>
    %165 = arith.truncf %150 : vector<8x8xf32> to vector<8x8xbf16>
    %166 = arith.truncf %164 : vector<8x8xf32> to vector<8x8xbf16>
    %cst_44 = arith.constant dense<0.000000e+00> : vector<8x8xf32>
    %167 = tpu.matmul %165, %166, %cst_44 {dimension_numbers = #tpu.dot_dimension_numbers<[1], [1], [0], [0], [0, 0, 1, 0], [], []>} : vector<8x8xbf16>, vector<8x8xbf16>, vector<8x8xf32> -> vector<8x8xf32>
    %168 = vector.extract_strided_slice %126 {offsets = [0, 16], sizes = [8, 8], strides = [1, 1]} : vector<8x96xf32> to vector<8x8xf32>
    %169 = vector.extract_strided_slice %127 {offsets = [48, 0], sizes = [8, 8], strides = [1, 1]} : vector<96x8xf32> to vector<8x8xf32>
    %170 = vector.extract_strided_slice %127 {offsets = [80, 0], sizes = [8, 8], strides = [1, 1]} : vector<96x8xf32> to vector<8x8xf32>
    %171 = arith.truncf %168 : vector<8x8xf32> to vector<8x8xbf16>
    %172 = arith.truncf %169 : vector<8x8xf32> to vector<8x8xbf16>
    %cst_45 = arith.constant dense<0.000000e+00> : vector<8x8xf32>
    %173 = tpu.matmul %171, %172, %cst_45 {dimension_numbers = #tpu.dot_dimension_numbers<[1], [0], [0], [1], [0, 0, 1, 1], [], []>} : vector<8x8xbf16>, vector<8x8xbf16>, vector<8x8xf32> -> vector<8x8xf32>
    %174 = arith.addf %173, %9 : vector<8x8xf32>
    %cst_46 = arith.constant dense<0xFF800000> : vector<8xf32>
    %175 = vector.multi_reduction <maximumf>, %174, %cst_46 [1] : vector<8x8xf32> to vector<8xf32>
    %176 = vector.shape_cast %175 : vector<8xf32> to vector<8x1xf32>
    %177 = vector.broadcast %176 : vector<8x1xf32> to vector<8x8xf32>
    %178 = arith.subf %174, %177 : vector<8x8xf32>
    %179 = math.exp %178 : vector<8x8xf32>
    %cst_47 = arith.constant dense<0.000000e+00> : vector<8xf32>
    %180 = vector.multi_reduction <add>, %179, %cst_47 [1] : vector<8x8xf32> to vector<8xf32>
    %181 = vector.shape_cast %180 : vector<8xf32> to vector<8x1xf32>
    %182 = tpu.reciprocal %181 {approx = true} : vector<8x1xf32> -> vector<8x1xf32>
    %183 = vector.broadcast %182 : vector<8x1xf32> to vector<8x8xf32>
    %184 = arith.mulf %179, %183 : vector<8x8xf32>
    %185 = arith.truncf %170 : vector<8x8xf32> to vector<8x8xbf16>
    %186 = arith.truncf %184 : vector<8x8xf32> to vector<8x8xbf16>
    %cst_48 = arith.constant dense<0.000000e+00> : vector<8x8xf32>
    %187 = tpu.matmul %185, %186, %cst_48 {dimension_numbers = #tpu.dot_dimension_numbers<[1], [1], [0], [0], [0, 0, 1, 0], [], []>} : vector<8x8xbf16>, vector<8x8xbf16>, vector<8x8xf32> -> vector<8x8xf32>
    %188 = vector.extract_strided_slice %126 {offsets = [0, 24], sizes = [8, 8], strides = [1, 1]} : vector<8x96xf32> to vector<8x8xf32>
    %189 = vector.extract_strided_slice %127 {offsets = [56, 0], sizes = [8, 8], strides = [1, 1]} : vector<96x8xf32> to vector<8x8xf32>
    %190 = vector.extract_strided_slice %127 {offsets = [88, 0], sizes = [8, 8], strides = [1, 1]} : vector<96x8xf32> to vector<8x8xf32>
    %191 = arith.truncf %188 : vector<8x8xf32> to vector<8x8xbf16>
    %192 = arith.truncf %189 : vector<8x8xf32> to vector<8x8xbf16>
    %cst_49 = arith.constant dense<0.000000e+00> : vector<8x8xf32>
    %193 = tpu.matmul %191, %192, %cst_49 {dimension_numbers = #tpu.dot_dimension_numbers<[1], [0], [0], [1], [0, 0, 1, 1], [], []>} : vector<8x8xbf16>, vector<8x8xbf16>, vector<8x8xf32> -> vector<8x8xf32>
    %194 = arith.addf %193, %9 : vector<8x8xf32>
    %cst_50 = arith.constant dense<0xFF800000> : vector<8xf32>
    %195 = vector.multi_reduction <maximumf>, %194, %cst_50 [1] : vector<8x8xf32> to vector<8xf32>
    %196 = vector.shape_cast %195 : vector<8xf32> to vector<8x1xf32>
    %197 = vector.broadcast %196 : vector<8x1xf32> to vector<8x8xf32>
    %198 = arith.subf %194, %197 : vector<8x8xf32>
    %199 = math.exp %198 : vector<8x8xf32>
    %cst_51 = arith.constant dense<0.000000e+00> : vector<8xf32>
    %200 = vector.multi_reduction <add>, %199, %cst_51 [1] : vector<8x8xf32> to vector<8xf32>
    %201 = vector.shape_cast %200 : vector<8xf32> to vector<8x1xf32>
    %202 = tpu.reciprocal %201 {approx = true} : vector<8x1xf32> -> vector<8x1xf32>
    %203 = vector.broadcast %202 : vector<8x1xf32> to vector<8x8xf32>
    %204 = arith.mulf %199, %203 : vector<8x8xf32>
    %205 = arith.truncf %190 : vector<8x8xf32> to vector<8x8xbf16>
    %206 = arith.truncf %204 : vector<8x8xf32> to vector<8x8xbf16>
    %cst_52 = arith.constant dense<0.000000e+00> : vector<8x8xf32>
    %207 = tpu.matmul %205, %206, %cst_52 {dimension_numbers = #tpu.dot_dimension_numbers<[1], [1], [0], [0], [0, 0, 1, 0], [], []>} : vector<8x8xbf16>, vector<8x8xbf16>, vector<8x8xf32> -> vector<8x8xf32>
    %208 = tpu.concatenate %147, %167, %187, %207 in 0 : vector<8x8xf32>, vector<8x8xf32>, vector<8x8xf32>, vector<8x8xf32> -> vector<32x8xf32>
    %209 = tpu.transpose %208, [1, 0] : vector<32x8xf32> -> vector<8x32xf32>
    %210 = tpu.concatenate %125, %209 in 0 : vector<8x32xf32>, vector<8x32xf32> -> vector<16x32xf32>
    %211 = arith.truncf %210 : vector<16x32xf32> to vector<16x32xbf16>
    %c0_53 = arith.constant 0 : index
    %c0_54 = arith.constant 0 : index
    %c0_55 = arith.constant 0 : index
    %212 = vector.load %arg6[%c0_53, %c0_54, %c0_55] : memref<1x32x32xbf16, #tpu.memory_space<vmem>>, vector<1x32x32xbf16>
    %213 = vector.shape_cast %212 : vector<1x32x32xbf16> to vector<32x32xbf16>
    %cst_56 = arith.constant dense<0.000000e+00> : vector<16x32xf32>
    %214 = tpu.matmul %211, %213, %cst_56 {dimension_numbers = #tpu.dot_dimension_numbers<[1], [0], [0], [1], [0, 0, 1, 1], [], []>} : vector<16x32xbf16>, vector<32x32xbf16>, vector<16x32xf32> -> vector<16x32xf32>
    %c0_57 = arith.constant 0 : index
    %c0_58 = arith.constant 0 : index
    %c0_59 = arith.constant 0 : index
    %215 = vector.load %arg7[%c0_57, %c0_58, %c0_59] : memref<1x1x32xf32, #tpu.memory_space<vmem>>, vector<1x1x32xf32>
    %216 = vector.shape_cast %215 : vector<1x1x32xf32> to vector<1x32xf32>
    %217 = vector.broadcast %216 : vector<1x32xf32> to vector<16x32xf32>
    %218 = arith.addf %214, %217 : vector<16x32xf32>
    %219 = arith.addf %3, %218 : vector<16x32xf32>
    %c0_60 = arith.constant 0 : index
    %c0_61 = arith.constant 0 : index
    %c0_62 = arith.constant 0 : index
    %220 = vector.load %arg8[%c0_60, %c0_61, %c0_62] : memref<1x1x32xf32, #tpu.memory_space<vmem>>, vector<1x1x32xf32>
    %221 = vector.shape_cast %220 : vector<1x1x32xf32> to vector<1x32xf32>
    %c0_63 = arith.constant 0 : index
    %c0_64 = arith.constant 0 : index
    %c0_65 = arith.constant 0 : index
    %222 = vector.load %arg9[%c0_63, %c0_64, %c0_65] : memref<1x1x32xf32, #tpu.memory_space<vmem>>, vector<1x1x32xf32>
    %223 = vector.shape_cast %222 : vector<1x1x32xf32> to vector<1x32xf32>
    %cst_66 = arith.constant dense<0.000000e+00> : vector<16xf32>
    %224 = vector.multi_reduction <add>, %219, %cst_66 [1] : vector<16x32xf32> to vector<16xf32>
    %225 = vector.shape_cast %224 : vector<16xf32> to vector<16x1xf32>
    %cst_67 = arith.constant 3.200000e+01 : f32
    %226 = vector.broadcast %cst_67 : f32 to vector<16x1xf32>
    %227 = arith.divf %225, %226 : vector<16x1xf32>
    %228 = vector.broadcast %227 : vector<16x1xf32> to vector<16x32xf32>
    %229 = arith.subf %219, %228 : vector<16x32xf32>
    %230 = arith.mulf %229, %229 : vector<16x32xf32>
    %cst_68 = arith.constant dense<0.000000e+00> : vector<16xf32>
    %231 = vector.multi_reduction <add>, %230, %cst_68 [1] : vector<16x32xf32> to vector<16xf32>
    %232 = vector.shape_cast %231 : vector<16xf32> to vector<16x1xf32>
    %cst_69 = arith.constant 3.200000e+01 : f32
    %233 = vector.broadcast %cst_69 : f32 to vector<16x1xf32>
    %234 = arith.divf %232, %233 : vector<16x1xf32>
    %cst_70 = arith.constant 9.99999974E-6 : f32
    %235 = vector.broadcast %cst_70 : f32 to vector<16x1xf32>
    %236 = arith.addf %234, %235 : vector<16x1xf32>
    %237 = math.rsqrt %236 : vector<16x1xf32>
    %238 = vector.broadcast %237 : vector<16x1xf32> to vector<16x32xf32>
    %239 = arith.mulf %229, %238 : vector<16x32xf32>
    %240 = vector.broadcast %221 : vector<1x32xf32> to vector<16x32xf32>
    %241 = arith.mulf %239, %240 : vector<16x32xf32>
    %242 = vector.broadcast %223 : vector<1x32xf32> to vector<16x32xf32>
    %243 = arith.addf %241, %242 : vector<16x32xf32>
    %244 = arith.truncf %243 : vector<16x32xf32> to vector<16x32xbf16>
    %c0_71 = arith.constant 0 : index
    %c0_72 = arith.constant 0 : index
    %c0_73 = arith.constant 0 : index
    %245 = vector.load %arg10[%c0_71, %c0_72, %c0_73] : memref<1x32x128xbf16, #tpu.memory_space<vmem>>, vector<1x32x128xbf16>
    %246 = vector.shape_cast %245 : vector<1x32x128xbf16> to vector<32x128xbf16>
    %cst_74 = arith.constant dense<0.000000e+00> : vector<16x128xf32>
    %247 = tpu.matmul %244, %246, %cst_74 {dimension_numbers = #tpu.dot_dimension_numbers<[1], [0], [0], [1], [0, 0, 1, 1], [], []>} : vector<16x32xbf16>, vector<32x128xbf16>, vector<16x128xf32> -> vector<16x128xf32>
    %c0_75 = arith.constant 0 : index
    %c0_76 = arith.constant 0 : index
    %c0_77 = arith.constant 0 : index
    %248 = vector.load %arg11[%c0_75, %c0_76, %c0_77] : memref<1x1x128xf32, #tpu.memory_space<vmem>>, vector<1x1x128xf32>
    %249 = vector.shape_cast %248 : vector<1x1x128xf32> to vector<1x128xf32>
    %250 = vector.broadcast %249 : vector<1x128xf32> to vector<16x128xf32>
    %251 = arith.addf %247, %250 : vector<16x128xf32>
    %cst_78 = arith.constant 5.000000e-01 : f32
    %252 = vector.broadcast %cst_78 : f32 to vector<16x128xf32>
    %253 = arith.mulf %252, %251 : vector<16x128xf32>
    %cst_79 = arith.constant 4.471500e-02 : f32
    %254 = vector.broadcast %cst_79 : f32 to vector<16x128xf32>
    %255 = arith.mulf %254, %251 : vector<16x128xf32>
    %256 = arith.mulf %255, %251 : vector<16x128xf32>
    %257 = arith.mulf %256, %251 : vector<16x128xf32>
    %258 = arith.addf %251, %257 : vector<16x128xf32>
    %cst_80 = arith.constant 0.797884583 : f32
    %259 = vector.broadcast %cst_80 : f32 to vector<16x128xf32>
    %260 = arith.mulf %259, %258 : vector<16x128xf32>
    %261 = math.tanh %260 : vector<16x128xf32>
    %cst_81 = arith.constant 1.000000e+00 : f32
    %262 = vector.broadcast %cst_81 : f32 to vector<16x128xf32>
    %263 = arith.addf %262, %261 : vector<16x128xf32>
    %264 = arith.mulf %253, %263 : vector<16x128xf32>
    %265 = arith.truncf %264 : vector<16x128xf32> to vector<16x128xbf16>
    %c0_82 = arith.constant 0 : index
    %c0_83 = arith.constant 0 : index
    %c0_84 = arith.constant 0 : index
    %266 = vector.load %arg12[%c0_82, %c0_83, %c0_84] : memref<1x128x32xbf16, #tpu.memory_space<vmem>>, vector<1x128x32xbf16>
    %267 = vector.shape_cast %266 : vector<1x128x32xbf16> to vector<128x32xbf16>
    %cst_85 = arith.constant dense<0.000000e+00> : vector<16x32xf32>
    %268 = tpu.matmul %265, %267, %cst_85 {dimension_numbers = #tpu.dot_dimension_numbers<[1], [0], [0], [1], [0, 0, 1, 1], [], []>} : vector<16x128xbf16>, vector<128x32xbf16>, vector<16x32xf32> -> vector<16x32xf32>
    %c0_86 = arith.constant 0 : index
    %c0_87 = arith.constant 0 : index
    %c0_88 = arith.constant 0 : index
    %269 = vector.load %arg13[%c0_86, %c0_87, %c0_88] : memref<1x1x32xf32, #tpu.memory_space<vmem>>, vector<1x1x32xf32>
    %270 = vector.shape_cast %269 : vector<1x1x32xf32> to vector<1x32xf32>
    %271 = vector.broadcast %270 : vector<1x32xf32> to vector<16x32xf32>
    %272 = arith.addf %268, %271 : vector<16x32xf32>
    %273 = arith.addf %219, %272 : vector<16x32xf32>
    %c0_89 = arith.constant 0 : index
    %c0_90 = arith.constant 0 : index
    %274 = vector.load %arg15[%c0_89, %c0_90] : memref<16x32xf32, #tpu.memory_space<vmem>>, vector<16x32xf32>
    tpu.vector_store %arg15[%c0_89, %c0_90], %273 {strides = array<i32>} : memref<16x32xf32, #tpu.memory_space<vmem>>, vector<16x32xf32>,
    %c1_i32 = arith.constant 1 : i32
    %275 = arith.cmpi eq, %arg0, %c1_i32 : i32
    %276 = arith.extui %275 : i1 to i32
    %c0_i32_91 = arith.constant 0 : i32
    %277 = arith.cmpi ne, %276, %c0_i32_91 : i32
    scf.if %277 {
      %c0_92 = arith.constant 0 : index
      %c0_93 = arith.constant 0 : index
      %278 = vector.load %arg14[%c0_92, %c0_93] : memref<16x32xf32, #tpu.memory_space<vmem>>, vector<16x32xf32>
      tpu.vector_store %arg14[%c0_92, %c0_93], %273 {strides = array<i32>} : memref<16x32xf32, #tpu.memory_space<vmem>>, vector<16x32xf32>,
    } else {
    }
    return
  }
  func.func @transform_0(%arg0: i32) -> (i32, i32) {
    %c0_i32 = arith.constant 0 : i32
    %c0_i32_0 = arith.constant 0 : i32
    %c0_i32_1 = arith.constant 0 : i32
    return %c0_i32, %c0_i32_0 : i32, i32
  }
  func.func @transform_1(%arg0: i32) -> (i32, i32, i32) {
    %c0_i32 = arith.constant 0 : i32
    %c0_i32_0 = arith.constant 0 : i32
    %c0_i32_1 = arith.constant 0 : i32
    return %arg0, %c0_i32, %c0_i32_0 : i32, i32, i32
  }
  func.func @transform_2(%arg0: i32) -> (i32, i32, i32) {
    %c0_i32 = arith.constant 0 : i32
    %c0_i32_0 = arith.constant 0 : i32
    %c0_i32_1 = arith.constant 0 : i32
    return %arg0, %c0_i32, %c0_i32_0 : i32, i32, i32
  }
  func.func @transform_3(%arg0: i32) -> (i32, i32, i32) {
    %c0_i32 = arith.constant 0 : i32
    %c0_i32_0 = arith.constant 0 : i32
    %c0_i32_1 = arith.constant 0 : i32
    return %arg0, %c0_i32, %c0_i32_0 : i32, i32, i32
  }
  func.func @transform_4(%arg0: i32) -> (i32, i32, i32) {
    %c0_i32 = arith.constant 0 : i32
    %c0_i32_0 = arith.constant 0 : i32
    %c0_i32_1 = arith.constant 0 : i32
    return %arg0, %c0_i32, %c0_i32_0 : i32, i32, i32
  }
  func.func @transform_5(%arg0: i32) -> (i32, i32, i32) {
    %c0_i32 = arith.constant 0 : i32
    %c0_i32_0 = arith.constant 0 : i32
    %c0_i32_1 = arith.constant 0 : i32
    return %arg0, %c0_i32, %c0_i32_0 : i32, i32, i32
  }
  func.func @transform_6(%arg0: i32) -> (i32, i32, i32) {
    %c0_i32 = arith.constant 0 : i32
    %c0_i32_0 = arith.constant 0 : i32
    %c0_i32_1 = arith.constant 0 : i32
    return %arg0, %c0_i32, %c0_i32_0 : i32, i32, i32
  }
  func.func @transform_7(%arg0: i32) -> (i32, i32, i32) {
    %c0_i32 = arith.constant 0 : i32
    %c0_i32_0 = arith.constant 0 : i32
    %c0_i32_1 = arith.constant 0 : i32
    return %arg0, %c0_i32, %c0_i32_0 : i32, i32, i32
  }
  func.func @transform_8(%arg0: i32) -> (i32, i32, i32) {
    %c0_i32 = arith.constant 0 : i32
    %c0_i32_0 = arith.constant 0 : i32
    %c0_i32_1 = arith.constant 0 : i32
    return %arg0, %c0_i32, %c0_i32_0 : i32, i32, i32
  }
  func.func @transform_9(%arg0: i32) -> (i32, i32, i32) {
    %c0_i32 = arith.constant 0 : i32
    %c0_i32_0 = arith.constant 0 : i32
    %c0_i32_1 = arith.constant 0 : i32
    return %arg0, %c0_i32, %c0_i32_0 : i32, i32, i32
  }
  func.func @transform_10(%arg0: i32) -> (i32, i32, i32) {
    %c0_i32 = arith.constant 0 : i32
    %c0_i32_0 = arith.constant 0 : i32
    %c0_i32_1 = arith.constant 0 : i32
    return %arg0, %c0_i32, %c0_i32_0 : i32, i32, i32
  }
  func.func @transform_11(%arg0: i32) -> (i32, i32, i32) {
    %c0_i32 = arith.constant 0 : i32
    %c0_i32_0 = arith.constant 0 : i32
    %c0_i32_1 = arith.constant 0 : i32
    return %arg0, %c0_i32, %c0_i32_0 : i32, i32, i32
  }
  func.func @transform_12(%arg0: i32) -> (i32, i32, i32) {
    %c0_i32 = arith.constant 0 : i32
    %c0_i32_0 = arith.constant 0 : i32
    %c0_i32_1 = arith.constant 0 : i32
    return %arg0, %c0_i32, %c0_i32_0 : i32, i32, i32
  }
  func.func @transform_13(%arg0: i32) -> (i32, i32) {
    %c0_i32 = arith.constant 0 : i32
    %c0_i32_0 = arith.constant 0 : i32
    %c0_i32_1 = arith.constant 0 : i32
    return %c0_i32, %c0_i32_0 : i32, i32
  }
}

module attributes {stable_mosaic.version = 11 : i64} {
  func.func @_ln_linear_kernel(%arg0: memref<16x32xf32, #tpu.memory_space<vmem>>, %arg1: memref<1x32xf32, #tpu.memory_space<vmem>>, %arg2: memref<1x32xf32, #tpu.memory_space<vmem>>, %arg3: memref<32x32xbf16, #tpu.memory_space<vmem>>, %arg4: memref<1x32xf32, #tpu.memory_space<vmem>>, %arg5: memref<16x32xf32, #tpu.memory_space<vmem>>, %arg6: memref<16x32xf32, #tpu.memory_space<vmem>>) attributes {dimension_semantics = [], scalar_prefetch = 0 : i64, scratch_operands = 0 : i64, tpu.core_type = #tpu.core_type<tc>} {
    %c0 = arith.constant 0 : index
    %c0_0 = arith.constant 0 : index
    %0 = vector.load %arg0[%c0, %c0_0] : memref<16x32xf32, #tpu.memory_space<vmem>>, vector<16x32xf32>
    %c0_1 = arith.constant 0 : index
    %c0_2 = arith.constant 0 : index
    %1 = vector.load %arg1[%c0_1, %c0_2] : memref<1x32xf32, #tpu.memory_space<vmem>>, vector<1x32xf32>
    %c0_3 = arith.constant 0 : index
    %c0_4 = arith.constant 0 : index
    %2 = vector.load %arg2[%c0_3, %c0_4] : memref<1x32xf32, #tpu.memory_space<vmem>>, vector<1x32xf32>
    %cst = arith.constant dense<0.000000e+00> : vector<16xf32>
    %3 = vector.multi_reduction <add>, %0, %cst [1] : vector<16x32xf32> to vector<16xf32>
    %4 = vector.shape_cast %3 : vector<16xf32> to vector<16x1xf32>
    %cst_5 = arith.constant 3.200000e+01 : f32
    %5 = vector.broadcast %cst_5 : f32 to vector<16x1xf32>
    %6 = arith.divf %4, %5 : vector<16x1xf32>
    %7 = vector.broadcast %6 : vector<16x1xf32> to vector<16x32xf32>
    %8 = arith.subf %0, %7 : vector<16x32xf32>
    %9 = arith.mulf %8, %8 : vector<16x32xf32>
    %cst_6 = arith.constant dense<0.000000e+00> : vector<16xf32>
    %10 = vector.multi_reduction <add>, %9, %cst_6 [1] : vector<16x32xf32> to vector<16xf32>
    %11 = vector.shape_cast %10 : vector<16xf32> to vector<16x1xf32>
    %cst_7 = arith.constant 3.200000e+01 : f32
    %12 = vector.broadcast %cst_7 : f32 to vector<16x1xf32>
    %13 = arith.divf %11, %12 : vector<16x1xf32>
    %cst_8 = arith.constant 9.99999974E-6 : f32
    %14 = vector.broadcast %cst_8 : f32 to vector<16x1xf32>
    %15 = arith.addf %13, %14 : vector<16x1xf32>
    %16 = math.rsqrt %15 : vector<16x1xf32>
    %17 = vector.broadcast %16 : vector<16x1xf32> to vector<16x32xf32>
    %18 = arith.mulf %8, %17 : vector<16x32xf32>
    %19 = vector.broadcast %1 : vector<1x32xf32> to vector<16x32xf32>
    %20 = arith.mulf %18, %19 : vector<16x32xf32>
    %21 = vector.broadcast %2 : vector<1x32xf32> to vector<16x32xf32>
    %22 = arith.addf %20, %21 : vector<16x32xf32>
    %c0_9 = arith.constant 0 : index
    %c0_10 = arith.constant 0 : index
    %23 = vector.load %arg5[%c0_9, %c0_10] : memref<16x32xf32, #tpu.memory_space<vmem>>, vector<16x32xf32>
    tpu.vector_store %arg5[%c0_9, %c0_10], %22 {strides = array<i32>} : memref<16x32xf32, #tpu.memory_space<vmem>>, vector<16x32xf32>,
    %24 = arith.truncf %22 : vector<16x32xf32> to vector<16x32xbf16>
    %c0_11 = arith.constant 0 : index
    %c0_12 = arith.constant 0 : index
    %25 = vector.load %arg3[%c0_11, %c0_12] : memref<32x32xbf16, #tpu.memory_space<vmem>>, vector<32x32xbf16>
    %cst_13 = arith.constant dense<0.000000e+00> : vector<16x32xf32>
    %26 = tpu.matmul %24, %25, %cst_13 {dimension_numbers = #tpu.dot_dimension_numbers<[1], [0], [0], [1], [0, 0, 1, 1], [], []>} : vector<16x32xbf16>, vector<32x32xbf16>, vector<16x32xf32> -> vector<16x32xf32>
    %c0_14 = arith.constant 0 : index
    %c0_15 = arith.constant 0 : index
    %27 = vector.load %arg4[%c0_14, %c0_15] : memref<1x32xf32, #tpu.memory_space<vmem>>, vector<1x32xf32>
    %28 = vector.broadcast %27 : vector<1x32xf32> to vector<16x32xf32>
    %29 = arith.addf %26, %28 : vector<16x32xf32>
    %c0_16 = arith.constant 0 : index
    %c0_17 = arith.constant 0 : index
    %30 = vector.load %arg6[%c0_16, %c0_17] : memref<16x32xf32, #tpu.memory_space<vmem>>, vector<16x32xf32>
    tpu.vector_store %arg6[%c0_16, %c0_17], %29 {strides = array<i32>} : memref<16x32xf32, #tpu.memory_space<vmem>>, vector<16x32xf32>,
    return
  }
}

module attributes {stable_mosaic.version = 11 : i64} {
  func.func @_ln_linear_kernel(%arg0: memref<48x32xf32, #tpu.memory_space<vmem>>, %arg1: memref<1x32xf32, #tpu.memory_space<vmem>>, %arg2: memref<1x32xf32, #tpu.memory_space<vmem>>, %arg3: memref<32x48xbf16, #tpu.memory_space<vmem>>, %arg4: memref<1x48xf32, #tpu.memory_space<vmem>>, %arg5: memref<48x32xf32, #tpu.memory_space<vmem>>, %arg6: memref<48x48xf32, #tpu.memory_space<vmem>>) attributes {dimension_semantics = [], scalar_prefetch = 0 : i64, scratch_operands = 0 : i64, tpu.core_type = #tpu.core_type<tc>} {
    %c0 = arith.constant 0 : index
    %c0_0 = arith.constant 0 : index
    %0 = vector.load %arg0[%c0, %c0_0] : memref<48x32xf32, #tpu.memory_space<vmem>>, vector<48x32xf32>
    %c0_1 = arith.constant 0 : index
    %c0_2 = arith.constant 0 : index
    %1 = vector.load %arg1[%c0_1, %c0_2] : memref<1x32xf32, #tpu.memory_space<vmem>>, vector<1x32xf32>
    %c0_3 = arith.constant 0 : index
    %c0_4 = arith.constant 0 : index
    %2 = vector.load %arg2[%c0_3, %c0_4] : memref<1x32xf32, #tpu.memory_space<vmem>>, vector<1x32xf32>
    %cst = arith.constant dense<0.000000e+00> : vector<48xf32>
    %3 = vector.multi_reduction <add>, %0, %cst [1] : vector<48x32xf32> to vector<48xf32>
    %4 = vector.shape_cast %3 : vector<48xf32> to vector<48x1xf32>
    %cst_5 = arith.constant 3.200000e+01 : f32
    %5 = vector.broadcast %cst_5 : f32 to vector<48x1xf32>
    %6 = arith.divf %4, %5 : vector<48x1xf32>
    %7 = vector.broadcast %6 : vector<48x1xf32> to vector<48x32xf32>
    %8 = arith.subf %0, %7 : vector<48x32xf32>
    %9 = arith.mulf %8, %8 : vector<48x32xf32>
    %cst_6 = arith.constant dense<0.000000e+00> : vector<48xf32>
    %10 = vector.multi_reduction <add>, %9, %cst_6 [1] : vector<48x32xf32> to vector<48xf32>
    %11 = vector.shape_cast %10 : vector<48xf32> to vector<48x1xf32>
    %cst_7 = arith.constant 3.200000e+01 : f32
    %12 = vector.broadcast %cst_7 : f32 to vector<48x1xf32>
    %13 = arith.divf %11, %12 : vector<48x1xf32>
    %cst_8 = arith.constant 9.99999974E-6 : f32
    %14 = vector.broadcast %cst_8 : f32 to vector<48x1xf32>
    %15 = arith.addf %13, %14 : vector<48x1xf32>
    %16 = math.rsqrt %15 : vector<48x1xf32>
    %17 = vector.broadcast %16 : vector<48x1xf32> to vector<48x32xf32>
    %18 = arith.mulf %8, %17 : vector<48x32xf32>
    %19 = vector.broadcast %1 : vector<1x32xf32> to vector<48x32xf32>
    %20 = arith.mulf %18, %19 : vector<48x32xf32>
    %21 = vector.broadcast %2 : vector<1x32xf32> to vector<48x32xf32>
    %22 = arith.addf %20, %21 : vector<48x32xf32>
    %c0_9 = arith.constant 0 : index
    %c0_10 = arith.constant 0 : index
    %23 = vector.load %arg5[%c0_9, %c0_10] : memref<48x32xf32, #tpu.memory_space<vmem>>, vector<48x32xf32>
    tpu.vector_store %arg5[%c0_9, %c0_10], %22 {strides = array<i32>} : memref<48x32xf32, #tpu.memory_space<vmem>>, vector<48x32xf32>,
    %24 = arith.truncf %22 : vector<48x32xf32> to vector<48x32xbf16>
    %c0_11 = arith.constant 0 : index
    %c0_12 = arith.constant 0 : index
    %25 = vector.load %arg3[%c0_11, %c0_12] : memref<32x48xbf16, #tpu.memory_space<vmem>>, vector<32x48xbf16>
    %cst_13 = arith.constant dense<0.000000e+00> : vector<48x48xf32>
    %26 = tpu.matmul %24, %25, %cst_13 {dimension_numbers = #tpu.dot_dimension_numbers<[1], [0], [0], [1], [0, 0, 1, 1], [], []>} : vector<48x32xbf16>, vector<32x48xbf16>, vector<48x48xf32> -> vector<48x48xf32>
    %c0_14 = arith.constant 0 : index
    %c0_15 = arith.constant 0 : index
    %27 = vector.load %arg4[%c0_14, %c0_15] : memref<1x48xf32, #tpu.memory_space<vmem>>, vector<1x48xf32>
    %28 = vector.broadcast %27 : vector<1x48xf32> to vector<48x48xf32>
    %29 = arith.addf %26, %28 : vector<48x48xf32>
    %c0_16 = arith.constant 0 : index
    %c0_17 = arith.constant 0 : index
    %30 = vector.load %arg6[%c0_16, %c0_17] : memref<48x48xf32, #tpu.memory_space<vmem>>, vector<48x48xf32>
    tpu.vector_store %arg6[%c0_16, %c0_17], %29 {strides = array<i32>} : memref<48x48xf32, #tpu.memory_space<vmem>>, vector<48x48xf32>,
    return
  }
}

module attributes {stable_mosaic.version = 11 : i64} {
  func.func @_stack_block_kernel(%arg0: i32, %arg1: memref<48x32xf32, #tpu.memory_space<vmem>>, %arg2: memref<1x1x32xf32, #tpu.memory_space<vmem>>, %arg3: memref<1x1x32xf32, #tpu.memory_space<vmem>>, %arg4: memref<1x32x96xbf16, #tpu.memory_space<vmem>>, %arg5: memref<1x1x96xf32, #tpu.memory_space<vmem>>, %arg6: memref<1x32x32xbf16, #tpu.memory_space<vmem>>, %arg7: memref<1x1x32xf32, #tpu.memory_space<vmem>>, %arg8: memref<1x1x32xf32, #tpu.memory_space<vmem>>, %arg9: memref<1x1x32xf32, #tpu.memory_space<vmem>>, %arg10: memref<1x32x128xbf16, #tpu.memory_space<vmem>>, %arg11: memref<1x1x128xf32, #tpu.memory_space<vmem>>, %arg12: memref<1x128x32xbf16, #tpu.memory_space<vmem>>, %arg13: memref<1x1x32xf32, #tpu.memory_space<vmem>>, %arg14: memref<48x32xf32, #tpu.memory_space<vmem>>, %arg15: memref<48x32xf32, #tpu.memory_space<vmem>>) attributes {dimension_semantics = [#tpu.dimension_semantics<arbitrary>], iteration_bounds = array<i64: 2>, scalar_prefetch = 0 : i64, scratch_operands = 1 : i64, tpu.core_type = #tpu.core_type<tc>, window_params = [{pipeline_mode = #tpu.pipeline_mode<synchronous>, transform_indices = @transform_0, window_bounds = array<i64: 48, 32>}, {transform_indices = @transform_1, window_bounds = array<i64: 1, 1, 32>}, {transform_indices = @transform_2, window_bounds = array<i64: 1, 1, 32>}, {transform_indices = @transform_3, window_bounds = array<i64: 1, 32, 96>}, {transform_indices = @transform_4, window_bounds = array<i64: 1, 1, 96>}, {transform_indices = @transform_5, window_bounds = array<i64: 1, 32, 32>}, {transform_indices = @transform_6, window_bounds = array<i64: 1, 1, 32>}, {transform_indices = @transform_7, window_bounds = array<i64: 1, 1, 32>}, {transform_indices = @transform_8, window_bounds = array<i64: 1, 1, 32>}, {transform_indices = @transform_9, window_bounds = array<i64: 1, 32, 128>}, {transform_indices = @transform_10, window_bounds = array<i64: 1, 1, 128>}, {transform_indices = @transform_11, window_bounds = array<i64: 1, 128, 32>}, {transform_indices = @transform_12, window_bounds = array<i64: 1, 1, 32>}, {pipeline_mode = #tpu.pipeline_mode<synchronous>, transform_indices = @transform_13, window_bounds = array<i64: 48, 32>}]} {
    %c0_i32 = arith.constant 0 : i32
    %0 = arith.cmpi eq, %arg0, %c0_i32 : i32
    %1 = arith.extui %0 : i1 to i32
    %c0_i32_0 = arith.constant 0 : i32
    %2 = arith.cmpi ne, %1, %c0_i32_0 : i32
    scf.if %2 {
      %c0_92 = arith.constant 0 : index
      %c0_93 = arith.constant 0 : index
      %278 = vector.load %arg1[%c0_92, %c0_93] : memref<48x32xf32, #tpu.memory_space<vmem>>, vector<48x32xf32>
      %c0_94 = arith.constant 0 : index
      %c0_95 = arith.constant 0 : index
      %279 = vector.load %arg15[%c0_94, %c0_95] : memref<48x32xf32, #tpu.memory_space<vmem>>, vector<48x32xf32>
      tpu.vector_store %arg15[%c0_94, %c0_95], %278 {strides = array<i32>} : memref<48x32xf32, #tpu.memory_space<vmem>>, vector<48x32xf32>,
    } else {
    }
    %c0 = arith.constant 0 : index
    %c0_1 = arith.constant 0 : index
    %3 = vector.load %arg15[%c0, %c0_1] : memref<48x32xf32, #tpu.memory_space<vmem>>, vector<48x32xf32>
    %4 = tpu.iota {dimensions = array<i32: 1>} : vector<24x24xi32>
    %c17_i32 = arith.constant 17 : i32
    %5 = vector.broadcast %c17_i32 : i32 to vector<24x24xi32>
    %6 = arith.cmpi slt, %4, %5 : vector<24x24xi32>
    %cst = arith.constant 0.000000e+00 : f32
    %cst_2 = arith.constant -1.000000e+30 : f32
    %7 = vector.broadcast %cst : f32 to vector<24x24xf32>
    %8 = vector.broadcast %cst_2 : f32 to vector<24x24xf32>
    %9 = arith.select %6, %7, %8 : vector<24x24xi1>, vector<24x24xf32>
    %c0_3 = arith.constant 0 : index
    %c0_4 = arith.constant 0 : index
    %c0_5 = arith.constant 0 : index
    %10 = vector.load %arg2[%c0_3, %c0_4, %c0_5] : memref<1x1x32xf32, #tpu.memory_space<vmem>>, vector<1x1x32xf32>
    %11 = vector.shape_cast %10 : vector<1x1x32xf32> to vector<1x32xf32>
    %c0_6 = arith.constant 0 : index
    %c0_7 = arith.constant 0 : index
    %c0_8 = arith.constant 0 : index
    %12 = vector.load %arg3[%c0_6, %c0_7, %c0_8] : memref<1x1x32xf32, #tpu.memory_space<vmem>>, vector<1x1x32xf32>
    %13 = vector.shape_cast %12 : vector<1x1x32xf32> to vector<1x32xf32>
    %cst_9 = arith.constant dense<0.000000e+00> : vector<48xf32>
    %14 = vector.multi_reduction <add>, %3, %cst_9 [1] : vector<48x32xf32> to vector<48xf32>
    %15 = vector.shape_cast %14 : vector<48xf32> to vector<48x1xf32>
    %cst_10 = arith.constant 3.200000e+01 : f32
    %16 = vector.broadcast %cst_10 : f32 to vector<48x1xf32>
    %17 = arith.divf %15, %16 : vector<48x1xf32>
    %18 = vector.broadcast %17 : vector<48x1xf32> to vector<48x32xf32>
    %19 = arith.subf %3, %18 : vector<48x32xf32>
    %20 = arith.mulf %19, %19 : vector<48x32xf32>
    %cst_11 = arith.constant dense<0.000000e+00> : vector<48xf32>
    %21 = vector.multi_reduction <add>, %20, %cst_11 [1] : vector<48x32xf32> to vector<48xf32>
    %22 = vector.shape_cast %21 : vector<48xf32> to vector<48x1xf32>
    %cst_12 = arith.constant 3.200000e+01 : f32
    %23 = vector.broadcast %cst_12 : f32 to vector<48x1xf32>
    %24 = arith.divf %22, %23 : vector<48x1xf32>
    %cst_13 = arith.constant 9.99999974E-6 : f32
    %25 = vector.broadcast %cst_13 : f32 to vector<48x1xf32>
    %26 = arith.addf %24, %25 : vector<48x1xf32>
    %27 = math.rsqrt %26 : vector<48x1xf32>
    %28 = vector.broadcast %27 : vector<48x1xf32> to vector<48x32xf32>
    %29 = arith.mulf %19, %28 : vector<48x32xf32>
    %30 = vector.broadcast %11 : vector<1x32xf32> to vector<48x32xf32>
    %31 = arith.mulf %29, %30 : vector<48x32xf32>
    %32 = vector.broadcast %13 : vector<1x32xf32> to vector<48x32xf32>
    %33 = arith.addf %31, %32 : vector<48x32xf32>
    %34 = arith.truncf %33 : vector<48x32xf32> to vector<48x32xbf16>
    %c0_14 = arith.constant 0 : index
    %c0_15 = arith.constant 0 : index
    %c0_16 = arith.constant 0 : index
    %35 = vector.load %arg4[%c0_14, %c0_15, %c0_16] : memref<1x32x96xbf16, #tpu.memory_space<vmem>>, vector<1x32x96xbf16>
    %36 = vector.shape_cast %35 : vector<1x32x96xbf16> to vector<32x96xbf16>
    %cst_17 = arith.constant dense<0.000000e+00> : vector<48x96xf32>
    %37 = tpu.matmul %34, %36, %cst_17 {dimension_numbers = #tpu.dot_dimension_numbers<[1], [0], [0], [1], [0, 0, 1, 1], [], []>} : vector<48x32xbf16>, vector<32x96xbf16>, vector<48x96xf32> -> vector<48x96xf32>
    %c0_18 = arith.constant 0 : index
    %c0_19 = arith.constant 0 : index
    %c0_20 = arith.constant 0 : index
    %38 = vector.load %arg5[%c0_18, %c0_19, %c0_20] : memref<1x1x96xf32, #tpu.memory_space<vmem>>, vector<1x1x96xf32>
    %39 = vector.shape_cast %38 : vector<1x1x96xf32> to vector<1x96xf32>
    %40 = vector.broadcast %39 : vector<1x96xf32> to vector<48x96xf32>
    %41 = arith.addf %37, %40 : vector<48x96xf32>
    %42 = vector.extract_strided_slice %41 {offsets = [0, 0], sizes = [24, 96], strides = [1, 1]} : vector<48x96xf32> to vector<24x96xf32>
    %43 = tpu.transpose %42, [1, 0] : vector<24x96xf32> -> vector<96x24xf32>
    %44 = vector.extract_strided_slice %42 {offsets = [0, 0], sizes = [24, 8], strides = [1, 1]} : vector<24x96xf32> to vector<24x8xf32>
    %45 = vector.extract_strided_slice %43 {offsets = [32, 0], sizes = [8, 24], strides = [1, 1]} : vector<96x24xf32> to vector<8x24xf32>
    %46 = vector.extract_strided_slice %43 {offsets = [64, 0], sizes = [8, 24], strides = [1, 1]} : vector<96x24xf32> to vector<8x24xf32>
    %47 = arith.truncf %44 : vector<24x8xf32> to vector<24x8xbf16>
    %48 = arith.truncf %45 : vector<8x24xf32> to vector<8x24xbf16>
    %cst_21 = arith.constant dense<0.000000e+00> : vector<24x24xf32>
    %49 = tpu.matmul %47, %48, %cst_21 {dimension_numbers = #tpu.dot_dimension_numbers<[1], [0], [0], [1], [0, 0, 1, 1], [], []>} : vector<24x8xbf16>, vector<8x24xbf16>, vector<24x24xf32> -> vector<24x24xf32>
    %50 = arith.addf %49, %9 : vector<24x24xf32>
    %cst_22 = arith.constant dense<0xFF800000> : vector<24xf32>
    %51 = vector.multi_reduction <maximumf>, %50, %cst_22 [1] : vector<24x24xf32> to vector<24xf32>
    %52 = vector.shape_cast %51 : vector<24xf32> to vector<24x1xf32>
    %53 = vector.broadcast %52 : vector<24x1xf32> to vector<24x24xf32>
    %54 = arith.subf %50, %53 : vector<24x24xf32>
    %55 = math.exp %54 : vector<24x24xf32>
    %cst_23 = arith.constant dense<0.000000e+00> : vector<24xf32>
    %56 = vector.multi_reduction <add>, %55, %cst_23 [1] : vector<24x24xf32> to vector<24xf32>
    %57 = vector.shape_cast %56 : vector<24xf32> to vector<24x1xf32>
    %58 = tpu.reciprocal %57 {approx = true} : vector<24x1xf32> -> vector<24x1xf32>
    %59 = vector.broadcast %58 : vector<24x1xf32> to vector<24x24xf32>
    %60 = arith.mulf %55, %59 : vector<24x24xf32>
    %61 = arith.truncf %46 : vector<8x24xf32> to vector<8x24xbf16>
    %62 = arith.truncf %60 : vector<24x24xf32> to vector<24x24xbf16>
    %cst_24 = arith.constant dense<0.000000e+00> : vector<8x24xf32>
    %63 = tpu.matmul %61, %62, %cst_24 {dimension_numbers = #tpu.dot_dimension_numbers<[1], [1], [0], [0], [0, 0, 1, 0], [], []>} : vector<8x24xbf16>, vector<24x24xbf16>, vector<8x24xf32> -> vector<8x24xf32>
    %64 = vector.extract_strided_slice %42 {offsets = [0, 8], sizes = [24, 8], strides = [1, 1]} : vector<24x96xf32> to vector<24x8xf32>
    %65 = vector.extract_strided_slice %43 {offsets = [40, 0], sizes = [8, 24], strides = [1, 1]} : vector<96x24xf32> to vector<8x24xf32>
    %66 = vector.extract_strided_slice %43 {offsets = [72, 0], sizes = [8, 24], strides = [1, 1]} : vector<96x24xf32> to vector<8x24xf32>
    %67 = arith.truncf %64 : vector<24x8xf32> to vector<24x8xbf16>
    %68 = arith.truncf %65 : vector<8x24xf32> to vector<8x24xbf16>
    %cst_25 = arith.constant dense<0.000000e+00> : vector<24x24xf32>
    %69 = tpu.matmul %67, %68, %cst_25 {dimension_numbers = #tpu.dot_dimension_numbers<[1], [0], [0], [1], [0, 0, 1, 1], [], []>} : vector<24x8xbf16>, vector<8x24xbf16>, vector<24x24xf32> -> vector<24x24xf32>
    %70 = arith.addf %69, %9 : vector<24x24xf32>
    %cst_26 = arith.constant dense<0xFF800000> : vector<24xf32>
    %71 = vector.multi_reduction <maximumf>, %70, %cst_26 [1] : vector<24x24xf32> to vector<24xf32>
    %72 = vector.shape_cast %71 : vector<24xf32> to vector<24x1xf32>
    %73 = vector.broadcast %72 : vector<24x1xf32> to vector<24x24xf32>
    %74 = arith.subf %70, %73 : vector<24x24xf32>
    %75 = math.exp %74 : vector<24x24xf32>
    %cst_27 = arith.constant dense<0.000000e+00> : vector<24xf32>
    %76 = vector.multi_reduction <add>, %75, %cst_27 [1] : vector<24x24xf32> to vector<24xf32>
    %77 = vector.shape_cast %76 : vector<24xf32> to vector<24x1xf32>
    %78 = tpu.reciprocal %77 {approx = true} : vector<24x1xf32> -> vector<24x1xf32>
    %79 = vector.broadcast %78 : vector<24x1xf32> to vector<24x24xf32>
    %80 = arith.mulf %75, %79 : vector<24x24xf32>
    %81 = arith.truncf %66 : vector<8x24xf32> to vector<8x24xbf16>
    %82 = arith.truncf %80 : vector<24x24xf32> to vector<24x24xbf16>
    %cst_28 = arith.constant dense<0.000000e+00> : vector<8x24xf32>
    %83 = tpu.matmul %81, %82, %cst_28 {dimension_numbers = #tpu.dot_dimension_numbers<[1], [1], [0], [0], [0, 0, 1, 0], [], []>} : vector<8x24xbf16>, vector<24x24xbf16>, vector<8x24xf32> -> vector<8x24xf32>
    %84 = vector.extract_strided_slice %42 {offsets = [0, 16], sizes = [24, 8], strides = [1, 1]} : vector<24x96xf32> to vector<24x8xf32>
    %85 = vector.extract_strided_slice %43 {offsets = [48, 0], sizes = [8, 24], strides = [1, 1]} : vector<96x24xf32> to vector<8x24xf32>
    %86 = vector.extract_strided_slice %43 {offsets = [80, 0], sizes = [8, 24], strides = [1, 1]} : vector<96x24xf32> to vector<8x24xf32>
    %87 = arith.truncf %84 : vector<24x8xf32> to vector<24x8xbf16>
    %88 = arith.truncf %85 : vector<8x24xf32> to vector<8x24xbf16>
    %cst_29 = arith.constant dense<0.000000e+00> : vector<24x24xf32>
    %89 = tpu.matmul %87, %88, %cst_29 {dimension_numbers = #tpu.dot_dimension_numbers<[1], [0], [0], [1], [0, 0, 1, 1], [], []>} : vector<24x8xbf16>, vector<8x24xbf16>, vector<24x24xf32> -> vector<24x24xf32>
    %90 = arith.addf %89, %9 : vector<24x24xf32>
    %cst_30 = arith.constant dense<0xFF800000> : vector<24xf32>
    %91 = vector.multi_reduction <maximumf>, %90, %cst_30 [1] : vector<24x24xf32> to vector<24xf32>
    %92 = vector.shape_cast %91 : vector<24xf32> to vector<24x1xf32>
    %93 = vector.broadcast %92 : vector<24x1xf32> to vector<24x24xf32>
    %94 = arith.subf %90, %93 : vector<24x24xf32>
    %95 = math.exp %94 : vector<24x24xf32>
    %cst_31 = arith.constant dense<0.000000e+00> : vector<24xf32>
    %96 = vector.multi_reduction <add>, %95, %cst_31 [1] : vector<24x24xf32> to vector<24xf32>
    %97 = vector.shape_cast %96 : vector<24xf32> to vector<24x1xf32>
    %98 = tpu.reciprocal %97 {approx = true} : vector<24x1xf32> -> vector<24x1xf32>
    %99 = vector.broadcast %98 : vector<24x1xf32> to vector<24x24xf32>
    %100 = arith.mulf %95, %99 : vector<24x24xf32>
    %101 = arith.truncf %86 : vector<8x24xf32> to vector<8x24xbf16>
    %102 = arith.truncf %100 : vector<24x24xf32> to vector<24x24xbf16>
    %cst_32 = arith.constant dense<0.000000e+00> : vector<8x24xf32>
    %103 = tpu.matmul %101, %102, %cst_32 {dimension_numbers = #tpu.dot_dimension_numbers<[1], [1], [0], [0], [0, 0, 1, 0], [], []>} : vector<8x24xbf16>, vector<24x24xbf16>, vector<8x24xf32> -> vector<8x24xf32>
    %104 = vector.extract_strided_slice %42 {offsets = [0, 24], sizes = [24, 8], strides = [1, 1]} : vector<24x96xf32> to vector<24x8xf32>
    %105 = vector.extract_strided_slice %43 {offsets = [56, 0], sizes = [8, 24], strides = [1, 1]} : vector<96x24xf32> to vector<8x24xf32>
    %106 = vector.extract_strided_slice %43 {offsets = [88, 0], sizes = [8, 24], strides = [1, 1]} : vector<96x24xf32> to vector<8x24xf32>
    %107 = arith.truncf %104 : vector<24x8xf32> to vector<24x8xbf16>
    %108 = arith.truncf %105 : vector<8x24xf32> to vector<8x24xbf16>
    %cst_33 = arith.constant dense<0.000000e+00> : vector<24x24xf32>
    %109 = tpu.matmul %107, %108, %cst_33 {dimension_numbers = #tpu.dot_dimension_numbers<[1], [0], [0], [1], [0, 0, 1, 1], [], []>} : vector<24x8xbf16>, vector<8x24xbf16>, vector<24x24xf32> -> vector<24x24xf32>
    %110 = arith.addf %109, %9 : vector<24x24xf32>
    %cst_34 = arith.constant dense<0xFF800000> : vector<24xf32>
    %111 = vector.multi_reduction <maximumf>, %110, %cst_34 [1] : vector<24x24xf32> to vector<24xf32>
    %112 = vector.shape_cast %111 : vector<24xf32> to vector<24x1xf32>
    %113 = vector.broadcast %112 : vector<24x1xf32> to vector<24x24xf32>
    %114 = arith.subf %110, %113 : vector<24x24xf32>
    %115 = math.exp %114 : vector<24x24xf32>
    %cst_35 = arith.constant dense<0.000000e+00> : vector<24xf32>
    %116 = vector.multi_reduction <add>, %115, %cst_35 [1] : vector<24x24xf32> to vector<24xf32>
    %117 = vector.shape_cast %116 : vector<24xf32> to vector<24x1xf32>
    %118 = tpu.reciprocal %117 {approx = true} : vector<24x1xf32> -> vector<24x1xf32>
    %119 = vector.broadcast %118 : vector<24x1xf32> to vector<24x24xf32>
    %120 = arith.mulf %115, %119 : vector<24x24xf32>
    %121 = arith.truncf %106 : vector<8x24xf32> to vector<8x24xbf16>
    %122 = arith.truncf %120 : vector<24x24xf32> to vector<24x24xbf16>
    %cst_36 = arith.constant dense<0.000000e+00> : vector<8x24xf32>
    %123 = tpu.matmul %121, %122, %cst_36 {dimension_numbers = #tpu.dot_dimension_numbers<[1], [1], [0], [0], [0, 0, 1, 0], [], []>} : vector<8x24xbf16>, vector<24x24xbf16>, vector<8x24xf32> -> vector<8x24xf32>
    %124 = tpu.concatenate %63, %83, %103, %123 in 0 : vector<8x24xf32>, vector<8x24xf32>, vector<8x24xf32>, vector<8x24xf32> -> vector<32x24xf32>
    %125 = tpu.transpose %124, [1, 0] : vector<32x24xf32> -> vector<24x32xf32>
    %126 = vector.extract_strided_slice %41 {offsets = [24, 0], sizes = [24, 96], strides = [1, 1]} : vector<48x96xf32> to vector<24x96xf32>
    %127 = tpu.transpose %126, [1, 0] : vector<24x96xf32> -> vector<96x24xf32>
    %128 = vector.extract_strided_slice %126 {offsets = [0, 0], sizes = [24, 8], strides = [1, 1]} : vector<24x96xf32> to vector<24x8xf32>
    %129 = vector.extract_strided_slice %127 {offsets = [32, 0], sizes = [8, 24], strides = [1, 1]} : vector<96x24xf32> to vector<8x24xf32>
    %130 = vector.extract_strided_slice %127 {offsets = [64, 0], sizes = [8, 24], strides = [1, 1]} : vector<96x24xf32> to vector<8x24xf32>
    %131 = arith.truncf %128 : vector<24x8xf32> to vector<24x8xbf16>
    %132 = arith.truncf %129 : vector<8x24xf32> to vector<8x24xbf16>
    %cst_37 = arith.constant dense<0.000000e+00> : vector<24x24xf32>
    %133 = tpu.matmul %131, %132, %cst_37 {dimension_numbers = #tpu.dot_dimension_numbers<[1], [0], [0], [1], [0, 0, 1, 1], [], []>} : vector<24x8xbf16>, vector<8x24xbf16>, vector<24x24xf32> -> vector<24x24xf32>
    %134 = arith.addf %133, %9 : vector<24x24xf32>
    %cst_38 = arith.constant dense<0xFF800000> : vector<24xf32>
    %135 = vector.multi_reduction <maximumf>, %134, %cst_38 [1] : vector<24x24xf32> to vector<24xf32>
    %136 = vector.shape_cast %135 : vector<24xf32> to vector<24x1xf32>
    %137 = vector.broadcast %136 : vector<24x1xf32> to vector<24x24xf32>
    %138 = arith.subf %134, %137 : vector<24x24xf32>
    %139 = math.exp %138 : vector<24x24xf32>
    %cst_39 = arith.constant dense<0.000000e+00> : vector<24xf32>
    %140 = vector.multi_reduction <add>, %139, %cst_39 [1] : vector<24x24xf32> to vector<24xf32>
    %141 = vector.shape_cast %140 : vector<24xf32> to vector<24x1xf32>
    %142 = tpu.reciprocal %141 {approx = true} : vector<24x1xf32> -> vector<24x1xf32>
    %143 = vector.broadcast %142 : vector<24x1xf32> to vector<24x24xf32>
    %144 = arith.mulf %139, %143 : vector<24x24xf32>
    %145 = arith.truncf %130 : vector<8x24xf32> to vector<8x24xbf16>
    %146 = arith.truncf %144 : vector<24x24xf32> to vector<24x24xbf16>
    %cst_40 = arith.constant dense<0.000000e+00> : vector<8x24xf32>
    %147 = tpu.matmul %145, %146, %cst_40 {dimension_numbers = #tpu.dot_dimension_numbers<[1], [1], [0], [0], [0, 0, 1, 0], [], []>} : vector<8x24xbf16>, vector<24x24xbf16>, vector<8x24xf32> -> vector<8x24xf32>
    %148 = vector.extract_strided_slice %126 {offsets = [0, 8], sizes = [24, 8], strides = [1, 1]} : vector<24x96xf32> to vector<24x8xf32>
    %149 = vector.extract_strided_slice %127 {offsets = [40, 0], sizes = [8, 24], strides = [1, 1]} : vector<96x24xf32> to vector<8x24xf32>
    %150 = vector.extract_strided_slice %127 {offsets = [72, 0], sizes = [8, 24], strides = [1, 1]} : vector<96x24xf32> to vector<8x24xf32>
    %151 = arith.truncf %148 : vector<24x8xf32> to vector<24x8xbf16>
    %152 = arith.truncf %149 : vector<8x24xf32> to vector<8x24xbf16>
    %cst_41 = arith.constant dense<0.000000e+00> : vector<24x24xf32>
    %153 = tpu.matmul %151, %152, %cst_41 {dimension_numbers = #tpu.dot_dimension_numbers<[1], [0], [0], [1], [0, 0, 1, 1], [], []>} : vector<24x8xbf16>, vector<8x24xbf16>, vector<24x24xf32> -> vector<24x24xf32>
    %154 = arith.addf %153, %9 : vector<24x24xf32>
    %cst_42 = arith.constant dense<0xFF800000> : vector<24xf32>
    %155 = vector.multi_reduction <maximumf>, %154, %cst_42 [1] : vector<24x24xf32> to vector<24xf32>
    %156 = vector.shape_cast %155 : vector<24xf32> to vector<24x1xf32>
    %157 = vector.broadcast %156 : vector<24x1xf32> to vector<24x24xf32>
    %158 = arith.subf %154, %157 : vector<24x24xf32>
    %159 = math.exp %158 : vector<24x24xf32>
    %cst_43 = arith.constant dense<0.000000e+00> : vector<24xf32>
    %160 = vector.multi_reduction <add>, %159, %cst_43 [1] : vector<24x24xf32> to vector<24xf32>
    %161 = vector.shape_cast %160 : vector<24xf32> to vector<24x1xf32>
    %162 = tpu.reciprocal %161 {approx = true} : vector<24x1xf32> -> vector<24x1xf32>
    %163 = vector.broadcast %162 : vector<24x1xf32> to vector<24x24xf32>
    %164 = arith.mulf %159, %163 : vector<24x24xf32>
    %165 = arith.truncf %150 : vector<8x24xf32> to vector<8x24xbf16>
    %166 = arith.truncf %164 : vector<24x24xf32> to vector<24x24xbf16>
    %cst_44 = arith.constant dense<0.000000e+00> : vector<8x24xf32>
    %167 = tpu.matmul %165, %166, %cst_44 {dimension_numbers = #tpu.dot_dimension_numbers<[1], [1], [0], [0], [0, 0, 1, 0], [], []>} : vector<8x24xbf16>, vector<24x24xbf16>, vector<8x24xf32> -> vector<8x24xf32>
    %168 = vector.extract_strided_slice %126 {offsets = [0, 16], sizes = [24, 8], strides = [1, 1]} : vector<24x96xf32> to vector<24x8xf32>
    %169 = vector.extract_strided_slice %127 {offsets = [48, 0], sizes = [8, 24], strides = [1, 1]} : vector<96x24xf32> to vector<8x24xf32>
    %170 = vector.extract_strided_slice %127 {offsets = [80, 0], sizes = [8, 24], strides = [1, 1]} : vector<96x24xf32> to vector<8x24xf32>
    %171 = arith.truncf %168 : vector<24x8xf32> to vector<24x8xbf16>
    %172 = arith.truncf %169 : vector<8x24xf32> to vector<8x24xbf16>
    %cst_45 = arith.constant dense<0.000000e+00> : vector<24x24xf32>
    %173 = tpu.matmul %171, %172, %cst_45 {dimension_numbers = #tpu.dot_dimension_numbers<[1], [0], [0], [1], [0, 0, 1, 1], [], []>} : vector<24x8xbf16>, vector<8x24xbf16>, vector<24x24xf32> -> vector<24x24xf32>
    %174 = arith.addf %173, %9 : vector<24x24xf32>
    %cst_46 = arith.constant dense<0xFF800000> : vector<24xf32>
    %175 = vector.multi_reduction <maximumf>, %174, %cst_46 [1] : vector<24x24xf32> to vector<24xf32>
    %176 = vector.shape_cast %175 : vector<24xf32> to vector<24x1xf32>
    %177 = vector.broadcast %176 : vector<24x1xf32> to vector<24x24xf32>
    %178 = arith.subf %174, %177 : vector<24x24xf32>
    %179 = math.exp %178 : vector<24x24xf32>
    %cst_47 = arith.constant dense<0.000000e+00> : vector<24xf32>
    %180 = vector.multi_reduction <add>, %179, %cst_47 [1] : vector<24x24xf32> to vector<24xf32>
    %181 = vector.shape_cast %180 : vector<24xf32> to vector<24x1xf32>
    %182 = tpu.reciprocal %181 {approx = true} : vector<24x1xf32> -> vector<24x1xf32>
    %183 = vector.broadcast %182 : vector<24x1xf32> to vector<24x24xf32>
    %184 = arith.mulf %179, %183 : vector<24x24xf32>
    %185 = arith.truncf %170 : vector<8x24xf32> to vector<8x24xbf16>
    %186 = arith.truncf %184 : vector<24x24xf32> to vector<24x24xbf16>
    %cst_48 = arith.constant dense<0.000000e+00> : vector<8x24xf32>
    %187 = tpu.matmul %185, %186, %cst_48 {dimension_numbers = #tpu.dot_dimension_numbers<[1], [1], [0], [0], [0, 0, 1, 0], [], []>} : vector<8x24xbf16>, vector<24x24xbf16>, vector<8x24xf32> -> vector<8x24xf32>
    %188 = vector.extract_strided_slice %126 {offsets = [0, 24], sizes = [24, 8], strides = [1, 1]} : vector<24x96xf32> to vector<24x8xf32>
    %189 = vector.extract_strided_slice %127 {offsets = [56, 0], sizes = [8, 24], strides = [1, 1]} : vector<96x24xf32> to vector<8x24xf32>
    %190 = vector.extract_strided_slice %127 {offsets = [88, 0], sizes = [8, 24], strides = [1, 1]} : vector<96x24xf32> to vector<8x24xf32>
    %191 = arith.truncf %188 : vector<24x8xf32> to vector<24x8xbf16>
    %192 = arith.truncf %189 : vector<8x24xf32> to vector<8x24xbf16>
    %cst_49 = arith.constant dense<0.000000e+00> : vector<24x24xf32>
    %193 = tpu.matmul %191, %192, %cst_49 {dimension_numbers = #tpu.dot_dimension_numbers<[1], [0], [0], [1], [0, 0, 1, 1], [], []>} : vector<24x8xbf16>, vector<8x24xbf16>, vector<24x24xf32> -> vector<24x24xf32>
    %194 = arith.addf %193, %9 : vector<24x24xf32>
    %cst_50 = arith.constant dense<0xFF800000> : vector<24xf32>
    %195 = vector.multi_reduction <maximumf>, %194, %cst_50 [1] : vector<24x24xf32> to vector<24xf32>
    %196 = vector.shape_cast %195 : vector<24xf32> to vector<24x1xf32>
    %197 = vector.broadcast %196 : vector<24x1xf32> to vector<24x24xf32>
    %198 = arith.subf %194, %197 : vector<24x24xf32>
    %199 = math.exp %198 : vector<24x24xf32>
    %cst_51 = arith.constant dense<0.000000e+00> : vector<24xf32>
    %200 = vector.multi_reduction <add>, %199, %cst_51 [1] : vector<24x24xf32> to vector<24xf32>
    %201 = vector.shape_cast %200 : vector<24xf32> to vector<24x1xf32>
    %202 = tpu.reciprocal %201 {approx = true} : vector<24x1xf32> -> vector<24x1xf32>
    %203 = vector.broadcast %202 : vector<24x1xf32> to vector<24x24xf32>
    %204 = arith.mulf %199, %203 : vector<24x24xf32>
    %205 = arith.truncf %190 : vector<8x24xf32> to vector<8x24xbf16>
    %206 = arith.truncf %204 : vector<24x24xf32> to vector<24x24xbf16>
    %cst_52 = arith.constant dense<0.000000e+00> : vector<8x24xf32>
    %207 = tpu.matmul %205, %206, %cst_52 {dimension_numbers = #tpu.dot_dimension_numbers<[1], [1], [0], [0], [0, 0, 1, 0], [], []>} : vector<8x24xbf16>, vector<24x24xbf16>, vector<8x24xf32> -> vector<8x24xf32>
    %208 = tpu.concatenate %147, %167, %187, %207 in 0 : vector<8x24xf32>, vector<8x24xf32>, vector<8x24xf32>, vector<8x24xf32> -> vector<32x24xf32>
    %209 = tpu.transpose %208, [1, 0] : vector<32x24xf32> -> vector<24x32xf32>
    %210 = tpu.concatenate %125, %209 in 0 : vector<24x32xf32>, vector<24x32xf32> -> vector<48x32xf32>
    %211 = arith.truncf %210 : vector<48x32xf32> to vector<48x32xbf16>
    %c0_53 = arith.constant 0 : index
    %c0_54 = arith.constant 0 : index
    %c0_55 = arith.constant 0 : index
    %212 = vector.load %arg6[%c0_53, %c0_54, %c0_55] : memref<1x32x32xbf16, #tpu.memory_space<vmem>>, vector<1x32x32xbf16>
    %213 = vector.shape_cast %212 : vector<1x32x32xbf16> to vector<32x32xbf16>
    %cst_56 = arith.constant dense<0.000000e+00> : vector<48x32xf32>
    %214 = tpu.matmul %211, %213, %cst_56 {dimension_numbers = #tpu.dot_dimension_numbers<[1], [0], [0], [1], [0, 0, 1, 1], [], []>} : vector<48x32xbf16>, vector<32x32xbf16>, vector<48x32xf32> -> vector<48x32xf32>
    %c0_57 = arith.constant 0 : index
    %c0_58 = arith.constant 0 : index
    %c0_59 = arith.constant 0 : index
    %215 = vector.load %arg7[%c0_57, %c0_58, %c0_59] : memref<1x1x32xf32, #tpu.memory_space<vmem>>, vector<1x1x32xf32>
    %216 = vector.shape_cast %215 : vector<1x1x32xf32> to vector<1x32xf32>
    %217 = vector.broadcast %216 : vector<1x32xf32> to vector<48x32xf32>
    %218 = arith.addf %214, %217 : vector<48x32xf32>
    %219 = arith.addf %3, %218 : vector<48x32xf32>
    %c0_60 = arith.constant 0 : index
    %c0_61 = arith.constant 0 : index
    %c0_62 = arith.constant 0 : index
    %220 = vector.load %arg8[%c0_60, %c0_61, %c0_62] : memref<1x1x32xf32, #tpu.memory_space<vmem>>, vector<1x1x32xf32>
    %221 = vector.shape_cast %220 : vector<1x1x32xf32> to vector<1x32xf32>
    %c0_63 = arith.constant 0 : index
    %c0_64 = arith.constant 0 : index
    %c0_65 = arith.constant 0 : index
    %222 = vector.load %arg9[%c0_63, %c0_64, %c0_65] : memref<1x1x32xf32, #tpu.memory_space<vmem>>, vector<1x1x32xf32>
    %223 = vector.shape_cast %222 : vector<1x1x32xf32> to vector<1x32xf32>
    %cst_66 = arith.constant dense<0.000000e+00> : vector<48xf32>
    %224 = vector.multi_reduction <add>, %219, %cst_66 [1] : vector<48x32xf32> to vector<48xf32>
    %225 = vector.shape_cast %224 : vector<48xf32> to vector<48x1xf32>
    %cst_67 = arith.constant 3.200000e+01 : f32
    %226 = vector.broadcast %cst_67 : f32 to vector<48x1xf32>
    %227 = arith.divf %225, %226 : vector<48x1xf32>
    %228 = vector.broadcast %227 : vector<48x1xf32> to vector<48x32xf32>
    %229 = arith.subf %219, %228 : vector<48x32xf32>
    %230 = arith.mulf %229, %229 : vector<48x32xf32>
    %cst_68 = arith.constant dense<0.000000e+00> : vector<48xf32>
    %231 = vector.multi_reduction <add>, %230, %cst_68 [1] : vector<48x32xf32> to vector<48xf32>
    %232 = vector.shape_cast %231 : vector<48xf32> to vector<48x1xf32>
    %cst_69 = arith.constant 3.200000e+01 : f32
    %233 = vector.broadcast %cst_69 : f32 to vector<48x1xf32>
    %234 = arith.divf %232, %233 : vector<48x1xf32>
    %cst_70 = arith.constant 9.99999974E-6 : f32
    %235 = vector.broadcast %cst_70 : f32 to vector<48x1xf32>
    %236 = arith.addf %234, %235 : vector<48x1xf32>
    %237 = math.rsqrt %236 : vector<48x1xf32>
    %238 = vector.broadcast %237 : vector<48x1xf32> to vector<48x32xf32>
    %239 = arith.mulf %229, %238 : vector<48x32xf32>
    %240 = vector.broadcast %221 : vector<1x32xf32> to vector<48x32xf32>
    %241 = arith.mulf %239, %240 : vector<48x32xf32>
    %242 = vector.broadcast %223 : vector<1x32xf32> to vector<48x32xf32>
    %243 = arith.addf %241, %242 : vector<48x32xf32>
    %244 = arith.truncf %243 : vector<48x32xf32> to vector<48x32xbf16>
    %c0_71 = arith.constant 0 : index
    %c0_72 = arith.constant 0 : index
    %c0_73 = arith.constant 0 : index
    %245 = vector.load %arg10[%c0_71, %c0_72, %c0_73] : memref<1x32x128xbf16, #tpu.memory_space<vmem>>, vector<1x32x128xbf16>
    %246 = vector.shape_cast %245 : vector<1x32x128xbf16> to vector<32x128xbf16>
    %cst_74 = arith.constant dense<0.000000e+00> : vector<48x128xf32>
    %247 = tpu.matmul %244, %246, %cst_74 {dimension_numbers = #tpu.dot_dimension_numbers<[1], [0], [0], [1], [0, 0, 1, 1], [], []>} : vector<48x32xbf16>, vector<32x128xbf16>, vector<48x128xf32> -> vector<48x128xf32>
    %c0_75 = arith.constant 0 : index
    %c0_76 = arith.constant 0 : index
    %c0_77 = arith.constant 0 : index
    %248 = vector.load %arg11[%c0_75, %c0_76, %c0_77] : memref<1x1x128xf32, #tpu.memory_space<vmem>>, vector<1x1x128xf32>
    %249 = vector.shape_cast %248 : vector<1x1x128xf32> to vector<1x128xf32>
    %250 = vector.broadcast %249 : vector<1x128xf32> to vector<48x128xf32>
    %251 = arith.addf %247, %250 : vector<48x128xf32>
    %cst_78 = arith.constant 5.000000e-01 : f32
    %252 = vector.broadcast %cst_78 : f32 to vector<48x128xf32>
    %253 = arith.mulf %252, %251 : vector<48x128xf32>
    %cst_79 = arith.constant 4.471500e-02 : f32
    %254 = vector.broadcast %cst_79 : f32 to vector<48x128xf32>
    %255 = arith.mulf %254, %251 : vector<48x128xf32>
    %256 = arith.mulf %255, %251 : vector<48x128xf32>
    %257 = arith.mulf %256, %251 : vector<48x128xf32>
    %258 = arith.addf %251, %257 : vector<48x128xf32>
    %cst_80 = arith.constant 0.797884583 : f32
    %259 = vector.broadcast %cst_80 : f32 to vector<48x128xf32>
    %260 = arith.mulf %259, %258 : vector<48x128xf32>
    %261 = math.tanh %260 : vector<48x128xf32>
    %cst_81 = arith.constant 1.000000e+00 : f32
    %262 = vector.broadcast %cst_81 : f32 to vector<48x128xf32>
    %263 = arith.addf %262, %261 : vector<48x128xf32>
    %264 = arith.mulf %253, %263 : vector<48x128xf32>
    %265 = arith.truncf %264 : vector<48x128xf32> to vector<48x128xbf16>
    %c0_82 = arith.constant 0 : index
    %c0_83 = arith.constant 0 : index
    %c0_84 = arith.constant 0 : index
    %266 = vector.load %arg12[%c0_82, %c0_83, %c0_84] : memref<1x128x32xbf16, #tpu.memory_space<vmem>>, vector<1x128x32xbf16>
    %267 = vector.shape_cast %266 : vector<1x128x32xbf16> to vector<128x32xbf16>
    %cst_85 = arith.constant dense<0.000000e+00> : vector<48x32xf32>
    %268 = tpu.matmul %265, %267, %cst_85 {dimension_numbers = #tpu.dot_dimension_numbers<[1], [0], [0], [1], [0, 0, 1, 1], [], []>} : vector<48x128xbf16>, vector<128x32xbf16>, vector<48x32xf32> -> vector<48x32xf32>
    %c0_86 = arith.constant 0 : index
    %c0_87 = arith.constant 0 : index
    %c0_88 = arith.constant 0 : index
    %269 = vector.load %arg13[%c0_86, %c0_87, %c0_88] : memref<1x1x32xf32, #tpu.memory_space<vmem>>, vector<1x1x32xf32>
    %270 = vector.shape_cast %269 : vector<1x1x32xf32> to vector<1x32xf32>
    %271 = vector.broadcast %270 : vector<1x32xf32> to vector<48x32xf32>
    %272 = arith.addf %268, %271 : vector<48x32xf32>
    %273 = arith.addf %219, %272 : vector<48x32xf32>
    %c0_89 = arith.constant 0 : index
    %c0_90 = arith.constant 0 : index
    %274 = vector.load %arg15[%c0_89, %c0_90] : memref<48x32xf32, #tpu.memory_space<vmem>>, vector<48x32xf32>
    tpu.vector_store %arg15[%c0_89, %c0_90], %273 {strides = array<i32>} : memref<48x32xf32, #tpu.memory_space<vmem>>, vector<48x32xf32>,
    %c1_i32 = arith.constant 1 : i32
    %275 = arith.cmpi eq, %arg0, %c1_i32 : i32
    %276 = arith.extui %275 : i1 to i32
    %c0_i32_91 = arith.constant 0 : i32
    %277 = arith.cmpi ne, %276, %c0_i32_91 : i32
    scf.if %277 {
      %c0_92 = arith.constant 0 : index
      %c0_93 = arith.constant 0 : index
      %278 = vector.load %arg14[%c0_92, %c0_93] : memref<48x32xf32, #tpu.memory_space<vmem>>, vector<48x32xf32>
      tpu.vector_store %arg14[%c0_92, %c0_93], %273 {strides = array<i32>} : memref<48x32xf32, #tpu.memory_space<vmem>>, vector<48x32xf32>,
    } else {
    }
    return
  }
  func.func @transform_0(%arg0: i32) -> (i32, i32) {
    %c0_i32 = arith.constant 0 : i32
    %c0_i32_0 = arith.constant 0 : i32
    %c0_i32_1 = arith.constant 0 : i32
    return %c0_i32, %c0_i32_0 : i32, i32
  }
  func.func @transform_1(%arg0: i32) -> (i32, i32, i32) {
    %c0_i32 = arith.constant 0 : i32
    %c0_i32_0 = arith.constant 0 : i32
    %c0_i32_1 = arith.constant 0 : i32
    return %arg0, %c0_i32, %c0_i32_0 : i32, i32, i32
  }
  func.func @transform_2(%arg0: i32) -> (i32, i32, i32) {
    %c0_i32 = arith.constant 0 : i32
    %c0_i32_0 = arith.constant 0 : i32
    %c0_i32_1 = arith.constant 0 : i32
    return %arg0, %c0_i32, %c0_i32_0 : i32, i32, i32
  }
  func.func @transform_3(%arg0: i32) -> (i32, i32, i32) {
    %c0_i32 = arith.constant 0 : i32
    %c0_i32_0 = arith.constant 0 : i32
    %c0_i32_1 = arith.constant 0 : i32
    return %arg0, %c0_i32, %c0_i32_0 : i32, i32, i32
  }
  func.func @transform_4(%arg0: i32) -> (i32, i32, i32) {
    %c0_i32 = arith.constant 0 : i32
    %c0_i32_0 = arith.constant 0 : i32
    %c0_i32_1 = arith.constant 0 : i32
    return %arg0, %c0_i32, %c0_i32_0 : i32, i32, i32
  }
  func.func @transform_5(%arg0: i32) -> (i32, i32, i32) {
    %c0_i32 = arith.constant 0 : i32
    %c0_i32_0 = arith.constant 0 : i32
    %c0_i32_1 = arith.constant 0 : i32
    return %arg0, %c0_i32, %c0_i32_0 : i32, i32, i32
  }
  func.func @transform_6(%arg0: i32) -> (i32, i32, i32) {
    %c0_i32 = arith.constant 0 : i32
    %c0_i32_0 = arith.constant 0 : i32
    %c0_i32_1 = arith.constant 0 : i32
    return %arg0, %c0_i32, %c0_i32_0 : i32, i32, i32
  }
  func.func @transform_7(%arg0: i32) -> (i32, i32, i32) {
    %c0_i32 = arith.constant 0 : i32
    %c0_i32_0 = arith.constant 0 : i32
    %c0_i32_1 = arith.constant 0 : i32
    return %arg0, %c0_i32, %c0_i32_0 : i32, i32, i32
  }
  func.func @transform_8(%arg0: i32) -> (i32, i32, i32) {
    %c0_i32 = arith.constant 0 : i32
    %c0_i32_0 = arith.constant 0 : i32
    %c0_i32_1 = arith.constant 0 : i32
    return %arg0, %c0_i32, %c0_i32_0 : i32, i32, i32
  }
  func.func @transform_9(%arg0: i32) -> (i32, i32, i32) {
    %c0_i32 = arith.constant 0 : i32
    %c0_i32_0 = arith.constant 0 : i32
    %c0_i32_1 = arith.constant 0 : i32
    return %arg0, %c0_i32, %c0_i32_0 : i32, i32, i32
  }
  func.func @transform_10(%arg0: i32) -> (i32, i32, i32) {
    %c0_i32 = arith.constant 0 : i32
    %c0_i32_0 = arith.constant 0 : i32
    %c0_i32_1 = arith.constant 0 : i32
    return %arg0, %c0_i32, %c0_i32_0 : i32, i32, i32
  }
  func.func @transform_11(%arg0: i32) -> (i32, i32, i32) {
    %c0_i32 = arith.constant 0 : i32
    %c0_i32_0 = arith.constant 0 : i32
    %c0_i32_1 = arith.constant 0 : i32
    return %arg0, %c0_i32, %c0_i32_0 : i32, i32, i32
  }
  func.func @transform_12(%arg0: i32) -> (i32, i32, i32) {
    %c0_i32 = arith.constant 0 : i32
    %c0_i32_0 = arith.constant 0 : i32
    %c0_i32_1 = arith.constant 0 : i32
    return %arg0, %c0_i32, %c0_i32_0 : i32, i32, i32
  }
  func.func @transform_13(%arg0: i32) -> (i32, i32) {
    %c0_i32 = arith.constant 0 : i32
    %c0_i32_0 = arith.constant 0 : i32
    %c0_i32_1 = arith.constant 0 : i32
    return %c0_i32, %c0_i32_0 : i32, i32
  }
}

module attributes {stable_mosaic.version = 11 : i64} {
  func.func @_masked_mse_kernel(%arg0: memref<2x16x48xf32, #tpu.memory_space<vmem>>, %arg1: memref<2x16x48xf32, #tpu.memory_space<vmem>>, %arg2: memref<2x16xf32, #tpu.memory_space<vmem>>, %arg3: memref<1x1xf32, #tpu.memory_space<vmem>>) attributes {dimension_semantics = [], scalar_prefetch = 0 : i64, scratch_operands = 0 : i64, tpu.core_type = #tpu.core_type<tc>} {
    %c0 = arith.constant 0 : index
    %c0_0 = arith.constant 0 : index
    %c0_1 = arith.constant 0 : index
    %0 = vector.load %arg0[%c0, %c0_0, %c0_1] : memref<2x16x48xf32, #tpu.memory_space<vmem>>, vector<2x16x48xf32>
    %c0_2 = arith.constant 0 : index
    %c0_3 = arith.constant 0 : index
    %c0_4 = arith.constant 0 : index
    %1 = vector.load %arg1[%c0_2, %c0_3, %c0_4] : memref<2x16x48xf32, #tpu.memory_space<vmem>>, vector<2x16x48xf32>
    %2 = arith.subf %0, %1 : vector<2x16x48xf32>
    %3 = arith.mulf %2, %2 : vector<2x16x48xf32>
    %cst = arith.constant dense<0.000000e+00> : vector<2x16xf32>
    %4 = vector.multi_reduction <add>, %3, %cst [2] : vector<2x16x48xf32> to vector<2x16xf32>
    %cst_5 = arith.constant 4.800000e+01 : f32
    %5 = vector.broadcast %cst_5 : f32 to vector<2x16xf32>
    %6 = arith.divf %4, %5 : vector<2x16xf32>
    %c0_6 = arith.constant 0 : index
    %c0_7 = arith.constant 0 : index
    %7 = vector.load %arg2[%c0_6, %c0_7] : memref<2x16xf32, #tpu.memory_space<vmem>>, vector<2x16xf32>
    %cst_8 = arith.constant 1.000000e+00 : f32
    %8 = vector.broadcast %cst_8 : f32 to vector<2x16xf32>
    %9 = arith.subf %8, %7 : vector<2x16xf32>
    %10 = arith.mulf %6, %9 : vector<2x16xf32>
    %cst_9 = arith.constant dense<0.000000e+00> : vector<2xf32>
    %11 = vector.multi_reduction <add>, %10, %cst_9 [1] : vector<2x16xf32> to vector<2xf32>
    %12 = vector.shape_cast %11 : vector<2xf32> to vector<2x1xf32>
    %cst_10 = arith.constant dense<0.000000e+00> : vector<1xf32>
    %13 = vector.multi_reduction <add>, %12, %cst_10 [0] : vector<2x1xf32> to vector<1xf32>
    %14 = vector.shape_cast %13 : vector<1xf32> to vector<1x1xf32>
    %cst_11 = arith.constant dense<0.000000e+00> : vector<2xf32>
    %15 = vector.multi_reduction <add>, %9, %cst_11 [1] : vector<2x16xf32> to vector<2xf32>
    %16 = vector.shape_cast %15 : vector<2xf32> to vector<2x1xf32>
    %cst_12 = arith.constant dense<0.000000e+00> : vector<1xf32>
    %17 = vector.multi_reduction <add>, %16, %cst_12 [0] : vector<2x1xf32> to vector<1xf32>
    %18 = vector.shape_cast %17 : vector<1xf32> to vector<1x1xf32>
    %cst_13 = arith.constant 1.000000e+00 : f32
    %19 = vector.broadcast %cst_13 : f32 to vector<1x1xf32>
    %20 = arith.maximumf %18, %19 : vector<1x1xf32>
    %21 = arith.divf %14, %20 : vector<1x1xf32>
    %c0_14 = arith.constant 0 : index
    %c0_15 = arith.constant 0 : index
    %22 = vector.load %arg3[%c0_14, %c0_15] : memref<1x1xf32, #tpu.memory_space<vmem>>, vector<1x1xf32>
    tpu.vector_store %arg3[%c0_14, %c0_15], %21 {strides = array<i32>} : memref<1x1xf32, #tpu.memory_space<vmem>>, vector<1x1xf32>,
    return
  }
}

</mosaic_0001>

<llo_original>
// kernel: cmuim_forward.6
$region0: #{cmuim_forward.6}
  #allocation0 [shape = 'u32[]', space=smem, size = 0x4, offset = 0x4, fixed_abs, tag = 'smem constant byte address 0x4 - core index']
  #allocation1 [shape = 'u32[144,128]{1,0:T(1,128)}', space=vmem, size = 0x12000, scoped, tag = 'internal scratch']
  %s0 = inlined_call_operand.vmem [shape: f32[32,48], index: 0, kind: input, shape index: {}]
  %s1 = inlined_call_operand.vmem [shape: bf16[48,32], index: 1, kind: input, shape index: {}]
  %s2 = inlined_call_operand.vmem [shape: f32[1,32], index: 2, kind: input, shape index: {}]
  %s3 = inlined_call_operand.vmem [shape: f32[32,32], index: 3, kind: output, shape index: {}]
  %s4 = sld [smem:[#allocation0]]
  $region22: #{cmuim_forward.6} parent=0
    _
  %s6 = ssub.s32 1, %s4
  %s7 = scalar_select 0, %s6, %s4
  // Predicated region
  $region2: #{cmuim_forward.6} parent=0 // pred_check
    _
  $region3: #{cmuim_forward.6} parent=0 // pred_check_branch
    %9 = sbr.rel (0) target = $region5
  $region4: #{cmuim_forward.6} parent=0 // pred_region
    _
  $region5: #{cmuim_forward.6} parent=0 // pred_fallthru
    _
  // Predicated region
  $region6: #{cmuim_forward.6} parent=0 // pred_check
    _
  $region7: #{cmuim_forward.6} parent=0 // pred_check_branch
    %11 = sbr.rel (0) target = $region9
  $region8: #{cmuim_forward.6} parent=0 // pred_region
    _
  $region9: #{cmuim_forward.6} parent=0 // pred_fallthru
    _
  // Predicated region
  $region10: #{cmuim_forward.6} parent=0 // pred_check
    _
  $region11: #{cmuim_forward.6} parent=0 // pred_check_branch
    %13 = sbr.rel (0) target = $region13
  $region12: #{cmuim_forward.6} parent=0 // pred_region
    _
  $region13: #{cmuim_forward.6} parent=0 // pred_fallthru
    _
  %v15 = vld [vmem:[%s0] sm:$0xff]
  %v16 = vld [vmem:[%s0 + $0x8] sm:$0xff]
  %v17 = vld [vmem:[%s0 + $0x10] sm:$0xff]
  %v18 = vld [vmem:[%s0 + $0x18] sm:$0xff]
  %v19 = vpack.c.bf16 %v16, %v15
  %v20 = vpack.c.bf16 %v18, %v17
  %v21 = vld [vmem:[%s1] sm:$0xf]
  %v22 = vld [vmem:[%s1 + $0x4] sm:$0xf]
  %v23 = vld [vmem:[%s1 + $0x8] sm:$0xf]
  %v24 = vld [vmem:[%s1 + $0xc] sm:$0xf]
  %v25 = vld [vmem:[%s1 + $0x10] sm:$0xf]
  %v26 = vld [vmem:[%s1 + $0x14] sm:$0xf]
  %v27 = vld [vmem:[%s2] sm:$0x1]
  %v29 = vlaneseq
  %v30 = vshrl.u32 %v29, 7
  %v31 = vsub.s32 0, %v30
  %v32 = vrot.slane %v27, %v31
  %v40 = vunpack.c.l.b16 %v21
  %v41 = vunpack.c.l.b16 %v22
  %v42 = vunpack.c.l.b16 %v23
  %v43 = vunpack.c.l.b16 %v24
  %v44 = vunpack.c.l.b16 %v25
  %v45 = vunpack.c.l.b16 %v26
  %v46 = vpack.c.b16 %v41, %v40
  %v47 = vpack.c.b16 %v43, %v42
  %v48 = vpack.c.b16 %v45, %v44
  %vm52 = vcmask 392192
  %v54 = vsel %vm52, %v19, 0
  %v57 = vsel %vm52, %v20, 0
  %59 = vmatprep.subr.bf16.mxu0 0
  %60 = vmatpush1.bf16.msra.mxu0 %v46
  %61 = vmatprep.subr.bf16.mxu0 0
  %62 = vmatpush1.bf16.msra.mxu0 %v47
  %63 = vmatprep.subr.bf16.mxu0 0
  %64 = vmatpush1.bf16.msra.mxu0 %v48
  %65 = vmatprep.subr.bf16.mxu0 0
  %66 = vmatpush1.bf16.msra.mxu0 0
  %67 = vmatprep.subr.bf16.mxu0 0
  %68 = vmatpush1.bf16.msra.mxu0 0
  %69 = vmatprep.subr.bf16.mxu0 0
  %70 = vmatpush1.bf16.msra.mxu0 0
  %71 = vmatprep.subr.bf16.mxu0 0
  %72 = vmatpush1.bf16.msra.mxu0 0
  %73 = vmatprep.subr.bf16.mxu0 0
  %74 = vmatpush1.bf16.msra.mxu0 0
  %75 = vmatprep.subr.bf16.mxu0 0
  %76 = vmatpush1.bf16.msra.mxu0 0
  %77 = vmatprep.subr.bf16.mxu0 0
  %78 = vmatpush1.bf16.msra.mxu0 0
  %79 = vmatprep.subr.bf16.mxu0 0
  %80 = vmatpush1.bf16.msra.mxu0 0
  %81 = vmatprep.subr.bf16.mxu0 0
  %82 = vmatpush1.bf16.msra.mxu0 0
  %83 = vmatprep.subr.bf16.mxu0 0
  %84 = vmatpush1.bf16.msra.mxu0 0
  %85 = vmatprep.subr.bf16.mxu0 0
  %86 = vmatpush1.bf16.msra.mxu0 0
  %87 = vmatprep.subr.bf16.mxu0 0
  %88 = vmatpush1.bf16.msra.mxu0 0
  %89 = vmatprep.subr.bf16.mxu0 0
  %90 = vmatpush1.bf16.msra.mxu0 0
  %91 = vmatprep.mubr.bf16.mxu0 0
  %92 = vmatmul.mubr.bf16.gmra.mrb[0].mxu0 %v54
  %v93 = vpop.f32.mrb[0].mxu0
  %v94 = vadd.f32 %v32, %v93
  %v95 = vpop.f32.mrb[0].mxu0
  %v96 = vpop.f32.mrb[0].mxu0
  %v97 = vadd.f32 %v32, %v96
  %v98 = vpop.f32.mrb[0].mxu0
  %99 = vmatprep.mubr.bf16.mxu0 0
  %100 = vmatmul.mubr.bf16.gmra.mrb[0].mxu0 %v57
  %v101 = vpop.f32.mrb[0].mxu0
  %v102 = vadd.f32 %v32, %v101
  %v103 = vpop.f32.mrb[0].mxu0
  %v104 = vpop.f32.mrb[0].mxu0
  %v105 = vadd.f32 %v32, %v104
  %v106 = vpop.f32.mrb[0].mxu0
  %107 = vdwg.mxu0
  %vm108 = vcmask 261120
  %109 = vst.msk [vmem:[%s3] sm:$0xff] %vm108, %v94
  %110 = vst.msk [vmem:[%s3 + $0x8] sm:$0xff] %vm108, %v97
  %111 = vst.msk [vmem:[%s3 + $0x10] sm:$0xff] %vm108, %v102
  %112 = vst.msk [vmem:[%s3 + $0x18] sm:$0xff] %vm108, %v105
  // Predicated region
  $region14: #{cmuim_forward.6} parent=0 // pred_check
    _
  $region15: #{cmuim_forward.6} parent=0 // pred_check_branch
    %114 = sbr.rel (0) target = $region17
  $region16: #{cmuim_forward.6} parent=0 // pred_region
    _
  $region17: #{cmuim_forward.6} parent=0 // pred_fallthru
    _
  // Predicated region
  $region18: #{cmuim_forward.6} parent=0 // pred_check
    _
  $region19: #{cmuim_forward.6} parent=0 // pred_check_branch
    %116 = sbr.rel (0) target = $region21
  $region20: #{cmuim_forward.6} parent=0 // pred_region
    _
  $region21: #{cmuim_forward.6} parent=0 // pred_fallthru
    _

// kernel: cmuim_forward.8
$region0: #{cmuim_forward.8}
  #allocation0 [shape = 'u32[]', space=smem, size = 0x4, offset = 0x4, fixed_abs, tag = 'smem constant byte address 0x4 - core index']
  #allocation1 [shape = 'u32[144,128]{1,0:T(1,128)}', space=vmem, size = 0x12000, scoped, tag = 'internal scratch']
  %s0 = inlined_call_operand.vmem [shape: f32[16,32], index: 0, kind: input, shape index: {}]
  %s1 = inlined_call_operand.vmem [shape: f32[1,32], index: 1, kind: input, shape index: {}]
  %s2 = inlined_call_operand.vmem [shape: f32[1,32], index: 2, kind: input, shape index: {}]
  %s3 = inlined_call_operand.vmem [shape: bf16[32,32], index: 3, kind: input, shape index: {}]
  %s4 = inlined_call_operand.vmem [shape: f32[1,32], index: 4, kind: input, shape index: {}]
  %s5 = inlined_call_operand.vmem [shape: f32[16,32], index: 5, kind: output, shape index: {0}]
  %s6 = inlined_call_operand.vmem [shape: f32[16,32], index: 6, kind: output, shape index: {1}]
  %7 = xla_tuple %s5, %s6
  %s8 = sld [smem:[#allocation0]]
  $region38: #{cmuim_forward.8} parent=0
    _
  %s10 = ssub.s32 1, %s8
  %s11 = scalar_select 0, %s10, %s8
  // Predicated region
  $region2: #{cmuim_forward.8} parent=0 // pred_check
    _
  $region3: #{cmuim_forward.8} parent=0 // pred_check_branch
    %13 = sbr.rel (0) target = $region5
  $region4: #{cmuim_forward.8} parent=0 // pred_region
    _
  $region5: #{cmuim_forward.8} parent=0 // pred_fallthru
    _
  // Predicated region
  $region6: #{cmuim_forward.8} parent=0 // pred_check
    _
  $region7: #{cmuim_forward.8} parent=0 // pred_check_branch
    %15 = sbr.rel (0) target = $region9
  $region8: #{cmuim_forward.8} parent=0 // pred_region
    _
  $region9: #{cmuim_forward.8} parent=0 // pred_fallthru
    _
  // Predicated region
  $region10: #{cmuim_forward.8} parent=0 // pred_check
    _
  $region11: #{cmuim_forward.8} parent=0 // pred_check_branch
    %17 = sbr.rel (0) target = $region13
  $region12: #{cmuim_forward.8} parent=0 // pred_region
    _
  $region13: #{cmuim_forward.8} parent=0 // pred_fallthru
    _
  // Predicated region
  $region14: #{cmuim_forward.8} parent=0 // pred_check
    _
  $region15: #{cmuim_forward.8} parent=0 // pred_check_branch
    %19 = sbr.rel (0) target = $region17
  $region16: #{cmuim_forward.8} parent=0 // pred_region
    _
  $region17: #{cmuim_forward.8} parent=0 // pred_fallthru
    _
  // Predicated region
  $region18: #{cmuim_forward.8} parent=0 // pred_check
    _
  $region19: #{cmuim_forward.8} parent=0 // pred_check_branch
    %21 = sbr.rel (0) target = $region21
  $region20: #{cmuim_forward.8} parent=0 // pred_region
    _
  $region21: #{cmuim_forward.8} parent=0 // pred_fallthru
    _
  %v23 = vld [vmem:[%s0] sm:$0xff]
  %v24 = vld [vmem:[%s0 + $0x8] sm:$0xff]
  %v25 = vld [vmem:[%s1] sm:$0x1]
  %v26 = vld [vmem:[%s2] sm:$0x1]
  %vm27 = vcmask 261120
  %v28 = vsel %vm27, %v23, 0.0
  %29 = vadd.xlane.f32.xlu0 %v28
  %v30 = vpop.xlane.xlu0 %29
  %v31 = vsel %vm27, %v24, 0.0
  %32 = vadd.xlane.f32.xlu0 %v31
  %v33 = vpop.xlane.xlu0 %32
  %v34 = vrcp.pop 32.0
  %v35 = vmul.f32 %v30, %v34
  %v36 = vmul.f32 %v33, %v34
  %v37 = vsub.f32 %v23, %v35
  %v38 = vsub.f32 %v24, %v36
  %v39 = vmul.f32 %v37, %v37
  %v40 = vmul.f32 %v38, %v38
  %v41 = vsel %vm27, %v39, 0.0
  %42 = vadd.xlane.f32.xlu0 %v41
  %v43 = vpop.xlane.xlu0 %42
  %v44 = vsel %vm27, %v40, 0.0
  %45 = vadd.xlane.f32.xlu0 %v44
  %v46 = vpop.xlane.xlu0 %45
  %v47 = vmul.f32 %v43, %v34
  %v48 = vmul.f32 %v46, %v34
  %v49 = vadd.f32 %v47, 1e-05
  %v50 = vadd.f32 %v48, 1e-05
  %v51 = vrsqrt.pop %v49
  %v52 = vrsqrt.pop %v50
  %v53 = vmul.f32 %v37, %v51
  %v54 = vmul.f32 %v38, %v52
  %v56 = vlaneseq
  %v57 = vshrl.u32 %v56, 7
  %v58 = vsub.s32 0, %v57
  %v59 = vrot.slane %v25, %v58
  %v61 = vmul.f32 %v53, %v59
  %v62 = vmul.f32 %v54, %v59
  %v64 = vlaneseq
  %v65 = vshrl.u32 %v64, 7
  %v66 = vsub.s32 0, %v65
  %v67 = vrot.slane %v26, %v66
  %v69 = vadd.f32 %v61, %v67
  %v70 = vadd.f32 %v62, %v67
  %71 = vst.msk [vmem:[%s5] sm:$0xff] %vm27, %v69
  %72 = vst.msk [vmem:[%s5 + $0x8] sm:$0xff] %vm27, %v70
  %v73 = vpack.c.bf16 %v70, %v69
  %v74 = vld [vmem:[%s3] sm:$0xf]
  %v75 = vld [vmem:[%s3 + $0x4] sm:$0xf]
  %v76 = vld [vmem:[%s3 + $0x8] sm:$0xf]
  %v77 = vld [vmem:[%s3 + $0xc] sm:$0xf]
  %v78 = vld [vmem:[%s4] sm:$0x1]
  %v80 = vlaneseq
  %v81 = vshrl.u32 %v80, 7
  %v82 = vsub.s32 0, %v81
  %v83 = vrot.slane %v78, %v82
  %v89 = vunpack.c.l.b16 %v74
  %v90 = vunpack.c.l.b16 %v75
  %v91 = vunpack.c.l.b16 %v76
  %v92 = vunpack.c.l.b16 %v77
  %v93 = vpack.c.b16 %v90, %v89
  %v94 = vpack.c.b16 %v92, %v91
  %v98 = vsel %vm27, %v73, 0
  %100 = vmatprep.subr.bf16.mxu0 0
  %101 = vmatpush1.bf16.msra.mxu0 %v93
  %102 = vmatprep.subr.bf16.mxu0 0
  %103 = vmatpush1.bf16.msra.mxu0 %v94
  %104 = vmatprep.subr.bf16.mxu0 0
  %105 = vmatpush1.bf16.msra.mxu0 0
  %106 = vmatprep.subr.bf16.mxu0 0
  %107 = vmatpush1.bf16.msra.mxu0 0
  %108 = vmatprep.subr.bf16.mxu0 0
  %109 = vmatpush1.bf16.msra.mxu0 0
  %110 = vmatprep.subr.bf16.mxu0 0
  %111 = vmatpush1.bf16.msra.mxu0 0
  %112 = vmatprep.subr.bf16.mxu0 0
  %113 = vmatpush1.bf16.msra.mxu0 0
  %114 = vmatprep.subr.bf16.mxu0 0
  %115 = vmatpush1.bf16.msra.mxu0 0
  %116 = vmatprep.subr.bf16.mxu0 0
  %117 = vmatpush1.bf16.msra.mxu0 0
  %118 = vmatprep.subr.bf16.mxu0 0
  %119 = vmatpush1.bf16.msra.mxu0 0
  %120 = vmatprep.subr.bf16.mxu0 0
  %121 = vmatpush1.bf16.msra.mxu0 0
  %122 = vmatprep.subr.bf16.mxu0 0
  %123 = vmatpush1.bf16.msra.mxu0 0
  %124 = vmatprep.subr.bf16.mxu0 0
  %125 = vmatpush1.bf16.msra.mxu0 0
  %126 = vmatprep.subr.bf16.mxu0 0
  %127 = vmatpush1.bf16.msra.mxu0 0
  %128 = vmatprep.subr.bf16.mxu0 0
  %129 = vmatpush1.bf16.msra.mxu0 0
  %130 = vmatprep.subr.bf16.mxu0 0
  %131 = vmatpush1.bf16.msra.mxu0 0
  %132 = vmatprep.mubr.bf16.mxu0 0
  %133 = vmatmul.mubr.bf16.gmra.mrb[0].mxu0 %v98
  %v134 = vpop.f32.mrb[0].mxu0
  %v135 = vadd.f32 %v83, %v134
  %v136 = vpop.f32.mrb[0].mxu0
  %v137 = vpop.f32.mrb[0].mxu0
  %v138 = vadd.f32 %v83, %v137
  %v139 = vpop.f32.mrb[0].mxu0
  %140 = vdwg.mxu0
  %141 = vst.msk [vmem:[%s6] sm:$0xff] %vm27, %v135
  %142 = vst.msk [vmem:[%s6 + $0x8] sm:$0xff] %vm27, %v138
  // Predicated region
  $region22: #{cmuim_forward.8} parent=0 // pred_check
    _
  $region23: #{cmuim_forward.8} parent=0 // pred_check_branch
    %144 = sbr.rel (0) target = $region25
  $region24: #{cmuim_forward.8} parent=0 // pred_region
    _
  $region25: #{cmuim_forward.8} parent=0 // pred_fallthru
    _
  // Predicated region
  $region26: #{cmuim_forward.8} parent=0 // pred_check
    _
  $region27: #{cmuim_forward.8} parent=0 // pred_check_branch
    %146 = sbr.rel (0) target = $region29
  $region28: #{cmuim_forward.8} parent=0 // pred_region
    _
  $region29: #{cmuim_forward.8} parent=0 // pred_fallthru
    _
  // Predicated region
  $region30: #{cmuim_forward.8} parent=0 // pred_check
    _
  $region31: #{cmuim_forward.8} parent=0 // pred_check_branch
    %148 = sbr.rel (0) target = $region33
  $region32: #{cmuim_forward.8} parent=0 // pred_region
    _
  $region33: #{cmuim_forward.8} parent=0 // pred_fallthru
    _
  // Predicated region
  $region34: #{cmuim_forward.8} parent=0 // pred_check
    _
  $region35: #{cmuim_forward.8} parent=0 // pred_check_branch
    %150 = sbr.rel (0) target = $region37
  $region36: #{cmuim_forward.8} parent=0 // pred_region
    _
  $region37: #{cmuim_forward.8} parent=0 // pred_fallthru
    _

// kernel: cmuim_forward.10
$region0: #{cmuim_forward.10}
  #allocation0 [shape = 'u32[]', space=smem, size = 0x4, offset = 0x4, fixed_abs, tag = 'smem constant byte address 0x4 - core index']
  #allocation1 [shape = 'u32[144,128]{1,0:T(1,128)}', space=vmem, size = 0x12000, scoped, tag = 'internal scratch']
  %s0 = inlined_call_operand.vmem [shape: f32[48,32], index: 0, kind: input, shape index: {}]
  %s1 = inlined_call_operand.vmem [shape: f32[1,32], index: 1, kind: input, shape index: {}]
  %s2 = inlined_call_operand.vmem [shape: f32[1,32], index: 2, kind: input, shape index: {}]
  %s3 = inlined_call_operand.vmem [shape: bf16[32,48], index: 3, kind: input, shape index: {}]
  %s4 = inlined_call_operand.vmem [shape: f32[1,48], index: 4, kind: input, shape index: {}]
  %s5 = inlined_call_operand.hbm [shape: f32[48,32], index: 5, kind: output, shape index: {0}]
  %s6 = inlined_call_operand.vmem [shape: f32[48,48], index: 6, kind: output, shape index: {1}]
  %7 = xla_tuple %s5, %s6
  %s8 = sld [smem:[#allocation0]]
  $region38: #{cmuim_forward.10} parent=0
    _
  %s10 = ssub.s32 1, %s8
  %s11 = scalar_select 0, %s10, %s8
  $region1: #{cmuim_forward.10} parent=0
    #allocation2 [shape = 'u8[24576]{0}', space=vmem, size = 0x6000, scoped, tag = 'output window, operand 0, single buffered']
    #allocation3 [shape = 's32[1]{0}', space=sflag, size = 0x4, scoped, tag = 'scoped memory for cmuim_forward.10']
    %12 = vsyncpa [#allocation3], 0
    // Predicated region
    $region2: #{cmuim_forward.10} parent=1 // pred_check
      _
    $region3: #{cmuim_forward.10} parent=1 // pred_check_branch
      %14 = sbr.rel (0) target = $region5
    $region4: #{cmuim_forward.10} parent=1 // pred_region
      _
    $region5: #{cmuim_forward.10} parent=1 // pred_fallthru
      _
    // Predicated region
    $region6: #{cmuim_forward.10} parent=1 // pred_check
      _
    $region7: #{cmuim_forward.10} parent=1 // pred_check_branch
      %16 = sbr.rel (0) target = $region9
    $region8: #{cmuim_forward.10} parent=1 // pred_region
      _
    $region9: #{cmuim_forward.10} parent=1 // pred_fallthru
      _
    // Predicated region
    $region10: #{cmuim_forward.10} parent=1 // pred_check
      _
    $region11: #{cmuim_forward.10} parent=1 // pred_check_branch
      %18 = sbr.rel (0) target = $region13
    $region12: #{cmuim_forward.10} parent=1 // pred_region
      _
    $region13: #{cmuim_forward.10} parent=1 // pred_fallthru
      _
    // Predicated region
    $region14: #{cmuim_forward.10} parent=1 // pred_check
      _
    $region15: #{cmuim_forward.10} parent=1 // pred_check_branch
      %20 = sbr.rel (0) target = $region17
    $region16: #{cmuim_forward.10} parent=1 // pred_region
      _
    $region17: #{cmuim_forward.10} parent=1 // pred_fallthru
      _
    // Predicated region
    $region18: #{cmuim_forward.10} parent=1 // pred_check
      _
    $region19: #{cmuim_forward.10} parent=1 // pred_check_branch
      %22 = sbr.rel (0) target = $region21
    $region20: #{cmuim_forward.10} parent=1 // pred_region
      _
    $region21: #{cmuim_forward.10} parent=1 // pred_fallthru
      _
    %v24 = vld [vmem:[%s0] sm:$0xff]
    %v25 = vld [vmem:[%s0 + $0x8] sm:$0xff]
    %v26 = vld [vmem:[%s0 + $0x10] sm:$0xff]
    %v27 = vld [vmem:[%s0 + $0x18] sm:$0xff]
    %v28 = vld [vmem:[%s0 + $0x20] sm:$0xff]
    %v29 = vld [vmem:[%s0 + $0x28] sm:$0xff]
    %v30 = vld [vmem:[%s1] sm:$0x1]
    %v31 = vld [vmem:[%s2] sm:$0x1]
    %vm32 = vcmask 261120
    %v33 = vsel %vm32, %v24, 0.0
    %34 = vadd.xlane.f32.xlu0 %v33
    %v35 = vpop.xlane.xlu0 %34
    %v36 = vsel %vm32, %v25, 0.0
    %37 = vadd.xlane.f32.xlu0 %v36
    %v38 = vpop.xlane.xlu0 %37
    %v39 = vsel %vm32, %v26, 0.0
    %40 = vadd.xlane.f32.xlu0 %v39
    %v41 = vpop.xlane.xlu0 %40
    %v42 = vsel %vm32, %v27, 0.0
    %43 = vadd.xlane.f32.xlu0 %v42
    %v44 = vpop.xlane.xlu0 %43
    %v45 = vsel %vm32, %v28, 0.0
    %46 = vadd.xlane.f32.xlu0 %v45
    %v47 = vpop.xlane.xlu0 %46
    %v48 = vsel %vm32, %v29, 0.0
    %49 = vadd.xlane.f32.xlu0 %v48
    %v50 = vpop.xlane.xlu0 %49
    %v51 = vrcp.pop 32.0
    %v52 = vmul.f32 %v35, %v51
    %v53 = vmul.f32 %v38, %v51
    %v54 = vmul.f32 %v41, %v51
    %v55 = vmul.f32 %v44, %v51
    %v56 = vmul.f32 %v47, %v51
    %v57 = vmul.f32 %v50, %v51
    %v58 = vsub.f32 %v24, %v52
    %v59 = vsub.f32 %v25, %v53
    %v60 = vsub.f32 %v26, %v54
    %v61 = vsub.f32 %v27, %v55
    %v62 = vsub.f32 %v28, %v56
    %v63 = vsub.f32 %v29, %v57
    %v64 = vmul.f32 %v58, %v58
    %v65 = vmul.f32 %v59, %v59
    %v66 = vmul.f32 %v60, %v60
    %v67 = vmul.f32 %v61, %v61
    %v68 = vmul.f32 %v62, %v62
    %v69 = vmul.f32 %v63, %v63
    %v70 = vsel %vm32, %v64, 0.0
    %71 = vadd.xlane.f32.xlu0 %v70
    %v72 = vpop.xlane.xlu0 %71
    %v73 = vsel %vm32, %v65, 0.0
    %74 = vadd.xlane.f32.xlu0 %v73
    %v75 = vpop.xlane.xlu0 %74
    %v76 = vsel %vm32, %v66, 0.0
    %77 = vadd.xlane.f32.xlu0 %v76
    %v78 = vpop.xlane.xlu0 %77
    %v79 = vsel %vm32, %v67, 0.0
    %80 = vadd.xlane.f32.xlu0 %v79
    %v81 = vpop.xlane.xlu0 %80
    %v82 = vsel %vm32, %v68, 0.0
    %83 = vadd.xlane.f32.xlu0 %v82
    %v84 = vpop.xlane.xlu0 %83
    %v85 = vsel %vm32, %v69, 0.0
    %86 = vadd.xlane.f32.xlu0 %v85
    %v87 = vpop.xlane.xlu0 %86
    %v88 = vmul.f32 %v72, %v51
    %v89 = vmul.f32 %v75, %v51
    %v90 = vmul.f32 %v78, %v51
    %v91 = vmul.f32 %v81, %v51
    %v92 = vmul.f32 %v84, %v51
    %v93 = vmul.f32 %v87, %v51
    %v94 = vadd.f32 %v88, 1e-05
    %v95 = vadd.f32 %v89, 1e-05
    %v96 = vadd.f32 %v90, 1e-05
    %v97 = vadd.f32 %v91, 1e-05
    %v98 = vadd.f32 %v92, 1e-05
    %v99 = vadd.f32 %v93, 1e-05
    %v100 = vrsqrt.pop %v94
    %v101 = vrsqrt.pop %v95
    %v102 = vrsqrt.pop %v96
    %v103 = vrsqrt.pop %v97
    %v104 = vrsqrt.pop %v98
    %v105 = vrsqrt.pop %v99
    %v106 = vmul.f32 %v58, %v100
    %v107 = vmul.f32 %v59, %v101
    %v108 = vmul.f32 %v60, %v102
    %v109 = vmul.f32 %v61, %v103
    %v110 = vmul.f32 %v62, %v104
    %v111 = vmul.f32 %v63, %v105
    %v113 = vlaneseq
    %v114 = vshrl.u32 %v113, 7
    %v115 = vsub.s32 0, %v114
    %v116 = vrot.slane %v30, %v115
    %v118 = vmul.f32 %v106, %v116
    %v119 = vmul.f32 %v107, %v116
    %v120 = vmul.f32 %v108, %v116
    %v121 = vmul.f32 %v109, %v116
    %v122 = vmul.f32 %v110, %v116
    %v123 = vmul.f32 %v111, %v116
    %v125 = vlaneseq
    %v126 = vshrl.u32 %v125, 7
    %v127 = vsub.s32 0, %v126
    %v128 = vrot.slane %v31, %v127
    %v130 = vadd.f32 %v118, %v128
    %v131 = vadd.f32 %v119, %v128
    %v132 = vadd.f32 %v120, %v128
    %v133 = vadd.f32 %v121, %v128
    %v134 = vadd.f32 %v122, %v128
    %v135 = vadd.f32 %v123, %v128
    %136 = vst.msk [vmem:[#allocation2] sm:$0xff] %vm32, %v130
    %137 = vst.msk [vmem:[#allocation2 + $0x8] sm:$0xff] %vm32, %v131
    %138 = vst.msk [vmem:[#allocation2 + $0x10] sm:$0xff] %vm32, %v132
    %139 = vst.msk [vmem:[#allocation2 + $0x18] sm:$0xff] %vm32, %v133
    %140 = vst.msk [vmem:[#allocation2 + $0x20] sm:$0xff] %vm32, %v134
    %141 = vst.msk [vmem:[#allocation2 + $0x28] sm:$0xff] %vm32, %v135
    %v142 = vpack.c.bf16 %v131, %v130
    %v143 = vpack.c.bf16 %v133, %v132
    %v144 = vpack.c.bf16 %v135, %v134
    %v145 = vld [vmem:[%s3] sm:$0xf]
    %v146 = vld [vmem:[%s3 + $0x4] sm:$0xf]
    %v147 = vld [vmem:[%s3 + $0x8] sm:$0xf]
    %v148 = vld [vmem:[%s3 + $0xc] sm:$0xf]
    %v149 = vld [vmem:[%s4] sm:$0x1]
    %v151 = vlaneseq
    %v152 = vshrl.u32 %v151, 7
    %v153 = vsub.s32 0, %v152
    %v154 = vrot.slane %v149, %v153
    %v160 = vunpack.c.l.b16 %v145
    %v161 = vunpack.c.l.b16 %v146
    %v162 = vunpack.c.l.b16 %v147
    %v163 = vunpack.c.l.b16 %v148
    %v164 = vpack.c.b16 %v161, %v160
    %v165 = vpack.c.b16 %v163, %v162
    %v169 = vsel %vm32, %v142, 0
    %v172 = vsel %vm32, %v143, 0
    %v175 = vsel %vm32, %v144, 0
    %177 = vmatprep.subr.bf16.mxu0 0
    %178 = vmatpush1.bf16.msra.mxu0 %v164
    %179 = vmatprep.subr.bf16.mxu0 0
    %180 = vmatpush1.bf16.msra.mxu0 %v165
    %181 = vmatprep.subr.bf16.mxu0 0
    %182 = vmatpush1.bf16.msra.mxu0 0
    %183 = vmatprep.subr.bf16.mxu0 0
    %184 = vmatpush1.bf16.msra.mxu0 0
    %185 = vmatprep.subr.bf16.mxu0 0
    %186 = vmatpush1.bf16.msra.mxu0 0
    %187 = vmatprep.subr.bf16.mxu0 0
    %188 = vmatpush1.bf16.msra.mxu0 0
    %189 = vmatprep.subr.bf16.mxu0 0
    %190 = vmatpush1.bf16.msra.mxu0 0
    %191 = vmatprep.subr.bf16.mxu0 0
    %192 = vmatpush1.bf16.msra.mxu0 0
    %193 = vmatprep.subr.bf16.mxu0 0
    %194 = vmatpush1.bf16.msra.mxu0 0
    %195 = vmatprep.subr.bf16.mxu0 0
    %196 = vmatpush1.bf16.msra.mxu0 0
    %197 = vmatprep.subr.bf16.mxu0 0
    %198 = vmatpush1.bf16.msra.mxu0 0
    %199 = vmatprep.subr.bf16.mxu0 0
    %200 = vmatpush1.bf16.msra.mxu0 0
    %201 = vmatprep.subr.bf16.mxu0 0
    %202 = vmatpush1.bf16.msra.mxu0 0
    %203 = vmatprep.subr.bf16.mxu0 0
    %204 = vmatpush1.bf16.msra.mxu0 0
    %205 = vmatprep.subr.bf16.mxu0 0
    %206 = vmatpush1.bf16.msra.mxu0 0
    %207 = vmatprep.subr.bf16.mxu0 0
    %208 = vmatpush1.bf16.msra.mxu0 0
    %209 = vmatprep.mubr.bf16.mxu0 0
    %210 = vmatmul.mubr.bf16.gmra.mrb[0].mxu0 %v169
    %v211 = vpop.f32.mrb[0].mxu0
    %v212 = vadd.f32 %v154, %v211
    %v213 = vpop.f32.mrb[0].mxu0
    %v214 = vpop.f32.mrb[0].mxu0
    %v215 = vadd.f32 %v154, %v214
    %v216 = vpop.f32.mrb[0].mxu0
    %217 = vmatprep.mubr.bf16.mxu0 0
    %218 = vmatmul.mubr.bf16.gmra.mrb[0].mxu0 %v172
    %v219 = vpop.f32.mrb[0].mxu0
    %v220 = vadd.f32 %v154, %v219
    %v221 = vpop.f32.mrb[0].mxu0
    %v222 = vpop.f32.mrb[0].mxu0
    %v223 = vadd.f32 %v154, %v222
    %v224 = vpop.f32.mrb[0].mxu0
    %225 = vmatprep.mubr.bf16.mxu0 0
    %226 = vmatmul.mubr.bf16.gmra.mrb[0].mxu0 %v175
    %v227 = vpop.f32.mrb[0].mxu0
    %v228 = vadd.f32 %v154, %v227
    %v229 = vpop.f32.mrb[0].mxu0
    %v230 = vpop.f32.mrb[0].mxu0
    %v231 = vadd.f32 %v154, %v230
    %v232 = vpop.f32.mrb[0].mxu0
    %233 = vdwg.mxu0
    %vm234 = vcmask 392192
    %235 = vst.msk [vmem:[%s6] sm:$0xff] %vm234, %v212
    %236 = vst.msk [vmem:[%s6 + $0x8] sm:$0xff] %vm234, %v215
    %237 = vst.msk [vmem:[%s6 + $0x10] sm:$0xff] %vm234, %v220
    %238 = vst.msk [vmem:[%s6 + $0x18] sm:$0xff] %vm234, %v223
    %239 = vst.msk [vmem:[%s6 + $0x20] sm:$0xff] %vm234, %v228
    %240 = vst.msk [vmem:[%s6 + $0x28] sm:$0xff] %vm234, %v231
    // Predicated region
    $region22: #{cmuim_forward.10} parent=1 // pred_check
      _
    $region23: #{cmuim_forward.10} parent=1 // pred_check_branch
      %242 = sbr.rel (0) target = $region25
    $region24: #{cmuim_forward.10} parent=1 // pred_region
      %s244 = ssub.s32 768, 768
      %245 = vsyncadd [#allocation3], %s244
      %s246 = sshll.u32 [#allocation2], 4
      %s247 = int_to_ptr.vmem [resolvable:$true] %s246
      %252 = dma.vmem_to_hbm [thread:$0]  %s247, 768, %s5, [#allocation3], 128, 128, 8
    $region25: #{cmuim_forward.10} parent=1 // pred_fallthru
      _
    // Predicated region
    $region26: #{cmuim_forward.10} parent=1 // pred_check
      _
    $region27: #{cmuim_forward.10} parent=1 // pred_check_branch
      %254 = sbr.rel (0) target = $region29
    $region28: #{cmuim_forward.10} parent=1 // pred_region
      _
    $region29: #{cmuim_forward.10} parent=1 // pred_fallthru
      _
    // Predicated region
    $region30: #{cmuim_forward.10} parent=1 // pred_check
      _
    $region31: #{cmuim_forward.10} parent=1 // pred_check_branch
      %256 = sbr.rel (0) target = $region33
    $region32: #{cmuim_forward.10} parent=1 // pred_region
      %257 = dma.done [#allocation3], 768
    $region33: #{cmuim_forward.10} parent=1 // pred_fallthru
      _
    // Predicated region
    $region34: #{cmuim_forward.10} parent=1 // pred_check
      _
    $region35: #{cmuim_forward.10} parent=1 // pred_check_branch
      %259 = sbr.rel (0) target = $region37
    $region36: #{cmuim_forward.10} parent=1 // pred_region
      _
    $region37: #{cmuim_forward.10} parent=1 // pred_fallthru
      _
    %260 = vsyncpa [#allocation3], 1

// kernel: cmuim_forward.11
$region0: #{cmuim_forward.11}
  #allocation0 [shape = 'u32[]', space=smem, size = 0x4, offset = 0x4, fixed_abs, tag = 'smem constant byte address 0x4 - core index']
  #allocation1 [shape = 'u32[144,128]{1,0:T(1,128)}', space=vmem, size = 0x12000, scoped, tag = 'internal scratch']
  %s0 = inlined_call_operand.vmem [shape: f32[2,16,48], index: 0, kind: input, shape index: {}]
  %s1 = inlined_call_operand.vmem [shape: f32[2,16,48], index: 1, kind: input, shape index: {}]
  %s2 = inlined_call_operand.vmem [shape: f32[2,16], index: 2, kind: input, shape index: {}]
  %s3 = inlined_call_operand.hbm [shape: f32[1,1], index: 3, kind: output, shape index: {}]
  %s4 = sld [smem:[#allocation0]]
  $region22: #{cmuim_forward.11} parent=0
    _
  %s6 = ssub.s32 1, %s4
  %s7 = scalar_select 0, %s6, %s4
  $region1: #{cmuim_forward.11} parent=0
    #allocation2 [shape = 'u8[512]{0}', space=vmem, size = 0x400, scoped, tag = 'output window, operand 0, single buffered']
    #allocation3 [shape = 's32[1]{0}', space=sflag, size = 0x4, scoped, tag = 'scoped memory for cmuim_forward.11']
    %8 = vsyncpa [#allocation3], 0
    // Predicated region
    $region2: #{cmuim_forward.11} parent=1 // pred_check
      _
    $region3: #{cmuim_forward.11} parent=1 // pred_check_branch
      %10 = sbr.rel (0) target = $region5
    $region4: #{cmuim_forward.11} parent=1 // pred_region
      _
    $region5: #{cmuim_forward.11} parent=1 // pred_fallthru
      _
    // Predicated region
    $region6: #{cmuim_forward.11} parent=1 // pred_check
      _
    $region7: #{cmuim_forward.11} parent=1 // pred_check_branch
      %12 = sbr.rel (0) target = $region9
    $region8: #{cmuim_forward.11} parent=1 // pred_region
      _
    $region9: #{cmuim_forward.11} parent=1 // pred_fallthru
      _
    // Predicated region
    $region10: #{cmuim_forward.11} parent=1 // pred_check
      _
    $region11: #{cmuim_forward.11} parent=1 // pred_check_branch
      %14 = sbr.rel (0) target = $region13
    $region12: #{cmuim_forward.11} parent=1 // pred_region
      _
    $region13: #{cmuim_forward.11} parent=1 // pred_fallthru
      _
    %v15 = vld [vmem:[%s0] sm:$0xff]
    %v16 = vld [vmem:[%s0 + $0x8] sm:$0xff]
    %v17 = vld [vmem:[%s0 + $0x10] sm:$0xff]
    %v18 = vld [vmem:[%s0 + $0x18] sm:$0xff]
    %v19 = vld [vmem:[%s1] sm:$0xff]
    %v20 = vld [vmem:[%s1 + $0x8] sm:$0xff]
    %v21 = vld [vmem:[%s1 + $0x10] sm:$0xff]
    %v22 = vld [vmem:[%s1 + $0x18] sm:$0xff]
    %v23 = vsub.f32 %v15, %v19
    %v24 = vsub.f32 %v16, %v20
    %v25 = vsub.f32 %v17, %v21
    %v26 = vsub.f32 %v18, %v22
    %v27 = vmul.f32 %v23, %v23
    %v28 = vmul.f32 %v24, %v24
    %v29 = vmul.f32 %v25, %v25
    %v30 = vmul.f32 %v26, %v26
    %vm31 = vcmask 392192
    %v32 = vsel %vm31, %v27, 0.0
    %33 = vadd.xlane.f32.xlu0 %v32
    %v34 = vpop.xlane.xlu0 %33
    %v35 = vsel %vm31, %v28, 0.0
    %36 = vadd.xlane.f32.xlu0 %v35
    %v37 = vpop.xlane.xlu0 %36
    %v38 = vsel %vm31, %v29, 0.0
    %39 = vadd.xlane.f32.xlu0 %v38
    %v40 = vpop.xlane.xlu0 %39
    %v41 = vsel %vm31, %v30, 0.0
    %42 = vadd.xlane.f32.xlu0 %v41
    %v43 = vpop.xlane.xlu0 %42
    %v44 = vrcp.pop 48.0
    %v45 = vmul.f32 %v34, %v44
    %v46 = vmul.f32 %v37, %v44
    %v47 = vmul.f32 %v40, %v44
    %v48 = vmul.f32 %v43, %v44
    %v49 = vld [vmem:[%s2] sm:$0x3]
    %v50 = vsub.f32 1.0, %v49
    %v52 = vlaneseq
    %v53 = vshrl.u32 %v52, 7
    %v54 = vsub.s32 0, %v53
    %v55 = vrot.slane %v50, %v54
    %57 = vbcast.lane.b32.xlu0 %v55, 256
    %v58 = vpop.permute.xlu0 %57
    %s60 = sor.u32 256, 8
    %61 = vbcast.lane.b32.xlu0 %v55, %s60
    %v62 = vpop.permute.xlu0 %61
    %v63 = vlaneseq
    %v64 = vshrl.u32 %v63, 7
    %v65 = vsub.s32 1, %v64
    %v66 = vrot.slane %v50, %v65
    %68 = vbcast.lane.b32.xlu0 %v66, 256
    %v69 = vpop.permute.xlu0 %68
    %s71 = sor.u32 256, 8
    %72 = vbcast.lane.b32.xlu0 %v66, %s71
    %v73 = vpop.permute.xlu0 %72
    %v78 = vmul.f32 %v45, %v58
    %v79 = vmul.f32 %v46, %v62
    %v80 = vmul.f32 %v47, %v69
    %v81 = vmul.f32 %v48, %v73
    %86 = vset.pattern.permute.xlu0 0
    %87 = vperm.xlu0 %86, %v78
    %v88 = vpop.permute.xlu0 %87
    %89 = vset.pattern.permute.xlu0 0
    %90 = vperm.xlu0 %89, %v79
    %v91 = vpop.permute.xlu0 %90
    %92 = vset.pattern.permute.xlu0 0
    %93 = vperm.xlu0 %92, %v80
    %v94 = vpop.permute.xlu0 %93
    %95 = vset.pattern.permute.xlu0 0
    %96 = vperm.xlu0 %95, %v81
    %v97 = vpop.permute.xlu0 %96
    %v98 = vlaneseq
    %v99 = vand.u32 %v98, 127
    %v100 = vlaneseq
    %v101 = vshrl.u32 %v100, 7
    %v102 = vsub.s32 %v99, %v101
    %v103 = vrot.slane %v88, %v102
    %v104 = vadd.s32 %v99, 4294967288
    %v105 = vlaneseq
    %v106 = vshrl.u32 %v105, 7
    %v107 = vsub.s32 %v104, %v106
    %v108 = vrot.slane %v91, %v107
    %vm109 = vcmask 130112
    %v110 = vsel %vm109, %v108, %v103
    %v111 = vlaneseq
    %v112 = vshrl.u32 %v111, 7
    %v113 = vsub.s32 %v99, %v112
    %v114 = vrot.slane %v94, %v113
    %v115 = vlaneseq
    %v116 = vshrl.u32 %v115, 7
    %v117 = vsub.s32 %v104, %v116
    %v118 = vrot.slane %v97, %v117
    %v119 = vsel %vm109, %v118, %v114
    %vm120 = vcmask 1041409
    %v121 = vsel %vm120, %v119, %v110
    %vm123 = vcmask 123904
    %v124 = vsel %vm123, %v121, 0.0
    %125 = vadd.xlane.f32.xlu0 %v124
    %v126 = vpop.xlane.xlu0 %125
    %vm127 = vcmask 1041408
    %v128 = vsel %vm127, %v126, 0.0
    %v129 = vrot.slane %v128, 4
    %v130 = vadd.f32 %v128, %v129
    %v131 = vrot.slane %v130, 2
    %v132 = vadd.f32 %v130, %v131
    %v133 = vrot.slane %v132, 1
    %v134 = vadd.f32 %v132, %v133
    %v135 = vsel %vm123, %v50, 0.0
    %136 = vadd.xlane.f32.xlu0 %v135
    %v137 = vpop.xlane.xlu0 %136
    %v138 = vsel %vm127, %v137, 0.0
    %v139 = vrot.slane %v138, 4
    %v140 = vadd.f32 %v138, %v139
    %v141 = vrot.slane %v140, 2
    %v142 = vadd.f32 %v140, %v141
    %v143 = vrot.slane %v142, 1
    %v144 = vadd.f32 %v142, %v143
    %v145 = vmax.f32 %v144, 1.0
    %v146 = vrcp.pop %v145
    %v147 = vmul.f32 %v134, %v146
    %vm148 = vcmask 0
    %149 = vst.msk [vmem:[#allocation2] sm:$0x1] %vm148, %v147
    // Predicated region
    $region14: #{cmuim_forward.11} parent=1 // pred_check
      _
    $region15: #{cmuim_forward.11} parent=1 // pred_check_branch
      %151 = sbr.rel (0) target = $region17
    $region16: #{cmuim_forward.11} parent=1 // pred_region
      %s153 = ssub.s32 16, 16
      %154 = vsyncadd [#allocation3], %s153
      %s156 = sshll.u32 [#allocation2], 4
      %s157 = int_to_ptr.vmem [resolvable:$true] %s156
      %159 = dma.vmem_to_hbm [thread:$0]  %s157, 16, %s3, [#allocation3]
    $region17: #{cmuim_forward.11} parent=1 // pred_fallthru
      _
    // Predicated region
    $region18: #{cmuim_forward.11} parent=1 // pred_check
      _
    $region19: #{cmuim_forward.11} parent=1 // pred_check_branch
      %161 = sbr.rel (0) target = $region21
    $region20: #{cmuim_forward.11} parent=1 // pred_region
      %162 = dma.done [#allocation3], 16
    $region21: #{cmuim_forward.11} parent=1 // pred_fallthru
      _
    %163 = vsyncpa [#allocation3], 1

// kernel: cmuim_forward.7
$region0: #{cmuim_forward.7}
  #allocation0 [shape = 'u32[]', space=smem, size = 0x4, offset = 0x4, fixed_abs, tag = 'smem constant byte address 0x4 - core index']
  #allocation1 [shape = 'u32[144,128]{1,0:T(1,128)}', space=vmem, size = 0x12000, scoped, tag = 'internal scratch']
  #allocation2 [shape = 'f32[16,32]{1,0:T(8,128)}', space=vmem, size = 0x2000, scoped, tag = 'scratch operand']
  %s0 = inlined_call_operand.vmem [shape: f32[16,32], index: 0, kind: input, shape index: {}]
  %s1 = inlined_call_operand.vmem [shape: f32[2,1,32], index: 1, kind: input, shape index: {}]
  %s2 = inlined_call_operand.vmem [shape: f32[2,1,32], index: 2, kind: input, shape index: {}]
  %s3 = inlined_call_operand.vmem [shape: bf16[2,32,96], index: 3, kind: input, shape index: {}]
  %s4 = inlined_call_operand.vmem [shape: f32[2,1,96], index: 4, kind: input, shape index: {}]
  %s5 = inlined_call_operand.vmem [shape: bf16[2,32,32], index: 5, kind: input, shape index: {}]
  %s6 = inlined_call_operand.vmem [shape: f32[2,1,32], index: 6, kind: input, shape index: {}]
  %s7 = inlined_call_operand.vmem [shape: f32[2,1,32], index: 7, kind: input, shape index: {}]
  %s8 = inlined_call_operand.vmem [shape: f32[2,1,32], index: 8, kind: input, shape index: {}]
  %s9 = inlined_call_operand.vmem [shape: bf16[2,32,128], index: 9, kind: input, shape index: {}]
  %s10 = inlined_call_operand.vmem [shape: f32[2,1,128], index: 10, kind: input, shape index: {}]
  %s11 = inlined_call_operand.vmem [shape: bf16[2,128,32], index: 11, kind: input, shape index: {}]
  %s12 = inlined_call_operand.vmem [shape: f32[2,1,32], index: 12, kind: input, shape index: {}]
  %s13 = inlined_call_operand.vmem [shape: f32[16,32], index: 13, kind: output, shape index: {}]
  %s14 = sld [smem:[#allocation0]]
  $region93: #{cmuim_forward.7} parent=0
    _
  %s16 = ssub.s32 1, %s14
  %s17 = scalar_select 0, %s16, %s14
  loop: start=0, step=1, limit=4
  $region2: #{cmuim_forward.7} parent=0 // loop_pre_header
    _
  $region3: #{cmuim_forward.7} parent=0 // loop_header
    %s19 = sphi 0, %s23
    %p20 = scmp.ge.s32.totalorder %s19, 4
    %s27 = sphi 0, %s27
    %s29 = sphi 0, %s27
    %s30 = sphi 0, %s29
    %s44 = sphi 0, %s30
    %s50 = sphi 0, %s52
    %s53 = sphi 0, %s50
    %s54 = sphi 0, %s53
    %s70 = sphi 0, %s54
    %s76 = sphi 0, %s78
    %s79 = sphi 0, %s76
    %s80 = sphi 0, %s79
    %s96 = sphi 0, %s80
    %s102 = sphi 0, %s104
    %s105 = sphi 0, %s102
    %s106 = sphi 0, %s105
    %s122 = sphi 0, %s106
    %s128 = sphi 0, %s130
    %s131 = sphi 0, %s128
    %s132 = sphi 0, %s131
    %s148 = sphi 0, %s132
    %s154 = sphi 0, %s156
    %s157 = sphi 0, %s154
    %s158 = sphi 0, %s157
    %s174 = sphi 0, %s158
    %s180 = sphi 0, %s182
    %s183 = sphi 0, %s180
    %s184 = sphi 0, %s183
    %s200 = sphi 0, %s184
    %s206 = sphi 0, %s208
    %s209 = sphi 0, %s206
    %s210 = sphi 0, %s209
    %s226 = sphi 0, %s210
    %s232 = sphi 0, %s234
    %s235 = sphi 0, %s232
    %s236 = sphi 0, %s235
    %s252 = sphi 0, %s236
    %s258 = sphi 0, %s260
    %s261 = sphi 0, %s258
    %s262 = sphi 0, %s261
    %s278 = sphi 0, %s262
    %s284 = sphi 0, %s286
    %s287 = sphi 0, %s284
    %s288 = sphi 0, %s287
    %s304 = sphi 0, %s288
    %s310 = sphi 0, %s312
    %s313 = sphi 0, %s310
    %s314 = sphi 0, %s313
    %s330 = sphi 0, %s314
    %s336 = sphi 0, %s338
    %s339 = sphi 0, %s336
    %s340 = sphi 0, %s339
    %s356 = sphi 0, %s340
    %s360 = sphi 0, %s360
    %s362 = sphi 0, %s360
    %s363 = sphi 0, %s362
    %s377 = sphi 0, %s363
  $region4: #{cmuim_forward.7} parent=0 // loop_header_branch
    %22 = sbr.rel (%p20) target = $region8
  $region5: #{cmuim_forward.7} parent=0 // loop_body
    %s24 = ssub.s32 %s19, 1
    %s25 = ssub.s32 %s19, 2
    %s26 = sadd.s32 %s19, 1
    %s28 = sadd.s32 %s27, 1
    %p31 = scmp.eq.s32.totalorder %s19, 1
    %p32 = scmp.ne.s32.totalorder %s27, %s29
    %p33 = scmp.eq.s32.totalorder %s19, 0
    %p34 = por %p32, %p33
    %p35 = scmp.ne.s32.totalorder %s27, %s29
    %p36 = scmp.eq.s32.totalorder %s24, 1
    %p37 = por %p35, %p36
    %p38 = scmp.ne.s32.totalorder %s29, %s30
    %p39 = scmp.eq.s32.totalorder %s24, 0
    %p40 = por %p38, %p39
    %p41 = scmp.ne.s32.totalorder %s29, %s30
    %p42 = scmp.eq.s32.totalorder %s25, 1
    %p43 = por %p41, %p42
    %p45 = scmp.ne.s32.totalorder %s30, %s44
    %p46 = scmp.eq.s32.totalorder %s25, 0
    %p47 = por %p45, %p46
    %s48 = ssub.s32 %s19, %s26
    %p49 = scmp.eq.s32.totalorder %s48, 0
    %s51 = sadd.s32 %s50, 1
    %s52 = scalar_select %p49, %s50, %s51
    %p55 = pneg %p49
    %p56 = scmp.eq.s32.totalorder %s19, 1
    %p57 = por %p55, %p56
    %p58 = scmp.ne.s32.totalorder %s50, %s53
    %p59 = scmp.eq.s32.totalorder %s19, 0
    %p60 = por %p58, %p59
    %p61 = scmp.ne.s32.totalorder %s50, %s53
    %p62 = scmp.eq.s32.totalorder %s24, 1
    %p63 = por %p61, %p62
    %p64 = scmp.ne.s32.totalorder %s53, %s54
    %p65 = scmp.eq.s32.totalorder %s24, 0
    %p66 = por %p64, %p65
    %p67 = scmp.ne.s32.totalorder %s53, %s54
    %p68 = scmp.eq.s32.totalorder %s25, 1
    %p69 = por %p67, %p68
    %p71 = scmp.ne.s32.totalorder %s54, %s70
    %p72 = scmp.eq.s32.totalorder %s25, 0
    %p73 = por %p71, %p72
    %s74 = ssub.s32 %s19, %s26
    %p75 = scmp.eq.s32.totalorder %s74, 0
    %s77 = sadd.s32 %s76, 1
    %s78 = scalar_select %p75, %s76, %s77
    %p81 = pneg %p75
    %p82 = scmp.eq.s32.totalorder %s19, 1
    %p83 = por %p81, %p82
    %p84 = scmp.ne.s32.totalorder %s76, %s79
    %p85 = scmp.eq.s32.totalorder %s19, 0
    %p86 = por %p84, %p85
    %p87 = scmp.ne.s32.totalorder %s76, %s79
    %p88 = scmp.eq.s32.totalorder %s24, 1
    %p89 = por %p87, %p88
    %p90 = scmp.ne.s32.totalorder %s79, %s80
    %p91 = scmp.eq.s32.totalorder %s24, 0
    %p92 = por %p90, %p91
    %p93 = scmp.ne.s32.totalorder %s79, %s80
    %p94 = scmp.eq.s32.totalorder %s25, 1
    %p95 = por %p93, %p94
    %p97 = scmp.ne.s32.totalorder %s80, %s96
    %p98 = scmp.eq.s32.totalorder %s25, 0
    %p99 = por %p97, %p98
    %s100 = ssub.s32 %s19, %s26
    %p101 = scmp.eq.s32.totalorder %s100, 0
    %s103 = sadd.s32 %s102, 1
    %s104 = scalar_select %p101, %s102, %s103
    %p107 = pneg %p101
    %p108 = scmp.eq.s32.totalorder %s19, 1
    %p109 = por %p107, %p108
    %p110 = scmp.ne.s32.totalorder %s102, %s105
    %p111 = scmp.eq.s32.totalorder %s19, 0
    %p112 = por %p110, %p111
    %p113 = scmp.ne.s32.totalorder %s102, %s105
    %p114 = scmp.eq.s32.totalorder %s24, 1
    %p115 = por %p113, %p114
    %p116 = scmp.ne.s32.totalorder %s105, %s106
    %p117 = scmp.eq.s32.totalorder %s24, 0
    %p118 = por %p116, %p117
    %p119 = scmp.ne.s32.totalorder %s105, %s106
    %p120 = scmp.eq.s32.totalorder %s25, 1
    %p121 = por %p119, %p120
    %p123 = scmp.ne.s32.totalorder %s106, %s122
    %p124 = scmp.eq.s32.totalorder %s25, 0
    %p125 = por %p123, %p124
    %s126 = ssub.s32 %s19, %s26
    %p127 = scmp.eq.s32.totalorder %s126, 0
    %s129 = sadd.s32 %s128, 1
    %s130 = scalar_select %p127, %s128, %s129
    %p133 = pneg %p127
    %p134 = scmp.eq.s32.totalorder %s19, 1
    %p135 = por %p133, %p134
    %p136 = scmp.ne.s32.totalorder %s128, %s131
    %p137 = scmp.eq.s32.totalorder %s19, 0
    %p138 = por %p136, %p137
    %p139 = scmp.ne.s32.totalorder %s128, %s131
    %p140 = scmp.eq.s32.totalorder %s24, 1
    %p141 = por %p139, %p140
    %p142 = scmp.ne.s32.totalorder %s131, %s132
    %p143 = scmp.eq.s32.totalorder %s24, 0
    %p144 = por %p142, %p143
    %p145 = scmp.ne.s32.totalorder %s131, %s132
    %p146 = scmp.eq.s32.totalorder %s25, 1
    %p147 = por %p145, %p146
    %p149 = scmp.ne.s32.totalorder %s132, %s148
    %p150 = scmp.eq.s32.totalorder %s25, 0
    %p151 = por %p149, %p150
    %s152 = ssub.s32 %s19, %s26
    %p153 = scmp.eq.s32.totalorder %s152, 0
    %s155 = sadd.s32 %s154, 1
    %s156 = scalar_select %p153, %s154, %s155
    %p159 = pneg %p153
    %p160 = scmp.eq.s32.totalorder %s19, 1
    %p161 = por %p159, %p160
    %p162 = scmp.ne.s32.totalorder %s154, %s157
    %p163 = scmp.eq.s32.totalorder %s19, 0
    %p164 = por %p162, %p163
    %p165 = scmp.ne.s32.totalorder %s154, %s157
    %p166 = scmp.eq.s32.totalorder %s24, 1
    %p167 = por %p165, %p166
    %p168 = scmp.ne.s32.totalorder %s157, %s158
    %p169 = scmp.eq.s32.totalorder %s24, 0
    %p170 = por %p168, %p169
    %p171 = scmp.ne.s32.totalorder %s157, %s158
    %p172 = scmp.eq.s32.totalorder %s25, 1
    %p173 = por %p171, %p172
    %p175 = scmp.ne.s32.totalorder %s158, %s174
    %p176 = scmp.eq.s32.totalorder %s25, 0
    %p177 = por %p175, %p176
    %s178 = ssub.s32 %s19, %s26
    %p179 = scmp.eq.s32.totalorder %s178, 0
    %s181 = sadd.s32 %s180, 1
    %s182 = scalar_select %p179, %s180, %s181
    %p185 = pneg %p179
    %p186 = scmp.eq.s32.totalorder %s19, 1
    %p187 = por %p185, %p186
    %p188 = scmp.ne.s32.totalorder %s180, %s183
    %p189 = scmp.eq.s32.totalorder %s19, 0
    %p190 = por %p188, %p189
    %p191 = scmp.ne.s32.totalorder %s180, %s183
    %p192 = scmp.eq.s32.totalorder %s24, 1
    %p193 = por %p191, %p192
    %p194 = scmp.ne.s32.totalorder %s183, %s184
    %p195 = scmp.eq.s32.totalorder %s24, 0
    %p196 = por %p194, %p195
    %p197 = scmp.ne.s32.totalorder %s183, %s184
    %p198 = scmp.eq.s32.totalorder %s25, 1
    %p199 = por %p197, %p198
    %p201 = scmp.ne.s32.totalorder %s184, %s200
    %p202 = scmp.eq.s32.totalorder %s25, 0
    %p203 = por %p201, %p202
    %s204 = ssub.s32 %s19, %s26
    %p205 = scmp.eq.s32.totalorder %s204, 0
    %s207 = sadd.s32 %s206, 1
    %s208 = scalar_select %p205, %s206, %s207
    %p211 = pneg %p205
    %p212 = scmp.eq.s32.totalorder %s19, 1
    %p213 = por %p211, %p212
    %p214 = scmp.ne.s32.totalorder %s206, %s209
    %p215 = scmp.eq.s32.totalorder %s19, 0
    %p216 = por %p214, %p215
    %p217 = scmp.ne.s32.totalorder %s206, %s209
    %p218 = scmp.eq.s32.totalorder %s24, 1
    %p219 = por %p217, %p218
    %p220 = scmp.ne.s32.totalorder %s209, %s210
    %p221 = scmp.eq.s32.totalorder %s24, 0
    %p222 = por %p220, %p221
    %p223 = scmp.ne.s32.totalorder %s209, %s210
    %p224 = scmp.eq.s32.totalorder %s25, 1
    %p225 = por %p223, %p224
    %p227 = scmp.ne.s32.totalorder %s210, %s226
    %p228 = scmp.eq.s32.totalorder %s25, 0
    %p229 = por %p227, %p228
    %s230 = ssub.s32 %s19, %s26
    %p231 = scmp.eq.s32.totalorder %s230, 0
    %s233 = sadd.s32 %s232, 1
    %s234 = scalar_select %p231, %s232, %s233
    %p237 = pneg %p231
    %p238 = scmp.eq.s32.totalorder %s19, 1
    %p239 = por %p237, %p238
    %p240 = scmp.ne.s32.totalorder %s232, %s235
    %p241 = scmp.eq.s32.totalorder %s19, 0
    %p242 = por %p240, %p241
    %p243 = scmp.ne.s32.totalorder %s232, %s235
    %p244 = scmp.eq.s32.totalorder %s24, 1
    %p245 = por %p243, %p244
    %p246 = scmp.ne.s32.totalorder %s235, %s236
    %p247 = scmp.eq.s32.totalorder %s24, 0
    %p248 = por %p246, %p247
    %p249 = scmp.ne.s32.totalorder %s235, %s236
    %p250 = scmp.eq.s32.totalorder %s25, 1
    %p251 = por %p249, %p250
    %p253 = scmp.ne.s32.totalorder %s236, %s252
    %p254 = scmp.eq.s32.totalorder %s25, 0
    %p255 = por %p253, %p254
    %s256 = ssub.s32 %s19, %s26
    %p257 = scmp.eq.s32.totalorder %s256, 0
    %s259 = sadd.s32 %s258, 1
    %s260 = scalar_select %p257, %s258, %s259
    %p263 = pneg %p257
    %p264 = scmp.eq.s32.totalorder %s19, 1
    %p265 = por %p263, %p264
    %p266 = scmp.ne.s32.totalorder %s258, %s261
    %p267 = scmp.eq.s32.totalorder %s19, 0
    %p268 = por %p266, %p267
    %p269 = scmp.ne.s32.totalorder %s258, %s261
    %p270 = scmp.eq.s32.totalorder %s24, 1
    %p271 = por %p269, %p270
    %p272 = scmp.ne.s32.totalorder %s261, %s262
    %p273 = scmp.eq.s32.totalorder %s24, 0
    %p274 = por %p272, %p273
    %p275 = scmp.ne.s32.totalorder %s261, %s262
    %p276 = scmp.eq.s32.totalorder %s25, 1
    %p277 = por %p275, %p276
    %p279 = scmp.ne.s32.totalorder %s262, %s278
    %p280 = scmp.eq.s32.totalorder %s25, 0
    %p281 = por %p279, %p280
    %s282 = ssub.s32 %s19, %s26
    %p283 = scmp.eq.s32.totalorder %s282, 0
    %s285 = sadd.s32 %s284, 1
    %s286 = scalar_select %p283, %s284, %s285
    %p289 = pneg %p283
    %p290 = scmp.eq.s32.totalorder %s19, 1
    %p291 = por %p289, %p290
    %p292 = scmp.ne.s32.totalorder %s284, %s287
    %p293 = scmp.eq.s32.totalorder %s19, 0
    %p294 = por %p292, %p293
    %p295 = scmp.ne.s32.totalorder %s284, %s287
    %p296 = scmp.eq.s32.totalorder %s24, 1
    %p297 = por %p295, %p296
    %p298 = scmp.ne.s32.totalorder %s287, %s288
    %p299 = scmp.eq.s32.totalorder %s24, 0
    %p300 = por %p298, %p299
    %p301 = scmp.ne.s32.totalorder %s287, %s288
    %p302 = scmp.eq.s32.totalorder %s25, 1
    %p303 = por %p301, %p302
    %p305 = scmp.ne.s32.totalorder %s288, %s304
    %p306 = scmp.eq.s32.totalorder %s25, 0
    %p307 = por %p305, %p306
    %s308 = ssub.s32 %s19, %s26
    %p309 = scmp.eq.s32.totalorder %s308, 0
    %s311 = sadd.s32 %s310, 1
    %s312 = scalar_select %p309, %s310, %s311
    %p315 = pneg %p309
    %p316 = scmp.eq.s32.totalorder %s19, 1
    %p317 = por %p315, %p316
    %p318 = scmp.ne.s32.totalorder %s310, %s313
    %p319 = scmp.eq.s32.totalorder %s19, 0
    %p320 = por %p318, %p319
    %p321 = scmp.ne.s32.totalorder %s310, %s313
    %p322 = scmp.eq.s32.totalorder %s24, 1
    %p323 = por %p321, %p322
    %p324 = scmp.ne.s32.totalorder %s313, %s314
    %p325 = scmp.eq.s32.totalorder %s24, 0
    %p326 = por %p324, %p325
    %p327 = scmp.ne.s32.totalorder %s313, %s314
    %p328 = scmp.eq.s32.totalorder %s25, 1
    %p329 = por %p327, %p328
    %p331 = scmp.ne.s32.totalorder %s314, %s330
    %p332 = scmp.eq.s32.totalorder %s25, 0
    %p333 = por %p331, %p332
    %s334 = ssub.s32 %s19, %s26
    %p335 = scmp.eq.s32.totalorder %s334, 0
    %s337 = sadd.s32 %s336, 1
    %s338 = scalar_select %p335, %s336, %s337
    %p341 = pneg %p335
    %p342 = scmp.eq.s32.totalorder %s19, 1
    %p343 = por %p341, %p342
    %p344 = scmp.ne.s32.totalorder %s336, %s339
    %p345 = scmp.eq.s32.totalorder %s19, 0
    %p346 = por %p344, %p345
    %p347 = scmp.ne.s32.totalorder %s336, %s339
    %p348 = scmp.eq.s32.totalorder %s24, 1
    %p349 = por %p347, %p348
    %p350 = scmp.ne.s32.totalorder %s339, %s340
    %p351 = scmp.eq.s32.totalorder %s24, 0
    %p352 = por %p350, %p351
    %p353 = scmp.ne.s32.totalorder %s339, %s340
    %p354 = scmp.eq.s32.totalorder %s25, 1
    %p355 = por %p353, %p354
    %p357 = scmp.ne.s32.totalorder %s340, %s356
    %p358 = scmp.eq.s32.totalorder %s25, 0
    %p359 = por %p357, %p358
    %s361 = sadd.s32 %s360, 1
    %p364 = scmp.eq.s32.totalorder %s19, 1
    %p365 = scmp.ne.s32.totalorder %s360, %s362
    %p366 = scmp.eq.s32.totalorder %s19, 0
    %p367 = por %p365, %p366
    %p368 = scmp.ne.s32.totalorder %s360, %s362
    %p369 = scmp.eq.s32.totalorder %s24, 1
    %p370 = por %p368, %p369
    %p371 = scmp.ne.s32.totalorder %s362, %s363
    %p372 = scmp.eq.s32.totalorder %s24, 0
    %p373 = por %p371, %p372
    %p374 = scmp.ne.s32.totalorder %s362, %s363
    %p375 = scmp.eq.s32.totalorder %s25, 1
    %p376 = por %p374, %p375
    %p378 = scmp.ne.s32.totalorder %s363, %s377
    %p379 = scmp.eq.s32.totalorder %s25, 0
    %p380 = por %p378, %p379
    %p381 = scmp.le.s32.totalorder 1, %s19
    %p382 = scmp.lt.s32.totalorder %s19, 3
    %p383 = pnand %p381, %p382
    %p384 = pneg %p383
    // Predicated region
    $region9: #{cmuim_forward.7} parent=5 // pred_check
      _
    $region10: #{cmuim_forward.7} parent=5 // pred_check_branch
      %386 = sbr.rel (%p383) target = $region12
    $region11: #{cmuim_forward.7} parent=5 // pred_region
      %s387 = ssub.s32 %s19, 1
      // Predicated region
      $region13: #{cmuim_forward.7} parent=11 // pred_check
        %p388 = pneg %p40
      $region14: #{cmuim_forward.7} parent=11 // pred_check_branch
        %390 = sbr.rel (%p388) target = $region16
      $region15: #{cmuim_forward.7} parent=11 // pred_region
        _
      $region16: #{cmuim_forward.7} parent=11 // pred_fallthru
        _
    $region12: #{cmuim_forward.7} parent=5 // pred_fallthru
      _
    %p391 = scmp.lt.s32.totalorder %s19, 2
    // Predicated region
    $region17: #{cmuim_forward.7} parent=5 // pred_check
      %p392 = pneg %p391
    $region18: #{cmuim_forward.7} parent=5 // pred_check_branch
      %394 = sbr.rel (%p392) target = $region20
    $region19: #{cmuim_forward.7} parent=5 // pred_region
      // Predicated region
      $region21: #{cmuim_forward.7} parent=19 // pred_check
        %p395 = pneg %p60
      $region22: #{cmuim_forward.7} parent=19 // pred_check_branch
        %397 = sbr.rel (%p395) target = $region24
      $region23: #{cmuim_forward.7} parent=19 // pred_region
        %p398 = scmp.lt.s32.totalorder %s19, 1
        %s399 = scalar_select %p398, %s19, 1
        %s400 = scalar_lea.vmem %s1, %s399
      $region24: #{cmuim_forward.7} parent=19 // pred_fallthru
        _
      // Predicated region
      $region25: #{cmuim_forward.7} parent=19 // pred_check
        %p401 = pneg %p86
      $region26: #{cmuim_forward.7} parent=19 // pred_check_branch
        %403 = sbr.rel (%p401) target = $region28
      $region27: #{cmuim_forward.7} parent=19 // pred_region
        %p404 = scmp.lt.s32.totalorder %s19, 1
        %s405 = scalar_select %p404, %s19, 1
        %s406 = scalar_lea.vmem %s2, %s405
      $region28: #{cmuim_forward.7} parent=19 // pred_fallthru
        _
      // Predicated region
      $region29: #{cmuim_forward.7} parent=19 // pred_check
        %p407 = pneg %p112
      $region30: #{cmuim_forward.7} parent=19 // pred_check_branch
        %409 = sbr.rel (%p407) target = $region32
      $region31: #{cmuim_forward.7} parent=19 // pred_region
        %p410 = scmp.lt.s32.totalorder %s19, 1
        %s411 = scalar_select %p410, %s19, 1
        %s412 = smul.addr %s411, 4
        %s413 = smul.addr %s412, 4
        %s414 = scalar_lea.vmem %s3, %s413
      $region32: #{cmuim_forward.7} parent=19 // pred_fallthru
        _
      // Predicated region
      $region33: #{cmuim_forward.7} parent=19 // pred_check
        %p415 = pneg %p138
      $region34: #{cmuim_forward.7} parent=19 // pred_check_branch
        %417 = sbr.rel (%p415) target = $region36
      $region35: #{cmuim_forward.7} parent=19 // pred_region
        %p418 = scmp.lt.s32.totalorder %s19, 1
        %s419 = scalar_select %p418, %s19, 1
        %s420 = scalar_lea.vmem %s4, %s419
      $region36: #{cmuim_forward.7} parent=19 // pred_fallthru
        _
      // Predicated region
      $region37: #{cmuim_forward.7} parent=19 // pred_check
        %p421 = pneg %p164
      $region38: #{cmuim_forward.7} parent=19 // pred_check_branch
        %423 = sbr.rel (%p421) target = $region40
      $region39: #{cmuim_forward.7} parent=19 // pred_region
        %p424 = scmp.lt.s32.totalorder %s19, 1
        %s425 = scalar_select %p424, %s19, 1
        %s426 = smul.addr %s425, 4
        %s427 = smul.addr %s426, 4
        %s428 = scalar_lea.vmem %s5, %s427
      $region40: #{cmuim_forward.7} parent=19 // pred_fallthru
        _
      // Predicated region
      $region41: #{cmuim_forward.7} parent=19 // pred_check
        %p429 = pneg %p190
      $region42: #{cmuim_forward.7} parent=19 // pred_check_branch
        %431 = sbr.rel (%p429) target = $region44
      $region43: #{cmuim_forward.7} parent=19 // pred_region
        %p432 = scmp.lt.s32.totalorder %s19, 1
        %s433 = scalar_select %p432, %s19, 1
        %s434 = scalar_lea.vmem %s6, %s433
      $region44: #{cmuim_forward.7} parent=19 // pred_fallthru
        _
      // Predicated region
      $region45: #{cmuim_forward.7} parent=19 // pred_check
        %p435 = pneg %p216
      $region46: #{cmuim_forward.7} parent=19 // pred_check_branch
        %437 = sbr.rel (%p435) target = $region48
      $region47: #{cmuim_forward.7} parent=19 // pred_region
        %p438 = scmp.lt.s32.totalorder %s19, 1
        %s439 = scalar_select %p438, %s19, 1
        %s440 = scalar_lea.vmem %s7, %s439
      $region48: #{cmuim_forward.7} parent=19 // pred_fallthru
        _
      // Predicated region
      $region49: #{cmuim_forward.7} parent=19 // pred_check
        %p441 = pneg %p242
      $region50: #{cmuim_forward.7} parent=19 // pred_check_branch
        %443 = sbr.rel (%p441) target = $region52
      $region51: #{cmuim_forward.7} parent=19 // pred_region
        %p444 = scmp.lt.s32.totalorder %s19, 1
        %s445 = scalar_select %p444, %s19, 1
        %s446 = scalar_lea.vmem %s8, %s445
      $region52: #{cmuim_forward.7} parent=19 // pred_fallthru
        _
      // Predicated region
      $region53: #{cmuim_forward.7} parent=19 // pred_check
        %p447 = pneg %p268
      $region54: #{cmuim_forward.7} parent=19 // pred_check_branch
        %449 = sbr.rel (%p447) target = $region56
      $region55: #{cmuim_forward.7} parent=19 // pred_region
        %p450 = scmp.lt.s32.totalorder %s19, 1
        %s451 = scalar_select %p450, %s19, 1
        %s452 = smul.addr %s451, 4
        %s453 = smul.addr %s452, 4
        %s454 = scalar_lea.vmem %s9, %s453
      $region56: #{cmuim_forward.7} parent=19 // pred_fallthru
        _
      // Predicated region
      $region57: #{cmuim_forward.7} parent=19 // pred_check
        %p455 = pneg %p294
      $region58: #{cmuim_forward.7} parent=19 // pred_check_branch
        %457 = sbr.rel (%p455) target = $region60
      $region59: #{cmuim_forward.7} parent=19 // pred_region
        %p458 = scmp.lt.s32.totalorder %s19, 1
        %s459 = scalar_select %p458, %s19, 1
        %s460 = scalar_lea.vmem %s10, %s459
      $region60: #{cmuim_forward.7} parent=19 // pred_fallthru
        _
      // Predicated region
      $region61: #{cmuim_forward.7} parent=19 // pred_check
        %p461 = pneg %p320
      $region62: #{cmuim_forward.7} parent=19 // pred_check_branch
        %463 = sbr.rel (%p461) target = $region64
      $region63: #{cmuim_forward.7} parent=19 // pred_region
        %p464 = scmp.lt.s32.totalorder %s19, 1
        %s465 = scalar_select %p464, %s19, 1
        %s466 = smul.addr %s465, 16
        %s467 = smul.addr %s466, 4
        %s468 = scalar_lea.vmem %s11, %s467
      $region64: #{cmuim_forward.7} parent=19 // pred_fallthru
        _
      // Predicated region
      $region65: #{cmuim_forward.7} parent=19 // pred_check
        %p469 = pneg %p346
      $region66: #{cmuim_forward.7} parent=19 // pred_check_branch
        %471 = sbr.rel (%p469) target = $region68
      $region67: #{cmuim_forward.7} parent=19 // pred_region
        %p472 = scmp.lt.s32.totalorder %s19, 1
        %s473 = scalar_select %p472, %s19, 1
        %s474 = scalar_lea.vmem %s12, %s473
      $region68: #{cmuim_forward.7} parent=19 // pred_fallthru
        _
    $region20: #{cmuim_forward.7} parent=5 // pred_fallthru
      _
    %p475 = scmp.le.s32.totalorder 1, %s19
    %p476 = scmp.lt.s32.totalorder %s19, 3
    %p477 = pnand %p475, %p476
    %p478 = pneg %p477
    // Predicated region
    $region69: #{cmuim_forward.7} parent=5 // pred_check
      _
    $region70: #{cmuim_forward.7} parent=5 // pred_check_branch
      %480 = sbr.rel (%p477) target = $region72
    $region71: #{cmuim_forward.7} parent=5 // pred_region
      %s481 = ssub.s32 %s19, 1
      %p482 = pneg %p40
      %p483 = pneg %p37
      %p484 = scmp.lt.s32.totalorder %s24, 1
      %s485 = scalar_select %p484, %s24, 1
      %s486 = scalar_lea.vmem %s1, %s485
      %p487 = pneg %p66
      %p488 = pneg %p63
      %p489 = scmp.lt.s32.totalorder %s24, 1
      %s490 = scalar_select %p489, %s24, 1
      %s491 = scalar_lea.vmem %s2, %s490
      %p492 = pneg %p92
      %p493 = pneg %p89
      %p494 = scmp.lt.s32.totalorder %s24, 1
      %s495 = scalar_select %p494, %s24, 1
      %s496 = smul.addr %s495, 4
      %s497 = smul.addr %s496, 4
      %s498 = scalar_lea.vmem %s3, %s497
      %p499 = pneg %p118
      %p500 = pneg %p115
      %p501 = scmp.lt.s32.totalorder %s24, 1
      %s502 = scalar_select %p501, %s24, 1
      %s503 = scalar_lea.vmem %s4, %s502
      %p504 = pneg %p144
      %p505 = pneg %p141
      %p506 = scmp.lt.s32.totalorder %s24, 1
      %s507 = scalar_select %p506, %s24, 1
      %s508 = smul.addr %s507, 4
      %s509 = smul.addr %s508, 4
      %s510 = scalar_lea.vmem %s5, %s509
      %p511 = pneg %p170
      %p512 = pneg %p167
      %p513 = scmp.lt.s32.totalorder %s24, 1
      %s514 = scalar_select %p513, %s24, 1
      %s515 = scalar_lea.vmem %s6, %s514
      %p516 = pneg %p196
      %p517 = pneg %p193
      %p518 = scmp.lt.s32.totalorder %s24, 1
      %s519 = scalar_select %p518, %s24, 1
      %s520 = scalar_lea.vmem %s7, %s519
      %p521 = pneg %p222
      %p522 = pneg %p219
      %p523 = scmp.lt.s32.totalorder %s24, 1
      %s524 = scalar_select %p523, %s24, 1
      %s525 = scalar_lea.vmem %s8, %s524
      %p526 = pneg %p248
      %p527 = pneg %p245
      %p528 = scmp.lt.s32.totalorder %s24, 1
      %s529 = scalar_select %p528, %s24, 1
      %s530 = smul.addr %s529, 4
      %s531 = smul.addr %s530, 4
      %s532 = scalar_lea.vmem %s9, %s531
      %p533 = pneg %p274
      %p534 = pneg %p271
      %p535 = scmp.lt.s32.totalorder %s24, 1
      %s536 = scalar_select %p535, %s24, 1
      %s537 = scalar_lea.vmem %s10, %s536
      %p538 = pneg %p300
      %p539 = pneg %p297
      %p540 = scmp.lt.s32.totalorder %s24, 1
      %s541 = scalar_select %p540, %s24, 1
      %s542 = smul.addr %s541, 16
      %s543 = smul.addr %s542, 4
      %s544 = scalar_lea.vmem %s11, %s543
      %p545 = pneg %p326
      %p546 = pneg %p323
      %p547 = scmp.lt.s32.totalorder %s24, 1
      %s548 = scalar_select %p547, %s24, 1
      %s549 = scalar_lea.vmem %s12, %s548
      %p550 = pneg %p352
      %p551 = pneg %p349
      %p552 = pneg %p373
      %p553 = pneg %p370
      %p554 = scmp.lt.s32.totalorder %s24, 1
      %s555 = scalar_select %p554, %s24, 1
      %s556 = scalar_lea.vmem %s1, %s555
      %p557 = scmp.lt.s32.totalorder %s24, 1
      %s558 = scalar_select %p557, %s24, 1
      %s559 = scalar_lea.vmem %s2, %s558
      %p560 = scmp.lt.s32.totalorder %s24, 1
      %s561 = scalar_select %p560, %s24, 1
      %s562 = smul.addr %s561, 4
      %s563 = smul.addr %s562, 4
      %s564 = scalar_lea.vmem %s3, %s563
      %p565 = scmp.lt.s32.totalorder %s24, 1
      %s566 = scalar_select %p565, %s24, 1
      %s567 = scalar_lea.vmem %s4, %s566
      %p568 = scmp.lt.s32.totalorder %s24, 1
      %s569 = scalar_select %p568, %s24, 1
      %s570 = smul.addr %s569, 4
      %s571 = smul.addr %s570, 4
      %s572 = scalar_lea.vmem %s5, %s571
      %p573 = scmp.lt.s32.totalorder %s24, 1
      %s574 = scalar_select %p573, %s24, 1
      %s575 = scalar_lea.vmem %s6, %s574
      %p576 = scmp.lt.s32.totalorder %s24, 1
      %s577 = scalar_select %p576, %s24, 1
      %s578 = scalar_lea.vmem %s7, %s577
      %p579 = scmp.lt.s32.totalorder %s24, 1
      %s580 = scalar_select %p579, %s24, 1
      %s581 = scalar_lea.vmem %s8, %s580
      %p582 = scmp.lt.s32.totalorder %s24, 1
      %s583 = scalar_select %p582, %s24, 1
      %s584 = smul.addr %s583, 4
      %s585 = smul.addr %s584, 4
      %s586 = scalar_lea.vmem %s9, %s585
      %p587 = scmp.lt.s32.totalorder %s24, 1
      %s588 = scalar_select %p587, %s24, 1
      %s589 = scalar_lea.vmem %s10, %s588
      %p590 = scmp.lt.s32.totalorder %s24, 1
      %s591 = scalar_select %p590, %s24, 1
      %s592 = smul.addr %s591, 16
      %s593 = smul.addr %s592, 4
      %s594 = scalar_lea.vmem %s11, %s593
      %p595 = scmp.lt.s32.totalorder %s24, 1
      %s596 = scalar_select %p595, %s24, 1
      %s597 = scalar_lea.vmem %s12, %s596
      %p599 = scmp.eq.s32.totalorder %s24, 0
      // Predicated region
      $region73: #{cmuim_forward.7} parent=71 // pred_check
        %p600 = pneg %p599
      $region74: #{cmuim_forward.7} parent=71 // pred_check_branch
        %602 = sbr.rel (%p600) target = $region76
      $region75: #{cmuim_forward.7} parent=71 // pred_region
        %v603 = vld [vmem:[%s0] sm:$0xff]
        %v604 = vld [vmem:[%s0 + $0x8] sm:$0xff]
        %vm605 = vcmask 261120
        %606 = vst.msk [vmem:[#allocation2] sm:$0xff] %vm605, %v603
        %607 = vst.msk [vmem:[#allocation2 + $0x8] sm:$0xff] %vm605, %v604
      $region76: #{cmuim_forward.7} parent=71 // pred_fallthru
        _
      %v608 = vld [vmem:[#allocation2] sm:$0xff]
      %v609 = vld [vmem:[#allocation2 + $0x8] sm:$0xff]
      %v610 = vlaneseq
      %v611 = vand.u32 %v610, 127
      %vm612 = vcmp.lt.s32.totalorder %v611, 5
      %v613 = vsel %vm612, 0.0, -1e+30
      %v614 = vld [vmem:[%s556] sm:$0x1]
      %v615 = vld [vmem:[%s559] sm:$0x1]
      %vm616 = vcmask 261120
      %v617 = vsel %vm616, %v608, 0.0
      %618 = vadd.xlane.f32.xlu0 %v617
      %v619 = vpop.xlane.xlu0 %618
      %v620 = vsel %vm616, %v609, 0.0
      %621 = vadd.xlane.f32.xlu0 %v620
      %v622 = vpop.xlane.xlu0 %621
      %v623 = vrcp.pop 32.0
      %v624 = vmul.f32 %v619, %v623
      %v625 = vmul.f32 %v622, %v623
      %v626 = vsub.f32 %v608, %v624
      %v627 = vsub.f32 %v609, %v625
      %v628 = vmul.f32 %v626, %v626
      %v629 = vmul.f32 %v627, %v627
      %v630 = vsel %vm616, %v628, 0.0
      %631 = vadd.xlane.f32.xlu0 %v630
      %v632 = vpop.xlane.xlu0 %631
      %v633 = vsel %vm616, %v629, 0.0
      %634 = vadd.xlane.f32.xlu0 %v633
      %v635 = vpop.xlane.xlu0 %634
      %v636 = vmul.f32 %v632, %v623
      %v637 = vmul.f32 %v635, %v623
      %v638 = vadd.f32 %v636, 1e-05
      %v639 = vadd.f32 %v637, 1e-05
      %v640 = vrsqrt.pop %v638
      %v641 = vrsqrt.pop %v639
      %v642 = vmul.f32 %v626, %v640
      %v643 = vmul.f32 %v627, %v641
      %v645 = vlaneseq
      %v646 = vshrl.u32 %v645, 7
      %v647 = vsub.s32 0, %v646
      %v648 = vrot.slane %v614, %v647
      %v650 = vmul.f32 %v642, %v648
      %v651 = vmul.f32 %v643, %v648
      %v653 = vlaneseq
      %v654 = vshrl.u32 %v653, 7
      %v655 = vsub.s32 0, %v654
      %v656 = vrot.slane %v615, %v655
      %v658 = vadd.f32 %v650, %v656
      %v659 = vadd.f32 %v651, %v656
      %v660 = vpack.c.bf16 %v659, %v658
      %v661 = vld [vmem:[%s564] sm:$0xf]
      %v662 = vld [vmem:[%s564 + $0x4] sm:$0xf]
      %v663 = vld [vmem:[%s564 + $0x8] sm:$0xf]
      %v664 = vld [vmem:[%s564 + $0xc] sm:$0xf]
      %v665 = vld [vmem:[%s567] sm:$0x1]
      %v667 = vlaneseq
      %v668 = vshrl.u32 %v667, 7
      %v669 = vsub.s32 0, %v668
      %v670 = vrot.slane %v665, %v669
      %v676 = vunpack.c.l.b16 %v661
      %v677 = vunpack.c.l.b16 %v662
      %v678 = vunpack.c.l.b16 %v663
      %v679 = vunpack.c.l.b16 %v664
      %v680 = vpack.c.b16 %v677, %v676
      %v681 = vpack.c.b16 %v679, %v678
      %v685 = vsel %vm616, %v660, 0
      %687 = vmatprep.subr.bf16.mxu0 0
      %688 = vmatpush1.bf16.msra.mxu0 %v680
      %689 = vmatprep.subr.bf16.mxu0 0
      %690 = vmatpush1.bf16.msra.mxu0 %v681
      %691 = vmatprep.subr.bf16.mxu0 0
      %692 = vmatpush1.bf16.msra.mxu0 0
      %693 = vmatprep.subr.bf16.mxu0 0
      %694 = vmatpush1.bf16.msra.mxu0 0
      %695 = vmatprep.subr.bf16.mxu0 0
      %696 = vmatpush1.bf16.msra.mxu0 0
      %697 = vmatprep.subr.bf16.mxu0 0
      %698 = vmatpush1.bf16.msra.mxu0 0
      %699 = vmatprep.subr.bf16.mxu0 0
      %700 = vmatpush1.bf16.msra.mxu0 0
      %701 = vmatprep.subr.bf16.mxu0 0
      %702 = vmatpush1.bf16.msra.mxu0 0
      %703 = vmatprep.subr.bf16.mxu0 0
      %704 = vmatpush1.bf16.msra.mxu0 0
      %705 = vmatprep.subr.bf16.mxu0 0
      %706 = vmatpush1.bf16.msra.mxu0 0
      %707 = vmatprep.subr.bf16.mxu0 0
      %708 = vmatpush1.bf16.msra.mxu0 0
      %709 = vmatprep.subr.bf16.mxu0 0
      %710 = vmatpush1.bf16.msra.mxu0 0
      %711 = vmatprep.subr.bf16.mxu0 0
      %712 = vmatpush1.bf16.msra.mxu0 0
      %713 = vmatprep.subr.bf16.mxu0 0
      %714 = vmatpush1.bf16.msra.mxu0 0
      %715 = vmatprep.subr.bf16.mxu0 0
      %716 = vmatpush1.bf16.msra.mxu0 0
      %717 = vmatprep.subr.bf16.mxu0 0
      %718 = vmatpush1.bf16.msra.mxu0 0
      %719 = vmatprep.mubr.bf16.mxu0 0
      %720 = vmatmul.mubr.bf16.gmra.mrb[0].mxu0 %v685
      %v721 = vpop.f32.mrb[0].mxu0
      %v722 = vadd.f32 %v670, %v721
      %v723 = vpop.f32.mrb[0].mxu0
      %v724 = vpop.f32.mrb[0].mxu0
      %v725 = vadd.f32 %v670, %v724
      %v726 = vpop.f32.mrb[0].mxu0
      %727 = vdwg.mxu0
      %728 = vxpose.xlu0.b32.start [1/16] %v722, 128
      %729 = vxpose.xlu0.b32.cont [2/16] 0.0, 128
      %730 = vxpose.xlu0.b32.cont [3/16] 0.0, 128
      %731 = vxpose.xlu0.b32.cont [4/16] 0.0, 128
      %732 = vxpose.xlu0.b32.cont [5/16] 0.0, 128
      %733 = vxpose.xlu0.b32.cont [6/16] 0.0, 128
      %734 = vxpose.xlu0.b32.cont [7/16] 0.0, 128
      %735 = vxpose.xlu0.b32.cont [8/16] 0.0, 128
      %736 = vxpose.xlu0.b32.cont [9/16] 0.0, 128
      %737 = vxpose.xlu0.b32.cont [10/16] 0.0, 128
      %738 = vxpose.xlu0.b32.cont [11/16] 0.0, 128
      %739 = vxpose.xlu0.b32.cont [12/16] 0.0, 128
      %740 = vxpose.xlu0.b32.cont [13/16] 0.0, 128
      %741 = vxpose.xlu0.b32.cont [14/16] 0.0, 128
      %742 = vxpose.xlu0.b32.cont [15/16] 0.0, 128
      %743 = vxpose.xlu0.b32.end [16/16] 0.0, 128
      %v744 = vpop.trf.xlu0
      %v745 = vpop.trf.xlu0
      %v746 = vpop.trf.xlu0
      %v747 = vpop.trf.xlu0
      %v748 = vpop.trf.xlu0
      %v749 = vpop.trf.xlu0
      %v750 = vpop.trf.xlu0
      %v751 = vpop.trf.xlu0
      %v752 = vpop.trf.xlu0
      %v753 = vpop.trf.xlu0
      %v754 = vpop.trf.xlu0
      %v755 = vpop.trf.xlu0
      %v756 = vpop.trf.xlu0
      %v757 = vpop.trf.xlu0
      %v758 = vpop.trf.xlu0
      %v759 = vpop.trf.xlu0
      %v760 = vpack.c.bf16 %v722, %v722
      %v761 = vpack.c.bf16 %v748, %v748
      %vm762 = vcmask 64512
      %v764 = vsel %vm762, %v760, 0
      %vm766 = vcmask 1043456
      %v768 = vsel %vm766, %v761, 0
      %770 = vmatprep.subr.bf16.mxu0 0
      %771 = vmatpush1.bf16.msra.mxu0 %v768
      %772 = vmatprep.subr.bf16.mxu0 0
      %773 = vmatpush1.bf16.msra.mxu0 0
      %774 = vmatprep.subr.bf16.mxu0 0
      %775 = vmatpush1.bf16.msra.mxu0 0
      %776 = vmatprep.subr.bf16.mxu0 0
      %777 = vmatpush1.bf16.msra.mxu0 0
      %778 = vmatprep.subr.bf16.mxu0 0
      %779 = vmatpush1.bf16.msra.mxu0 0
      %780 = vmatprep.subr.bf16.mxu0 0
      %781 = vmatpush1.bf16.msra.mxu0 0
      %782 = vmatprep.subr.bf16.mxu0 0
      %783 = vmatpush1.bf16.msra.mxu0 0
      %784 = vmatprep.subr.bf16.mxu0 0
      %785 = vmatpush1.bf16.msra.mxu0 0
      %786 = vmatprep.subr.bf16.mxu0 0
      %787 = vmatpush1.bf16.msra.mxu0 0
      %788 = vmatprep.subr.bf16.mxu0 0
      %789 = vmatpush1.bf16.msra.mxu0 0
      %790 = vmatprep.subr.bf16.mxu0 0
      %791 = vmatpush1.bf16.msra.mxu0 0
      %792 = vmatprep.subr.bf16.mxu0 0
      %793 = vmatpush1.bf16.msra.mxu0 0
      %794 = vmatprep.subr.bf16.mxu0 0
      %795 = vmatpush1.bf16.msra.mxu0 0
      %796 = vmatprep.subr.bf16.mxu0 0
      %797 = vmatpush1.bf16.msra.mxu0 0
      %798 = vmatprep.subr.bf16.mxu0 0
      %799 = vmatpush1.bf16.msra.mxu0 0
      %800 = vmatprep.subr.bf16.mxu0 0
      %801 = vmatpush1.bf16.msra.mxu0 0
      %802 = vmatprep.mubr.bf16.mxu0 0
      %803 = vmatmul.mubr.bf16.gmra.mrb[0].mxu0 %v764
      %v804 = vpop.f32.mrb[0].mxu0
      %v805 = vadd.f32 %v613, %v804
      %v806 = vpop.f32.mrb[0].mxu0
      %v807 = vpop.f32.mrb[0].mxu0
      %v808 = vpop.f32.mrb[0].mxu0
      %809 = vdwg.mxu0
      %v810 = vsel %vm762, %v805, -inf
      %811 = vmax.xlane.f32.xlu0 %v810
      %v812 = vpop.xlane.xlu0 %811
      %v813 = vsub.f32 %v805, %v812
      %v814 = vmul.f32 %v813, 1.442695
      %v815 = vpow.pop %v814
      %v816 = vsel %vm762, %v815, 0.0
      %817 = vadd.xlane.f32.xlu0 %v816
      %v818 = vpop.xlane.xlu0 %817
      %v819 = vrcp.pop %v818
      %v820 = vmul.f32 %v815, %v819
      %v821 = vpack.c.bf16 %v752, %v752
      %v822 = vpack.c.bf16 %v820, %v820
      %v824 = vsel %vm762, %v821, 0
      %v827 = vsel %vm762, %v822, 0
      %829 = vmatprep.subr.bf16.mxu0 0
      %830 = vmatpush1.bf16.xpose.msra.mxu0 %v827
      %831 = vmatprep.subr.bf16.mxu0 0
      %832 = vmatpush1.bf16.xpose.msra.mxu0 0
      %833 = vmatprep.subr.bf16.mxu0 0
      %834 = vmatpush1.bf16.xpose.msra.mxu0 0
      %835 = vmatprep.subr.bf16.mxu0 0
      %836 = vmatpush1.bf16.xpose.msra.mxu0 0
      %837 = vmatprep.subr.bf16.mxu0 0
      %838 = vmatpush1.bf16.xpose.msra.mxu0 0
      %839 = vmatprep.subr.bf16.mxu0 0
      %840 = vmatpush1.bf16.xpose.msra.mxu0 0
      %841 = vmatprep.subr.bf16.mxu0 0
      %842 = vmatpush1.bf16.xpose.msra.mxu0 0
      %843 = vmatprep.subr.bf16.mxu0 0
      %844 = vmatpush1.bf16.xpose.msra.mxu0 0
      %845 = vmatprep.subr.bf16.mxu0 0
      %846 = vmatpush1.bf16.xpose.msra.mxu0 0
      %847 = vmatprep.subr.bf16.mxu0 0
      %848 = vmatpush1.bf16.xpose.msra.mxu0 0
      %849 = vmatprep.subr.bf16.mxu0 0
      %850 = vmatpush1.bf16.xpose.msra.mxu0 0
      %851 = vmatprep.subr.bf16.mxu0 0
      %852 = vmatpush1.bf16.xpose.msra.mxu0 0
      %853 = vmatprep.subr.bf16.mxu0 0
      %854 = vmatpush1.bf16.xpose.msra.mxu0 0
      %855 = vmatprep.subr.bf16.mxu0 0
      %856 = vmatpush1.bf16.xpose.msra.mxu0 0
      %857 = vmatprep.subr.bf16.mxu0 0
      %858 = vmatpush1.bf16.xpose.msra.mxu0 0
      %859 = vmatprep.subr.bf16.mxu0 0
      %860 = vmatpush1.bf16.xpose.msra.mxu0 0
      %861 = vmatprep.mubr.bf16.mxu0 0
      %862 = vmatmul.mubr.bf16.gmra.mrb[0].mxu0 %v824
      %v863 = vpop.f32.mrb[0].mxu0
      %v864 = vadd.f32 0.0, %v863
      %v865 = vpop.f32.mrb[0].mxu0
      %v866 = vpop.f32.mrb[0].mxu0
      %v867 = vpop.f32.mrb[0].mxu0
      %868 = vdwg.mxu0
      %v869 = vpack.c.bf16 %v749, %v749
      %871 = vrot.lane.b32.xlu0 %v760, 120
      %v872 = vpop.permute.xlu0 %871
      %v874 = vsel %vm762, %v872, 0
      %v877 = vsel %vm766, %v869, 0
      %879 = vmatprep.subr.bf16.mxu0 0
      %880 = vmatpush1.bf16.msra.mxu0 %v877
      %881 = vmatprep.subr.bf16.mxu0 0
      %882 = vmatpush1.bf16.msra.mxu0 0
      %883 = vmatprep.subr.bf16.mxu0 0
      %884 = vmatpush1.bf16.msra.mxu0 0
      %885 = vmatprep.subr.bf16.mxu0 0
      %886 = vmatpush1.bf16.msra.mxu0 0
      %887 = vmatprep.subr.bf16.mxu0 0
      %888 = vmatpush1.bf16.msra.mxu0 0
      %889 = vmatprep.subr.bf16.mxu0 0
      %890 = vmatpush1.bf16.msra.mxu0 0
      %891 = vmatprep.subr.bf16.mxu0 0
      %892 = vmatpush1.bf16.msra.mxu0 0
      %893 = vmatprep.subr.bf16.mxu0 0
      %894 = vmatpush1.bf16.msra.mxu0 0
      %895 = vmatprep.subr.bf16.mxu0 0
      %896 = vmatpush1.bf16.msra.mxu0 0
      %897 = vmatprep.subr.bf16.mxu0 0
      %898 = vmatpush1.bf16.msra.mxu0 0
      %899 = vmatprep.subr.bf16.mxu0 0
      %900 = vmatpush1.bf16.msra.mxu0 0
      %901 = vmatprep.subr.bf16.mxu0 0
      %902 = vmatpush1.bf16.msra.mxu0 0
      %903 = vmatprep.subr.bf16.mxu0 0
      %904 = vmatpush1.bf16.msra.mxu0 0
      %905 = vmatprep.subr.bf16.mxu0 0
      %906 = vmatpush1.bf16.msra.mxu0 0
      %907 = vmatprep.subr.bf16.mxu0 0
      %908 = vmatpush1.bf16.msra.mxu0 0
      %909 = vmatprep.subr.bf16.mxu0 0
      %910 = vmatpush1.bf16.msra.mxu0 0
      %911 = vmatprep.mubr.bf16.mxu0 0
      %912 = vmatmul.mubr.bf16.gmra.mrb[0].mxu0 %v874
      %v913 = vpop.f32.mrb[0].mxu0
      %v914 = vadd.f32 %v613, %v913
      %v915 = vpop.f32.mrb[0].mxu0
      %v916 = vpop.f32.mrb[0].mxu0
      %v917 = vpop.f32.mrb[0].mxu0
      %918 = vdwg.mxu0
      %v919 = vsel %vm762, %v914, -inf
      %920 = vmax.xlane.f32.xlu0 %v919
      %v921 = vpop.xlane.xlu0 %920
      %v922 = vsub.f32 %v914, %v921
      %v923 = vmul.f32 %v922, 1.442695
      %v924 = vpow.pop %v923
      %v925 = vsel %vm762, %v924, 0.0
      %926 = vadd.xlane.f32.xlu0 %v925
      %v927 = vpop.xlane.xlu0 %926
      %v928 = vrcp.pop %v927
      %v929 = vmul.f32 %v924, %v928
      %v930 = vpack.c.bf16 %v753, %v753
      %v931 = vpack.c.bf16 %v929, %v929
      %v933 = vsel %vm762, %v930, 0
      %v936 = vsel %vm762, %v931, 0
      %938 = vmatprep.subr.bf16.mxu0 0
      %939 = vmatpush1.bf16.xpose.msra.mxu0 %v936
      %940 = vmatprep.subr.bf16.mxu0 0
      %941 = vmatpush1.bf16.xpose.msra.mxu0 0
      %942 = vmatprep.subr.bf16.mxu0 0
      %943 = vmatpush1.bf16.xpose.msra.mxu0 0
      %944 = vmatprep.subr.bf16.mxu0 0
      %945 = vmatpush1.bf16.xpose.msra.mxu0 0
      %946 = vmatprep.subr.bf16.mxu0 0
      %947 = vmatpush1.bf16.xpose.msra.mxu0 0
      %948 = vmatprep.subr.bf16.mxu0 0
      %949 = vmatpush1.bf16.xpose.msra.mxu0 0
      %950 = vmatprep.subr.bf16.mxu0 0
      %951 = vmatpush1.bf16.xpose.msra.mxu0 0
      %952 = vmatprep.subr.bf16.mxu0 0
      %953 = vmatpush1.bf16.xpose.msra.mxu0 0
      %954 = vmatprep.subr.bf16.mxu0 0
      %955 = vmatpush1.bf16.xpose.msra.mxu0 0
      %956 = vmatprep.subr.bf16.mxu0 0
      %957 = vmatpush1.bf16.xpose.msra.mxu0 0
      %958 = vmatprep.subr.bf16.mxu0 0
      %959 = vmatpush1.bf16.xpose.msra.mxu0 0
      %960 = vmatprep.subr.bf16.mxu0 0
      %961 = vmatpush1.bf16.xpose.msra.mxu0 0
      %962 = vmatprep.subr.bf16.mxu0 0
      %963 = vmatpush1.bf16.xpose.msra.mxu0 0
      %964 = vmatprep.subr.bf16.mxu0 0
      %965 = vmatpush1.bf16.xpose.msra.mxu0 0
      %966 = vmatprep.subr.bf16.mxu0 0
      %967 = vmatpush1.bf16.xpose.msra.mxu0 0
      %968 = vmatprep.subr.bf16.mxu0 0
      %969 = vmatpush1.bf16.xpose.msra.mxu0 0
      %970 = vmatprep.mubr.bf16.mxu0 0
      %971 = vmatmul.mubr.bf16.gmra.mrb[0].mxu0 %v933
      %v972 = vpop.f32.mrb[0].mxu0
      %v973 = vadd.f32 0.0, %v972
      %v974 = vpop.f32.mrb[0].mxu0
      %v975 = vpop.f32.mrb[0].mxu0
      %v976 = vpop.f32.mrb[0].mxu0
      %977 = vdwg.mxu0
      %v978 = vpack.c.bf16 %v750, %v750
      %979 = vrot.lane.b32.xlu0 %v760, 112
      %v980 = vpop.permute.xlu0 %979
      %v982 = vsel %vm762, %v980, 0
      %v985 = vsel %vm766, %v978, 0
      %987 = vmatprep.subr.bf16.mxu0 0
      %988 = vmatpush1.bf16.msra.mxu0 %v985
      %989 = vmatprep.subr.bf16.mxu0 0
      %990 = vmatpush1.bf16.msra.mxu0 0
      %991 = vmatprep.subr.bf16.mxu0 0
      %992 = vmatpush1.bf16.msra.mxu0 0
      %993 = vmatprep.subr.bf16.mxu0 0
      %994 = vmatpush1.bf16.msra.mxu0 0
      %995 = vmatprep.subr.bf16.mxu0 0
      %996 = vmatpush1.bf16.msra.mxu0 0
      %997 = vmatprep.subr.bf16.mxu0 0
      %998 = vmatpush1.bf16.msra.mxu0 0
      %999 = vmatprep.subr.bf16.mxu0 0
      %1000 = vmatpush1.bf16.msra.mxu0 0
      %1001 = vmatprep.subr.bf16.mxu0 0
      %1002 = vmatpush1.bf16.msra.mxu0 0
      %1003 = vmatprep.subr.bf16.mxu0 0
      %1004 = vmatpush1.bf16.msra.mxu0 0
      %1005 = vmatprep.subr.bf16.mxu0 0
      %1006 = vmatpush1.bf16.msra.mxu0 0
      %1007 = vmatprep.subr.bf16.mxu0 0
      %1008 = vmatpush1.bf16.msra.mxu0 0
      %1009 = vmatprep.subr.bf16.mxu0 0
      %1010 = vmatpush1.bf16.msra.mxu0 0
      %1011 = vmatprep.subr.bf16.mxu0 0
      %1012 = vmatpush1.bf16.msra.mxu0 0
      %1013 = vmatprep.subr.bf16.mxu0 0
      %1014 = vmatpush1.bf16.msra.mxu0 0
      %1015 = vmatprep.subr.bf16.mxu0 0
      %1016 = vmatpush1.bf16.msra.mxu0 0
      %1017 = vmatprep.subr.bf16.mxu0 0
      %1018 = vmatpush1.bf16.msra.mxu0 0
      %1019 = vmatprep.mubr.bf16.mxu0 0
      %1020 = vmatmul.mubr.bf16.gmra.mrb[0].mxu0 %v982
      %v1021 = vpop.f32.mrb[0].mxu0
      %v1022 = vadd.f32 %v613, %v1021
      %v1023 = vpop.f32.mrb[0].mxu0
      %v1024 = vpop.f32.mrb[0].mxu0
      %v1025 = vpop.f32.mrb[0].mxu0
      %1026 = vdwg.mxu0
      %v1027 = vsel %vm762, %v1022, -inf
      %1028 = vmax.xlane.f32.xlu0 %v1027
      %v1029 = vpop.xlane.xlu0 %1028
      %v1030 = vsub.f32 %v1022, %v1029
      %v1031 = vmul.f32 %v1030, 1.442695
      %v1032 = vpow.pop %v1031
      %v1033 = vsel %vm762, %v1032, 0.0
      %1034 = vadd.xlane.f32.xlu0 %v1033
      %v1035 = vpop.xlane.xlu0 %1034
      %v1036 = vrcp.pop %v1035
      %v1037 = vmul.f32 %v1032, %v1036
      %v1038 = vpack.c.bf16 %v754, %v754
      %v1039 = vpack.c.bf16 %v1037, %v1037
      %v1041 = vsel %vm762, %v1038, 0
      %v1044 = vsel %vm762, %v1039, 0
      %1046 = vmatprep.subr.bf16.mxu0 0
      %1047 = vmatpush1.bf16.xpose.msra.mxu0 %v1044
      %1048 = vmatprep.subr.bf16.mxu0 0
      %1049 = vmatpush1.bf16.xpose.msra.mxu0 0
      %1050 = vmatprep.subr.bf16.mxu0 0
      %1051 = vmatpush1.bf16.xpose.msra.mxu0 0
      %1052 = vmatprep.subr.bf16.mxu0 0
      %1053 = vmatpush1.bf16.xpose.msra.mxu0 0
      %1054 = vmatprep.subr.bf16.mxu0 0
      %1055 = vmatpush1.bf16.xpose.msra.mxu0 0
      %1056 = vmatprep.subr.bf16.mxu0 0
      %1057 = vmatpush1.bf16.xpose.msra.mxu0 0
      %1058 = vmatprep.subr.bf16.mxu0 0
      %1059 = vmatpush1.bf16.xpose.msra.mxu0 0
      %1060 = vmatprep.subr.bf16.mxu0 0
      %1061 = vmatpush1.bf16.xpose.msra.mxu0 0
      %1062 = vmatprep.subr.bf16.mxu0 0
      %1063 = vmatpush1.bf16.xpose.msra.mxu0 0
      %1064 = vmatprep.subr.bf16.mxu0 0
      %1065 = vmatpush1.bf16.xpose.msra.mxu0 0
      %1066 = vmatprep.subr.bf16.mxu0 0
      %1067 = vmatpush1.bf16.xpose.msra.mxu0 0
      %1068 = vmatprep.subr.bf16.mxu0 0
      %1069 = vmatpush1.bf16.xpose.msra.mxu0 0
      %1070 = vmatprep.subr.bf16.mxu0 0
      %1071 = vmatpush1.bf16.xpose.msra.mxu0 0
      %1072 = vmatprep.subr.bf16.mxu0 0
      %1073 = vmatpush1.bf16.xpose.msra.mxu0 0
      %1074 = vmatprep.subr.bf16.mxu0 0
      %1075 = vmatpush1.bf16.xpose.msra.mxu0 0
      %1076 = vmatprep.subr.bf16.mxu0 0
      %1077 = vmatpush1.bf16.xpose.msra.mxu0 0
      %1078 = vmatprep.mubr.bf16.mxu0 0
      %1079 = vmatmul.mubr.bf16.gmra.mrb[0].mxu0 %v1041
      %v1080 = vpop.f32.mrb[0].mxu0
      %v1081 = vadd.f32 0.0, %v1080
      %v1082 = vpop.f32.mrb[0].mxu0
      %v1083 = vpop.f32.mrb[0].mxu0
      %v1084 = vpop.f32.mrb[0].mxu0
      %1085 = vdwg.mxu0
      %v1086 = vpack.c.bf16 %v751, %v751
      %1087 = vrot.lane.b32.xlu0 %v760, 104
      %v1088 = vpop.permute.xlu0 %1087
      %v1090 = vsel %vm762, %v1088, 0
      %v1093 = vsel %vm766, %v1086, 0
      %1095 = vmatprep.subr.bf16.mxu0 0
      %1096 = vmatpush1.bf16.msra.mxu0 %v1093
      %1097 = vmatprep.subr.bf16.mxu0 0
      %1098 = vmatpush1.bf16.msra.mxu0 0
      %1099 = vmatprep.subr.bf16.mxu0 0
      %1100 = vmatpush1.bf16.msra.mxu0 0
      %1101 = vmatprep.subr.bf16.mxu0 0
      %1102 = vmatpush1.bf16.msra.mxu0 0
      %1103 = vmatprep.subr.bf16.mxu0 0
      %1104 = vmatpush1.bf16.msra.mxu0 0
      %1105 = vmatprep.subr.bf16.mxu0 0
      %1106 = vmatpush1.bf16.msra.mxu0 0
      %1107 = vmatprep.subr.bf16.mxu0 0
      %1108 = vmatpush1.bf16.msra.mxu0 0
      %1109 = vmatprep.subr.bf16.mxu0 0
      %1110 = vmatpush1.bf16.msra.mxu0 0
      %1111 = vmatprep.subr.bf16.mxu0 0
      %1112 = vmatpush1.bf16.msra.mxu0 0
      %1113 = vmatprep.subr.bf16.mxu0 0
      %1114 = vmatpush1.bf16.msra.mxu0 0
      %1115 = vmatprep.subr.bf16.mxu0 0
      %1116 = vmatpush1.bf16.msra.mxu0 0
      %1117 = vmatprep.subr.bf16.mxu0 0
      %1118 = vmatpush1.bf16.msra.mxu0 0
      %1119 = vmatprep.subr.bf16.mxu0 0
      %1120 = vmatpush1.bf16.msra.mxu0 0
      %1121 = vmatprep.subr.bf16.mxu0 0
      %1122 = vmatpush1.bf16.msra.mxu0 0
      %1123 = vmatprep.subr.bf16.mxu0 0
      %1124 = vmatpush1.bf16.msra.mxu0 0
      %1125 = vmatprep.subr.bf16.mxu0 0
      %1126 = vmatpush1.bf16.msra.mxu0 0
      %1127 = vmatprep.mubr.bf16.mxu0 0
      %1128 = vmatmul.mubr.bf16.gmra.mrb[0].mxu0 %v1090
      %v1129 = vpop.f32.mrb[0].mxu0
      %v1130 = vadd.f32 %v613, %v1129
      %v1131 = vpop.f32.mrb[0].mxu0
      %v1132 = vpop.f32.mrb[0].mxu0
      %v1133 = vpop.f32.mrb[0].mxu0
      %1134 = vdwg.mxu0
      %v1135 = vsel %vm762, %v1130, -inf
      %1136 = vmax.xlane.f32.xlu0 %v1135
      %v1137 = vpop.xlane.xlu0 %1136
      %v1138 = vsub.f32 %v1130, %v1137
      %v1139 = vmul.f32 %v1138, 1.442695
      %v1140 = vpow.pop %v1139
      %v1141 = vsel %vm762, %v1140, 0.0
      %1142 = vadd.xlane.f32.xlu0 %v1141
      %v1143 = vpop.xlane.xlu0 %1142
      %v1144 = vrcp.pop %v1143
      %v1145 = vmul.f32 %v1140, %v1144
      %v1146 = vpack.c.bf16 %v755, %v755
      %v1147 = vpack.c.bf16 %v1145, %v1145
      %v1149 = vsel %vm762, %v1146, 0
      %v1152 = vsel %vm762, %v1147, 0
      %1154 = vmatprep.subr.bf16.mxu0 0
      %1155 = vmatpush1.bf16.xpose.msra.mxu0 %v1152
      %1156 = vmatprep.subr.bf16.mxu0 0
      %1157 = vmatpush1.bf16.xpose.msra.mxu0 0
      %1158 = vmatprep.subr.bf16.mxu0 0
      %1159 = vmatpush1.bf16.xpose.msra.mxu0 0
      %1160 = vmatprep.subr.bf16.mxu0 0
      %1161 = vmatpush1.bf16.xpose.msra.mxu0 0
      %1162 = vmatprep.subr.bf16.mxu0 0
      %1163 = vmatpush1.bf16.xpose.msra.mxu0 0
      %1164 = vmatprep.subr.bf16.mxu0 0
      %1165 = vmatpush1.bf16.xpose.msra.mxu0 0
      %1166 = vmatprep.subr.bf16.mxu0 0
      %1167 = vmatpush1.bf16.xpose.msra.mxu0 0
      %1168 = vmatprep.subr.bf16.mxu0 0
      %1169 = vmatpush1.bf16.xpose.msra.mxu0 0
      %1170 = vmatprep.subr.bf16.mxu0 0
      %1171 = vmatpush1.bf16.xpose.msra.mxu0 0
      %1172 = vmatprep.subr.bf16.mxu0 0
      %1173 = vmatpush1.bf16.xpose.msra.mxu0 0
      %1174 = vmatprep.subr.bf16.mxu0 0
      %1175 = vmatpush1.bf16.xpose.msra.mxu0 0
      %1176 = vmatprep.subr.bf16.mxu0 0
      %1177 = vmatpush1.bf16.xpose.msra.mxu0 0
      %1178 = vmatprep.subr.bf16.mxu0 0
      %1179 = vmatpush1.bf16.xpose.msra.mxu0 0
      %1180 = vmatprep.subr.bf16.mxu0 0
      %1181 = vmatpush1.bf16.xpose.msra.mxu0 0
      %1182 = vmatprep.subr.bf16.mxu0 0
      %1183 = vmatpush1.bf16.xpose.msra.mxu0 0
      %1184 = vmatprep.subr.bf16.mxu0 0
      %1185 = vmatpush1.bf16.xpose.msra.mxu0 0
      %1186 = vmatprep.mubr.bf16.mxu0 0
      %1187 = vmatmul.mubr.bf16.gmra.mrb[0].mxu0 %v1149
      %v1188 = vpop.f32.mrb[0].mxu0
      %v1189 = vadd.f32 0.0, %v1188
      %v1190 = vpop.f32.mrb[0].mxu0
      %v1191 = vpop.f32.mrb[0].mxu0
      %v1192 = vpop.f32.mrb[0].mxu0
      %1193 = vdwg.mxu0
      %1194 = vxpose.xlu0.b32.start [1/16] %v864, 128
      %1195 = vxpose.xlu0.b32.cont [2/16] %v973, 128
      %1196 = vxpose.xlu0.b32.cont [3/16] %v1081, 128
      %1197 = vxpose.xlu0.b32.cont [4/16] %v1189, 128
      %1198 = vxpose.xlu0.b32.cont [5/16] 0.0, 128
      %1199 = vxpose.xlu0.b32.cont [6/16] 0.0, 128
      %1200 = vxpose.xlu0.b32.cont [7/16] 0.0, 128
      %1201 = vxpose.xlu0.b32.cont [8/16] 0.0, 128
      %1202 = vxpose.xlu0.b32.cont [9/16] 0.0, 128
      %1203 = vxpose.xlu0.b32.cont [10/16] 0.0, 128
      %1204 = vxpose.xlu0.b32.cont [11/16] 0.0, 128
      %1205 = vxpose.xlu0.b32.cont [12/16] 0.0, 128
      %1206 = vxpose.xlu0.b32.cont [13/16] 0.0, 128
      %1207 = vxpose.xlu0.b32.cont [14/16] 0.0, 128
      %1208 = vxpose.xlu0.b32.cont [15/16] 0.0, 128
      %1209 = vxpose.xlu0.b32.end [16/16] 0.0, 128
      %v1210 = vpop.trf.xlu0
      %v1211 = vpop.trf.xlu0
      %v1212 = vpop.trf.xlu0
      %v1213 = vpop.trf.xlu0
      %v1214 = vpop.trf.xlu0
      %v1215 = vpop.trf.xlu0
      %v1216 = vpop.trf.xlu0
      %v1217 = vpop.trf.xlu0
      %v1218 = vpop.trf.xlu0
      %v1219 = vpop.trf.xlu0
      %v1220 = vpop.trf.xlu0
      %v1221 = vpop.trf.xlu0
      %v1222 = vpop.trf.xlu0
      %v1223 = vpop.trf.xlu0
      %v1224 = vpop.trf.xlu0
      %v1225 = vpop.trf.xlu0
      %1226 = vxpose.xlu0.b32.start [1/16] %v725, 128
      %1227 = vxpose.xlu0.b32.cont [2/16] 0.0, 128
      %1228 = vxpose.xlu0.b32.cont [3/16] 0.0, 128
      %1229 = vxpose.xlu0.b32.cont [4/16] 0.0, 128
      %1230 = vxpose.xlu0.b32.cont [5/16] 0.0, 128
      %1231 = vxpose.xlu0.b32.cont [6/16] 0.0, 128
      %1232 = vxpose.xlu0.b32.cont [7/16] 0.0, 128
      %1233 = vxpose.xlu0.b32.cont [8/16] 0.0, 128
      %1234 = vxpose.xlu0.b32.cont [9/16] 0.0, 128
      %1235 = vxpose.xlu0.b32.cont [10/16] 0.0, 128
      %1236 = vxpose.xlu0.b32.cont [11/16] 0.0, 128
      %1237 = vxpose.xlu0.b32.cont [12/16] 0.0, 128
      %1238 = vxpose.xlu0.b32.cont [13/16] 0.0, 128
      %1239 = vxpose.xlu0.b32.cont [14/16] 0.0, 128
      %1240 = vxpose.xlu0.b32.cont [15/16] 0.0, 128
      %1241 = vxpose.xlu0.b32.end [16/16] 0.0, 128
      %v1242 = vpop.trf.xlu0
      %v1243 = vpop.trf.xlu0
      %v1244 = vpop.trf.xlu0
      %v1245 = vpop.trf.xlu0
      %v1246 = vpop.trf.xlu0
      %v1247 = vpop.trf.xlu0
      %v1248 = vpop.trf.xlu0
      %v1249 = vpop.trf.xlu0
      %v1250 = vpop.trf.xlu0
      %v1251 = vpop.trf.xlu0
      %v1252 = vpop.trf.xlu0
      %v1253 = vpop.trf.xlu0
      %v1254 = vpop.trf.xlu0
      %v1255 = vpop.trf.xlu0
      %v1256 = vpop.trf.xlu0
      %v1257 = vpop.trf.xlu0
      %v1258 = vpack.c.bf16 %v725, %v725
      %v1259 = vpack.c.bf16 %v1246, %v1246
      %v1261 = vsel %vm762, %v1258, 0
      %v1264 = vsel %vm766, %v1259, 0
      %1266 = vmatprep.subr.bf16.mxu0 0
      %1267 = vmatpush1.bf16.msra.mxu0 %v1264
      %1268 = vmatprep.subr.bf16.mxu0 0
      %1269 = vmatpush1.bf16.msra.mxu0 0
      %1270 = vmatprep.subr.bf16.mxu0 0
      %1271 = vmatpush1.bf16.msra.mxu0 0
      %1272 = vmatprep.subr.bf16.mxu0 0
      %1273 = vmatpush1.bf16.msra.mxu0 0
      %1274 = vmatprep.subr.bf16.mxu0 0
      %1275 = vmatpush1.bf16.msra.mxu0 0
      %1276 = vmatprep.subr.bf16.mxu0 0
      %1277 = vmatpush1.bf16.msra.mxu0 0
      %1278 = vmatprep.subr.bf16.mxu0 0
      %1279 = vmatpush1.bf16.msra.mxu0 0
      %1280 = vmatprep.subr.bf16.mxu0 0
      %1281 = vmatpush1.bf16.msra.mxu0 0
      %1282 = vmatprep.subr.bf16.mxu0 0
      %1283 = vmatpush1.bf16.msra.mxu0 0
      %1284 = vmatprep.subr.bf16.mxu0 0
      %1285 = vmatpush1.bf16.msra.mxu0 0
      %1286 = vmatprep.subr.bf16.mxu0 0
      %1287 = vmatpush1.bf16.msra.mxu0 0
      %1288 = vmatprep.subr.bf16.mxu0 0
      %1289 = vmatpush1.bf16.msra.mxu0 0
      %1290 = vmatprep.subr.bf16.mxu0 0
      %1291 = vmatpush1.bf16.msra.mxu0 0
      %1292 = vmatprep.subr.bf16.mxu0 0
      %1293 = vmatpush1.bf16.msra.mxu0 0
      %1294 = vmatprep.subr.bf16.mxu0 0
      %1295 = vmatpush1.bf16.msra.mxu0 0
      %1296 = vmatprep.subr.bf16.mxu0 0
      %1297 = vmatpush1.bf16.msra.mxu0 0
      %1298 = vmatprep.mubr.bf16.mxu0 0
      %1299 = vmatmul.mubr.bf16.gmra.mrb[0].mxu0 %v1261
      %v1300 = vpop.f32.mrb[0].mxu0
      %v1301 = vadd.f32 %v613, %v1300
      %v1302 = vpop.f32.mrb[0].mxu0
      %v1303 = vpop.f32.mrb[0].mxu0
      %v1304 = vpop.f32.mrb[0].mxu0
      %1305 = vdwg.mxu0
      %v1306 = vsel %vm762, %v1301, -inf
      %1307 = vmax.xlane.f32.xlu0 %v1306
      %v1308 = vpop.xlane.xlu0 %1307
      %v1309 = vsub.f32 %v1301, %v1308
      %v1310 = vmul.f32 %v1309, 1.442695
      %v1311 = vpow.pop %v1310
      %v1312 = vsel %vm762, %v1311, 0.0
      %1313 = vadd.xlane.f32.xlu0 %v1312
      %v1314 = vpop.xlane.xlu0 %1313
      %v1315 = vrcp.pop %v1314
      %v1316 = vmul.f32 %v1311, %v1315
      %v1317 = vpack.c.bf16 %v1250, %v1250
      %v1318 = vpack.c.bf16 %v1316, %v1316
      %v1320 = vsel %vm762, %v1317, 0
      %v1323 = vsel %vm762, %v1318, 0
      %1325 = vmatprep.subr.bf16.mxu0 0
      %1326 = vmatpush1.bf16.xpose.msra.mxu0 %v1323
      %1327 = vmatprep.subr.bf16.mxu0 0
      %1328 = vmatpush1.bf16.xpose.msra.mxu0 0
      %1329 = vmatprep.subr.bf16.mxu0 0
      %1330 = vmatpush1.bf16.xpose.msra.mxu0 0
      %1331 = vmatprep.subr.bf16.mxu0 0
      %1332 = vmatpush1.bf16.xpose.msra.mxu0 0
      %1333 = vmatprep.subr.bf16.mxu0 0
      %1334 = vmatpush1.bf16.xpose.msra.mxu0 0
      %1335 = vmatprep.subr.bf16.mxu0 0
      %1336 = vmatpush1.bf16.xpose.msra.mxu0 0
      %1337 = vmatprep.subr.bf16.mxu0 0
      %1338 = vmatpush1.bf16.xpose.msra.mxu0 0
      %1339 = vmatprep.subr.bf16.mxu0 0
      %1340 = vmatpush1.bf16.xpose.msra.mxu0 0
      %1341 = vmatprep.subr.bf16.mxu0 0
      %1342 = vmatpush1.bf16.xpose.msra.mxu0 0
      %1343 = vmatprep.subr.bf16.mxu0 0
      %1344 = vmatpush1.bf16.xpose.msra.mxu0 0
      %1345 = vmatprep.subr.bf16.mxu0 0
      %1346 = vmatpush1.bf16.xpose.msra.mxu0 0
      %1347 = vmatprep.subr.bf16.mxu0 0
      %1348 = vmatpush1.bf16.xpose.msra.mxu0 0
      %1349 = vmatprep.subr.bf16.mxu0 0
      %1350 = vmatpush1.bf16.xpose.msra.mxu0 0
      %1351 = vmatprep.subr.bf16.mxu0 0
      %1352 = vmatpush1.bf16.xpose.msra.mxu0 0
      %1353 = vmatprep.subr.bf16.mxu0 0
      %1354 = vmatpush1.bf16.xpose.msra.mxu0 0
      %1355 = vmatprep.subr.bf16.mxu0 0
      %1356 = vmatpush1.bf16.xpose.msra.mxu0 0
      %1357 = vmatprep.mubr.bf16.mxu0 0
      %1358 = vmatmul.mubr.bf16.gmra.mrb[0].mxu0 %v1320
      %v1359 = vpop.f32.mrb[0].mxu0
      %v1360 = vadd.f32 0.0, %v1359
      %v1361 = vpop.f32.mrb[0].mxu0
      %v1362 = vpop.f32.mrb[0].mxu0
      %v1363 = vpop.f32.mrb[0].mxu0
      %1364 = vdwg.mxu0
      %v1365 = vpack.c.bf16 %v1247, %v1247
      %1367 = vrot.lane.b32.xlu0 %v1258, 120
      %v1368 = vpop.permute.xlu0 %1367
      %v1370 = vsel %vm762, %v1368, 0
      %v1373 = vsel %vm766, %v1365, 0
      %1375 = vmatprep.subr.bf16.mxu0 0
      %1376 = vmatpush1.bf16.msra.mxu0 %v1373
      %1377 = vmatprep.subr.bf16.mxu0 0
      %1378 = vmatpush1.bf16.msra.mxu0 0
      %1379 = vmatprep.subr.bf16.mxu0 0
      %1380 = vmatpush1.bf16.msra.mxu0 0
      %1381 = vmatprep.subr.bf16.mxu0 0
      %1382 = vmatpush1.bf16.msra.mxu0 0
      %1383 = vmatprep.subr.bf16.mxu0 0
      %1384 = vmatpush1.bf16.msra.mxu0 0
      %1385 = vmatprep.subr.bf16.mxu0 0
      %1386 = vmatpush1.bf16.msra.mxu0 0
      %1387 = vmatprep.subr.bf16.mxu0 0
      %1388 = vmatpush1.bf16.msra.mxu0 0
      %1389 = vmatprep.subr.bf16.mxu0 0
      %1390 = vmatpush1.bf16.msra.mxu0 0
      %1391 = vmatprep.subr.bf16.mxu0 0
      %1392 = vmatpush1.bf16.msra.mxu0 0
      %1393 = vmatprep.subr.bf16.mxu0 0
      %1394 = vmatpush1.bf16.msra.mxu0 0
      %1395 = vmatprep.subr.bf16.mxu0 0
      %1396 = vmatpush1.bf16.msra.mxu0 0
      %1397 = vmatprep.subr.bf16.mxu0 0
      %1398 = vmatpush1.bf16.msra.mxu0 0
      %1399 = vmatprep.subr.bf16.mxu0 0
      %1400 = vmatpush1.bf16.msra.mxu0 0
      %1401 = vmatprep.subr.bf16.mxu0 0
      %1402 = vmatpush1.bf16.msra.mxu0 0
      %1403 = vmatprep.subr.bf16.mxu0 0
      %1404 = vmatpush1.bf16.msra.mxu0 0
      %1405 = vmatprep.subr.bf16.mxu0 0
      %1406 = vmatpush1.bf16.msra.mxu0 0
      %1407 = vmatprep.mubr.bf16.mxu0 0
      %1408 = vmatmul.mubr.bf16.gmra.mrb[0].mxu0 %v1370
      %v1409 = vpop.f32.mrb[0].mxu0
      %v1410 = vadd.f32 %v613, %v1409
      %v1411 = vpop.f32.mrb[0].mxu0
      %v1412 = vpop.f32.mrb[0].mxu0
      %v1413 = vpop.f32.mrb[0].mxu0
      %1414 = vdwg.mxu0
      %v1415 = vsel %vm762, %v1410, -inf
      %1416 = vmax.xlane.f32.xlu0 %v1415
      %v1417 = vpop.xlane.xlu0 %1416
      %v1418 = vsub.f32 %v1410, %v1417
      %v1419 = vmul.f32 %v1418, 1.442695
      %v1420 = vpow.pop %v1419
      %v1421 = vsel %vm762, %v1420, 0.0
      %1422 = vadd.xlane.f32.xlu0 %v1421
      %v1423 = vpop.xlane.xlu0 %1422
      %v1424 = vrcp.pop %v1423
      %v1425 = vmul.f32 %v1420, %v1424
      %v1426 = vpack.c.bf16 %v1251, %v1251
      %v1427 = vpack.c.bf16 %v1425, %v1425
      %v1429 = vsel %vm762, %v1426, 0
      %v1432 = vsel %vm762, %v1427, 0
      %1434 = vmatprep.subr.bf16.mxu0 0
      %1435 = vmatpush1.bf16.xpose.msra.mxu0 %v1432
      %1436 = vmatprep.subr.bf16.mxu0 0
      %1437 = vmatpush1.bf16.xpose.msra.mxu0 0
      %1438 = vmatprep.subr.bf16.mxu0 0
      %1439 = vmatpush1.bf16.xpose.msra.mxu0 0
      %1440 = vmatprep.subr.bf16.mxu0 0
      %1441 = vmatpush1.bf16.xpose.msra.mxu0 0
      %1442 = vmatprep.subr.bf16.mxu0 0
      %1443 = vmatpush1.bf16.xpose.msra.mxu0 0
      %1444 = vmatprep.subr.bf16.mxu0 0
      %1445 = vmatpush1.bf16.xpose.msra.mxu0 0
      %1446 = vmatprep.subr.bf16.mxu0 0
      %1447 = vmatpush1.bf16.xpose.msra.mxu0 0
      %1448 = vmatprep.subr.bf16.mxu0 0
      %1449 = vmatpush1.bf16.xpose.msra.mxu0 0
      %1450 = vmatprep.subr.bf16.mxu0 0
      %1451 = vmatpush1.bf16.xpose.msra.mxu0 0
      %1452 = vmatprep.subr.bf16.mxu0 0
      %1453 = vmatpush1.bf16.xpose.msra.mxu0 0
      %1454 = vmatprep.subr.bf16.mxu0 0
      %1455 = vmatpush1.bf16.xpose.msra.mxu0 0
      %1456 = vmatprep.subr.bf16.mxu0 0
      %1457 = vmatpush1.bf16.xpose.msra.mxu0 0
      %1458 = vmatprep.subr.bf16.mxu0 0
      %1459 = vmatpush1.bf16.xpose.msra.mxu0 0
      %1460 = vmatprep.subr.bf16.mxu0 0
      %1461 = vmatpush1.bf16.xpose.msra.mxu0 0
      %1462 = vmatprep.subr.bf16.mxu0 0
      %1463 = vmatpush1.bf16.xpose.msra.mxu0 0
      %1464 = vmatprep.subr.bf16.mxu0 0
      %1465 = vmatpush1.bf16.xpose.msra.mxu0 0
      %1466 = vmatprep.mubr.bf16.mxu0 0
      %1467 = vmatmul.mubr.bf16.gmra.mrb[0].mxu0 %v1429
      %v1468 = vpop.f32.mrb[0].mxu0
      %v1469 = vadd.f32 0.0, %v1468
      %v1470 = vpop.f32.mrb[0].mxu0
      %v1471 = vpop.f32.mrb[0].mxu0
      %v1472 = vpop.f32.mrb[0].mxu0
      %1473 = vdwg.mxu0
      %v1474 = vpack.c.bf16 %v1248, %v1248
      %1475 = vrot.lane.b32.xlu0 %v1258, 112
      %v1476 = vpop.permute.xlu0 %1475
      %v1478 = vsel %vm762, %v1476, 0
      %v1481 = vsel %vm766, %v1474, 0
      %1483 = vmatprep.subr.bf16.mxu0 0
      %1484 = vmatpush1.bf16.msra.mxu0 %v1481
      %1485 = vmatprep.subr.bf16.mxu0 0
      %1486 = vmatpush1.bf16.msra.mxu0 0
      %1487 = vmatprep.subr.bf16.mxu0 0
      %1488 = vmatpush1.bf16.msra.mxu0 0
      %1489 = vmatprep.subr.bf16.mxu0 0
      %1490 = vmatpush1.bf16.msra.mxu0 0
      %1491 = vmatprep.subr.bf16.mxu0 0
      %1492 = vmatpush1.bf16.msra.mxu0 0
      %1493 = vmatprep.subr.bf16.mxu0 0
      %1494 = vmatpush1.bf16.msra.mxu0 0
      %1495 = vmatprep.subr.bf16.mxu0 0
      %1496 = vmatpush1.bf16.msra.mxu0 0
      %1497 = vmatprep.subr.bf16.mxu0 0
      %1498 = vmatpush1.bf16.msra.mxu0 0
      %1499 = vmatprep.subr.bf16.mxu0 0
      %1500 = vmatpush1.bf16.msra.mxu0 0
      %1501 = vmatprep.subr.bf16.mxu0 0
      %1502 = vmatpush1.bf16.msra.mxu0 0
      %1503 = vmatprep.subr.bf16.mxu0 0
      %1504 = vmatpush1.bf16.msra.mxu0 0
      %1505 = vmatprep.subr.bf16.mxu0 0
      %1506 = vmatpush1.bf16.msra.mxu0 0
      %1507 = vmatprep.subr.bf16.mxu0 0
      %1508 = vmatpush1.bf16.msra.mxu0 0
      %1509 = vmatprep.subr.bf16.mxu0 0
      %1510 = vmatpush1.bf16.msra.mxu0 0
      %1511 = vmatprep.subr.bf16.mxu0 0
      %1512 = vmatpush1.bf16.msra.mxu0 0
      %1513 = vmatprep.subr.bf16.mxu0 0
      %1514 = vmatpush1.bf16.msra.mxu0 0
      %1515 = vmatprep.mubr.bf16.mxu0 0
      %1516 = vmatmul.mubr.bf16.gmra.mrb[0].mxu0 %v1478
      %v1517 = vpop.f32.mrb[0].mxu0
      %v1518 = vadd.f32 %v613, %v1517
      %v1519 = vpop.f32.mrb[0].mxu0
      %v1520 = vpop.f32.mrb[0].mxu0
      %v1521 = vpop.f32.mrb[0].mxu0
      %1522 = vdwg.mxu0
      %v1523 = vsel %vm762, %v1518, -inf
      %1524 = vmax.xlane.f32.xlu0 %v1523
      %v1525 = vpop.xlane.xlu0 %1524
      %v1526 = vsub.f32 %v1518, %v1525
      %v1527 = vmul.f32 %v1526, 1.442695
      %v1528 = vpow.pop %v1527
      %v1529 = vsel %vm762, %v1528, 0.0
      %1530 = vadd.xlane.f32.xlu0 %v1529
      %v1531 = vpop.xlane.xlu0 %1530
      %v1532 = vrcp.pop %v1531
      %v1533 = vmul.f32 %v1528, %v1532
      %v1534 = vpack.c.bf16 %v1252, %v1252
      %v1535 = vpack.c.bf16 %v1533, %v1533
      %v1537 = vsel %vm762, %v1534, 0
      %v1540 = vsel %vm762, %v1535, 0
      %1542 = vmatprep.subr.bf16.mxu0 0
      %1543 = vmatpush1.bf16.xpose.msra.mxu0 %v1540
      %1544 = vmatprep.subr.bf16.mxu0 0
      %1545 = vmatpush1.bf16.xpose.msra.mxu0 0
      %1546 = vmatprep.subr.bf16.mxu0 0
      %1547 = vmatpush1.bf16.xpose.msra.mxu0 0
      %1548 = vmatprep.subr.bf16.mxu0 0
      %1549 = vmatpush1.bf16.xpose.msra.mxu0 0
      %1550 = vmatprep.subr.bf16.mxu0 0
      %1551 = vmatpush1.bf16.xpose.msra.mxu0 0
      %1552 = vmatprep.subr.bf16.mxu0 0
      %1553 = vmatpush1.bf16.xpose.msra.mxu0 0
      %1554 = vmatprep.subr.bf16.mxu0 0
      %1555 = vmatpush1.bf16.xpose.msra.mxu0 0
      %1556 = vmatprep.subr.bf16.mxu0 0
      %1557 = vmatpush1.bf16.xpose.msra.mxu0 0
      %1558 = vmatprep.subr.bf16.mxu0 0
      %1559 = vmatpush1.bf16.xpose.msra.mxu0 0
      %1560 = vmatprep.subr.bf16.mxu0 0
      %1561 = vmatpush1.bf16.xpose.msra.mxu0 0
      %1562 = vmatprep.subr.bf16.mxu0 0
      %1563 = vmatpush1.bf16.xpose.msra.mxu0 0
      %1564 = vmatprep.subr.bf16.mxu0 0
      %1565 = vmatpush1.bf16.xpose.msra.mxu0 0
      %1566 = vmatprep.subr.bf16.mxu0 0
      %1567 = vmatpush1.bf16.xpose.msra.mxu0 0
      %1568 = vmatprep.subr.bf16.mxu0 0
      %1569 = vmatpush1.bf16.xpose.msra.mxu0 0
      %1570 = vmatprep.subr.bf16.mxu0 0
      %1571 = vmatpush1.bf16.xpose.msra.mxu0 0
      %1572 = vmatprep.subr.bf16.mxu0 0
      %1573 = vmatpush1.bf16.xpose.msra.mxu0 0
      %1574 = vmatprep.mubr.bf16.mxu0 0
      %1575 = vmatmul.mubr.bf16.gmra.mrb[0].mxu0 %v1537
      %v1576 = vpop.f32.mrb[0].mxu0
      %v1577 = vadd.f32 0.0, %v1576
      %v1578 = vpop.f32.mrb[0].mxu0
      %v1579 = vpop.f32.mrb[0].mxu0
      %v1580 = vpop.f32.mrb[0].mxu0
      %1581 = vdwg.mxu0
      %v1582 = vpack.c.bf16 %v1249, %v1249
      %1583 = vrot.lane.b32.xlu0 %v1258, 104
      %v1584 = vpop.permute.xlu0 %1583
      %v1586 = vsel %vm762, %v1584, 0
      %v1589 = vsel %vm766, %v1582, 0
      %1591 = vmatprep.subr.bf16.mxu0 0
      %1592 = vmatpush1.bf16.msra.mxu0 %v1589
      %1593 = vmatprep.subr.bf16.mxu0 0
      %1594 = vmatpush1.bf16.msra.mxu0 0
      %1595 = vmatprep.subr.bf16.mxu0 0
      %1596 = vmatpush1.bf16.msra.mxu0 0
      %1597 = vmatprep.subr.bf16.mxu0 0
      %1598 = vmatpush1.bf16.msra.mxu0 0
      %1599 = vmatprep.subr.bf16.mxu0 0
      %1600 = vmatpush1.bf16.msra.mxu0 0
      %1601 = vmatprep.subr.bf16.mxu0 0
      %1602 = vmatpush1.bf16.msra.mxu0 0
      %1603 = vmatprep.subr.bf16.mxu0 0
      %1604 = vmatpush1.bf16.msra.mxu0 0
      %1605 = vmatprep.subr.bf16.mxu0 0
      %1606 = vmatpush1.bf16.msra.mxu0 0
      %1607 = vmatprep.subr.bf16.mxu0 0
      %1608 = vmatpush1.bf16.msra.mxu0 0
      %1609 = vmatprep.subr.bf16.mxu0 0
      %1610 = vmatpush1.bf16.msra.mxu0 0
      %1611 = vmatprep.subr.bf16.mxu0 0
      %1612 = vmatpush1.bf16.msra.mxu0 0
      %1613 = vmatprep.subr.bf16.mxu0 0
      %1614 = vmatpush1.bf16.msra.mxu0 0
      %1615 = vmatprep.subr.bf16.mxu0 0
      %1616 = vmatpush1.bf16.msra.mxu0 0
      %1617 = vmatprep.subr.bf16.mxu0 0
      %1618 = vmatpush1.bf16.msra.mxu0 0
      %1619 = vmatprep.subr.bf16.mxu0 0
      %1620 = vmatpush1.bf16.msra.mxu0 0
      %1621 = vmatprep.subr.bf16.mxu0 0
      %1622 = vmatpush1.bf16.msra.mxu0 0
      %1623 = vmatprep.mubr.bf16.mxu0 0
      %1624 = vmatmul.mubr.bf16.gmra.mrb[0].mxu0 %v1586
      %v1625 = vpop.f32.mrb[0].mxu0
      %v1626 = vadd.f32 %v613, %v1625
      %v1627 = vpop.f32.mrb[0].mxu0
      %v1628 = vpop.f32.mrb[0].mxu0
      %v1629 = vpop.f32.mrb[0].mxu0
      %1630 = vdwg.mxu0
      %v1631 = vsel %vm762, %v1626, -inf
      %1632 = vmax.xlane.f32.xlu0 %v1631
      %v1633 = vpop.xlane.xlu0 %1632
      %v1634 = vsub.f32 %v1626, %v1633
      %v1635 = vmul.f32 %v1634, 1.442695
      %v1636 = vpow.pop %v1635
      %v1637 = vsel %vm762, %v1636, 0.0
      %1638 = vadd.xlane.f32.xlu0 %v1637
      %v1639 = vpop.xlane.xlu0 %1638
      %v1640 = vrcp.pop %v1639
      %v1641 = vmul.f32 %v1636, %v1640
      %v1642 = vpack.c.bf16 %v1253, %v1253
      %v1643 = vpack.c.bf16 %v1641, %v1641
      %v1645 = vsel %vm762, %v1642, 0
      %v1648 = vsel %vm762, %v1643, 0
      %1650 = vmatprep.subr.bf16.mxu0 0
      %1651 = vmatpush1.bf16.xpose.msra.mxu0 %v1648
      %1652 = vmatprep.subr.bf16.mxu0 0
      %1653 = vmatpush1.bf16.xpose.msra.mxu0 0
      %1654 = vmatprep.subr.bf16.mxu0 0
      %1655 = vmatpush1.bf16.xpose.msra.mxu0 0
      %1656 = vmatprep.subr.bf16.mxu0 0
      %1657 = vmatpush1.bf16.xpose.msra.mxu0 0
      %1658 = vmatprep.subr.bf16.mxu0 0
      %1659 = vmatpush1.bf16.xpose.msra.mxu0 0
      %1660 = vmatprep.subr.bf16.mxu0 0
      %1661 = vmatpush1.bf16.xpose.msra.mxu0 0
      %1662 = vmatprep.subr.bf16.mxu0 0
      %1663 = vmatpush1.bf16.xpose.msra.mxu0 0
      %1664 = vmatprep.subr.bf16.mxu0 0
      %1665 = vmatpush1.bf16.xpose.msra.mxu0 0
      %1666 = vmatprep.subr.bf16.mxu0 0
      %1667 = vmatpush1.bf16.xpose.msra.mxu0 0
      %1668 = vmatprep.subr.bf16.mxu0 0
      %1669 = vmatpush1.bf16.xpose.msra.mxu0 0
      %1670 = vmatprep.subr.bf16.mxu0 0
      %1671 = vmatpush1.bf16.xpose.msra.mxu0 0
      %1672 = vmatprep.subr.bf16.mxu0 0
      %1673 = vmatpush1.bf16.xpose.msra.mxu0 0
      %1674 = vmatprep.subr.bf16.mxu0 0
      %1675 = vmatpush1.bf16.xpose.msra.mxu0 0
      %1676 = vmatprep.subr.bf16.mxu0 0
      %1677 = vmatpush1.bf16.xpose.msra.mxu0 0
      %1678 = vmatprep.subr.bf16.mxu0 0
      %1679 = vmatpush1.bf16.xpose.msra.mxu0 0
      %1680 = vmatprep.subr.bf16.mxu0 0
      %1681 = vmatpush1.bf16.xpose.msra.mxu0 0
      %1682 = vmatprep.mubr.bf16.mxu0 0
      %1683 = vmatmul.mubr.bf16.gmra.mrb[0].mxu0 %v1645
      %v1684 = vpop.f32.mrb[0].mxu0
      %v1685 = vadd.f32 0.0, %v1684
      %v1686 = vpop.f32.mrb[0].mxu0
      %v1687 = vpop.f32.mrb[0].mxu0
      %v1688 = vpop.f32.mrb[0].mxu0
      %1689 = vdwg.mxu0
      %1690 = vxpose.xlu0.b32.start [1/16] %v1360, 128
      %1691 = vxpose.xlu0.b32.cont [2/16] %v1469, 128
      %1692 = vxpose.xlu0.b32.cont [3/16] %v1577, 128
      %1693 = vxpose.xlu0.b32.cont [4/16] %v1685, 128
      %1694 = vxpose.xlu0.b32.cont [5/16] 0.0, 128
      %1695 = vxpose.xlu0.b32.cont [6/16] 0.0, 128
      %1696 = vxpose.xlu0.b32.cont [7/16] 0.0, 128
      %1697 = vxpose.xlu0.b32.cont [8/16] 0.0, 128
      %1698 = vxpose.xlu0.b32.cont [9/16] 0.0, 128
      %1699 = vxpose.xlu0.b32.cont [10/16] 0.0, 128
      %1700 = vxpose.xlu0.b32.cont [11/16] 0.0, 128
      %1701 = vxpose.xlu0.b32.cont [12/16] 0.0, 128
      %1702 = vxpose.xlu0.b32.cont [13/16] 0.0, 128
      %1703 = vxpose.xlu0.b32.cont [14/16] 0.0, 128
      %1704 = vxpose.xlu0.b32.cont [15/16] 0.0, 128
      %1705 = vxpose.xlu0.b32.end [16/16] 0.0, 128
      %v1706 = vpop.trf.xlu0
      %v1707 = vpop.trf.xlu0
      %v1708 = vpop.trf.xlu0
      %v1709 = vpop.trf.xlu0
      %v1710 = vpop.trf.xlu0
      %v1711 = vpop.trf.xlu0
      %v1712 = vpop.trf.xlu0
      %v1713 = vpop.trf.xlu0
      %v1714 = vpop.trf.xlu0
      %v1715 = vpop.trf.xlu0
      %v1716 = vpop.trf.xlu0
      %v1717 = vpop.trf.xlu0
      %v1718 = vpop.trf.xlu0
      %v1719 = vpop.trf.xlu0
      %v1720 = vpop.trf.xlu0
      %v1721 = vpop.trf.xlu0
      %v1722 = vpack.c.bf16 %v1706, %v1210
      %v1723 = vld [vmem:[%s572] sm:$0xf]
      %v1724 = vld [vmem:[%s572 + $0x4] sm:$0xf]
      %v1725 = vld [vmem:[%s572 + $0x8] sm:$0xf]
      %v1726 = vld [vmem:[%s572 + $0xc] sm:$0xf]
      %v1727 = vld [vmem:[%s575] sm:$0x1]
      %v1729 = vlaneseq
      %v1730 = vshrl.u32 %v1729, 7
      %v1731 = vsub.s32 0, %v1730
      %v1732 = vrot.slane %v1727, %v1731
      %v1738 = vunpack.c.l.b16 %v1723
      %v1739 = vunpack.c.l.b16 %v1724
      %v1740 = vunpack.c.l.b16 %v1725
      %v1741 = vunpack.c.l.b16 %v1726
      %v1742 = vpack.c.b16 %v1739, %v1738
      %v1743 = vpack.c.b16 %v1741, %v1740
      %v1747 = vsel %vm616, %v1722, 0
      %1749 = vmatprep.subr.bf16.mxu0 0
      %1750 = vmatpush1.bf16.msra.mxu0 %v1742
      %1751 = vmatprep.subr.bf16.mxu0 0
      %1752 = vmatpush1.bf16.msra.mxu0 %v1743
      %1753 = vmatprep.subr.bf16.mxu0 0
      %1754 = vmatpush1.bf16.msra.mxu0 0
      %1755 = vmatprep.subr.bf16.mxu0 0
      %1756 = vmatpush1.bf16.msra.mxu0 0
      %1757 = vmatprep.subr.bf16.mxu0 0
      %1758 = vmatpush1.bf16.msra.mxu0 0
      %1759 = vmatprep.subr.bf16.mxu0 0
      %1760 = vmatpush1.bf16.msra.mxu0 0
      %1761 = vmatprep.subr.bf16.mxu0 0
      %1762 = vmatpush1.bf16.msra.mxu0 0
      %1763 = vmatprep.subr.bf16.mxu0 0
      %1764 = vmatpush1.bf16.msra.mxu0 0
      %1765 = vmatprep.subr.bf16.mxu0 0
      %1766 = vmatpush1.bf16.msra.mxu0 0
      %1767 = vmatprep.subr.bf16.mxu0 0
      %1768 = vmatpush1.bf16.msra.mxu0 0
      %1769 = vmatprep.subr.bf16.mxu0 0
      %1770 = vmatpush1.bf16.msra.mxu0 0
      %1771 = vmatprep.subr.bf16.mxu0 0
      %1772 = vmatpush1.bf16.msra.mxu0 0
      %1773 = vmatprep.subr.bf16.mxu0 0
      %1774 = vmatpush1.bf16.msra.mxu0 0
      %1775 = vmatprep.subr.bf16.mxu0 0
      %1776 = vmatpush1.bf16.msra.mxu0 0
      %1777 = vmatprep.subr.bf16.mxu0 0
      %1778 = vmatpush1.bf16.msra.mxu0 0
      %1779 = vmatprep.subr.bf16.mxu0 0
      %1780 = vmatpush1.bf16.msra.mxu0 0
      %1781 = vmatprep.mubr.bf16.mxu0 0
      %1782 = vmatmul.mubr.bf16.gmra.mrb[0].mxu0 %v1747
      %v1783 = vpop.f32.mrb[0].mxu0
      %v1784 = vadd.f32 %v1732, %v1783
      %v1785 = vpop.f32.mrb[0].mxu0
      %v1786 = vpop.f32.mrb[0].mxu0
      %v1787 = vadd.f32 %v1732, %v1786
      %v1788 = vpop.f32.mrb[0].mxu0
      %1789 = vdwg.mxu0
      %v1790 = vadd.f32 %v608, %v1784
      %v1791 = vadd.f32 %v609, %v1787
      %v1792 = vld [vmem:[%s578] sm:$0x1]
      %v1793 = vld [vmem:[%s581] sm:$0x1]
      %v1794 = vsel %vm616, %v1790, 0.0
      %1795 = vadd.xlane.f32.xlu0 %v1794
      %v1796 = vpop.xlane.xlu0 %1795
      %v1797 = vsel %vm616, %v1791, 0.0
      %1798 = vadd.xlane.f32.xlu0 %v1797
      %v1799 = vpop.xlane.xlu0 %1798
      %v1800 = vmul.f32 %v1796, %v623
      %v1801 = vmul.f32 %v1799, %v623
      %v1802 = vsub.f32 %v1790, %v1800
      %v1803 = vsub.f32 %v1791, %v1801
      %v1804 = vmul.f32 %v1802, %v1802
      %v1805 = vmul.f32 %v1803, %v1803
      %v1806 = vsel %vm616, %v1804, 0.0
      %1807 = vadd.xlane.f32.xlu0 %v1806
      %v1808 = vpop.xlane.xlu0 %1807
      %v1809 = vsel %vm616, %v1805, 0.0
      %1810 = vadd.xlane.f32.xlu0 %v1809
      %v1811 = vpop.xlane.xlu0 %1810
      %v1812 = vmul.f32 %v1808, %v623
      %v1813 = vmul.f32 %v1811, %v623
      %v1814 = vadd.f32 %v1812, 1e-05
      %v1815 = vadd.f32 %v1813, 1e-05
      %v1816 = vrsqrt.pop %v1814
      %v1817 = vrsqrt.pop %v1815
      %v1818 = vmul.f32 %v1802, %v1816
      %v1819 = vmul.f32 %v1803, %v1817
      %v1821 = vlaneseq
      %v1822 = vshrl.u32 %v1821, 7
      %v1823 = vsub.s32 0, %v1822
      %v1824 = vrot.slane %v1792, %v1823
      %v1826 = vmul.f32 %v1818, %v1824
      %v1827 = vmul.f32 %v1819, %v1824
      %v1829 = vlaneseq
      %v1830 = vshrl.u32 %v1829, 7
      %v1831 = vsub.s32 0, %v1830
      %v1832 = vrot.slane %v1793, %v1831
      %v1834 = vadd.f32 %v1826, %v1832
      %v1835 = vadd.f32 %v1827, %v1832
      %v1836 = vpack.c.bf16 %v1835, %v1834
      %v1837 = vld [vmem:[%s586] sm:$0xf]
      %v1838 = vld [vmem:[%s586 + $0x4] sm:$0xf]
      %v1839 = vld [vmem:[%s586 + $0x8] sm:$0xf]
      %v1840 = vld [vmem:[%s586 + $0xc] sm:$0xf]
      %v1841 = vld [vmem:[%s589] sm:$0x1]
      %v1843 = vlaneseq
      %v1844 = vshrl.u32 %v1843, 7
      %v1845 = vsub.s32 0, %v1844
      %v1846 = vrot.slane %v1841, %v1845
      %v1852 = vunpack.c.l.b16 %v1837
      %v1853 = vunpack.c.l.b16 %v1838
      %v1854 = vunpack.c.l.b16 %v1839
      %v1855 = vunpack.c.l.b16 %v1840
      %v1856 = vpack.c.b16 %v1853, %v1852
      %v1857 = vpack.c.b16 %v1855, %v1854
      %v1861 = vsel %vm616, %v1836, 0
      %1863 = vmatprep.subr.bf16.mxu0 0
      %1864 = vmatpush1.bf16.msra.mxu0 %v1856
      %1865 = vmatprep.subr.bf16.mxu0 0
      %1866 = vmatpush1.bf16.msra.mxu0 %v1857
      %1867 = vmatprep.subr.bf16.mxu0 0
      %1868 = vmatpush1.bf16.msra.mxu0 0
      %1869 = vmatprep.subr.bf16.mxu0 0
      %1870 = vmatpush1.bf16.msra.mxu0 0
      %1871 = vmatprep.subr.bf16.mxu0 0
      %1872 = vmatpush1.bf16.msra.mxu0 0
      %1873 = vmatprep.subr.bf16.mxu0 0
      %1874 = vmatpush1.bf16.msra.mxu0 0
      %1875 = vmatprep.subr.bf16.mxu0 0
      %1876 = vmatpush1.bf16.msra.mxu0 0
      %1877 = vmatprep.subr.bf16.mxu0 0
      %1878 = vmatpush1.bf16.msra.mxu0 0
      %1879 = vmatprep.subr.bf16.mxu0 0
      %1880 = vmatpush1.bf16.msra.mxu0 0
      %1881 = vmatprep.subr.bf16.mxu0 0
      %1882 = vmatpush1.bf16.msra.mxu0 0
      %1883 = vmatprep.subr.bf16.mxu0 0
      %1884 = vmatpush1.bf16.msra.mxu0 0
      %1885 = vmatprep.subr.bf16.mxu0 0
      %1886 = vmatpush1.bf16.msra.mxu0 0
      %1887 = vmatprep.subr.bf16.mxu0 0
      %1888 = vmatpush1.bf16.msra.mxu0 0
      %1889 = vmatprep.subr.bf16.mxu0 0
      %1890 = vmatpush1.bf16.msra.mxu0 0
      %1891 = vmatprep.subr.bf16.mxu0 0
      %1892 = vmatpush1.bf16.msra.mxu0 0
      %1893 = vmatprep.subr.bf16.mxu0 0
      %1894 = vmatpush1.bf16.msra.mxu0 0
      %1895 = vmatprep.mubr.bf16.mxu0 0
      %1896 = vmatmul.mubr.bf16.gmra.mrb[0].mxu0 %v1861
      %v1897 = vpop.f32.mrb[0].mxu0
      %v1898 = vadd.f32 %v1846, %v1897
      %v1899 = vpop.f32.mrb[0].mxu0
      %v1900 = vpop.f32.mrb[0].mxu0
      %v1901 = vadd.f32 %v1846, %v1900
      %v1902 = vpop.f32.mrb[0].mxu0
      %1903 = vdwg.mxu0
      %v1904 = vmul.f32 %v1898, 0.5
      %v1905 = vmul.f32 %v1901, 0.5
      %v1906 = vmul.f32 %v1898, 0.044715
      %v1907 = vmul.f32 %v1901, 0.044715
      %v1908 = vmul.f32 %v1906, %v1898
      %v1909 = vmul.f32 %v1907, %v1901
      %v1910 = vmul.f32 %v1908, %v1898
      %v1911 = vmul.f32 %v1909, %v1901
      %v1912 = vadd.f32 %v1898, %v1910
      %v1913 = vadd.f32 %v1901, %v1911
      %v1914 = vmul.f32 %v1912, 0.7978846
      %v1915 = vmul.f32 %v1913, 0.7978846
      %v1916 = vtanh.pop %v1914
      %v1917 = vtanh.pop %v1915
      %v1918 = vadd.f32 %v1916, 1.0
      %v1919 = vadd.f32 %v1917, 1.0
      %v1920 = vmul.f32 %v1904, %v1918
      %v1921 = vmul.f32 %v1905, %v1919
      %v1922 = vpack.c.bf16 %v1921, %v1920
      %v1923 = vld [vmem:[%s594] sm:$0xf]
      %v1924 = vld [vmem:[%s594 + $0x4] sm:$0xf]
      %v1925 = vld [vmem:[%s594 + $0x8] sm:$0xf]
      %v1926 = vld [vmem:[%s594 + $0xc] sm:$0xf]
      %v1927 = vld [vmem:[%s594 + $0x10] sm:$0xf]
      %v1928 = vld [vmem:[%s594 + $0x14] sm:$0xf]
      %v1929 = vld [vmem:[%s594 + $0x18] sm:$0xf]
      %v1930 = vld [vmem:[%s594 + $0x1c] sm:$0xf]
      %v1931 = vld [vmem:[%s594 + $0x20] sm:$0xf]
      %v1932 = vld [vmem:[%s594 + $0x24] sm:$0xf]
      %v1933 = vld [vmem:[%s594 + $0x28] sm:$0xf]
      %v1934 = vld [vmem:[%s594 + $0x2c] sm:$0xf]
      %v1935 = vld [vmem:[%s594 + $0x30] sm:$0xf]
      %v1936 = vld [vmem:[%s594 + $0x34] sm:$0xf]
      %v1937 = vld [vmem:[%s594 + $0x38] sm:$0xf]
      %v1938 = vld [vmem:[%s594 + $0x3c] sm:$0xf]
      %v1939 = vld [vmem:[%s597] sm:$0x1]
      %v1941 = vlaneseq
      %v1942 = vshrl.u32 %v1941, 7
      %v1943 = vsub.s32 0, %v1942
      %v1944 = vrot.slane %v1939, %v1943
      %v1962 = vunpack.c.l.b16 %v1923
      %v1963 = vunpack.c.l.b16 %v1924
      %v1964 = vunpack.c.l.b16 %v1925
      %v1965 = vunpack.c.l.b16 %v1926
      %v1966 = vunpack.c.l.b16 %v1927
      %v1967 = vunpack.c.l.b16 %v1928
      %v1968 = vunpack.c.l.b16 %v1929
      %v1969 = vunpack.c.l.b16 %v1930
      %v1970 = vunpack.c.l.b16 %v1931
      %v1971 = vunpack.c.l.b16 %v1932
      %v1972 = vunpack.c.l.b16 %v1933
      %v1973 = vunpack.c.l.b16 %v1934
      %v1974 = vunpack.c.l.b16 %v1935
      %v1975 = vunpack.c.l.b16 %v1936
      %v1976 = vunpack.c.l.b16 %v1937
      %v1977 = vunpack.c.l.b16 %v1938
      %v1978 = vpack.c.b16 %v1963, %v1962
      %v1979 = vpack.c.b16 %v1965, %v1964
      %v1980 = vpack.c.b16 %v1967, %v1966
      %v1981 = vpack.c.b16 %v1969, %v1968
      %v1982 = vpack.c.b16 %v1971, %v1970
      %v1983 = vpack.c.b16 %v1973, %v1972
      %v1984 = vpack.c.b16 %v1975, %v1974
      %v1985 = vpack.c.b16 %v1977, %v1976
      %1994 = vmatprep.subr.bf16.mxu0 0
      %1995 = vmatpush1.bf16.msra.mxu0 %v1978
      %1996 = vmatprep.subr.bf16.mxu0 0
      %1997 = vmatpush1.bf16.msra.mxu0 %v1979
      %1998 = vmatprep.subr.bf16.mxu0 0
      %1999 = vmatpush1.bf16.msra.mxu0 %v1980
      %2000 = vmatprep.subr.bf16.mxu0 0
      %2001 = vmatpush1.bf16.msra.mxu0 %v1981
      %2002 = vmatprep.subr.bf16.mxu0 0
      %2003 = vmatpush1.bf16.msra.mxu0 %v1982
      %2004 = vmatprep.subr.bf16.mxu0 0
      %2005 = vmatpush1.bf16.msra.mxu0 %v1983
      %2006 = vmatprep.subr.bf16.mxu0 0
      %2007 = vmatpush1.bf16.msra.mxu0 %v1984
      %2008 = vmatprep.subr.bf16.mxu0 0
      %2009 = vmatpush1.bf16.msra.mxu0 %v1985
      %2010 = vmatprep.subr.bf16.mxu0 0
      %2011 = vmatpush1.bf16.msra.mxu0 0
      %2012 = vmatprep.subr.bf16.mxu0 0
      %2013 = vmatpush1.bf16.msra.mxu0 0
      %2014 = vmatprep.subr.bf16.mxu0 0
      %2015 = vmatpush1.bf16.msra.mxu0 0
      %2016 = vmatprep.subr.bf16.mxu0 0
      %2017 = vmatpush1.bf16.msra.mxu0 0
      %2018 = vmatprep.subr.bf16.mxu0 0
      %2019 = vmatpush1.bf16.msra.mxu0 0
      %2020 = vmatprep.subr.bf16.mxu0 0
      %2021 = vmatpush1.bf16.msra.mxu0 0
      %2022 = vmatprep.subr.bf16.mxu0 0
      %2023 = vmatpush1.bf16.msra.mxu0 0
      %2024 = vmatprep.subr.bf16.mxu0 0
      %2025 = vmatpush1.bf16.msra.mxu0 0
      %2026 = vmatprep.mubr.bf16.mxu0 0
      %2027 = vmatmul.mubr.bf16.gmra.mrb[0].mxu0 %v1922
      %v2028 = vpop.f32.mrb[0].mxu0
      %v2029 = vadd.f32 %v1944, %v2028
      %v2030 = vpop.f32.mrb[0].mxu0
      %v2031 = vpop.f32.mrb[0].mxu0
      %v2032 = vadd.f32 %v1944, %v2031
      %v2033 = vpop.f32.mrb[0].mxu0
      %2034 = vdwg.mxu0
      %v2035 = vadd.f32 %v1790, %v2029
      %v2036 = vadd.f32 %v1791, %v2032
      %2037 = vst.msk [vmem:[#allocation2] sm:$0xff] %vm616, %v2035
      %2038 = vst.msk [vmem:[#allocation2 + $0x8] sm:$0xff] %vm616, %v2036
      %p2039 = scmp.eq.s32.totalorder %s24, 1
      // Predicated region
      $region77: #{cmuim_forward.7} parent=71 // pred_check
        %p2040 = pneg %p2039
      $region78: #{cmuim_forward.7} parent=71 // pred_check_branch
        %2042 = sbr.rel (%p2040) target = $region80
      $region79: #{cmuim_forward.7} parent=71 // pred_region
        %2043 = vst.msk [vmem:[%s13] sm:$0xff] %vm616, %v2035
        %2044 = vst.msk [vmem:[%s13 + $0x8] sm:$0xff] %vm616, %v2036
      $region80: #{cmuim_forward.7} parent=71 // pred_fallthru
        _
      // Predicated region
      $region81: #{cmuim_forward.7} parent=71 // pred_check
        %p2045 = pneg %p370
      $region82: #{cmuim_forward.7} parent=71 // pred_check_branch
        %2047 = sbr.rel (%p2045) target = $region84
      $region83: #{cmuim_forward.7} parent=71 // pred_region
        _
      $region84: #{cmuim_forward.7} parent=71 // pred_fallthru
        _
      // Predicated region
      $region85: #{cmuim_forward.7} parent=71 // pred_check
        %p2048 = pneg %p370
      $region86: #{cmuim_forward.7} parent=71 // pred_check_branch
        %2050 = sbr.rel (%p2048) target = $region88
      $region87: #{cmuim_forward.7} parent=71 // pred_region
        _
      $region88: #{cmuim_forward.7} parent=71 // pred_fallthru
        _
    $region72: #{cmuim_forward.7} parent=5 // pred_fallthru
      _
    %p2051 = scmp.le.s32.totalorder 2, %s19
    // Predicated region
    $region89: #{cmuim_forward.7} parent=5 // pred_check
      %p2052 = pneg %p2051
    $region90: #{cmuim_forward.7} parent=5 // pred_check_branch
      %2054 = sbr.rel (%p2052) target = $region92
    $region91: #{cmuim_forward.7} parent=5 // pred_region
      %s2055 = ssub.s32 %s19, 2
    $region92: #{cmuim_forward.7} parent=5 // pred_fallthru
      _
  $region6: #{cmuim_forward.7} parent=0 // loop_footer
    %s23 = sadd.s32 1, %s19
  $region7: #{cmuim_forward.7} parent=0 // loop_footer_branch
    %18 = sbr.rel target = $region3
  $region8: #{cmuim_forward.7} parent=0 // loop_exit
    _

// kernel: cmuim_forward.9
$region0: #{cmuim_forward.9}
  #allocation0 [shape = 'u32[]', space=smem, size = 0x4, offset = 0x4, fixed_abs, tag = 'smem constant byte address 0x4 - core index']
  #allocation1 [shape = 'u32[144,128]{1,0:T(1,128)}', space=vmem, size = 0x12000, scoped, tag = 'internal scratch']
  #allocation2 [shape = 'f32[48,32]{1,0:T(8,128)}', space=vmem, size = 0x6000, scoped, tag = 'scratch operand']
  %s0 = inlined_call_operand.vmem [shape: f32[48,32], index: 0, kind: input, shape index: {}]
  %s1 = inlined_call_operand.vmem [shape: f32[2,1,32], index: 1, kind: input, shape index: {}]
  %s2 = inlined_call_operand.vmem [shape: f32[2,1,32], index: 2, kind: input, shape index: {}]
  %s3 = inlined_call_operand.vmem [shape: bf16[2,32,96], index: 3, kind: input, shape index: {}]
  %s4 = inlined_call_operand.vmem [shape: f32[2,1,96], index: 4, kind: input, shape index: {}]
  %s5 = inlined_call_operand.vmem [shape: bf16[2,32,32], index: 5, kind: input, shape index: {}]
  %s6 = inlined_call_operand.vmem [shape: f32[2,1,32], index: 6, kind: input, shape index: {}]
  %s7 = inlined_call_operand.vmem [shape: f32[2,1,32], index: 7, kind: input, shape index: {}]
  %s8 = inlined_call_operand.vmem [shape: f32[2,1,32], index: 8, kind: input, shape index: {}]
  %s9 = inlined_call_operand.vmem [shape: bf16[2,32,128], index: 9, kind: input, shape index: {}]
  %s10 = inlined_call_operand.vmem [shape: f32[2,1,128], index: 10, kind: input, shape index: {}]
  %s11 = inlined_call_operand.vmem [shape: bf16[2,128,32], index: 11, kind: input, shape index: {}]
  %s12 = inlined_call_operand.vmem [shape: f32[2,1,32], index: 12, kind: input, shape index: {}]
  %s13 = inlined_call_operand.vmem [shape: f32[48,32], index: 13, kind: output, shape index: {}]
  %s14 = sld [smem:[#allocation0]]
  $region93: #{cmuim_forward.9} parent=0
    _
  %s16 = ssub.s32 1, %s14
  %s17 = scalar_select 0, %s16, %s14
  loop: start=0, step=1, limit=4
  $region2: #{cmuim_forward.9} parent=0 // loop_pre_header
    _
  $region3: #{cmuim_forward.9} parent=0 // loop_header
    %s19 = sphi 0, %s23
    %p20 = scmp.ge.s32.totalorder %s19, 4
    %s27 = sphi 0, %s27
    %s29 = sphi 0, %s27
    %s30 = sphi 0, %s29
    %s44 = sphi 0, %s30
    %s50 = sphi 0, %s52
    %s53 = sphi 0, %s50
    %s54 = sphi 0, %s53
    %s70 = sphi 0, %s54
    %s76 = sphi 0, %s78
    %s79 = sphi 0, %s76
    %s80 = sphi 0, %s79
    %s96 = sphi 0, %s80
    %s102 = sphi 0, %s104
    %s105 = sphi 0, %s102
    %s106 = sphi 0, %s105
    %s122 = sphi 0, %s106
    %s128 = sphi 0, %s130
    %s131 = sphi 0, %s128
    %s132 = sphi 0, %s131
    %s148 = sphi 0, %s132
    %s154 = sphi 0, %s156
    %s157 = sphi 0, %s154
    %s158 = sphi 0, %s157
    %s174 = sphi 0, %s158
    %s180 = sphi 0, %s182
    %s183 = sphi 0, %s180
    %s184 = sphi 0, %s183
    %s200 = sphi 0, %s184
    %s206 = sphi 0, %s208
    %s209 = sphi 0, %s206
    %s210 = sphi 0, %s209
    %s226 = sphi 0, %s210
    %s232 = sphi 0, %s234
    %s235 = sphi 0, %s232
    %s236 = sphi 0, %s235
    %s252 = sphi 0, %s236
    %s258 = sphi 0, %s260
    %s261 = sphi 0, %s258
    %s262 = sphi 0, %s261
    %s278 = sphi 0, %s262
    %s284 = sphi 0, %s286
    %s287 = sphi 0, %s284
    %s288 = sphi 0, %s287
    %s304 = sphi 0, %s288
    %s310 = sphi 0, %s312
    %s313 = sphi 0, %s310
    %s314 = sphi 0, %s313
    %s330 = sphi 0, %s314
    %s336 = sphi 0, %s338
    %s339 = sphi 0, %s336
    %s340 = sphi 0, %s339
    %s356 = sphi 0, %s340
    %s360 = sphi 0, %s360
    %s362 = sphi 0, %s360
    %s363 = sphi 0, %s362
    %s377 = sphi 0, %s363
  $region4: #{cmuim_forward.9} parent=0 // loop_header_branch
    %22 = sbr.rel (%p20) target = $region8
  $region5: #{cmuim_forward.9} parent=0 // loop_body
    %s24 = ssub.s32 %s19, 1
    %s25 = ssub.s32 %s19, 2
    %s26 = sadd.s32 %s19, 1
    %s28 = sadd.s32 %s27, 1
    %p31 = scmp.eq.s32.totalorder %s19, 1
    %p32 = scmp.ne.s32.totalorder %s27, %s29
    %p33 = scmp.eq.s32.totalorder %s19, 0
    %p34 = por %p32, %p33
    %p35 = scmp.ne.s32.totalorder %s27, %s29
    %p36 = scmp.eq.s32.totalorder %s24, 1
    %p37 = por %p35, %p36
    %p38 = scmp.ne.s32.totalorder %s29, %s30
    %p39 = scmp.eq.s32.totalorder %s24, 0
    %p40 = por %p38, %p39
    %p41 = scmp.ne.s32.totalorder %s29, %s30
    %p42 = scmp.eq.s32.totalorder %s25, 1
    %p43 = por %p41, %p42
    %p45 = scmp.ne.s32.totalorder %s30, %s44
    %p46 = scmp.eq.s32.totalorder %s25, 0
    %p47 = por %p45, %p46
    %s48 = ssub.s32 %s19, %s26
    %p49 = scmp.eq.s32.totalorder %s48, 0
    %s51 = sadd.s32 %s50, 1
    %s52 = scalar_select %p49, %s50, %s51
    %p55 = pneg %p49
    %p56 = scmp.eq.s32.totalorder %s19, 1
    %p57 = por %p55, %p56
    %p58 = scmp.ne.s32.totalorder %s50, %s53
    %p59 = scmp.eq.s32.totalorder %s19, 0
    %p60 = por %p58, %p59
    %p61 = scmp.ne.s32.totalorder %s50, %s53
    %p62 = scmp.eq.s32.totalorder %s24, 1
    %p63 = por %p61, %p62
    %p64 = scmp.ne.s32.totalorder %s53, %s54
    %p65 = scmp.eq.s32.totalorder %s24, 0
    %p66 = por %p64, %p65
    %p67 = scmp.ne.s32.totalorder %s53, %s54
    %p68 = scmp.eq.s32.totalorder %s25, 1
    %p69 = por %p67, %p68
    %p71 = scmp.ne.s32.totalorder %s54, %s70
    %p72 = scmp.eq.s32.totalorder %s25, 0
    %p73 = por %p71, %p72
    %s74 = ssub.s32 %s19, %s26
    %p75 = scmp.eq.s32.totalorder %s74, 0
    %s77 = sadd.s32 %s76, 1
    %s78 = scalar_select %p75, %s76, %s77
    %p81 = pneg %p75
    %p82 = scmp.eq.s32.totalorder %s19, 1
    %p83 = por %p81, %p82
    %p84 = scmp.ne.s32.totalorder %s76, %s79
    %p85 = scmp.eq.s32.totalorder %s19, 0
    %p86 = por %p84, %p85
    %p87 = scmp.ne.s32.totalorder %s76, %s79
    %p88 = scmp.eq.s32.totalorder %s24, 1
    %p89 = por %p87, %p88
    %p90 = scmp.ne.s32.totalorder %s79, %s80
    %p91 = scmp.eq.s32.totalorder %s24, 0
    %p92 = por %p90, %p91
    %p93 = scmp.ne.s32.totalorder %s79, %s80
    %p94 = scmp.eq.s32.totalorder %s25, 1
    %p95 = por %p93, %p94
    %p97 = scmp.ne.s32.totalorder %s80, %s96
    %p98 = scmp.eq.s32.totalorder %s25, 0
    %p99 = por %p97, %p98
    %s100 = ssub.s32 %s19, %s26
    %p101 = scmp.eq.s32.totalorder %s100, 0
    %s103 = sadd.s32 %s102, 1
    %s104 = scalar_select %p101, %s102, %s103
    %p107 = pneg %p101
    %p108 = scmp.eq.s32.totalorder %s19, 1
    %p109 = por %p107, %p108
    %p110 = scmp.ne.s32.totalorder %s102, %s105
    %p111 = scmp.eq.s32.totalorder %s19, 0
    %p112 = por %p110, %p111
    %p113 = scmp.ne.s32.totalorder %s102, %s105
    %p114 = scmp.eq.s32.totalorder %s24, 1
    %p115 = por %p113, %p114
    %p116 = scmp.ne.s32.totalorder %s105, %s106
    %p117 = scmp.eq.s32.totalorder %s24, 0
    %p118 = por %p116, %p117
    %p119 = scmp.ne.s32.totalorder %s105, %s106
    %p120 = scmp.eq.s32.totalorder %s25, 1
    %p121 = por %p119, %p120
    %p123 = scmp.ne.s32.totalorder %s106, %s122
    %p124 = scmp.eq.s32.totalorder %s25, 0
    %p125 = por %p123, %p124
    %s126 = ssub.s32 %s19, %s26
    %p127 = scmp.eq.s32.totalorder %s126, 0
    %s129 = sadd.s32 %s128, 1
    %s130 = scalar_select %p127, %s128, %s129
    %p133 = pneg %p127
    %p134 = scmp.eq.s32.totalorder %s19, 1
    %p135 = por %p133, %p134
    %p136 = scmp.ne.s32.totalorder %s128, %s131
    %p137 = scmp.eq.s32.totalorder %s19, 0
    %p138 = por %p136, %p137
    %p139 = scmp.ne.s32.totalorder %s128, %s131
    %p140 = scmp.eq.s32.totalorder %s24, 1
    %p141 = por %p139, %p140
    %p142 = scmp.ne.s32.totalorder %s131, %s132
    %p143 = scmp.eq.s32.totalorder %s24, 0
    %p144 = por %p142, %p143
    %p145 = scmp.ne.s32.totalorder %s131, %s132
    %p146 = scmp.eq.s32.totalorder %s25, 1
    %p147 = por %p145, %p146
    %p149 = scmp.ne.s32.totalorder %s132, %s148
    %p150 = scmp.eq.s32.totalorder %s25, 0
    %p151 = por %p149, %p150
    %s152 = ssub.s32 %s19, %s26
    %p153 = scmp.eq.s32.totalorder %s152, 0
    %s155 = sadd.s32 %s154, 1
    %s156 = scalar_select %p153, %s154, %s155
    %p159 = pneg %p153
    %p160 = scmp.eq.s32.totalorder %s19, 1
    %p161 = por %p159, %p160
    %p162 = scmp.ne.s32.totalorder %s154, %s157
    %p163 = scmp.eq.s32.totalorder %s19, 0
    %p164 = por %p162, %p163
    %p165 = scmp.ne.s32.totalorder %s154, %s157
    %p166 = scmp.eq.s32.totalorder %s24, 1
    %p167 = por %p165, %p166
    %p168 = scmp.ne.s32.totalorder %s157, %s158
    %p169 = scmp.eq.s32.totalorder %s24, 0
    %p170 = por %p168, %p169
    %p171 = scmp.ne.s32.totalorder %s157, %s158
    %p172 = scmp.eq.s32.totalorder %s25, 1
    %p173 = por %p171, %p172
    %p175 = scmp.ne.s32.totalorder %s158, %s174
    %p176 = scmp.eq.s32.totalorder %s25, 0
    %p177 = por %p175, %p176
    %s178 = ssub.s32 %s19, %s26
    %p179 = scmp.eq.s32.totalorder %s178, 0
    %s181 = sadd.s32 %s180, 1
    %s182 = scalar_select %p179, %s180, %s181
    %p185 = pneg %p179
    %p186 = scmp.eq.s32.totalorder %s19, 1
    %p187 = por %p185, %p186
    %p188 = scmp.ne.s32.totalorder %s180, %s183
    %p189 = scmp.eq.s32.totalorder %s19, 0
    %p190 = por %p188, %p189
    %p191 = scmp.ne.s32.totalorder %s180, %s183
    %p192 = scmp.eq.s32.totalorder %s24, 1
    %p193 = por %p191, %p192
    %p194 = scmp.ne.s32.totalorder %s183, %s184
    %p195 = scmp.eq.s32.totalorder %s24, 0
    %p196 = por %p194, %p195
    %p197 = scmp.ne.s32.totalorder %s183, %s184
    %p198 = scmp.eq.s32.totalorder %s25, 1
    %p199 = por %p197, %p198
    %p201 = scmp.ne.s32.totalorder %s184, %s200
    %p202 = scmp.eq.s32.totalorder %s25, 0
    %p203 = por %p201, %p202
    %s204 = ssub.s32 %s19, %s26
    %p205 = scmp.eq.s32.totalorder %s204, 0
    %s207 = sadd.s32 %s206, 1
    %s208 = scalar_select %p205, %s206, %s207
    %p211 = pneg %p205
    %p212 = scmp.eq.s32.totalorder %s19, 1
    %p213 = por %p211, %p212
    %p214 = scmp.ne.s32.totalorder %s206, %s209
    %p215 = scmp.eq.s32.totalorder %s19, 0
    %p216 = por %p214, %p215
    %p217 = scmp.ne.s32.totalorder %s206, %s209
    %p218 = scmp.eq.s32.totalorder %s24, 1
    %p219 = por %p217, %p218
    %p220 = scmp.ne.s32.totalorder %s209, %s210
    %p221 = scmp.eq.s32.totalorder %s24, 0
    %p222 = por %p220, %p221
    %p223 = scmp.ne.s32.totalorder %s209, %s210
    %p224 = scmp.eq.s32.totalorder %s25, 1
    %p225 = por %p223, %p224
    %p227 = scmp.ne.s32.totalorder %s210, %s226
    %p228 = scmp.eq.s32.totalorder %s25, 0
    %p229 = por %p227, %p228
    %s230 = ssub.s32 %s19, %s26
    %p231 = scmp.eq.s32.totalorder %s230, 0
    %s233 = sadd.s32 %s232, 1
    %s234 = scalar_select %p231, %s232, %s233
    %p237 = pneg %p231
    %p238 = scmp.eq.s32.totalorder %s19, 1
    %p239 = por %p237, %p238
    %p240 = scmp.ne.s32.totalorder %s232, %s235
    %p241 = scmp.eq.s32.totalorder %s19, 0
    %p242 = por %p240, %p241
    %p243 = scmp.ne.s32.totalorder %s232, %s235
    %p244 = scmp.eq.s32.totalorder %s24, 1
    %p245 = por %p243, %p244
    %p246 = scmp.ne.s32.totalorder %s235, %s236
    %p247 = scmp.eq.s32.totalorder %s24, 0
    %p248 = por %p246, %p247
    %p249 = scmp.ne.s32.totalorder %s235, %s236
    %p250 = scmp.eq.s32.totalorder %s25, 1
    %p251 = por %p249, %p250
    %p253 = scmp.ne.s32.totalorder %s236, %s252
    %p254 = scmp.eq.s32.totalorder %s25, 0
    %p255 = por %p253, %p254
    %s256 = ssub.s32 %s19, %s26
    %p257 = scmp.eq.s32.totalorder %s256, 0
    %s259 = sadd.s32 %s258, 1
    %s260 = scalar_select %p257, %s258, %s259
    %p263 = pneg %p257
    %p264 = scmp.eq.s32.totalorder %s19, 1
    %p265 = por %p263, %p264
    %p266 = scmp.ne.s32.totalorder %s258, %s261
    %p267 = scmp.eq.s32.totalorder %s19, 0
    %p268 = por %p266, %p267
    %p269 = scmp.ne.s32.totalorder %s258, %s261
    %p270 = scmp.eq.s32.totalorder %s24, 1
    %p271 = por %p269, %p270
    %p272 = scmp.ne.s32.totalorder %s261, %s262
    %p273 = scmp.eq.s32.totalorder %s24, 0
    %p274 = por %p272, %p273
    %p275 = scmp.ne.s32.totalorder %s261, %s262
    %p276 = scmp.eq.s32.totalorder %s25, 1
    %p277 = por %p275, %p276
    %p279 = scmp.ne.s32.totalorder %s262, %s278
    %p280 = scmp.eq.s32.totalorder %s25, 0
    %p281 = por %p279, %p280
    %s282 = ssub.s32 %s19, %s26
    %p283 = scmp.eq.s32.totalorder %s282, 0
    %s285 = sadd.s32 %s284, 1
    %s286 = scalar_select %p283, %s284, %s285
    %p289 = pneg %p283
    %p290 = scmp.eq.s32.totalorder %s19, 1
    %p291 = por %p289, %p290
    %p292 = scmp.ne.s32.totalorder %s284, %s287
    %p293 = scmp.eq.s32.totalorder %s19, 0
    %p294 = por %p292, %p293
    %p295 = scmp.ne.s32.totalorder %s284, %s287
    %p296 = scmp.eq.s32.totalorder %s24, 1
    %p297 = por %p295, %p296
    %p298 = scmp.ne.s32.totalorder %s287, %s288
    %p299 = scmp.eq.s32.totalorder %s24, 0
    %p300 = por %p298, %p299
    %p301 = scmp.ne.s32.totalorder %s287, %s288
    %p302 = scmp.eq.s32.totalorder %s25, 1
    %p303 = por %p301, %p302
    %p305 = scmp.ne.s32.totalorder %s288, %s304
    %p306 = scmp.eq.s32.totalorder %s25, 0
    %p307 = por %p305, %p306
    %s308 = ssub.s32 %s19, %s26
    %p309 = scmp.eq.s32.totalorder %s308, 0
    %s311 = sadd.s32 %s310, 1
    %s312 = scalar_select %p309, %s310, %s311
    %p315 = pneg %p309
    %p316 = scmp.eq.s32.totalorder %s19, 1
    %p317 = por %p315, %p316
    %p318 = scmp.ne.s32.totalorder %s310, %s313
    %p319 = scmp.eq.s32.totalorder %s19, 0
    %p320 = por %p318, %p319
    %p321 = scmp.ne.s32.totalorder %s310, %s313
    %p322 = scmp.eq.s32.totalorder %s24, 1
    %p323 = por %p321, %p322
    %p324 = scmp.ne.s32.totalorder %s313, %s314
    %p325 = scmp.eq.s32.totalorder %s24, 0
    %p326 = por %p324, %p325
    %p327 = scmp.ne.s32.totalorder %s313, %s314
    %p328 = scmp.eq.s32.totalorder %s25, 1
    %p329 = por %p327, %p328
    %p331 = scmp.ne.s32.totalorder %s314, %s330
    %p332 = scmp.eq.s32.totalorder %s25, 0
    %p333 = por %p331, %p332
    %s334 = ssub.s32 %s19, %s26
    %p335 = scmp.eq.s32.totalorder %s334, 0
    %s337 = sadd.s32 %s336, 1
    %s338 = scalar_select %p335, %s336, %s337
    %p341 = pneg %p335
    %p342 = scmp.eq.s32.totalorder %s19, 1
    %p343 = por %p341, %p342
    %p344 = scmp.ne.s32.totalorder %s336, %s339
    %p345 = scmp.eq.s32.totalorder %s19, 0
    %p346 = por %p344, %p345
    %p347 = scmp.ne.s32.totalorder %s336, %s339
    %p348 = scmp.eq.s32.totalorder %s24, 1
    %p349 = por %p347, %p348
    %p350 = scmp.ne.s32.totalorder %s339, %s340
    %p351 = scmp.eq.s32.totalorder %s24, 0
    %p352 = por %p350, %p351
    %p353 = scmp.ne.s32.totalorder %s339, %s340
    %p354 = scmp.eq.s32.totalorder %s25, 1
    %p355 = por %p353, %p354
    %p357 = scmp.ne.s32.totalorder %s340, %s356
    %p358 = scmp.eq.s32.totalorder %s25, 0
    %p359 = por %p357, %p358
    %s361 = sadd.s32 %s360, 1
    %p364 = scmp.eq.s32.totalorder %s19, 1
    %p365 = scmp.ne.s32.totalorder %s360, %s362
    %p366 = scmp.eq.s32.totalorder %s19, 0
    %p367 = por %p365, %p366
    %p368 = scmp.ne.s32.totalorder %s360, %s362
    %p369 = scmp.eq.s32.totalorder %s24, 1
    %p370 = por %p368, %p369
    %p371 = scmp.ne.s32.totalorder %s362, %s363
    %p372 = scmp.eq.s32.totalorder %s24, 0
    %p373 = por %p371, %p372
    %p374 = scmp.ne.s32.totalorder %s362, %s363
    %p375 = scmp.eq.s32.totalorder %s25, 1
    %p376 = por %p374, %p375
    %p378 = scmp.ne.s32.totalorder %s363, %s377
    %p379 = scmp.eq.s32.totalorder %s25, 0
    %p380 = por %p378, %p379
    %p381 = scmp.le.s32.totalorder 1, %s19
    %p382 = scmp.lt.s32.totalorder %s19, 3
    %p383 = pnand %p381, %p382
    %p384 = pneg %p383
    // Predicated region
    $region9: #{cmuim_forward.9} parent=5 // pred_check
      _
    $region10: #{cmuim_forward.9} parent=5 // pred_check_branch
      %386 = sbr.rel (%p383) target = $region12
    $region11: #{cmuim_forward.9} parent=5 // pred_region
      %s387 = ssub.s32 %s19, 1
      // Predicated region
      $region13: #{cmuim_forward.9} parent=11 // pred_check
        %p388 = pneg %p40
      $region14: #{cmuim_forward.9} parent=11 // pred_check_branch
        %390 = sbr.rel (%p388) target = $region16
      $region15: #{cmuim_forward.9} parent=11 // pred_region
        _
      $region16: #{cmuim_forward.9} parent=11 // pred_fallthru
        _
    $region12: #{cmuim_forward.9} parent=5 // pred_fallthru
      _
    %p391 = scmp.lt.s32.totalorder %s19, 2
    // Predicated region
    $region17: #{cmuim_forward.9} parent=5 // pred_check
      %p392 = pneg %p391
    $region18: #{cmuim_forward.9} parent=5 // pred_check_branch
      %394 = sbr.rel (%p392) target = $region20
    $region19: #{cmuim_forward.9} parent=5 // pred_region
      // Predicated region
      $region21: #{cmuim_forward.9} parent=19 // pred_check
        %p395 = pneg %p60
      $region22: #{cmuim_forward.9} parent=19 // pred_check_branch
        %397 = sbr.rel (%p395) target = $region24
      $region23: #{cmuim_forward.9} parent=19 // pred_region
        %p398 = scmp.lt.s32.totalorder %s19, 1
        %s399 = scalar_select %p398, %s19, 1
        %s400 = scalar_lea.vmem %s1, %s399
      $region24: #{cmuim_forward.9} parent=19 // pred_fallthru
        _
      // Predicated region
      $region25: #{cmuim_forward.9} parent=19 // pred_check
        %p401 = pneg %p86
      $region26: #{cmuim_forward.9} parent=19 // pred_check_branch
        %403 = sbr.rel (%p401) target = $region28
      $region27: #{cmuim_forward.9} parent=19 // pred_region
        %p404 = scmp.lt.s32.totalorder %s19, 1
        %s405 = scalar_select %p404, %s19, 1
        %s406 = scalar_lea.vmem %s2, %s405
      $region28: #{cmuim_forward.9} parent=19 // pred_fallthru
        _
      // Predicated region
      $region29: #{cmuim_forward.9} parent=19 // pred_check
        %p407 = pneg %p112
      $region30: #{cmuim_forward.9} parent=19 // pred_check_branch
        %409 = sbr.rel (%p407) target = $region32
      $region31: #{cmuim_forward.9} parent=19 // pred_region
        %p410 = scmp.lt.s32.totalorder %s19, 1
        %s411 = scalar_select %p410, %s19, 1
        %s412 = smul.addr %s411, 4
        %s413 = smul.addr %s412, 4
        %s414 = scalar_lea.vmem %s3, %s413
      $region32: #{cmuim_forward.9} parent=19 // pred_fallthru
        _
      // Predicated region
      $region33: #{cmuim_forward.9} parent=19 // pred_check
        %p415 = pneg %p138
      $region34: #{cmuim_forward.9} parent=19 // pred_check_branch
        %417 = sbr.rel (%p415) target = $region36
      $region35: #{cmuim_forward.9} parent=19 // pred_region
        %p418 = scmp.lt.s32.totalorder %s19, 1
        %s419 = scalar_select %p418, %s19, 1
        %s420 = scalar_lea.vmem %s4, %s419
      $region36: #{cmuim_forward.9} parent=19 // pred_fallthru
        _
      // Predicated region
      $region37: #{cmuim_forward.9} parent=19 // pred_check
        %p421 = pneg %p164
      $region38: #{cmuim_forward.9} parent=19 // pred_check_branch
        %423 = sbr.rel (%p421) target = $region40
      $region39: #{cmuim_forward.9} parent=19 // pred_region
        %p424 = scmp.lt.s32.totalorder %s19, 1
        %s425 = scalar_select %p424, %s19, 1
        %s426 = smul.addr %s425, 4
        %s427 = smul.addr %s426, 4
        %s428 = scalar_lea.vmem %s5, %s427
      $region40: #{cmuim_forward.9} parent=19 // pred_fallthru
        _
      // Predicated region
      $region41: #{cmuim_forward.9} parent=19 // pred_check
        %p429 = pneg %p190
      $region42: #{cmuim_forward.9} parent=19 // pred_check_branch
        %431 = sbr.rel (%p429) target = $region44
      $region43: #{cmuim_forward.9} parent=19 // pred_region
        %p432 = scmp.lt.s32.totalorder %s19, 1
        %s433 = scalar_select %p432, %s19, 1
        %s434 = scalar_lea.vmem %s6, %s433
      $region44: #{cmuim_forward.9} parent=19 // pred_fallthru
        _
      // Predicated region
      $region45: #{cmuim_forward.9} parent=19 // pred_check
        %p435 = pneg %p216
      $region46: #{cmuim_forward.9} parent=19 // pred_check_branch
        %437 = sbr.rel (%p435) target = $region48
      $region47: #{cmuim_forward.9} parent=19 // pred_region
        %p438 = scmp.lt.s32.totalorder %s19, 1
        %s439 = scalar_select %p438, %s19, 1
        %s440 = scalar_lea.vmem %s7, %s439
      $region48: #{cmuim_forward.9} parent=19 // pred_fallthru
        _
      // Predicated region
      $region49: #{cmuim_forward.9} parent=19 // pred_check
        %p441 = pneg %p242
      $region50: #{cmuim_forward.9} parent=19 // pred_check_branch
        %443 = sbr.rel (%p441) target = $region52
      $region51: #{cmuim_forward.9} parent=19 // pred_region
        %p444 = scmp.lt.s32.totalorder %s19, 1
        %s445 = scalar_select %p444, %s19, 1
        %s446 = scalar_lea.vmem %s8, %s445
      $region52: #{cmuim_forward.9} parent=19 // pred_fallthru
        _
      // Predicated region
      $region53: #{cmuim_forward.9} parent=19 // pred_check
        %p447 = pneg %p268
      $region54: #{cmuim_forward.9} parent=19 // pred_check_branch
        %449 = sbr.rel (%p447) target = $region56
      $region55: #{cmuim_forward.9} parent=19 // pred_region
        %p450 = scmp.lt.s32.totalorder %s19, 1
        %s451 = scalar_select %p450, %s19, 1
        %s452 = smul.addr %s451, 4
        %s453 = smul.addr %s452, 4
        %s454 = scalar_lea.vmem %s9, %s453
      $region56: #{cmuim_forward.9} parent=19 // pred_fallthru
        _
      // Predicated region
      $region57: #{cmuim_forward.9} parent=19 // pred_check
        %p455 = pneg %p294
      $region58: #{cmuim_forward.9} parent=19 // pred_check_branch
        %457 = sbr.rel (%p455) target = $region60
      $region59: #{cmuim_forward.9} parent=19 // pred_region
        %p458 = scmp.lt.s32.totalorder %s19, 1
        %s459 = scalar_select %p458, %s19, 1
        %s460 = scalar_lea.vmem %s10, %s459
      $region60: #{cmuim_forward.9} parent=19 // pred_fallthru
        _
      // Predicated region
      $region61: #{cmuim_forward.9} parent=19 // pred_check
        %p461 = pneg %p320
      $region62: #{cmuim_forward.9} parent=19 // pred_check_branch
        %463 = sbr.rel (%p461) target = $region64
      $region63: #{cmuim_forward.9} parent=19 // pred_region
        %p464 = scmp.lt.s32.totalorder %s19, 1
        %s465 = scalar_select %p464, %s19, 1
        %s466 = smul.addr %s465, 16
        %s467 = smul.addr %s466, 4
        %s468 = scalar_lea.vmem %s11, %s467
      $region64: #{cmuim_forward.9} parent=19 // pred_fallthru
        _
      // Predicated region
      $region65: #{cmuim_forward.9} parent=19 // pred_check
        %p469 = pneg %p346
      $region66: #{cmuim_forward.9} parent=19 // pred_check_branch
        %471 = sbr.rel (%p469) target = $region68
      $region67: #{cmuim_forward.9} parent=19 // pred_region
        %p472 = scmp.lt.s32.totalorder %s19, 1
        %s473 = scalar_select %p472, %s19, 1
        %s474 = scalar_lea.vmem %s12, %s473
      $region68: #{cmuim_forward.9} parent=19 // pred_fallthru
        _
    $region20: #{cmuim_forward.9} parent=5 // pred_fallthru
      _
    %p475 = scmp.le.s32.totalorder 1, %s19
    %p476 = scmp.lt.s32.totalorder %s19, 3
    %p477 = pnand %p475, %p476
    %p478 = pneg %p477
    // Predicated region
    $region69: #{cmuim_forward.9} parent=5 // pred_check
      _
    $region70: #{cmuim_forward.9} parent=5 // pred_check_branch
      %480 = sbr.rel (%p477) target = $region72
    $region71: #{cmuim_forward.9} parent=5 // pred_region
      %s481 = ssub.s32 %s19, 1
      %p482 = pneg %p40
      %p483 = pneg %p37
      %p484 = scmp.lt.s32.totalorder %s24, 1
      %s485 = scalar_select %p484, %s24, 1
      %s486 = scalar_lea.vmem %s1, %s485
      %p487 = pneg %p66
      %p488 = pneg %p63
      %p489 = scmp.lt.s32.totalorder %s24, 1
      %s490 = scalar_select %p489, %s24, 1
      %s491 = scalar_lea.vmem %s2, %s490
      %p492 = pneg %p92
      %p493 = pneg %p89
      %p494 = scmp.lt.s32.totalorder %s24, 1
      %s495 = scalar_select %p494, %s24, 1
      %s496 = smul.addr %s495, 4
      %s497 = smul.addr %s496, 4
      %s498 = scalar_lea.vmem %s3, %s497
      %p499 = pneg %p118
      %p500 = pneg %p115
      %p501 = scmp.lt.s32.totalorder %s24, 1
      %s502 = scalar_select %p501, %s24, 1
      %s503 = scalar_lea.vmem %s4, %s502
      %p504 = pneg %p144
      %p505 = pneg %p141
      %p506 = scmp.lt.s32.totalorder %s24, 1
      %s507 = scalar_select %p506, %s24, 1
      %s508 = smul.addr %s507, 4
      %s509 = smul.addr %s508, 4
      %s510 = scalar_lea.vmem %s5, %s509
      %p511 = pneg %p170
      %p512 = pneg %p167
      %p513 = scmp.lt.s32.totalorder %s24, 1
      %s514 = scalar_select %p513, %s24, 1
      %s515 = scalar_lea.vmem %s6, %s514
      %p516 = pneg %p196
      %p517 = pneg %p193
      %p518 = scmp.lt.s32.totalorder %s24, 1
      %s519 = scalar_select %p518, %s24, 1
      %s520 = scalar_lea.vmem %s7, %s519
      %p521 = pneg %p222
      %p522 = pneg %p219
      %p523 = scmp.lt.s32.totalorder %s24, 1
      %s524 = scalar_select %p523, %s24, 1
      %s525 = scalar_lea.vmem %s8, %s524
      %p526 = pneg %p248
      %p527 = pneg %p245
      %p528 = scmp.lt.s32.totalorder %s24, 1
      %s529 = scalar_select %p528, %s24, 1
      %s530 = smul.addr %s529, 4
      %s531 = smul.addr %s530, 4
      %s532 = scalar_lea.vmem %s9, %s531
      %p533 = pneg %p274
      %p534 = pneg %p271
      %p535 = scmp.lt.s32.totalorder %s24, 1
      %s536 = scalar_select %p535, %s24, 1
      %s537 = scalar_lea.vmem %s10, %s536
      %p538 = pneg %p300
      %p539 = pneg %p297
      %p540 = scmp.lt.s32.totalorder %s24, 1
      %s541 = scalar_select %p540, %s24, 1
      %s542 = smul.addr %s541, 16
      %s543 = smul.addr %s542, 4
      %s544 = scalar_lea.vmem %s11, %s543
      %p545 = pneg %p326
      %p546 = pneg %p323
      %p547 = scmp.lt.s32.totalorder %s24, 1
      %s548 = scalar_select %p547, %s24, 1
      %s549 = scalar_lea.vmem %s12, %s548
      %p550 = pneg %p352
      %p551 = pneg %p349
      %p552 = pneg %p373
      %p553 = pneg %p370
      %p554 = scmp.lt.s32.totalorder %s24, 1
      %s555 = scalar_select %p554, %s24, 1
      %s556 = scalar_lea.vmem %s1, %s555
      %p557 = scmp.lt.s32.totalorder %s24, 1
      %s558 = scalar_select %p557, %s24, 1
      %s559 = scalar_lea.vmem %s2, %s558
      %p560 = scmp.lt.s32.totalorder %s24, 1
      %s561 = scalar_select %p560, %s24, 1
      %s562 = smul.addr %s561, 4
      %s563 = smul.addr %s562, 4
      %s564 = scalar_lea.vmem %s3, %s563
      %p565 = scmp.lt.s32.totalorder %s24, 1
      %s566 = scalar_select %p565, %s24, 1
      %s567 = scalar_lea.vmem %s4, %s566
      %p568 = scmp.lt.s32.totalorder %s24, 1
      %s569 = scalar_select %p568, %s24, 1
      %s570 = smul.addr %s569, 4
      %s571 = smul.addr %s570, 4
      %s572 = scalar_lea.vmem %s5, %s571
      %p573 = scmp.lt.s32.totalorder %s24, 1
      %s574 = scalar_select %p573, %s24, 1
      %s575 = scalar_lea.vmem %s6, %s574
      %p576 = scmp.lt.s32.totalorder %s24, 1
      %s577 = scalar_select %p576, %s24, 1
      %s578 = scalar_lea.vmem %s7, %s577
      %p579 = scmp.lt.s32.totalorder %s24, 1
      %s580 = scalar_select %p579, %s24, 1
      %s581 = scalar_lea.vmem %s8, %s580
      %p582 = scmp.lt.s32.totalorder %s24, 1
      %s583 = scalar_select %p582, %s24, 1
      %s584 = smul.addr %s583, 4
      %s585 = smul.addr %s584, 4
      %s586 = scalar_lea.vmem %s9, %s585
      %p587 = scmp.lt.s32.totalorder %s24, 1
      %s588 = scalar_select %p587, %s24, 1
      %s589 = scalar_lea.vmem %s10, %s588
      %p590 = scmp.lt.s32.totalorder %s24, 1
      %s591 = scalar_select %p590, %s24, 1
      %s592 = smul.addr %s591, 16
      %s593 = smul.addr %s592, 4
      %s594 = scalar_lea.vmem %s11, %s593
      %p595 = scmp.lt.s32.totalorder %s24, 1
      %s596 = scalar_select %p595, %s24, 1
      %s597 = scalar_lea.vmem %s12, %s596
      %p599 = scmp.eq.s32.totalorder %s24, 0
      // Predicated region
      $region73: #{cmuim_forward.9} parent=71 // pred_check
        %p600 = pneg %p599
      $region74: #{cmuim_forward.9} parent=71 // pred_check_branch
        %602 = sbr.rel (%p600) target = $region76
      $region75: #{cmuim_forward.9} parent=71 // pred_region
        %v603 = vld [vmem:[%s0] sm:$0xff]
        %v604 = vld [vmem:[%s0 + $0x8] sm:$0xff]
        %v605 = vld [vmem:[%s0 + $0x10] sm:$0xff]
        %v606 = vld [vmem:[%s0 + $0x18] sm:$0xff]
        %v607 = vld [vmem:[%s0 + $0x20] sm:$0xff]
        %v608 = vld [vmem:[%s0 + $0x28] sm:$0xff]
        %vm609 = vcmask 261120
        %610 = vst.msk [vmem:[#allocation2] sm:$0xff] %vm609, %v603
        %611 = vst.msk [vmem:[#allocation2 + $0x8] sm:$0xff] %vm609, %v604
        %612 = vst.msk [vmem:[#allocation2 + $0x10] sm:$0xff] %vm609, %v605
        %613 = vst.msk [vmem:[#allocation2 + $0x18] sm:$0xff] %vm609, %v606
        %614 = vst.msk [vmem:[#allocation2 + $0x20] sm:$0xff] %vm609, %v607
        %615 = vst.msk [vmem:[#allocation2 + $0x28] sm:$0xff] %vm609, %v608
      $region76: #{cmuim_forward.9} parent=71 // pred_fallthru
        _
      %v616 = vld [vmem:[#allocation2] sm:$0xff]
      %v617 = vld [vmem:[#allocation2 + $0x8] sm:$0xff]
      %v618 = vld [vmem:[#allocation2 + $0x10] sm:$0xff]
      %v619 = vld [vmem:[#allocation2 + $0x18] sm:$0xff]
      %v620 = vld [vmem:[#allocation2 + $0x20] sm:$0xff]
      %v621 = vld [vmem:[#allocation2 + $0x28] sm:$0xff]
      %v622 = vlaneseq
      %v623 = vand.u32 %v622, 127
      %vm624 = vcmp.lt.s32.totalorder %v623, 17
      %v625 = vsel %vm624, 0.0, -1e+30
      %v626 = vld [vmem:[%s556] sm:$0x1]
      %v627 = vld [vmem:[%s559] sm:$0x1]
      %vm628 = vcmask 261120
      %v629 = vsel %vm628, %v616, 0.0
      %630 = vadd.xlane.f32.xlu0 %v629
      %v631 = vpop.xlane.xlu0 %630
      %v632 = vsel %vm628, %v617, 0.0
      %633 = vadd.xlane.f32.xlu0 %v632
      %v634 = vpop.xlane.xlu0 %633
      %v635 = vsel %vm628, %v618, 0.0
      %636 = vadd.xlane.f32.xlu0 %v635
      %v637 = vpop.xlane.xlu0 %636
      %v638 = vsel %vm628, %v619, 0.0
      %639 = vadd.xlane.f32.xlu0 %v638
      %v640 = vpop.xlane.xlu0 %639
      %v641 = vsel %vm628, %v620, 0.0
      %642 = vadd.xlane.f32.xlu0 %v641
      %v643 = vpop.xlane.xlu0 %642
      %v644 = vsel %vm628, %v621, 0.0
      %645 = vadd.xlane.f32.xlu0 %v644
      %v646 = vpop.xlane.xlu0 %645
      %v647 = vrcp.pop 32.0
      %v648 = vmul.f32 %v631, %v647
      %v649 = vmul.f32 %v634, %v647
      %v650 = vmul.f32 %v637, %v647
      %v651 = vmul.f32 %v640, %v647
      %v652 = vmul.f32 %v643, %v647
      %v653 = vmul.f32 %v646, %v647
      %v654 = vsub.f32 %v616, %v648
      %v655 = vsub.f32 %v617, %v649
      %v656 = vsub.f32 %v618, %v650
      %v657 = vsub.f32 %v619, %v651
      %v658 = vsub.f32 %v620, %v652
      %v659 = vsub.f32 %v621, %v653
      %v660 = vmul.f32 %v654, %v654
      %v661 = vmul.f32 %v655, %v655
      %v662 = vmul.f32 %v656, %v656
      %v663 = vmul.f32 %v657, %v657
      %v664 = vmul.f32 %v658, %v658
      %v665 = vmul.f32 %v659, %v659
      %v666 = vsel %vm628, %v660, 0.0
      %667 = vadd.xlane.f32.xlu0 %v666
      %v668 = vpop.xlane.xlu0 %667
      %v669 = vsel %vm628, %v661, 0.0
      %670 = vadd.xlane.f32.xlu0 %v669
      %v671 = vpop.xlane.xlu0 %670
      %v672 = vsel %vm628, %v662, 0.0
      %673 = vadd.xlane.f32.xlu0 %v672
      %v674 = vpop.xlane.xlu0 %673
      %v675 = vsel %vm628, %v663, 0.0
      %676 = vadd.xlane.f32.xlu0 %v675
      %v677 = vpop.xlane.xlu0 %676
      %v678 = vsel %vm628, %v664, 0.0
      %679 = vadd.xlane.f32.xlu0 %v678
      %v680 = vpop.xlane.xlu0 %679
      %v681 = vsel %vm628, %v665, 0.0
      %682 = vadd.xlane.f32.xlu0 %v681
      %v683 = vpop.xlane.xlu0 %682
      %v684 = vmul.f32 %v668, %v647
      %v685 = vmul.f32 %v671, %v647
      %v686 = vmul.f32 %v674, %v647
      %v687 = vmul.f32 %v677, %v647
      %v688 = vmul.f32 %v680, %v647
      %v689 = vmul.f32 %v683, %v647
      %v690 = vadd.f32 %v684, 1e-05
      %v691 = vadd.f32 %v685, 1e-05
      %v692 = vadd.f32 %v686, 1e-05
      %v693 = vadd.f32 %v687, 1e-05
      %v694 = vadd.f32 %v688, 1e-05
      %v695 = vadd.f32 %v689, 1e-05
      %v696 = vrsqrt.pop %v690
      %v697 = vrsqrt.pop %v691
      %v698 = vrsqrt.pop %v692
      %v699 = vrsqrt.pop %v693
      %v700 = vrsqrt.pop %v694
      %v701 = vrsqrt.pop %v695
      %v702 = vmul.f32 %v654, %v696
      %v703 = vmul.f32 %v655, %v697
      %v704 = vmul.f32 %v656, %v698
      %v705 = vmul.f32 %v657, %v699
      %v706 = vmul.f32 %v658, %v700
      %v707 = vmul.f32 %v659, %v701
      %v709 = vlaneseq
      %v710 = vshrl.u32 %v709, 7
      %v711 = vsub.s32 0, %v710
      %v712 = vrot.slane %v626, %v711
      %v714 = vmul.f32 %v702, %v712
      %v715 = vmul.f32 %v703, %v712
      %v716 = vmul.f32 %v704, %v712
      %v717 = vmul.f32 %v705, %v712
      %v718 = vmul.f32 %v706, %v712
      %v719 = vmul.f32 %v707, %v712
      %v721 = vlaneseq
      %v722 = vshrl.u32 %v721, 7
      %v723 = vsub.s32 0, %v722
      %v724 = vrot.slane %v627, %v723
      %v726 = vadd.f32 %v714, %v724
      %v727 = vadd.f32 %v715, %v724
      %v728 = vadd.f32 %v716, %v724
      %v729 = vadd.f32 %v717, %v724
      %v730 = vadd.f32 %v718, %v724
      %v731 = vadd.f32 %v719, %v724
      %v732 = vpack.c.bf16 %v727, %v726
      %v733 = vpack.c.bf16 %v729, %v728
      %v734 = vpack.c.bf16 %v731, %v730
      %v735 = vld [vmem:[%s564] sm:$0xf]
      %v736 = vld [vmem:[%s564 + $0x4] sm:$0xf]
      %v737 = vld [vmem:[%s564 + $0x8] sm:$0xf]
      %v738 = vld [vmem:[%s564 + $0xc] sm:$0xf]
      %v739 = vld [vmem:[%s567] sm:$0x1]
      %v741 = vlaneseq
      %v742 = vshrl.u32 %v741, 7
      %v743 = vsub.s32 0, %v742
      %v744 = vrot.slane %v739, %v743
      %v750 = vunpack.c.l.b16 %v735
      %v751 = vunpack.c.l.b16 %v736
      %v752 = vunpack.c.l.b16 %v737
      %v753 = vunpack.c.l.b16 %v738
      %v754 = vpack.c.b16 %v751, %v750
      %v755 = vpack.c.b16 %v753, %v752
      %v759 = vsel %vm628, %v732, 0
      %v762 = vsel %vm628, %v733, 0
      %v765 = vsel %vm628, %v734, 0
      %767 = vmatprep.subr.bf16.mxu0 0
      %768 = vmatpush1.bf16.msra.mxu0 %v754
      %769 = vmatprep.subr.bf16.mxu0 0
      %770 = vmatpush1.bf16.msra.mxu0 %v755
      %771 = vmatprep.subr.bf16.mxu0 0
      %772 = vmatpush1.bf16.msra.mxu0 0
      %773 = vmatprep.subr.bf16.mxu0 0
      %774 = vmatpush1.bf16.msra.mxu0 0
      %775 = vmatprep.subr.bf16.mxu0 0
      %776 = vmatpush1.bf16.msra.mxu0 0
      %777 = vmatprep.subr.bf16.mxu0 0
      %778 = vmatpush1.bf16.msra.mxu0 0
      %779 = vmatprep.subr.bf16.mxu0 0
      %780 = vmatpush1.bf16.msra.mxu0 0
      %781 = vmatprep.subr.bf16.mxu0 0
      %782 = vmatpush1.bf16.msra.mxu0 0
      %783 = vmatprep.subr.bf16.mxu0 0
      %784 = vmatpush1.bf16.msra.mxu0 0
      %785 = vmatprep.subr.bf16.mxu0 0
      %786 = vmatpush1.bf16.msra.mxu0 0
      %787 = vmatprep.subr.bf16.mxu0 0
      %788 = vmatpush1.bf16.msra.mxu0 0
      %789 = vmatprep.subr.bf16.mxu0 0
      %790 = vmatpush1.bf16.msra.mxu0 0
      %791 = vmatprep.subr.bf16.mxu0 0
      %792 = vmatpush1.bf16.msra.mxu0 0
      %793 = vmatprep.subr.bf16.mxu0 0
      %794 = vmatpush1.bf16.msra.mxu0 0
      %795 = vmatprep.subr.bf16.mxu0 0
      %796 = vmatpush1.bf16.msra.mxu0 0
      %797 = vmatprep.subr.bf16.mxu0 0
      %798 = vmatpush1.bf16.msra.mxu0 0
      %799 = vmatprep.mubr.bf16.mxu0 0
      %800 = vmatmul.mubr.bf16.gmra.mrb[0].mxu0 %v759
      %v801 = vpop.f32.mrb[0].mxu0
      %v802 = vadd.f32 %v744, %v801
      %v803 = vpop.f32.mrb[0].mxu0
      %v804 = vpop.f32.mrb[0].mxu0
      %v805 = vadd.f32 %v744, %v804
      %v806 = vpop.f32.mrb[0].mxu0
      %807 = vmatprep.mubr.bf16.mxu0 0
      %808 = vmatmul.mubr.bf16.gmra.mrb[0].mxu0 %v762
      %v809 = vpop.f32.mrb[0].mxu0
      %v810 = vadd.f32 %v744, %v809
      %v811 = vpop.f32.mrb[0].mxu0
      %v812 = vpop.f32.mrb[0].mxu0
      %v813 = vadd.f32 %v744, %v812
      %v814 = vpop.f32.mrb[0].mxu0
      %815 = vmatprep.mubr.bf16.mxu0 0
      %816 = vmatmul.mubr.bf16.gmra.mrb[0].mxu0 %v765
      %v817 = vpop.f32.mrb[0].mxu0
      %v818 = vadd.f32 %v744, %v817
      %v819 = vpop.f32.mrb[0].mxu0
      %v820 = vpop.f32.mrb[0].mxu0
      %v821 = vadd.f32 %v744, %v820
      %v822 = vpop.f32.mrb[0].mxu0
      %823 = vdwg.mxu0
      %824 = vxpose.xlu0.b32.start [1/16] %v802, 128
      %825 = vxpose.xlu0.b32.cont [2/16] %v805, 128
      %826 = vxpose.xlu0.b32.cont [3/16] %v810, 128
      %827 = vxpose.xlu0.b32.cont [4/16] 0.0, 128
      %828 = vxpose.xlu0.b32.cont [5/16] 0.0, 128
      %829 = vxpose.xlu0.b32.cont [6/16] 0.0, 128
      %830 = vxpose.xlu0.b32.cont [7/16] 0.0, 128
      %831 = vxpose.xlu0.b32.cont [8/16] 0.0, 128
      %832 = vxpose.xlu0.b32.cont [9/16] 0.0, 128
      %833 = vxpose.xlu0.b32.cont [10/16] 0.0, 128
      %834 = vxpose.xlu0.b32.cont [11/16] 0.0, 128
      %835 = vxpose.xlu0.b32.cont [12/16] 0.0, 128
      %836 = vxpose.xlu0.b32.cont [13/16] 0.0, 128
      %837 = vxpose.xlu0.b32.cont [14/16] 0.0, 128
      %838 = vxpose.xlu0.b32.cont [15/16] 0.0, 128
      %839 = vxpose.xlu0.b32.end [16/16] 0.0, 128
      %v840 = vpop.trf.xlu0
      %v841 = vpop.trf.xlu0
      %v842 = vpop.trf.xlu0
      %v843 = vpop.trf.xlu0
      %v844 = vpop.trf.xlu0
      %v845 = vpop.trf.xlu0
      %v846 = vpop.trf.xlu0
      %v847 = vpop.trf.xlu0
      %v848 = vpop.trf.xlu0
      %v849 = vpop.trf.xlu0
      %v850 = vpop.trf.xlu0
      %v851 = vpop.trf.xlu0
      %v852 = vpop.trf.xlu0
      %v853 = vpop.trf.xlu0
      %v854 = vpop.trf.xlu0
      %v855 = vpop.trf.xlu0
      %v856 = vpack.c.bf16 %v805, %v802
      %v857 = vpack.c.bf16 %v810, %v810
      %v858 = vpack.c.bf16 %v844, %v844
      %vm859 = vcmask 64512
      %v861 = vsel %vm859, %v856, 0
      %v864 = vsel %vm859, %v857, 0
      %vm866 = vcmask 1043456
      %v868 = vsel %vm866, %v858, 0
      %870 = vmatprep.subr.bf16.mxu0 0
      %871 = vmatpush1.bf16.msra.mxu0 %v868
      %872 = vmatprep.subr.bf16.mxu0 0
      %873 = vmatpush1.bf16.msra.mxu0 0
      %874 = vmatprep.subr.bf16.mxu0 0
      %875 = vmatpush1.bf16.msra.mxu0 0
      %876 = vmatprep.subr.bf16.mxu0 0
      %877 = vmatpush1.bf16.msra.mxu0 0
      %878 = vmatprep.subr.bf16.mxu0 0
      %879 = vmatpush1.bf16.msra.mxu0 0
      %880 = vmatprep.subr.bf16.mxu0 0
      %881 = vmatpush1.bf16.msra.mxu0 0
      %882 = vmatprep.subr.bf16.mxu0 0
      %883 = vmatpush1.bf16.msra.mxu0 0
      %884 = vmatprep.subr.bf16.mxu0 0
      %885 = vmatpush1.bf16.msra.mxu0 0
      %886 = vmatprep.subr.bf16.mxu0 0
      %887 = vmatpush1.bf16.msra.mxu0 0
      %888 = vmatprep.subr.bf16.mxu0 0
      %889 = vmatpush1.bf16.msra.mxu0 0
      %890 = vmatprep.subr.bf16.mxu0 0
      %891 = vmatpush1.bf16.msra.mxu0 0
      %892 = vmatprep.subr.bf16.mxu0 0
      %893 = vmatpush1.bf16.msra.mxu0 0
      %894 = vmatprep.subr.bf16.mxu0 0
      %895 = vmatpush1.bf16.msra.mxu0 0
      %896 = vmatprep.subr.bf16.mxu0 0
      %897 = vmatpush1.bf16.msra.mxu0 0
      %898 = vmatprep.subr.bf16.mxu0 0
      %899 = vmatpush1.bf16.msra.mxu0 0
      %900 = vmatprep.subr.bf16.mxu0 0
      %901 = vmatpush1.bf16.msra.mxu0 0
      %902 = vmatprep.mubr.bf16.mxu0 0
      %903 = vmatmul.mubr.bf16.gmra.mrb[0].mxu0 %v861
      %v904 = vpop.f32.mrb[0].mxu0
      %v905 = vadd.f32 %v625, %v904
      %v906 = vpop.f32.mrb[0].mxu0
      %v907 = vpop.f32.mrb[0].mxu0
      %v908 = vadd.f32 %v625, %v907
      %v909 = vpop.f32.mrb[0].mxu0
      %910 = vmatprep.mubr.bf16.mxu0 0
      %911 = vmatmul.mubr.bf16.gmra.mrb[0].mxu0 %v864
      %v912 = vpop.f32.mrb[0].mxu0
      %v913 = vadd.f32 %v625, %v912
      %v914 = vpop.f32.mrb[0].mxu0
      %v915 = vpop.f32.mrb[0].mxu0
      %v916 = vpop.f32.mrb[0].mxu0
      %917 = vdwg.mxu0
      %vm918 = vcmask 195584
      %v919 = vsel %vm918, %v905, -inf
      %920 = vmax.xlane.f32.xlu0 %v919
      %v921 = vpop.xlane.xlu0 %920
      %v922 = vsel %vm918, %v908, -inf
      %923 = vmax.xlane.f32.xlu0 %v922
      %v924 = vpop.xlane.xlu0 %923
      %v925 = vsel %vm918, %v913, -inf
      %926 = vmax.xlane.f32.xlu0 %v925
      %v927 = vpop.xlane.xlu0 %926
      %v928 = vsub.f32 %v905, %v921
      %v929 = vsub.f32 %v908, %v924
      %v930 = vsub.f32 %v913, %v927
      %v931 = vmul.f32 %v928, 1.442695
      %v932 = vpow.pop %v931
      %v933 = vmul.f32 %v929, 1.442695
      %v934 = vpow.pop %v933
      %v935 = vmul.f32 %v930, 1.442695
      %v936 = vpow.pop %v935
      %v937 = vsel %vm918, %v932, 0.0
      %938 = vadd.xlane.f32.xlu0 %v937
      %v939 = vpop.xlane.xlu0 %938
      %v940 = vsel %vm918, %v934, 0.0
      %941 = vadd.xlane.f32.xlu0 %v940
      %v942 = vpop.xlane.xlu0 %941
      %v943 = vsel %vm918, %v936, 0.0
      %944 = vadd.xlane.f32.xlu0 %v943
      %v945 = vpop.xlane.xlu0 %944
      %v946 = vrcp.pop %v939
      %v947 = vrcp.pop %v942
      %v948 = vrcp.pop %v945
      %v949 = vmul.f32 %v932, %v946
      %v950 = vmul.f32 %v934, %v947
      %v951 = vmul.f32 %v936, %v948
      %v952 = vpack.c.bf16 %v848, %v848
      %v953 = vpack.c.bf16 %v950, %v949
      %v954 = vpack.c.bf16 %v951, %v951
      %v956 = vsel %vm918, %v952, 0
      %v959 = vsel %vm918, %v953, 0
      %v962 = vsel %vm918, %v954, 0
      %964 = vmatprep.subr.bf16.mxu0 0
      %965 = vmatpush1.bf16.xpose.msra.mxu0 %v959
      %966 = vmatprep.subr.bf16.mxu0 0
      %967 = vmatpush1.bf16.xpose.msra.mxu0 %v962
      %968 = vmatprep.subr.bf16.mxu0 0
      %969 = vmatpush1.bf16.xpose.msra.mxu0 0
      %970 = vmatprep.subr.bf16.mxu0 0
      %971 = vmatpush1.bf16.xpose.msra.mxu0 0
      %972 = vmatprep.subr.bf16.mxu0 0
      %973 = vmatpush1.bf16.xpose.msra.mxu0 0
      %974 = vmatprep.subr.bf16.mxu0 0
      %975 = vmatpush1.bf16.xpose.msra.mxu0 0
      %976 = vmatprep.subr.bf16.mxu0 0
      %977 = vmatpush1.bf16.xpose.msra.mxu0 0
      %978 = vmatprep.subr.bf16.mxu0 0
      %979 = vmatpush1.bf16.xpose.msra.mxu0 0
      %980 = vmatprep.subr.bf16.mxu0 0
      %981 = vmatpush1.bf16.xpose.msra.mxu0 0
      %982 = vmatprep.subr.bf16.mxu0 0
      %983 = vmatpush1.bf16.xpose.msra.mxu0 0
      %984 = vmatprep.subr.bf16.mxu0 0
      %985 = vmatpush1.bf16.xpose.msra.mxu0 0
      %986 = vmatprep.subr.bf16.mxu0 0
      %987 = vmatpush1.bf16.xpose.msra.mxu0 0
      %988 = vmatprep.subr.bf16.mxu0 0
      %989 = vmatpush1.bf16.xpose.msra.mxu0 0
      %990 = vmatprep.subr.bf16.mxu0 0
      %991 = vmatpush1.bf16.xpose.msra.mxu0 0
      %992 = vmatprep.subr.bf16.mxu0 0
      %993 = vmatpush1.bf16.xpose.msra.mxu0 0
      %994 = vmatprep.subr.bf16.mxu0 0
      %995 = vmatpush1.bf16.xpose.msra.mxu0 0
      %996 = vmatprep.mubr.bf16.mxu0 0
      %997 = vmatmul.mubr.bf16.gmra.mrb[0].mxu0 %v956
      %v998 = vpop.f32.mrb[0].mxu0
      %v999 = vadd.f32 0.0, %v998
      %v1000 = vpop.f32.mrb[0].mxu0
      %v1001 = vpop.f32.mrb[0].mxu0
      %v1002 = vpop.f32.mrb[0].mxu0
      %1003 = vdwg.mxu0
      %v1004 = vpack.c.bf16 %v845, %v845
      %1007 = vrot.lane.b32.xlu0 %v856, 120
      %v1008 = vpop.permute.xlu0 %1007
      %1009 = vrot.lane.b32.xlu0 %v857, 120
      %v1010 = vpop.permute.xlu0 %1009
      %v1012 = vsel %vm859, %v1008, 0
      %v1015 = vsel %vm859, %v1010, 0
      %v1018 = vsel %vm866, %v1004, 0
      %1020 = vmatprep.subr.bf16.mxu0 0
      %1021 = vmatpush1.bf16.msra.mxu0 %v1018
      %1022 = vmatprep.subr.bf16.mxu0 0
      %1023 = vmatpush1.bf16.msra.mxu0 0
      %1024 = vmatprep.subr.bf16.mxu0 0
      %1025 = vmatpush1.bf16.msra.mxu0 0
      %1026 = vmatprep.subr.bf16.mxu0 0
      %1027 = vmatpush1.bf16.msra.mxu0 0
      %1028 = vmatprep.subr.bf16.mxu0 0
      %1029 = vmatpush1.bf16.msra.mxu0 0
      %1030 = vmatprep.subr.bf16.mxu0 0
      %1031 = vmatpush1.bf16.msra.mxu0 0
      %1032 = vmatprep.subr.bf16.mxu0 0
      %1033 = vmatpush1.bf16.msra.mxu0 0
      %1034 = vmatprep.subr.bf16.mxu0 0
      %1035 = vmatpush1.bf16.msra.mxu0 0
      %1036 = vmatprep.subr.bf16.mxu0 0
      %1037 = vmatpush1.bf16.msra.mxu0 0
      %1038 = vmatprep.subr.bf16.mxu0 0
      %1039 = vmatpush1.bf16.msra.mxu0 0
      %1040 = vmatprep.subr.bf16.mxu0 0
      %1041 = vmatpush1.bf16.msra.mxu0 0
      %1042 = vmatprep.subr.bf16.mxu0 0
      %1043 = vmatpush1.bf16.msra.mxu0 0
      %1044 = vmatprep.subr.bf16.mxu0 0
      %1045 = vmatpush1.bf16.msra.mxu0 0
      %1046 = vmatprep.subr.bf16.mxu0 0
      %1047 = vmatpush1.bf16.msra.mxu0 0
      %1048 = vmatprep.subr.bf16.mxu0 0
      %1049 = vmatpush1.bf16.msra.mxu0 0
      %1050 = vmatprep.subr.bf16.mxu0 0
      %1051 = vmatpush1.bf16.msra.mxu0 0
      %1052 = vmatprep.mubr.bf16.mxu0 0
      %1053 = vmatmul.mubr.bf16.gmra.mrb[0].mxu0 %v1012
      %v1054 = vpop.f32.mrb[0].mxu0
      %v1055 = vadd.f32 %v625, %v1054
      %v1056 = vpop.f32.mrb[0].mxu0
      %v1057 = vpop.f32.mrb[0].mxu0
      %v1058 = vadd.f32 %v625, %v1057
      %v1059 = vpop.f32.mrb[0].mxu0
      %1060 = vmatprep.mubr.bf16.mxu0 0
      %1061 = vmatmul.mubr.bf16.gmra.mrb[0].mxu0 %v1015
      %v1062 = vpop.f32.mrb[0].mxu0
      %v1063 = vadd.f32 %v625, %v1062
      %v1064 = vpop.f32.mrb[0].mxu0
      %v1065 = vpop.f32.mrb[0].mxu0
      %v1066 = vpop.f32.mrb[0].mxu0
      %1067 = vdwg.mxu0
      %v1068 = vsel %vm918, %v1055, -inf
      %1069 = vmax.xlane.f32.xlu0 %v1068
      %v1070 = vpop.xlane.xlu0 %1069
      %v1071 = vsel %vm918, %v1058, -inf
      %1072 = vmax.xlane.f32.xlu0 %v1071
      %v1073 = vpop.xlane.xlu0 %1072
      %v1074 = vsel %vm918, %v1063, -inf
      %1075 = vmax.xlane.f32.xlu0 %v1074
      %v1076 = vpop.xlane.xlu0 %1075
      %v1077 = vsub.f32 %v1055, %v1070
      %v1078 = vsub.f32 %v1058, %v1073
      %v1079 = vsub.f32 %v1063, %v1076
      %v1080 = vmul.f32 %v1077, 1.442695
      %v1081 = vpow.pop %v1080
      %v1082 = vmul.f32 %v1078, 1.442695
      %v1083 = vpow.pop %v1082
      %v1084 = vmul.f32 %v1079, 1.442695
      %v1085 = vpow.pop %v1084
      %v1086 = vsel %vm918, %v1081, 0.0
      %1087 = vadd.xlane.f32.xlu0 %v1086
      %v1088 = vpop.xlane.xlu0 %1087
      %v1089 = vsel %vm918, %v1083, 0.0
      %1090 = vadd.xlane.f32.xlu0 %v1089
      %v1091 = vpop.xlane.xlu0 %1090
      %v1092 = vsel %vm918, %v1085, 0.0
      %1093 = vadd.xlane.f32.xlu0 %v1092
      %v1094 = vpop.xlane.xlu0 %1093
      %v1095 = vrcp.pop %v1088
      %v1096 = vrcp.pop %v1091
      %v1097 = vrcp.pop %v1094
      %v1098 = vmul.f32 %v1081, %v1095
      %v1099 = vmul.f32 %v1083, %v1096
      %v1100 = vmul.f32 %v1085, %v1097
      %v1101 = vpack.c.bf16 %v849, %v849
      %v1102 = vpack.c.bf16 %v1099, %v1098
      %v1103 = vpack.c.bf16 %v1100, %v1100
      %v1105 = vsel %vm918, %v1101, 0
      %v1108 = vsel %vm918, %v1102, 0
      %v1111 = vsel %vm918, %v1103, 0
      %1113 = vmatprep.subr.bf16.mxu0 0
      %1114 = vmatpush1.bf16.xpose.msra.mxu0 %v1108
      %1115 = vmatprep.subr.bf16.mxu0 0
      %1116 = vmatpush1.bf16.xpose.msra.mxu0 %v1111
      %1117 = vmatprep.subr.bf16.mxu0 0
      %1118 = vmatpush1.bf16.xpose.msra.mxu0 0
      %1119 = vmatprep.subr.bf16.mxu0 0
      %1120 = vmatpush1.bf16.xpose.msra.mxu0 0
      %1121 = vmatprep.subr.bf16.mxu0 0
      %1122 = vmatpush1.bf16.xpose.msra.mxu0 0
      %1123 = vmatprep.subr.bf16.mxu0 0
      %1124 = vmatpush1.bf16.xpose.msra.mxu0 0
      %1125 = vmatprep.subr.bf16.mxu0 0
      %1126 = vmatpush1.bf16.xpose.msra.mxu0 0
      %1127 = vmatprep.subr.bf16.mxu0 0
      %1128 = vmatpush1.bf16.xpose.msra.mxu0 0
      %1129 = vmatprep.subr.bf16.mxu0 0
      %1130 = vmatpush1.bf16.xpose.msra.mxu0 0
      %1131 = vmatprep.subr.bf16.mxu0 0
      %1132 = vmatpush1.bf16.xpose.msra.mxu0 0
      %1133 = vmatprep.subr.bf16.mxu0 0
      %1134 = vmatpush1.bf16.xpose.msra.mxu0 0
      %1135 = vmatprep.subr.bf16.mxu0 0
      %1136 = vmatpush1.bf16.xpose.msra.mxu0 0
      %1137 = vmatprep.subr.bf16.mxu0 0
      %1138 = vmatpush1.bf16.xpose.msra.mxu0 0
      %1139 = vmatprep.subr.bf16.mxu0 0
      %1140 = vmatpush1.bf16.xpose.msra.mxu0 0
      %1141 = vmatprep.subr.bf16.mxu0 0
      %1142 = vmatpush1.bf16.xpose.msra.mxu0 0
      %1143 = vmatprep.subr.bf16.mxu0 0
      %1144 = vmatpush1.bf16.xpose.msra.mxu0 0
      %1145 = vmatprep.mubr.bf16.mxu0 0
      %1146 = vmatmul.mubr.bf16.gmra.mrb[0].mxu0 %v1105
      %v1147 = vpop.f32.mrb[0].mxu0
      %v1148 = vadd.f32 0.0, %v1147
      %v1149 = vpop.f32.mrb[0].mxu0
      %v1150 = vpop.f32.mrb[0].mxu0
      %v1151 = vpop.f32.mrb[0].mxu0
      %1152 = vdwg.mxu0
      %v1153 = vpack.c.bf16 %v846, %v846
      %1154 = vrot.lane.b32.xlu0 %v856, 112
      %v1155 = vpop.permute.xlu0 %1154
      %1156 = vrot.lane.b32.xlu0 %v857, 112
      %v1157 = vpop.permute.xlu0 %1156
      %v1159 = vsel %vm859, %v1155, 0
      %v1162 = vsel %vm859, %v1157, 0
      %v1165 = vsel %vm866, %v1153, 0
      %1167 = vmatprep.subr.bf16.mxu0 0
      %1168 = vmatpush1.bf16.msra.mxu0 %v1165
      %1169 = vmatprep.subr.bf16.mxu0 0
      %1170 = vmatpush1.bf16.msra.mxu0 0
      %1171 = vmatprep.subr.bf16.mxu0 0
      %1172 = vmatpush1.bf16.msra.mxu0 0
      %1173 = vmatprep.subr.bf16.mxu0 0
      %1174 = vmatpush1.bf16.msra.mxu0 0
      %1175 = vmatprep.subr.bf16.mxu0 0
      %1176 = vmatpush1.bf16.msra.mxu0 0
      %1177 = vmatprep.subr.bf16.mxu0 0
      %1178 = vmatpush1.bf16.msra.mxu0 0
      %1179 = vmatprep.subr.bf16.mxu0 0
      %1180 = vmatpush1.bf16.msra.mxu0 0
      %1181 = vmatprep.subr.bf16.mxu0 0
      %1182 = vmatpush1.bf16.msra.mxu0 0
      %1183 = vmatprep.subr.bf16.mxu0 0
      %1184 = vmatpush1.bf16.msra.mxu0 0
      %1185 = vmatprep.subr.bf16.mxu0 0
      %1186 = vmatpush1.bf16.msra.mxu0 0
      %1187 = vmatprep.subr.bf16.mxu0 0
      %1188 = vmatpush1.bf16.msra.mxu0 0
      %1189 = vmatprep.subr.bf16.mxu0 0
      %1190 = vmatpush1.bf16.msra.mxu0 0
      %1191 = vmatprep.subr.bf16.mxu0 0
      %1192 = vmatpush1.bf16.msra.mxu0 0
      %1193 = vmatprep.subr.bf16.mxu0 0
      %1194 = vmatpush1.bf16.msra.mxu0 0
      %1195 = vmatprep.subr.bf16.mxu0 0
      %1196 = vmatpush1.bf16.msra.mxu0 0
      %1197 = vmatprep.subr.bf16.mxu0 0
      %1198 = vmatpush1.bf16.msra.mxu0 0
      %1199 = vmatprep.mubr.bf16.mxu0 0
      %1200 = vmatmul.mubr.bf16.gmra.mrb[0].mxu0 %v1159
      %v1201 = vpop.f32.mrb[0].mxu0
      %v1202 = vadd.f32 %v625, %v1201
      %v1203 = vpop.f32.mrb[0].mxu0
      %v1204 = vpop.f32.mrb[0].mxu0
      %v1205 = vadd.f32 %v625, %v1204
      %v1206 = vpop.f32.mrb[0].mxu0
      %1207 = vmatprep.mubr.bf16.mxu0 0
      %1208 = vmatmul.mubr.bf16.gmra.mrb[0].mxu0 %v1162
      %v1209 = vpop.f32.mrb[0].mxu0
      %v1210 = vadd.f32 %v625, %v1209
      %v1211 = vpop.f32.mrb[0].mxu0
      %v1212 = vpop.f32.mrb[0].mxu0
      %v1213 = vpop.f32.mrb[0].mxu0
      %1214 = vdwg.mxu0
      %v1215 = vsel %vm918, %v1202, -inf
      %1216 = vmax.xlane.f32.xlu0 %v1215
      %v1217 = vpop.xlane.xlu0 %1216
      %v1218 = vsel %vm918, %v1205, -inf
      %1219 = vmax.xlane.f32.xlu0 %v1218
      %v1220 = vpop.xlane.xlu0 %1219
      %v1221 = vsel %vm918, %v1210, -inf
      %1222 = vmax.xlane.f32.xlu0 %v1221
      %v1223 = vpop.xlane.xlu0 %1222
      %v1224 = vsub.f32 %v1202, %v1217
      %v1225 = vsub.f32 %v1205, %v1220
      %v1226 = vsub.f32 %v1210, %v1223
      %v1227 = vmul.f32 %v1224, 1.442695
      %v1228 = vpow.pop %v1227
      %v1229 = vmul.f32 %v1225, 1.442695
      %v1230 = vpow.pop %v1229
      %v1231 = vmul.f32 %v1226, 1.442695
      %v1232 = vpow.pop %v1231
      %v1233 = vsel %vm918, %v1228, 0.0
      %1234 = vadd.xlane.f32.xlu0 %v1233
      %v1235 = vpop.xlane.xlu0 %1234
      %v1236 = vsel %vm918, %v1230, 0.0
      %1237 = vadd.xlane.f32.xlu0 %v1236
      %v1238 = vpop.xlane.xlu0 %1237
      %v1239 = vsel %vm918, %v1232, 0.0
      %1240 = vadd.xlane.f32.xlu0 %v1239
      %v1241 = vpop.xlane.xlu0 %1240
      %v1242 = vrcp.pop %v1235
      %v1243 = vrcp.pop %v1238
      %v1244 = vrcp.pop %v1241
      %v1245 = vmul.f32 %v1228, %v1242
      %v1246 = vmul.f32 %v1230, %v1243
      %v1247 = vmul.f32 %v1232, %v1244
      %v1248 = vpack.c.bf16 %v850, %v850
      %v1249 = vpack.c.bf16 %v1246, %v1245
      %v1250 = vpack.c.bf16 %v1247, %v1247
      %v1252 = vsel %vm918, %v1248, 0
      %v1255 = vsel %vm918, %v1249, 0
      %v1258 = vsel %vm918, %v1250, 0
      %1260 = vmatprep.subr.bf16.mxu0 0
      %1261 = vmatpush1.bf16.xpose.msra.mxu0 %v1255
      %1262 = vmatprep.subr.bf16.mxu0 0
      %1263 = vmatpush1.bf16.xpose.msra.mxu0 %v1258
      %1264 = vmatprep.subr.bf16.mxu0 0
      %1265 = vmatpush1.bf16.xpose.msra.mxu0 0
      %1266 = vmatprep.subr.bf16.mxu0 0
      %1267 = vmatpush1.bf16.xpose.msra.mxu0 0
      %1268 = vmatprep.subr.bf16.mxu0 0
      %1269 = vmatpush1.bf16.xpose.msra.mxu0 0
      %1270 = vmatprep.subr.bf16.mxu0 0
      %1271 = vmatpush1.bf16.xpose.msra.mxu0 0
      %1272 = vmatprep.subr.bf16.mxu0 0
      %1273 = vmatpush1.bf16.xpose.msra.mxu0 0
      %1274 = vmatprep.subr.bf16.mxu0 0
      %1275 = vmatpush1.bf16.xpose.msra.mxu0 0
      %1276 = vmatprep.subr.bf16.mxu0 0
      %1277 = vmatpush1.bf16.xpose.msra.mxu0 0
      %1278 = vmatprep.subr.bf16.mxu0 0
      %1279 = vmatpush1.bf16.xpose.msra.mxu0 0
      %1280 = vmatprep.subr.bf16.mxu0 0
      %1281 = vmatpush1.bf16.xpose.msra.mxu0 0
      %1282 = vmatprep.subr.bf16.mxu0 0
      %1283 = vmatpush1.bf16.xpose.msra.mxu0 0
      %1284 = vmatprep.subr.bf16.mxu0 0
      %1285 = vmatpush1.bf16.xpose.msra.mxu0 0
      %1286 = vmatprep.subr.bf16.mxu0 0
      %1287 = vmatpush1.bf16.xpose.msra.mxu0 0
      %1288 = vmatprep.subr.bf16.mxu0 0
      %1289 = vmatpush1.bf16.xpose.msra.mxu0 0
      %1290 = vmatprep.subr.bf16.mxu0 0
      %1291 = vmatpush1.bf16.xpose.msra.mxu0 0
      %1292 = vmatprep.mubr.bf16.mxu0 0
      %1293 = vmatmul.mubr.bf16.gmra.mrb[0].mxu0 %v1252
      %v1294 = vpop.f32.mrb[0].mxu0
      %v1295 = vadd.f32 0.0, %v1294
      %v1296 = vpop.f32.mrb[0].mxu0
      %v1297 = vpop.f32.mrb[0].mxu0
      %v1298 = vpop.f32.mrb[0].mxu0
      %1299 = vdwg.mxu0
      %v1300 = vpack.c.bf16 %v847, %v847
      %1301 = vrot.lane.b32.xlu0 %v856, 104
      %v1302 = vpop.permute.xlu0 %1301
      %1303 = vrot.lane.b32.xlu0 %v857, 104
      %v1304 = vpop.permute.xlu0 %1303
      %v1306 = vsel %vm859, %v1302, 0
      %v1309 = vsel %vm859, %v1304, 0
      %v1312 = vsel %vm866, %v1300, 0
      %1314 = vmatprep.subr.bf16.mxu0 0
      %1315 = vmatpush1.bf16.msra.mxu0 %v1312
      %1316 = vmatprep.subr.bf16.mxu0 0
      %1317 = vmatpush1.bf16.msra.mxu0 0
      %1318 = vmatprep.subr.bf16.mxu0 0
      %1319 = vmatpush1.bf16.msra.mxu0 0
      %1320 = vmatprep.subr.bf16.mxu0 0
      %1321 = vmatpush1.bf16.msra.mxu0 0
      %1322 = vmatprep.subr.bf16.mxu0 0
      %1323 = vmatpush1.bf16.msra.mxu0 0
      %1324 = vmatprep.subr.bf16.mxu0 0
      %1325 = vmatpush1.bf16.msra.mxu0 0
      %1326 = vmatprep.subr.bf16.mxu0 0
      %1327 = vmatpush1.bf16.msra.mxu0 0
      %1328 = vmatprep.subr.bf16.mxu0 0
      %1329 = vmatpush1.bf16.msra.mxu0 0
      %1330 = vmatprep.subr.bf16.mxu0 0
      %1331 = vmatpush1.bf16.msra.mxu0 0
      %1332 = vmatprep.subr.bf16.mxu0 0
      %1333 = vmatpush1.bf16.msra.mxu0 0
      %1334 = vmatprep.subr.bf16.mxu0 0
      %1335 = vmatpush1.bf16.msra.mxu0 0
      %1336 = vmatprep.subr.bf16.mxu0 0
      %1337 = vmatpush1.bf16.msra.mxu0 0
      %1338 = vmatprep.subr.bf16.mxu0 0
      %1339 = vmatpush1.bf16.msra.mxu0 0
      %1340 = vmatprep.subr.bf16.mxu0 0
      %1341 = vmatpush1.bf16.msra.mxu0 0
      %1342 = vmatprep.subr.bf16.mxu0 0
      %1343 = vmatpush1.bf16.msra.mxu0 0
      %1344 = vmatprep.subr.bf16.mxu0 0
      %1345 = vmatpush1.bf16.msra.mxu0 0
      %1346 = vmatprep.mubr.bf16.mxu0 0
      %1347 = vmatmul.mubr.bf16.gmra.mrb[0].mxu0 %v1306
      %v1348 = vpop.f32.mrb[0].mxu0
      %v1349 = vadd.f32 %v625, %v1348
      %v1350 = vpop.f32.mrb[0].mxu0
      %v1351 = vpop.f32.mrb[0].mxu0
      %v1352 = vadd.f32 %v625, %v1351
      %v1353 = vpop.f32.mrb[0].mxu0
      %1354 = vmatprep.mubr.bf16.mxu0 0
      %1355 = vmatmul.mubr.bf16.gmra.mrb[0].mxu0 %v1309
      %v1356 = vpop.f32.mrb[0].mxu0
      %v1357 = vadd.f32 %v625, %v1356
      %v1358 = vpop.f32.mrb[0].mxu0
      %v1359 = vpop.f32.mrb[0].mxu0
      %v1360 = vpop.f32.mrb[0].mxu0
      %1361 = vdwg.mxu0
      %v1362 = vsel %vm918, %v1349, -inf
      %1363 = vmax.xlane.f32.xlu0 %v1362
      %v1364 = vpop.xlane.xlu0 %1363
      %v1365 = vsel %vm918, %v1352, -inf
      %1366 = vmax.xlane.f32.xlu0 %v1365
      %v1367 = vpop.xlane.xlu0 %1366
      %v1368 = vsel %vm918, %v1357, -inf
      %1369 = vmax.xlane.f32.xlu0 %v1368
      %v1370 = vpop.xlane.xlu0 %1369
      %v1371 = vsub.f32 %v1349, %v1364
      %v1372 = vsub.f32 %v1352, %v1367
      %v1373 = vsub.f32 %v1357, %v1370
      %v1374 = vmul.f32 %v1371, 1.442695
      %v1375 = vpow.pop %v1374
      %v1376 = vmul.f32 %v1372, 1.442695
      %v1377 = vpow.pop %v1376
      %v1378 = vmul.f32 %v1373, 1.442695
      %v1379 = vpow.pop %v1378
      %v1380 = vsel %vm918, %v1375, 0.0
      %1381 = vadd.xlane.f32.xlu0 %v1380
      %v1382 = vpop.xlane.xlu0 %1381
      %v1383 = vsel %vm918, %v1377, 0.0
      %1384 = vadd.xlane.f32.xlu0 %v1383
      %v1385 = vpop.xlane.xlu0 %1384
      %v1386 = vsel %vm918, %v1379, 0.0
      %1387 = vadd.xlane.f32.xlu0 %v1386
      %v1388 = vpop.xlane.xlu0 %1387
      %v1389 = vrcp.pop %v1382
      %v1390 = vrcp.pop %v1385
      %v1391 = vrcp.pop %v1388
      %v1392 = vmul.f32 %v1375, %v1389
      %v1393 = vmul.f32 %v1377, %v1390
      %v1394 = vmul.f32 %v1379, %v1391
      %v1395 = vpack.c.bf16 %v851, %v851
      %v1396 = vpack.c.bf16 %v1393, %v1392
      %v1397 = vpack.c.bf16 %v1394, %v1394
      %v1399 = vsel %vm918, %v1395, 0
      %v1402 = vsel %vm918, %v1396, 0
      %v1405 = vsel %vm918, %v1397, 0
      %1407 = vmatprep.subr.bf16.mxu0 0
      %1408 = vmatpush1.bf16.xpose.msra.mxu0 %v1402
      %1409 = vmatprep.subr.bf16.mxu0 0
      %1410 = vmatpush1.bf16.xpose.msra.mxu0 %v1405
      %1411 = vmatprep.subr.bf16.mxu0 0
      %1412 = vmatpush1.bf16.xpose.msra.mxu0 0
      %1413 = vmatprep.subr.bf16.mxu0 0
      %1414 = vmatpush1.bf16.xpose.msra.mxu0 0
      %1415 = vmatprep.subr.bf16.mxu0 0
      %1416 = vmatpush1.bf16.xpose.msra.mxu0 0
      %1417 = vmatprep.subr.bf16.mxu0 0
      %1418 = vmatpush1.bf16.xpose.msra.mxu0 0
      %1419 = vmatprep.subr.bf16.mxu0 0
      %1420 = vmatpush1.bf16.xpose.msra.mxu0 0
      %1421 = vmatprep.subr.bf16.mxu0 0
      %1422 = vmatpush1.bf16.xpose.msra.mxu0 0
      %1423 = vmatprep.subr.bf16.mxu0 0
      %1424 = vmatpush1.bf16.xpose.msra.mxu0 0
      %1425 = vmatprep.subr.bf16.mxu0 0
      %1426 = vmatpush1.bf16.xpose.msra.mxu0 0
      %1427 = vmatprep.subr.bf16.mxu0 0
      %1428 = vmatpush1.bf16.xpose.msra.mxu0 0
      %1429 = vmatprep.subr.bf16.mxu0 0
      %1430 = vmatpush1.bf16.xpose.msra.mxu0 0
      %1431 = vmatprep.subr.bf16.mxu0 0
      %1432 = vmatpush1.bf16.xpose.msra.mxu0 0
      %1433 = vmatprep.subr.bf16.mxu0 0
      %1434 = vmatpush1.bf16.xpose.msra.mxu0 0
      %1435 = vmatprep.subr.bf16.mxu0 0
      %1436 = vmatpush1.bf16.xpose.msra.mxu0 0
      %1437 = vmatprep.subr.bf16.mxu0 0
      %1438 = vmatpush1.bf16.xpose.msra.mxu0 0
      %1439 = vmatprep.mubr.bf16.mxu0 0
      %1440 = vmatmul.mubr.bf16.gmra.mrb[0].mxu0 %v1399
      %v1441 = vpop.f32.mrb[0].mxu0
      %v1442 = vadd.f32 0.0, %v1441
      %v1443 = vpop.f32.mrb[0].mxu0
      %v1444 = vpop.f32.mrb[0].mxu0
      %v1445 = vpop.f32.mrb[0].mxu0
      %1446 = vdwg.mxu0
      %1447 = vxpose.xlu0.b32.start [1/16] %v999, 128
      %1448 = vxpose.xlu0.b32.cont [2/16] %v1148, 128
      %1449 = vxpose.xlu0.b32.cont [3/16] %v1295, 128
      %1450 = vxpose.xlu0.b32.cont [4/16] %v1442, 128
      %1451 = vxpose.xlu0.b32.cont [5/16] 0.0, 128
      %1452 = vxpose.xlu0.b32.cont [6/16] 0.0, 128
      %1453 = vxpose.xlu0.b32.cont [7/16] 0.0, 128
      %1454 = vxpose.xlu0.b32.cont [8/16] 0.0, 128
      %1455 = vxpose.xlu0.b32.cont [9/16] 0.0, 128
      %1456 = vxpose.xlu0.b32.cont [10/16] 0.0, 128
      %1457 = vxpose.xlu0.b32.cont [11/16] 0.0, 128
      %1458 = vxpose.xlu0.b32.cont [12/16] 0.0, 128
      %1459 = vxpose.xlu0.b32.cont [13/16] 0.0, 128
      %1460 = vxpose.xlu0.b32.cont [14/16] 0.0, 128
      %1461 = vxpose.xlu0.b32.cont [15/16] 0.0, 128
      %1462 = vxpose.xlu0.b32.end [16/16] 0.0, 128
      %v1463 = vpop.trf.xlu0
      %v1464 = vpop.trf.xlu0
      %v1465 = vpop.trf.xlu0
      %v1466 = vpop.trf.xlu0
      %v1467 = vpop.trf.xlu0
      %v1468 = vpop.trf.xlu0
      %v1469 = vpop.trf.xlu0
      %v1470 = vpop.trf.xlu0
      %v1471 = vpop.trf.xlu0
      %v1472 = vpop.trf.xlu0
      %v1473 = vpop.trf.xlu0
      %v1474 = vpop.trf.xlu0
      %v1475 = vpop.trf.xlu0
      %v1476 = vpop.trf.xlu0
      %v1477 = vpop.trf.xlu0
      %v1478 = vpop.trf.xlu0
      %1479 = vxpose.xlu0.b32.start [1/16] %v813, 128
      %1480 = vxpose.xlu0.b32.cont [2/16] %v818, 128
      %1481 = vxpose.xlu0.b32.cont [3/16] %v821, 128
      %1482 = vxpose.xlu0.b32.cont [4/16] 0.0, 128
      %1483 = vxpose.xlu0.b32.cont [5/16] 0.0, 128
      %1484 = vxpose.xlu0.b32.cont [6/16] 0.0, 128
      %1485 = vxpose.xlu0.b32.cont [7/16] 0.0, 128
      %1486 = vxpose.xlu0.b32.cont [8/16] 0.0, 128
      %1487 = vxpose.xlu0.b32.cont [9/16] 0.0, 128
      %1488 = vxpose.xlu0.b32.cont [10/16] 0.0, 128
      %1489 = vxpose.xlu0.b32.cont [11/16] 0.0, 128
      %1490 = vxpose.xlu0.b32.cont [12/16] 0.0, 128
      %1491 = vxpose.xlu0.b32.cont [13/16] 0.0, 128
      %1492 = vxpose.xlu0.b32.cont [14/16] 0.0, 128
      %1493 = vxpose.xlu0.b32.cont [15/16] 0.0, 128
      %1494 = vxpose.xlu0.b32.end [16/16] 0.0, 128
      %v1495 = vpop.trf.xlu0
      %v1496 = vpop.trf.xlu0
      %v1497 = vpop.trf.xlu0
      %v1498 = vpop.trf.xlu0
      %v1499 = vpop.trf.xlu0
      %v1500 = vpop.trf.xlu0
      %v1501 = vpop.trf.xlu0
      %v1502 = vpop.trf.xlu0
      %v1503 = vpop.trf.xlu0
      %v1504 = vpop.trf.xlu0
      %v1505 = vpop.trf.xlu0
      %v1506 = vpop.trf.xlu0
      %v1507 = vpop.trf.xlu0
      %v1508 = vpop.trf.xlu0
      %v1509 = vpop.trf.xlu0
      %v1510 = vpop.trf.xlu0
      %v1511 = vpack.c.bf16 %v818, %v813
      %v1512 = vpack.c.bf16 %v821, %v821
      %v1513 = vpack.c.bf16 %v1499, %v1499
      %v1515 = vsel %vm859, %v1511, 0
      %v1518 = vsel %vm859, %v1512, 0
      %v1521 = vsel %vm866, %v1513, 0
      %1523 = vmatprep.subr.bf16.mxu0 0
      %1524 = vmatpush1.bf16.msra.mxu0 %v1521
      %1525 = vmatprep.subr.bf16.mxu0 0
      %1526 = vmatpush1.bf16.msra.mxu0 0
      %1527 = vmatprep.subr.bf16.mxu0 0
      %1528 = vmatpush1.bf16.msra.mxu0 0
      %1529 = vmatprep.subr.bf16.mxu0 0
      %1530 = vmatpush1.bf16.msra.mxu0 0
      %1531 = vmatprep.subr.bf16.mxu0 0
      %1532 = vmatpush1.bf16.msra.mxu0 0
      %1533 = vmatprep.subr.bf16.mxu0 0
      %1534 = vmatpush1.bf16.msra.mxu0 0
      %1535 = vmatprep.subr.bf16.mxu0 0
      %1536 = vmatpush1.bf16.msra.mxu0 0
      %1537 = vmatprep.subr.bf16.mxu0 0
      %1538 = vmatpush1.bf16.msra.mxu0 0
      %1539 = vmatprep.subr.bf16.mxu0 0
      %1540 = vmatpush1.bf16.msra.mxu0 0
      %1541 = vmatprep.subr.bf16.mxu0 0
      %1542 = vmatpush1.bf16.msra.mxu0 0
      %1543 = vmatprep.subr.bf16.mxu0 0
      %1544 = vmatpush1.bf16.msra.mxu0 0
      %1545 = vmatprep.subr.bf16.mxu0 0
      %1546 = vmatpush1.bf16.msra.mxu0 0
      %1547 = vmatprep.subr.bf16.mxu0 0
      %1548 = vmatpush1.bf16.msra.mxu0 0
      %1549 = vmatprep.subr.bf16.mxu0 0
      %1550 = vmatpush1.bf16.msra.mxu0 0
      %1551 = vmatprep.subr.bf16.mxu0 0
      %1552 = vmatpush1.bf16.msra.mxu0 0
      %1553 = vmatprep.subr.bf16.mxu0 0
      %1554 = vmatpush1.bf16.msra.mxu0 0
      %1555 = vmatprep.mubr.bf16.mxu0 0
      %1556 = vmatmul.mubr.bf16.gmra.mrb[0].mxu0 %v1515
      %v1557 = vpop.f32.mrb[0].mxu0
      %v1558 = vadd.f32 %v625, %v1557
      %v1559 = vpop.f32.mrb[0].mxu0
      %v1560 = vpop.f32.mrb[0].mxu0
      %v1561 = vadd.f32 %v625, %v1560
      %v1562 = vpop.f32.mrb[0].mxu0
      %1563 = vmatprep.mubr.bf16.mxu0 0
      %1564 = vmatmul.mubr.bf16.gmra.mrb[0].mxu0 %v1518
      %v1565 = vpop.f32.mrb[0].mxu0
      %v1566 = vadd.f32 %v625, %v1565
      %v1567 = vpop.f32.mrb[0].mxu0
      %v1568 = vpop.f32.mrb[0].mxu0
      %v1569 = vpop.f32.mrb[0].mxu0
      %1570 = vdwg.mxu0
      %v1571 = vsel %vm918, %v1558, -inf
      %1572 = vmax.xlane.f32.xlu0 %v1571
      %v1573 = vpop.xlane.xlu0 %1572
      %v1574 = vsel %vm918, %v1561, -inf
      %1575 = vmax.xlane.f32.xlu0 %v1574
      %v1576 = vpop.xlane.xlu0 %1575
      %v1577 = vsel %vm918, %v1566, -inf
      %1578 = vmax.xlane.f32.xlu0 %v1577
      %v1579 = vpop.xlane.xlu0 %1578
      %v1580 = vsub.f32 %v1558, %v1573
      %v1581 = vsub.f32 %v1561, %v1576
      %v1582 = vsub.f32 %v1566, %v1579
      %v1583 = vmul.f32 %v1580, 1.442695
      %v1584 = vpow.pop %v1583
      %v1585 = vmul.f32 %v1581, 1.442695
      %v1586 = vpow.pop %v1585
      %v1587 = vmul.f32 %v1582, 1.442695
      %v1588 = vpow.pop %v1587
      %v1589 = vsel %vm918, %v1584, 0.0
      %1590 = vadd.xlane.f32.xlu0 %v1589
      %v1591 = vpop.xlane.xlu0 %1590
      %v1592 = vsel %vm918, %v1586, 0.0
      %1593 = vadd.xlane.f32.xlu0 %v1592
      %v1594 = vpop.xlane.xlu0 %1593
      %v1595 = vsel %vm918, %v1588, 0.0
      %1596 = vadd.xlane.f32.xlu0 %v1595
      %v1597 = vpop.xlane.xlu0 %1596
      %v1598 = vrcp.pop %v1591
      %v1599 = vrcp.pop %v1594
      %v1600 = vrcp.pop %v1597
      %v1601 = vmul.f32 %v1584, %v1598
      %v1602 = vmul.f32 %v1586, %v1599
      %v1603 = vmul.f32 %v1588, %v1600
      %v1604 = vpack.c.bf16 %v1503, %v1503
      %v1605 = vpack.c.bf16 %v1602, %v1601
      %v1606 = vpack.c.bf16 %v1603, %v1603
      %v1608 = vsel %vm918, %v1604, 0
      %v1611 = vsel %vm918, %v1605, 0
      %v1614 = vsel %vm918, %v1606, 0
      %1616 = vmatprep.subr.bf16.mxu0 0
      %1617 = vmatpush1.bf16.xpose.msra.mxu0 %v1611
      %1618 = vmatprep.subr.bf16.mxu0 0
      %1619 = vmatpush1.bf16.xpose.msra.mxu0 %v1614
      %1620 = vmatprep.subr.bf16.mxu0 0
      %1621 = vmatpush1.bf16.xpose.msra.mxu0 0
      %1622 = vmatprep.subr.bf16.mxu0 0
      %1623 = vmatpush1.bf16.xpose.msra.mxu0 0
      %1624 = vmatprep.subr.bf16.mxu0 0
      %1625 = vmatpush1.bf16.xpose.msra.mxu0 0
      %1626 = vmatprep.subr.bf16.mxu0 0
      %1627 = vmatpush1.bf16.xpose.msra.mxu0 0
      %1628 = vmatprep.subr.bf16.mxu0 0
      %1629 = vmatpush1.bf16.xpose.msra.mxu0 0
      %1630 = vmatprep.subr.bf16.mxu0 0
      %1631 = vmatpush1.bf16.xpose.msra.mxu0 0
      %1632 = vmatprep.subr.bf16.mxu0 0
      %1633 = vmatpush1.bf16.xpose.msra.mxu0 0
      %1634 = vmatprep.subr.bf16.mxu0 0
      %1635 = vmatpush1.bf16.xpose.msra.mxu0 0
      %1636 = vmatprep.subr.bf16.mxu0 0
      %1637 = vmatpush1.bf16.xpose.msra.mxu0 0
      %1638 = vmatprep.subr.bf16.mxu0 0
      %1639 = vmatpush1.bf16.xpose.msra.mxu0 0
      %1640 = vmatprep.subr.bf16.mxu0 0
      %1641 = vmatpush1.bf16.xpose.msra.mxu0 0
      %1642 = vmatprep.subr.bf16.mxu0 0
      %1643 = vmatpush1.bf16.xpose.msra.mxu0 0
      %1644 = vmatprep.subr.bf16.mxu0 0
      %1645 = vmatpush1.bf16.xpose.msra.mxu0 0
      %1646 = vmatprep.subr.bf16.mxu0 0
      %1647 = vmatpush1.bf16.xpose.msra.mxu0 0
      %1648 = vmatprep.mubr.bf16.mxu0 0
      %1649 = vmatmul.mubr.bf16.gmra.mrb[0].mxu0 %v1608
      %v1650 = vpop.f32.mrb[0].mxu0
      %v1651 = vadd.f32 0.0, %v1650
      %v1652 = vpop.f32.mrb[0].mxu0
      %v1653 = vpop.f32.mrb[0].mxu0
      %v1654 = vpop.f32.mrb[0].mxu0
      %1655 = vdwg.mxu0
      %v1656 = vpack.c.bf16 %v1500, %v1500
      %1659 = vrot.lane.b32.xlu0 %v1511, 120
      %v1660 = vpop.permute.xlu0 %1659
      %1661 = vrot.lane.b32.xlu0 %v1512, 120
      %v1662 = vpop.permute.xlu0 %1661
      %v1664 = vsel %vm859, %v1660, 0
      %v1667 = vsel %vm859, %v1662, 0
      %v1670 = vsel %vm866, %v1656, 0
      %1672 = vmatprep.subr.bf16.mxu0 0
      %1673 = vmatpush1.bf16.msra.mxu0 %v1670
      %1674 = vmatprep.subr.bf16.mxu0 0
      %1675 = vmatpush1.bf16.msra.mxu0 0
      %1676 = vmatprep.subr.bf16.mxu0 0
      %1677 = vmatpush1.bf16.msra.mxu0 0
      %1678 = vmatprep.subr.bf16.mxu0 0
      %1679 = vmatpush1.bf16.msra.mxu0 0
      %1680 = vmatprep.subr.bf16.mxu0 0
      %1681 = vmatpush1.bf16.msra.mxu0 0
      %1682 = vmatprep.subr.bf16.mxu0 0
      %1683 = vmatpush1.bf16.msra.mxu0 0
      %1684 = vmatprep.subr.bf16.mxu0 0
      %1685 = vmatpush1.bf16.msra.mxu0 0
      %1686 = vmatprep.subr.bf16.mxu0 0
      %1687 = vmatpush1.bf16.msra.mxu0 0
      %1688 = vmatprep.subr.bf16.mxu0 0
      %1689 = vmatpush1.bf16.msra.mxu0 0
      %1690 = vmatprep.subr.bf16.mxu0 0
      %1691 = vmatpush1.bf16.msra.mxu0 0
      %1692 = vmatprep.subr.bf16.mxu0 0
      %1693 = vmatpush1.bf16.msra.mxu0 0
      %1694 = vmatprep.subr.bf16.mxu0 0
      %1695 = vmatpush1.bf16.msra.mxu0 0
      %1696 = vmatprep.subr.bf16.mxu0 0
      %1697 = vmatpush1.bf16.msra.mxu0 0
      %1698 = vmatprep.subr.bf16.mxu0 0
      %1699 = vmatpush1.bf16.msra.mxu0 0
      %1700 = vmatprep.subr.bf16.mxu0 0
      %1701 = vmatpush1.bf16.msra.mxu0 0
      %1702 = vmatprep.subr.bf16.mxu0 0
      %1703 = vmatpush1.bf16.msra.mxu0 0
      %1704 = vmatprep.mubr.bf16.mxu0 0
      %1705 = vmatmul.mubr.bf16.gmra.mrb[0].mxu0 %v1664
      %v1706 = vpop.f32.mrb[0].mxu0
      %v1707 = vadd.f32 %v625, %v1706
      %v1708 = vpop.f32.mrb[0].mxu0
      %v1709 = vpop.f32.mrb[0].mxu0
      %v1710 = vadd.f32 %v625, %v1709
      %v1711 = vpop.f32.mrb[0].mxu0
      %1712 = vmatprep.mubr.bf16.mxu0 0
      %1713 = vmatmul.mubr.bf16.gmra.mrb[0].mxu0 %v1667
      %v1714 = vpop.f32.mrb[0].mxu0
      %v1715 = vadd.f32 %v625, %v1714
      %v1716 = vpop.f32.mrb[0].mxu0
      %v1717 = vpop.f32.mrb[0].mxu0
      %v1718 = vpop.f32.mrb[0].mxu0
      %1719 = vdwg.mxu0
      %v1720 = vsel %vm918, %v1707, -inf
      %1721 = vmax.xlane.f32.xlu0 %v1720
      %v1722 = vpop.xlane.xlu0 %1721
      %v1723 = vsel %vm918, %v1710, -inf
      %1724 = vmax.xlane.f32.xlu0 %v1723
      %v1725 = vpop.xlane.xlu0 %1724
      %v1726 = vsel %vm918, %v1715, -inf
      %1727 = vmax.xlane.f32.xlu0 %v1726
      %v1728 = vpop.xlane.xlu0 %1727
      %v1729 = vsub.f32 %v1707, %v1722
      %v1730 = vsub.f32 %v1710, %v1725
      %v1731 = vsub.f32 %v1715, %v1728
      %v1732 = vmul.f32 %v1729, 1.442695
      %v1733 = vpow.pop %v1732
      %v1734 = vmul.f32 %v1730, 1.442695
      %v1735 = vpow.pop %v1734
      %v1736 = vmul.f32 %v1731, 1.442695
      %v1737 = vpow.pop %v1736
      %v1738 = vsel %vm918, %v1733, 0.0
      %1739 = vadd.xlane.f32.xlu0 %v1738
      %v1740 = vpop.xlane.xlu0 %1739
      %v1741 = vsel %vm918, %v1735, 0.0
      %1742 = vadd.xlane.f32.xlu0 %v1741
      %v1743 = vpop.xlane.xlu0 %1742
      %v1744 = vsel %vm918, %v1737, 0.0
      %1745 = vadd.xlane.f32.xlu0 %v1744
      %v1746 = vpop.xlane.xlu0 %1745
      %v1747 = vrcp.pop %v1740
      %v1748 = vrcp.pop %v1743
      %v1749 = vrcp.pop %v1746
      %v1750 = vmul.f32 %v1733, %v1747
      %v1751 = vmul.f32 %v1735, %v1748
      %v1752 = vmul.f32 %v1737, %v1749
      %v1753 = vpack.c.bf16 %v1504, %v1504
      %v1754 = vpack.c.bf16 %v1751, %v1750
      %v1755 = vpack.c.bf16 %v1752, %v1752
      %v1757 = vsel %vm918, %v1753, 0
      %v1760 = vsel %vm918, %v1754, 0
      %v1763 = vsel %vm918, %v1755, 0
      %1765 = vmatprep.subr.bf16.mxu0 0
      %1766 = vmatpush1.bf16.xpose.msra.mxu0 %v1760
      %1767 = vmatprep.subr.bf16.mxu0 0
      %1768 = vmatpush1.bf16.xpose.msra.mxu0 %v1763
      %1769 = vmatprep.subr.bf16.mxu0 0
      %1770 = vmatpush1.bf16.xpose.msra.mxu0 0
      %1771 = vmatprep.subr.bf16.mxu0 0
      %1772 = vmatpush1.bf16.xpose.msra.mxu0 0
      %1773 = vmatprep.subr.bf16.mxu0 0
      %1774 = vmatpush1.bf16.xpose.msra.mxu0 0
      %1775 = vmatprep.subr.bf16.mxu0 0
      %1776 = vmatpush1.bf16.xpose.msra.mxu0 0
      %1777 = vmatprep.subr.bf16.mxu0 0
      %1778 = vmatpush1.bf16.xpose.msra.mxu0 0
      %1779 = vmatprep.subr.bf16.mxu0 0
      %1780 = vmatpush1.bf16.xpose.msra.mxu0 0
      %1781 = vmatprep.subr.bf16.mxu0 0
      %1782 = vmatpush1.bf16.xpose.msra.mxu0 0
      %1783 = vmatprep.subr.bf16.mxu0 0
      %1784 = vmatpush1.bf16.xpose.msra.mxu0 0
      %1785 = vmatprep.subr.bf16.mxu0 0
      %1786 = vmatpush1.bf16.xpose.msra.mxu0 0
      %1787 = vmatprep.subr.bf16.mxu0 0
      %1788 = vmatpush1.bf16.xpose.msra.mxu0 0
      %1789 = vmatprep.subr.bf16.mxu0 0
      %1790 = vmatpush1.bf16.xpose.msra.mxu0 0
      %1791 = vmatprep.subr.bf16.mxu0 0
      %1792 = vmatpush1.bf16.xpose.msra.mxu0 0
      %1793 = vmatprep.subr.bf16.mxu0 0
      %1794 = vmatpush1.bf16.xpose.msra.mxu0 0
      %1795 = vmatprep.subr.bf16.mxu0 0
      %1796 = vmatpush1.bf16.xpose.msra.mxu0 0
      %1797 = vmatprep.mubr.bf16.mxu0 0
      %1798 = vmatmul.mubr.bf16.gmra.mrb[0].mxu0 %v1757
      %v1799 = vpop.f32.mrb[0].mxu0
      %v1800 = vadd.f32 0.0, %v1799
      %v1801 = vpop.f32.mrb[0].mxu0
      %v1802 = vpop.f32.mrb[0].mxu0
      %v1803 = vpop.f32.mrb[0].mxu0
      %1804 = vdwg.mxu0
      %v1805 = vpack.c.bf16 %v1501, %v1501
      %1806 = vrot.lane.b32.xlu0 %v1511, 112
      %v1807 = vpop.permute.xlu0 %1806
      %1808 = vrot.lane.b32.xlu0 %v1512, 112
      %v1809 = vpop.permute.xlu0 %1808
      %v1811 = vsel %vm859, %v1807, 0
      %v1814 = vsel %vm859, %v1809, 0
      %v1817 = vsel %vm866, %v1805, 0
      %1819 = vmatprep.subr.bf16.mxu0 0
      %1820 = vmatpush1.bf16.msra.mxu0 %v1817
      %1821 = vmatprep.subr.bf16.mxu0 0
      %1822 = vmatpush1.bf16.msra.mxu0 0
      %1823 = vmatprep.subr.bf16.mxu0 0
      %1824 = vmatpush1.bf16.msra.mxu0 0
      %1825 = vmatprep.subr.bf16.mxu0 0
      %1826 = vmatpush1.bf16.msra.mxu0 0
      %1827 = vmatprep.subr.bf16.mxu0 0
      %1828 = vmatpush1.bf16.msra.mxu0 0
      %1829 = vmatprep.subr.bf16.mxu0 0
      %1830 = vmatpush1.bf16.msra.mxu0 0
      %1831 = vmatprep.subr.bf16.mxu0 0
      %1832 = vmatpush1.bf16.msra.mxu0 0
      %1833 = vmatprep.subr.bf16.mxu0 0
      %1834 = vmatpush1.bf16.msra.mxu0 0
      %1835 = vmatprep.subr.bf16.mxu0 0
      %1836 = vmatpush1.bf16.msra.mxu0 0
      %1837 = vmatprep.subr.bf16.mxu0 0
      %1838 = vmatpush1.bf16.msra.mxu0 0
      %1839 = vmatprep.subr.bf16.mxu0 0
      %1840 = vmatpush1.bf16.msra.mxu0 0
      %1841 = vmatprep.subr.bf16.mxu0 0
      %1842 = vmatpush1.bf16.msra.mxu0 0
      %1843 = vmatprep.subr.bf16.mxu0 0
      %1844 = vmatpush1.bf16.msra.mxu0 0
      %1845 = vmatprep.subr.bf16.mxu0 0
      %1846 = vmatpush1.bf16.msra.mxu0 0
      %1847 = vmatprep.subr.bf16.mxu0 0
      %1848 = vmatpush1.bf16.msra.mxu0 0
      %1849 = vmatprep.subr.bf16.mxu0 0
      %1850 = vmatpush1.bf16.msra.mxu0 0
      %1851 = vmatprep.mubr.bf16.mxu0 0
      %1852 = vmatmul.mubr.bf16.gmra.mrb[0].mxu0 %v1811
      %v1853 = vpop.f32.mrb[0].mxu0
      %v1854 = vadd.f32 %v625, %v1853
      %v1855 = vpop.f32.mrb[0].mxu0
      %v1856 = vpop.f32.mrb[0].mxu0
      %v1857 = vadd.f32 %v625, %v1856
      %v1858 = vpop.f32.mrb[0].mxu0
      %1859 = vmatprep.mubr.bf16.mxu0 0
      %1860 = vmatmul.mubr.bf16.gmra.mrb[0].mxu0 %v1814
      %v1861 = vpop.f32.mrb[0].mxu0
      %v1862 = vadd.f32 %v625, %v1861
      %v1863 = vpop.f32.mrb[0].mxu0
      %v1864 = vpop.f32.mrb[0].mxu0
      %v1865 = vpop.f32.mrb[0].mxu0
      %1866 = vdwg.mxu0
      %v1867 = vsel %vm918, %v1854, -inf
      %1868 = vmax.xlane.f32.xlu0 %v1867
      %v1869 = vpop.xlane.xlu0 %1868
      %v1870 = vsel %vm918, %v1857, -inf
      %1871 = vmax.xlane.f32.xlu0 %v1870
      %v1872 = vpop.xlane.xlu0 %1871
      %v1873 = vsel %vm918, %v1862, -inf
      %1874 = vmax.xlane.f32.xlu0 %v1873
      %v1875 = vpop.xlane.xlu0 %1874
      %v1876 = vsub.f32 %v1854, %v1869
      %v1877 = vsub.f32 %v1857, %v1872
      %v1878 = vsub.f32 %v1862, %v1875
      %v1879 = vmul.f32 %v1876, 1.442695
      %v1880 = vpow.pop %v1879
      %v1881 = vmul.f32 %v1877, 1.442695
      %v1882 = vpow.pop %v1881
      %v1883 = vmul.f32 %v1878, 1.442695
      %v1884 = vpow.pop %v1883
      %v1885 = vsel %vm918, %v1880, 0.0
      %1886 = vadd.xlane.f32.xlu0 %v1885
      %v1887 = vpop.xlane.xlu0 %1886
      %v1888 = vsel %vm918, %v1882, 0.0
      %1889 = vadd.xlane.f32.xlu0 %v1888
      %v1890 = vpop.xlane.xlu0 %1889
      %v1891 = vsel %vm918, %v1884, 0.0
      %1892 = vadd.xlane.f32.xlu0 %v1891
      %v1893 = vpop.xlane.xlu0 %1892
      %v1894 = vrcp.pop %v1887
      %v1895 = vrcp.pop %v1890
      %v1896 = vrcp.pop %v1893
      %v1897 = vmul.f32 %v1880, %v1894
      %v1898 = vmul.f32 %v1882, %v1895
      %v1899 = vmul.f32 %v1884, %v1896
      %v1900 = vpack.c.bf16 %v1505, %v1505
      %v1901 = vpack.c.bf16 %v1898, %v1897
      %v1902 = vpack.c.bf16 %v1899, %v1899
      %v1904 = vsel %vm918, %v1900, 0
      %v1907 = vsel %vm918, %v1901, 0
      %v1910 = vsel %vm918, %v1902, 0
      %1912 = vmatprep.subr.bf16.mxu0 0
      %1913 = vmatpush1.bf16.xpose.msra.mxu0 %v1907
      %1914 = vmatprep.subr.bf16.mxu0 0
      %1915 = vmatpush1.bf16.xpose.msra.mxu0 %v1910
      %1916 = vmatprep.subr.bf16.mxu0 0
      %1917 = vmatpush1.bf16.xpose.msra.mxu0 0
      %1918 = vmatprep.subr.bf16.mxu0 0
      %1919 = vmatpush1.bf16.xpose.msra.mxu0 0
      %1920 = vmatprep.subr.bf16.mxu0 0
      %1921 = vmatpush1.bf16.xpose.msra.mxu0 0
      %1922 = vmatprep.subr.bf16.mxu0 0
      %1923 = vmatpush1.bf16.xpose.msra.mxu0 0
      %1924 = vmatprep.subr.bf16.mxu0 0
      %1925 = vmatpush1.bf16.xpose.msra.mxu0 0
      %1926 = vmatprep.subr.bf16.mxu0 0
      %1927 = vmatpush1.bf16.xpose.msra.mxu0 0
      %1928 = vmatprep.subr.bf16.mxu0 0
      %1929 = vmatpush1.bf16.xpose.msra.mxu0 0
      %1930 = vmatprep.subr.bf16.mxu0 0
      %1931 = vmatpush1.bf16.xpose.msra.mxu0 0
      %1932 = vmatprep.subr.bf16.mxu0 0
      %1933 = vmatpush1.bf16.xpose.msra.mxu0 0
      %1934 = vmatprep.subr.bf16.mxu0 0
      %1935 = vmatpush1.bf16.xpose.msra.mxu0 0
      %1936 = vmatprep.subr.bf16.mxu0 0
      %1937 = vmatpush1.bf16.xpose.msra.mxu0 0
      %1938 = vmatprep.subr.bf16.mxu0 0
      %1939 = vmatpush1.bf16.xpose.msra.mxu0 0
      %1940 = vmatprep.subr.bf16.mxu0 0
      %1941 = vmatpush1.bf16.xpose.msra.mxu0 0
      %1942 = vmatprep.subr.bf16.mxu0 0
      %1943 = vmatpush1.bf16.xpose.msra.mxu0 0
      %1944 = vmatprep.mubr.bf16.mxu0 0
      %1945 = vmatmul.mubr.bf16.gmra.mrb[0].mxu0 %v1904
      %v1946 = vpop.f32.mrb[0].mxu0
      %v1947 = vadd.f32 0.0, %v1946
      %v1948 = vpop.f32.mrb[0].mxu0
      %v1949 = vpop.f32.mrb[0].mxu0
      %v1950 = vpop.f32.mrb[0].mxu0
      %1951 = vdwg.mxu0
      %v1952 = vpack.c.bf16 %v1502, %v1502
      %1953 = vrot.lane.b32.xlu0 %v1511, 104
      %v1954 = vpop.permute.xlu0 %1953
      %1955 = vrot.lane.b32.xlu0 %v1512, 104
      %v1956 = vpop.permute.xlu0 %1955
      %v1958 = vsel %vm859, %v1954, 0
      %v1961 = vsel %vm859, %v1956, 0
      %v1964 = vsel %vm866, %v1952, 0
      %1966 = vmatprep.subr.bf16.mxu0 0
      %1967 = vmatpush1.bf16.msra.mxu0 %v1964
      %1968 = vmatprep.subr.bf16.mxu0 0
      %1969 = vmatpush1.bf16.msra.mxu0 0
      %1970 = vmatprep.subr.bf16.mxu0 0
      %1971 = vmatpush1.bf16.msra.mxu0 0
      %1972 = vmatprep.subr.bf16.mxu0 0
      %1973 = vmatpush1.bf16.msra.mxu0 0
      %1974 = vmatprep.subr.bf16.mxu0 0
      %1975 = vmatpush1.bf16.msra.mxu0 0
      %1976 = vmatprep.subr.bf16.mxu0 0
      %1977 = vmatpush1.bf16.msra.mxu0 0
      %1978 = vmatprep.subr.bf16.mxu0 0
      %1979 = vmatpush1.bf16.msra.mxu0 0
      %1980 = vmatprep.subr.bf16.mxu0 0
      %1981 = vmatpush1.bf16.msra.mxu0 0
      %1982 = vmatprep.subr.bf16.mxu0 0
      %1983 = vmatpush1.bf16.msra.mxu0 0
      %1984 = vmatprep.subr.bf16.mxu0 0
      %1985 = vmatpush1.bf16.msra.mxu0 0
      %1986 = vmatprep.subr.bf16.mxu0 0
      %1987 = vmatpush1.bf16.msra.mxu0 0
      %1988 = vmatprep.subr.bf16.mxu0 0
      %1989 = vmatpush1.bf16.msra.mxu0 0
      %1990 = vmatprep.subr.bf16.mxu0 0
      %1991 = vmatpush1.bf16.msra.mxu0 0
      %1992 = vmatprep.subr.bf16.mxu0 0
      %1993 = vmatpush1.bf16.msra.mxu0 0
      %1994 = vmatprep.subr.bf16.mxu0 0
      %1995 = vmatpush1.bf16.msra.mxu0 0
      %1996 = vmatprep.subr.bf16.mxu0 0
      %1997 = vmatpush1.bf16.msra.mxu0 0
      %1998 = vmatprep.mubr.bf16.mxu0 0
      %1999 = vmatmul.mubr.bf16.gmra.mrb[0].mxu0 %v1958
      %v2000 = vpop.f32.mrb[0].mxu0
      %v2001 = vadd.f32 %v625, %v2000
      %v2002 = vpop.f32.mrb[0].mxu0
      %v2003 = vpop.f32.mrb[0].mxu0
      %v2004 = vadd.f32 %v625, %v2003
      %v2005 = vpop.f32.mrb[0].mxu0
      %2006 = vmatprep.mubr.bf16.mxu0 0
      %2007 = vmatmul.mubr.bf16.gmra.mrb[0].mxu0 %v1961
      %v2008 = vpop.f32.mrb[0].mxu0
      %v2009 = vadd.f32 %v625, %v2008
      %v2010 = vpop.f32.mrb[0].mxu0
      %v2011 = vpop.f32.mrb[0].mxu0
      %v2012 = vpop.f32.mrb[0].mxu0
      %2013 = vdwg.mxu0
      %v2014 = vsel %vm918, %v2001, -inf
      %2015 = vmax.xlane.f32.xlu0 %v2014
      %v2016 = vpop.xlane.xlu0 %2015
      %v2017 = vsel %vm918, %v2004, -inf
      %2018 = vmax.xlane.f32.xlu0 %v2017
      %v2019 = vpop.xlane.xlu0 %2018
      %v2020 = vsel %vm918, %v2009, -inf
      %2021 = vmax.xlane.f32.xlu0 %v2020
      %v2022 = vpop.xlane.xlu0 %2021
      %v2023 = vsub.f32 %v2001, %v2016
      %v2024 = vsub.f32 %v2004, %v2019
      %v2025 = vsub.f32 %v2009, %v2022
      %v2026 = vmul.f32 %v2023, 1.442695
      %v2027 = vpow.pop %v2026
      %v2028 = vmul.f32 %v2024, 1.442695
      %v2029 = vpow.pop %v2028
      %v2030 = vmul.f32 %v2025, 1.442695
      %v2031 = vpow.pop %v2030
      %v2032 = vsel %vm918, %v2027, 0.0
      %2033 = vadd.xlane.f32.xlu0 %v2032
      %v2034 = vpop.xlane.xlu0 %2033
      %v2035 = vsel %vm918, %v2029, 0.0
      %2036 = vadd.xlane.f32.xlu0 %v2035
      %v2037 = vpop.xlane.xlu0 %2036
      %v2038 = vsel %vm918, %v2031, 0.0
      %2039 = vadd.xlane.f32.xlu0 %v2038
      %v2040 = vpop.xlane.xlu0 %2039
      %v2041 = vrcp.pop %v2034
      %v2042 = vrcp.pop %v2037
      %v2043 = vrcp.pop %v2040
      %v2044 = vmul.f32 %v2027, %v2041
      %v2045 = vmul.f32 %v2029, %v2042
      %v2046 = vmul.f32 %v2031, %v2043
      %v2047 = vpack.c.bf16 %v1506, %v1506
      %v2048 = vpack.c.bf16 %v2045, %v2044
      %v2049 = vpack.c.bf16 %v2046, %v2046
      %v2051 = vsel %vm918, %v2047, 0
      %v2054 = vsel %vm918, %v2048, 0
      %v2057 = vsel %vm918, %v2049, 0
      %2059 = vmatprep.subr.bf16.mxu0 0
      %2060 = vmatpush1.bf16.xpose.msra.mxu0 %v2054
      %2061 = vmatprep.subr.bf16.mxu0 0
      %2062 = vmatpush1.bf16.xpose.msra.mxu0 %v2057
      %2063 = vmatprep.subr.bf16.mxu0 0
      %2064 = vmatpush1.bf16.xpose.msra.mxu0 0
      %2065 = vmatprep.subr.bf16.mxu0 0
      %2066 = vmatpush1.bf16.xpose.msra.mxu0 0
      %2067 = vmatprep.subr.bf16.mxu0 0
      %2068 = vmatpush1.bf16.xpose.msra.mxu0 0
      %2069 = vmatprep.subr.bf16.mxu0 0
      %2070 = vmatpush1.bf16.xpose.msra.mxu0 0
      %2071 = vmatprep.subr.bf16.mxu0 0
      %2072 = vmatpush1.bf16.xpose.msra.mxu0 0
      %2073 = vmatprep.subr.bf16.mxu0 0
      %2074 = vmatpush1.bf16.xpose.msra.mxu0 0
      %2075 = vmatprep.subr.bf16.mxu0 0
      %2076 = vmatpush1.bf16.xpose.msra.mxu0 0
      %2077 = vmatprep.subr.bf16.mxu0 0
      %2078 = vmatpush1.bf16.xpose.msra.mxu0 0
      %2079 = vmatprep.subr.bf16.mxu0 0
      %2080 = vmatpush1.bf16.xpose.msra.mxu0 0
      %2081 = vmatprep.subr.bf16.mxu0 0
      %2082 = vmatpush1.bf16.xpose.msra.mxu0 0
      %2083 = vmatprep.subr.bf16.mxu0 0
      %2084 = vmatpush1.bf16.xpose.msra.mxu0 0
      %2085 = vmatprep.subr.bf16.mxu0 0
      %2086 = vmatpush1.bf16.xpose.msra.mxu0 0
      %2087 = vmatprep.subr.bf16.mxu0 0
      %2088 = vmatpush1.bf16.xpose.msra.mxu0 0
      %2089 = vmatprep.subr.bf16.mxu0 0
      %2090 = vmatpush1.bf16.xpose.msra.mxu0 0
      %2091 = vmatprep.mubr.bf16.mxu0 0
      %2092 = vmatmul.mubr.bf16.gmra.mrb[0].mxu0 %v2051
      %v2093 = vpop.f32.mrb[0].mxu0
      %v2094 = vadd.f32 0.0, %v2093
      %v2095 = vpop.f32.mrb[0].mxu0
      %v2096 = vpop.f32.mrb[0].mxu0
      %v2097 = vpop.f32.mrb[0].mxu0
      %2098 = vdwg.mxu0
      %2099 = vxpose.xlu0.b32.start [1/16] %v1651, 128
      %2100 = vxpose.xlu0.b32.cont [2/16] %v1800, 128
      %2101 = vxpose.xlu0.b32.cont [3/16] %v1947, 128
      %2102 = vxpose.xlu0.b32.cont [4/16] %v2094, 128
      %2103 = vxpose.xlu0.b32.cont [5/16] 0.0, 128
      %2104 = vxpose.xlu0.b32.cont [6/16] 0.0, 128
      %2105 = vxpose.xlu0.b32.cont [7/16] 0.0, 128
      %2106 = vxpose.xlu0.b32.cont [8/16] 0.0, 128
      %2107 = vxpose.xlu0.b32.cont [9/16] 0.0, 128
      %2108 = vxpose.xlu0.b32.cont [10/16] 0.0, 128
      %2109 = vxpose.xlu0.b32.cont [11/16] 0.0, 128
      %2110 = vxpose.xlu0.b32.cont [12/16] 0.0, 128
      %2111 = vxpose.xlu0.b32.cont [13/16] 0.0, 128
      %2112 = vxpose.xlu0.b32.cont [14/16] 0.0, 128
      %2113 = vxpose.xlu0.b32.cont [15/16] 0.0, 128
      %2114 = vxpose.xlu0.b32.end [16/16] 0.0, 128
      %v2115 = vpop.trf.xlu0
      %v2116 = vpop.trf.xlu0
      %v2117 = vpop.trf.xlu0
      %v2118 = vpop.trf.xlu0
      %v2119 = vpop.trf.xlu0
      %v2120 = vpop.trf.xlu0
      %v2121 = vpop.trf.xlu0
      %v2122 = vpop.trf.xlu0
      %v2123 = vpop.trf.xlu0
      %v2124 = vpop.trf.xlu0
      %v2125 = vpop.trf.xlu0
      %v2126 = vpop.trf.xlu0
      %v2127 = vpop.trf.xlu0
      %v2128 = vpop.trf.xlu0
      %v2129 = vpop.trf.xlu0
      %v2130 = vpop.trf.xlu0
      %v2131 = vpack.c.bf16 %v1464, %v1463
      %v2132 = vpack.c.bf16 %v2115, %v1465
      %v2133 = vpack.c.bf16 %v2117, %v2116
      %v2134 = vld [vmem:[%s572] sm:$0xf]
      %v2135 = vld [vmem:[%s572 + $0x4] sm:$0xf]
      %v2136 = vld [vmem:[%s572 + $0x8] sm:$0xf]
      %v2137 = vld [vmem:[%s572 + $0xc] sm:$0xf]
      %v2138 = vld [vmem:[%s575] sm:$0x1]
      %v2140 = vlaneseq
      %v2141 = vshrl.u32 %v2140, 7
      %v2142 = vsub.s32 0, %v2141
      %v2143 = vrot.slane %v2138, %v2142
      %v2149 = vunpack.c.l.b16 %v2134
      %v2150 = vunpack.c.l.b16 %v2135
      %v2151 = vunpack.c.l.b16 %v2136
      %v2152 = vunpack.c.l.b16 %v2137
      %v2153 = vpack.c.b16 %v2150, %v2149
      %v2154 = vpack.c.b16 %v2152, %v2151
      %v2158 = vsel %vm628, %v2131, 0
      %v2161 = vsel %vm628, %v2132, 0
      %v2164 = vsel %vm628, %v2133, 0
      %2166 = vmatprep.subr.bf16.mxu0 0
      %2167 = vmatpush1.bf16.msra.mxu0 %v2153
      %2168 = vmatprep.subr.bf16.mxu0 0
      %2169 = vmatpush1.bf16.msra.mxu0 %v2154
      %2170 = vmatprep.subr.bf16.mxu0 0
      %2171 = vmatpush1.bf16.msra.mxu0 0
      %2172 = vmatprep.subr.bf16.mxu0 0
      %2173 = vmatpush1.bf16.msra.mxu0 0
      %2174 = vmatprep.subr.bf16.mxu0 0
      %2175 = vmatpush1.bf16.msra.mxu0 0
      %2176 = vmatprep.subr.bf16.mxu0 0
      %2177 = vmatpush1.bf16.msra.mxu0 0
      %2178 = vmatprep.subr.bf16.mxu0 0
      %2179 = vmatpush1.bf16.msra.mxu0 0
      %2180 = vmatprep.subr.bf16.mxu0 0
      %2181 = vmatpush1.bf16.msra.mxu0 0
      %2182 = vmatprep.subr.bf16.mxu0 0
      %2183 = vmatpush1.bf16.msra.mxu0 0
      %2184 = vmatprep.subr.bf16.mxu0 0
      %2185 = vmatpush1.bf16.msra.mxu0 0
      %2186 = vmatprep.subr.bf16.mxu0 0
      %2187 = vmatpush1.bf16.msra.mxu0 0
      %2188 = vmatprep.subr.bf16.mxu0 0
      %2189 = vmatpush1.bf16.msra.mxu0 0
      %2190 = vmatprep.subr.bf16.mxu0 0
      %2191 = vmatpush1.bf16.msra.mxu0 0
      %2192 = vmatprep.subr.bf16.mxu0 0
      %2193 = vmatpush1.bf16.msra.mxu0 0
      %2194 = vmatprep.subr.bf16.mxu0 0
      %2195 = vmatpush1.bf16.msra.mxu0 0
      %2196 = vmatprep.subr.bf16.mxu0 0
      %2197 = vmatpush1.bf16.msra.mxu0 0
      %2198 = vmatprep.mubr.bf16.mxu0 0
      %2199 = vmatmul.mubr.bf16.gmra.mrb[0].mxu0 %v2158
      %v2200 = vpop.f32.mrb[0].mxu0
      %v2201 = vadd.f32 %v2143, %v2200
      %v2202 = vpop.f32.mrb[0].mxu0
      %v2203 = vpop.f32.mrb[0].mxu0
      %v2204 = vadd.f32 %v2143, %v2203
      %v2205 = vpop.f32.mrb[0].mxu0
      %2206 = vmatprep.mubr.bf16.mxu0 0
      %2207 = vmatmul.mubr.bf16.gmra.mrb[0].mxu0 %v2161
      %v2208 = vpop.f32.mrb[0].mxu0
      %v2209 = vadd.f32 %v2143, %v2208
      %v2210 = vpop.f32.mrb[0].mxu0
      %v2211 = vpop.f32.mrb[0].mxu0
      %v2212 = vadd.f32 %v2143, %v2211
      %v2213 = vpop.f32.mrb[0].mxu0
      %2214 = vmatprep.mubr.bf16.mxu0 0
      %2215 = vmatmul.mubr.bf16.gmra.mrb[0].mxu0 %v2164
      %v2216 = vpop.f32.mrb[0].mxu0
      %v2217 = vadd.f32 %v2143, %v2216
      %v2218 = vpop.f32.mrb[0].mxu0
      %v2219 = vpop.f32.mrb[0].mxu0
      %v2220 = vadd.f32 %v2143, %v2219
      %v2221 = vpop.f32.mrb[0].mxu0
      %2222 = vdwg.mxu0
      %v2223 = vadd.f32 %v616, %v2201
      %v2224 = vadd.f32 %v617, %v2204
      %v2225 = vadd.f32 %v618, %v2209
      %v2226 = vadd.f32 %v619, %v2212
      %v2227 = vadd.f32 %v620, %v2217
      %v2228 = vadd.f32 %v621, %v2220
      %v2229 = vld [vmem:[%s578] sm:$0x1]
      %v2230 = vld [vmem:[%s581] sm:$0x1]
      %v2231 = vsel %vm628, %v2223, 0.0
      %2232 = vadd.xlane.f32.xlu0 %v2231
      %v2233 = vpop.xlane.xlu0 %2232
      %v2234 = vsel %vm628, %v2224, 0.0
      %2235 = vadd.xlane.f32.xlu0 %v2234
      %v2236 = vpop.xlane.xlu0 %2235
      %v2237 = vsel %vm628, %v2225, 0.0
      %2238 = vadd.xlane.f32.xlu0 %v2237
      %v2239 = vpop.xlane.xlu0 %2238
      %v2240 = vsel %vm628, %v2226, 0.0
      %2241 = vadd.xlane.f32.xlu0 %v2240
      %v2242 = vpop.xlane.xlu0 %2241
      %v2243 = vsel %vm628, %v2227, 0.0
      %2244 = vadd.xlane.f32.xlu0 %v2243
      %v2245 = vpop.xlane.xlu0 %2244
      %v2246 = vsel %vm628, %v2228, 0.0
      %2247 = vadd.xlane.f32.xlu0 %v2246
      %v2248 = vpop.xlane.xlu0 %2247
      %v2249 = vmul.f32 %v2233, %v647
      %v2250 = vmul.f32 %v2236, %v647
      %v2251 = vmul.f32 %v2239, %v647
      %v2252 = vmul.f32 %v2242, %v647
      %v2253 = vmul.f32 %v2245, %v647
      %v2254 = vmul.f32 %v2248, %v647
      %v2255 = vsub.f32 %v2223, %v2249
      %v2256 = vsub.f32 %v2224, %v2250
      %v2257 = vsub.f32 %v2225, %v2251
      %v2258 = vsub.f32 %v2226, %v2252
      %v2259 = vsub.f32 %v2227, %v2253
      %v2260 = vsub.f32 %v2228, %v2254
      %v2261 = vmul.f32 %v2255, %v2255
      %v2262 = vmul.f32 %v2256, %v2256
      %v2263 = vmul.f32 %v2257, %v2257
      %v2264 = vmul.f32 %v2258, %v2258
      %v2265 = vmul.f32 %v2259, %v2259
      %v2266 = vmul.f32 %v2260, %v2260
      %v2267 = vsel %vm628, %v2261, 0.0
      %2268 = vadd.xlane.f32.xlu0 %v2267
      %v2269 = vpop.xlane.xlu0 %2268
      %v2270 = vsel %vm628, %v2262, 0.0
      %2271 = vadd.xlane.f32.xlu0 %v2270
      %v2272 = vpop.xlane.xlu0 %2271
      %v2273 = vsel %vm628, %v2263, 0.0
      %2274 = vadd.xlane.f32.xlu0 %v2273
      %v2275 = vpop.xlane.xlu0 %2274
      %v2276 = vsel %vm628, %v2264, 0.0
      %2277 = vadd.xlane.f32.xlu0 %v2276
      %v2278 = vpop.xlane.xlu0 %2277
      %v2279 = vsel %vm628, %v2265, 0.0
      %2280 = vadd.xlane.f32.xlu0 %v2279
      %v2281 = vpop.xlane.xlu0 %2280
      %v2282 = vsel %vm628, %v2266, 0.0
      %2283 = vadd.xlane.f32.xlu0 %v2282
      %v2284 = vpop.xlane.xlu0 %2283
      %v2285 = vmul.f32 %v2269, %v647
      %v2286 = vmul.f32 %v2272, %v647
      %v2287 = vmul.f32 %v2275, %v647
      %v2288 = vmul.f32 %v2278, %v647
      %v2289 = vmul.f32 %v2281, %v647
      %v2290 = vmul.f32 %v2284, %v647
      %v2291 = vadd.f32 %v2285, 1e-05
      %v2292 = vadd.f32 %v2286, 1e-05
      %v2293 = vadd.f32 %v2287, 1e-05
      %v2294 = vadd.f32 %v2288, 1e-05
      %v2295 = vadd.f32 %v2289, 1e-05
      %v2296 = vadd.f32 %v2290, 1e-05
      %v2297 = vrsqrt.pop %v2291
      %v2298 = vrsqrt.pop %v2292
      %v2299 = vrsqrt.pop %v2293
      %v2300 = vrsqrt.pop %v2294
      %v2301 = vrsqrt.pop %v2295
      %v2302 = vrsqrt.pop %v2296
      %v2303 = vmul.f32 %v2255, %v2297
      %v2304 = vmul.f32 %v2256, %v2298
      %v2305 = vmul.f32 %v2257, %v2299
      %v2306 = vmul.f32 %v2258, %v2300
      %v2307 = vmul.f32 %v2259, %v2301
      %v2308 = vmul.f32 %v2260, %v2302
      %v2310 = vlaneseq
      %v2311 = vshrl.u32 %v2310, 7
      %v2312 = vsub.s32 0, %v2311
      %v2313 = vrot.slane %v2229, %v2312
      %v2315 = vmul.f32 %v2303, %v2313
      %v2316 = vmul.f32 %v2304, %v2313
      %v2317 = vmul.f32 %v2305, %v2313
      %v2318 = vmul.f32 %v2306, %v2313
      %v2319 = vmul.f32 %v2307, %v2313
      %v2320 = vmul.f32 %v2308, %v2313
      %v2322 = vlaneseq
      %v2323 = vshrl.u32 %v2322, 7
      %v2324 = vsub.s32 0, %v2323
      %v2325 = vrot.slane %v2230, %v2324
      %v2327 = vadd.f32 %v2315, %v2325
      %v2328 = vadd.f32 %v2316, %v2325
      %v2329 = vadd.f32 %v2317, %v2325
      %v2330 = vadd.f32 %v2318, %v2325
      %v2331 = vadd.f32 %v2319, %v2325
      %v2332 = vadd.f32 %v2320, %v2325
      %v2333 = vpack.c.bf16 %v2328, %v2327
      %v2334 = vpack.c.bf16 %v2330, %v2329
      %v2335 = vpack.c.bf16 %v2332, %v2331
      %v2336 = vld [vmem:[%s586] sm:$0xf]
      %v2337 = vld [vmem:[%s586 + $0x4] sm:$0xf]
      %v2338 = vld [vmem:[%s586 + $0x8] sm:$0xf]
      %v2339 = vld [vmem:[%s586 + $0xc] sm:$0xf]
      %v2340 = vld [vmem:[%s589] sm:$0x1]
      %v2342 = vlaneseq
      %v2343 = vshrl.u32 %v2342, 7
      %v2344 = vsub.s32 0, %v2343
      %v2345 = vrot.slane %v2340, %v2344
      %v2351 = vunpack.c.l.b16 %v2336
      %v2352 = vunpack.c.l.b16 %v2337
      %v2353 = vunpack.c.l.b16 %v2338
      %v2354 = vunpack.c.l.b16 %v2339
      %v2355 = vpack.c.b16 %v2352, %v2351
      %v2356 = vpack.c.b16 %v2354, %v2353
      %v2360 = vsel %vm628, %v2333, 0
      %v2363 = vsel %vm628, %v2334, 0
      %v2366 = vsel %vm628, %v2335, 0
      %2368 = vmatprep.subr.bf16.mxu0 0
      %2369 = vmatpush1.bf16.msra.mxu0 %v2355
      %2370 = vmatprep.subr.bf16.mxu0 0
      %2371 = vmatpush1.bf16.msra.mxu0 %v2356
      %2372 = vmatprep.subr.bf16.mxu0 0
      %2373 = vmatpush1.bf16.msra.mxu0 0
      %2374 = vmatprep.subr.bf16.mxu0 0
      %2375 = vmatpush1.bf16.msra.mxu0 0
      %2376 = vmatprep.subr.bf16.mxu0 0
      %2377 = vmatpush1.bf16.msra.mxu0 0
      %2378 = vmatprep.subr.bf16.mxu0 0
      %2379 = vmatpush1.bf16.msra.mxu0 0
      %2380 = vmatprep.subr.bf16.mxu0 0
      %2381 = vmatpush1.bf16.msra.mxu0 0
      %2382 = vmatprep.subr.bf16.mxu0 0
      %2383 = vmatpush1.bf16.msra.mxu0 0
      %2384 = vmatprep.subr.bf16.mxu0 0
      %2385 = vmatpush1.bf16.msra.mxu0 0
      %2386 = vmatprep.subr.bf16.mxu0 0
      %2387 = vmatpush1.bf16.msra.mxu0 0
      %2388 = vmatprep.subr.bf16.mxu0 0
      %2389 = vmatpush1.bf16.msra.mxu0 0
      %2390 = vmatprep.subr.bf16.mxu0 0
      %2391 = vmatpush1.bf16.msra.mxu0 0
      %2392 = vmatprep.subr.bf16.mxu0 0
      %2393 = vmatpush1.bf16.msra.mxu0 0
      %2394 = vmatprep.subr.bf16.mxu0 0
      %2395 = vmatpush1.bf16.msra.mxu0 0
      %2396 = vmatprep.subr.bf16.mxu0 0
      %2397 = vmatpush1.bf16.msra.mxu0 0
      %2398 = vmatprep.subr.bf16.mxu0 0
      %2399 = vmatpush1.bf16.msra.mxu0 0
      %2400 = vmatprep.mubr.bf16.mxu0 0
      %2401 = vmatmul.mubr.bf16.gmra.mrb[0].mxu0 %v2360
      %v2402 = vpop.f32.mrb[0].mxu0
      %v2403 = vadd.f32 %v2345, %v2402
      %v2404 = vpop.f32.mrb[0].mxu0
      %v2405 = vpop.f32.mrb[0].mxu0
      %v2406 = vadd.f32 %v2345, %v2405
      %v2407 = vpop.f32.mrb[0].mxu0
      %2408 = vmatprep.mubr.bf16.mxu0 0
      %2409 = vmatmul.mubr.bf16.gmra.mrb[0].mxu0 %v2363
      %v2410 = vpop.f32.mrb[0].mxu0
      %v2411 = vadd.f32 %v2345, %v2410
      %v2412 = vpop.f32.mrb[0].mxu0
      %v2413 = vpop.f32.mrb[0].mxu0
      %v2414 = vadd.f32 %v2345, %v2413
      %v2415 = vpop.f32.mrb[0].mxu0
      %2416 = vmatprep.mubr.bf16.mxu0 0
      %2417 = vmatmul.mubr.bf16.gmra.mrb[0].mxu0 %v2366
      %v2418 = vpop.f32.mrb[0].mxu0
      %v2419 = vadd.f32 %v2345, %v2418
      %v2420 = vpop.f32.mrb[0].mxu0
      %v2421 = vpop.f32.mrb[0].mxu0
      %v2422 = vadd.f32 %v2345, %v2421
      %v2423 = vpop.f32.mrb[0].mxu0
      %2424 = vdwg.mxu0
      %v2425 = vmul.f32 %v2403, 0.5
      %v2426 = vmul.f32 %v2406, 0.5
      %v2427 = vmul.f32 %v2411, 0.5
      %v2428 = vmul.f32 %v2414, 0.5
      %v2429 = vmul.f32 %v2419, 0.5
      %v2430 = vmul.f32 %v2422, 0.5
      %v2431 = vmul.f32 %v2403, 0.044715
      %v2432 = vmul.f32 %v2406, 0.044715
      %v2433 = vmul.f32 %v2411, 0.044715
      %v2434 = vmul.f32 %v2414, 0.044715
      %v2435 = vmul.f32 %v2419, 0.044715
      %v2436 = vmul.f32 %v2422, 0.044715
      %v2437 = vmul.f32 %v2431, %v2403
      %v2438 = vmul.f32 %v2432, %v2406
      %v2439 = vmul.f32 %v2433, %v2411
      %v2440 = vmul.f32 %v2434, %v2414
      %v2441 = vmul.f32 %v2435, %v2419
      %v2442 = vmul.f32 %v2436, %v2422
      %v2443 = vmul.f32 %v2437, %v2403
      %v2444 = vmul.f32 %v2438, %v2406
      %v2445 = vmul.f32 %v2439, %v2411
      %v2446 = vmul.f32 %v2440, %v2414
      %v2447 = vmul.f32 %v2441, %v2419
      %v2448 = vmul.f32 %v2442, %v2422
      %v2449 = vadd.f32 %v2403, %v2443
      %v2450 = vadd.f32 %v2406, %v2444
      %v2451 = vadd.f32 %v2411, %v2445
      %v2452 = vadd.f32 %v2414, %v2446
      %v2453 = vadd.f32 %v2419, %v2447
      %v2454 = vadd.f32 %v2422, %v2448
      %v2455 = vmul.f32 %v2449, 0.7978846
      %v2456 = vmul.f32 %v2450, 0.7978846
      %v2457 = vmul.f32 %v2451, 0.7978846
      %v2458 = vmul.f32 %v2452, 0.7978846
      %v2459 = vmul.f32 %v2453, 0.7978846
      %v2460 = vmul.f32 %v2454, 0.7978846
      %v2461 = vtanh.pop %v2455
      %v2462 = vtanh.pop %v2456
      %v2463 = vtanh.pop %v2457
      %v2464 = vtanh.pop %v2458
      %v2465 = vtanh.pop %v2459
      %v2466 = vtanh.pop %v2460
      %v2467 = vadd.f32 %v2461, 1.0
      %v2468 = vadd.f32 %v2462, 1.0
      %v2469 = vadd.f32 %v2463, 1.0
      %v2470 = vadd.f32 %v2464, 1.0
      %v2471 = vadd.f32 %v2465, 1.0
      %v2472 = vadd.f32 %v2466, 1.0
      %v2473 = vmul.f32 %v2425, %v2467
      %v2474 = vmul.f32 %v2426, %v2468
      %v2475 = vmul.f32 %v2427, %v2469
      %v2476 = vmul.f32 %v2428, %v2470
      %v2477 = vmul.f32 %v2429, %v2471
      %v2478 = vmul.f32 %v2430, %v2472
      %v2479 = vpack.c.bf16 %v2474, %v2473
      %v2480 = vpack.c.bf16 %v2476, %v2475
      %v2481 = vpack.c.bf16 %v2478, %v2477
      %v2482 = vld [vmem:[%s594] sm:$0xf]
      %v2483 = vld [vmem:[%s594 + $0x4] sm:$0xf]
      %v2484 = vld [vmem:[%s594 + $0x8] sm:$0xf]
      %v2485 = vld [vmem:[%s594 + $0xc] sm:$0xf]
      %v2486 = vld [vmem:[%s594 + $0x10] sm:$0xf]
      %v2487 = vld [vmem:[%s594 + $0x14] sm:$0xf]
      %v2488 = vld [vmem:[%s594 + $0x18] sm:$0xf]
      %v2489 = vld [vmem:[%s594 + $0x1c] sm:$0xf]
      %v2490 = vld [vmem:[%s594 + $0x20] sm:$0xf]
      %v2491 = vld [vmem:[%s594 + $0x24] sm:$0xf]
      %v2492 = vld [vmem:[%s594 + $0x28] sm:$0xf]
      %v2493 = vld [vmem:[%s594 + $0x2c] sm:$0xf]
      %v2494 = vld [vmem:[%s594 + $0x30] sm:$0xf]
      %v2495 = vld [vmem:[%s594 + $0x34] sm:$0xf]
      %v2496 = vld [vmem:[%s594 + $0x38] sm:$0xf]
      %v2497 = vld [vmem:[%s594 + $0x3c] sm:$0xf]
      %v2498 = vld [vmem:[%s597] sm:$0x1]
      %v2500 = vlaneseq
      %v2501 = vshrl.u32 %v2500, 7
      %v2502 = vsub.s32 0, %v2501
      %v2503 = vrot.slane %v2498, %v2502
      %v2521 = vunpack.c.l.b16 %v2482
      %v2522 = vunpack.c.l.b16 %v2483
      %v2523 = vunpack.c.l.b16 %v2484
      %v2524 = vunpack.c.l.b16 %v2485
      %v2525 = vunpack.c.l.b16 %v2486
      %v2526 = vunpack.c.l.b16 %v2487
      %v2527 = vunpack.c.l.b16 %v2488
      %v2528 = vunpack.c.l.b16 %v2489
      %v2529 = vunpack.c.l.b16 %v2490
      %v2530 = vunpack.c.l.b16 %v2491
      %v2531 = vunpack.c.l.b16 %v2492
      %v2532 = vunpack.c.l.b16 %v2493
      %v2533 = vunpack.c.l.b16 %v2494
      %v2534 = vunpack.c.l.b16 %v2495
      %v2535 = vunpack.c.l.b16 %v2496
      %v2536 = vunpack.c.l.b16 %v2497
      %v2537 = vpack.c.b16 %v2522, %v2521
      %v2538 = vpack.c.b16 %v2524, %v2523
      %v2539 = vpack.c.b16 %v2526, %v2525
      %v2540 = vpack.c.b16 %v2528, %v2527
      %v2541 = vpack.c.b16 %v2530, %v2529
      %v2542 = vpack.c.b16 %v2532, %v2531
      %v2543 = vpack.c.b16 %v2534, %v2533
      %v2544 = vpack.c.b16 %v2536, %v2535
      %2553 = vmatprep.subr.bf16.mxu0 0
      %2554 = vmatpush1.bf16.msra.mxu0 %v2537
      %2555 = vmatprep.subr.bf16.mxu0 0
      %2556 = vmatpush1.bf16.msra.mxu0 %v2538
      %2557 = vmatprep.subr.bf16.mxu0 0
      %2558 = vmatpush1.bf16.msra.mxu0 %v2539
      %2559 = vmatprep.subr.bf16.mxu0 0
      %2560 = vmatpush1.bf16.msra.mxu0 %v2540
      %2561 = vmatprep.subr.bf16.mxu0 0
      %2562 = vmatpush1.bf16.msra.mxu0 %v2541
      %2563 = vmatprep.subr.bf16.mxu0 0
      %2564 = vmatpush1.bf16.msra.mxu0 %v2542
      %2565 = vmatprep.subr.bf16.mxu0 0
      %2566 = vmatpush1.bf16.msra.mxu0 %v2543
      %2567 = vmatprep.subr.bf16.mxu0 0
      %2568 = vmatpush1.bf16.msra.mxu0 %v2544
      %2569 = vmatprep.subr.bf16.mxu0 0
      %2570 = vmatpush1.bf16.msra.mxu0 0
      %2571 = vmatprep.subr.bf16.mxu0 0
      %2572 = vmatpush1.bf16.msra.mxu0 0
      %2573 = vmatprep.subr.bf16.mxu0 0
      %2574 = vmatpush1.bf16.msra.mxu0 0
      %2575 = vmatprep.subr.bf16.mxu0 0
      %2576 = vmatpush1.bf16.msra.mxu0 0
      %2577 = vmatprep.subr.bf16.mxu0 0
      %2578 = vmatpush1.bf16.msra.mxu0 0
      %2579 = vmatprep.subr.bf16.mxu0 0
      %2580 = vmatpush1.bf16.msra.mxu0 0
      %2581 = vmatprep.subr.bf16.mxu0 0
      %2582 = vmatpush1.bf16.msra.mxu0 0
      %2583 = vmatprep.subr.bf16.mxu0 0
      %2584 = vmatpush1.bf16.msra.mxu0 0
      %2585 = vmatprep.mubr.bf16.mxu0 0
      %2586 = vmatmul.mubr.bf16.gmra.mrb[0].mxu0 %v2479
      %v2587 = vpop.f32.mrb[0].mxu0
      %v2588 = vadd.f32 %v2503, %v2587
      %v2589 = vpop.f32.mrb[0].mxu0
      %v2590 = vpop.f32.mrb[0].mxu0
      %v2591 = vadd.f32 %v2503, %v2590
      %v2592 = vpop.f32.mrb[0].mxu0
      %2593 = vmatprep.mubr.bf16.mxu0 0
      %2594 = vmatmul.mubr.bf16.gmra.mrb[0].mxu0 %v2480
      %v2595 = vpop.f32.mrb[0].mxu0
      %v2596 = vadd.f32 %v2503, %v2595
      %v2597 = vpop.f32.mrb[0].mxu0
      %v2598 = vpop.f32.mrb[0].mxu0
      %v2599 = vadd.f32 %v2503, %v2598
      %v2600 = vpop.f32.mrb[0].mxu0
      %2601 = vmatprep.mubr.bf16.mxu0 0
      %2602 = vmatmul.mubr.bf16.gmra.mrb[0].mxu0 %v2481
      %v2603 = vpop.f32.mrb[0].mxu0
      %v2604 = vadd.f32 %v2503, %v2603
      %v2605 = vpop.f32.mrb[0].mxu0
      %v2606 = vpop.f32.mrb[0].mxu0
      %v2607 = vadd.f32 %v2503, %v2606
      %v2608 = vpop.f32.mrb[0].mxu0
      %2609 = vdwg.mxu0
      %v2610 = vadd.f32 %v2223, %v2588
      %v2611 = vadd.f32 %v2224, %v2591
      %v2612 = vadd.f32 %v2225, %v2596
      %v2613 = vadd.f32 %v2226, %v2599
      %v2614 = vadd.f32 %v2227, %v2604
      %v2615 = vadd.f32 %v2228, %v2607
      %2616 = vst.msk [vmem:[#allocation2] sm:$0xff] %vm628, %v2610
      %2617 = vst.msk [vmem:[#allocation2 + $0x8] sm:$0xff] %vm628, %v2611
      %2618 = vst.msk [vmem:[#allocation2 + $0x10] sm:$0xff] %vm628, %v2612
      %2619 = vst.msk [vmem:[#allocation2 + $0x18] sm:$0xff] %vm628, %v2613
      %2620 = vst.msk [vmem:[#allocation2 + $0x20] sm:$0xff] %vm628, %v2614
      %2621 = vst.msk [vmem:[#allocation2 + $0x28] sm:$0xff] %vm628, %v2615
      %p2622 = scmp.eq.s32.totalorder %s24, 1
      // Predicated region
      $region77: #{cmuim_forward.9} parent=71 // pred_check
        %p2623 = pneg %p2622
      $region78: #{cmuim_forward.9} parent=71 // pred_check_branch
        %2625 = sbr.rel (%p2623) target = $region80
      $region79: #{cmuim_forward.9} parent=71 // pred_region
        %2626 = vst.msk [vmem:[%s13] sm:$0xff] %vm628, %v2610
        %2627 = vst.msk [vmem:[%s13 + $0x8] sm:$0xff] %vm628, %v2611
        %2628 = vst.msk [vmem:[%s13 + $0x10] sm:$0xff] %vm628, %v2612
        %2629 = vst.msk [vmem:[%s13 + $0x18] sm:$0xff] %vm628, %v2613
        %2630 = vst.msk [vmem:[%s13 + $0x20] sm:$0xff] %vm628, %v2614
        %2631 = vst.msk [vmem:[%s13 + $0x28] sm:$0xff] %vm628, %v2615
      $region80: #{cmuim_forward.9} parent=71 // pred_fallthru
        _
      // Predicated region
      $region81: #{cmuim_forward.9} parent=71 // pred_check
        %p2632 = pneg %p370
      $region82: #{cmuim_forward.9} parent=71 // pred_check_branch
        %2634 = sbr.rel (%p2632) target = $region84
      $region83: #{cmuim_forward.9} parent=71 // pred_region
        _
      $region84: #{cmuim_forward.9} parent=71 // pred_fallthru
        _
      // Predicated region
      $region85: #{cmuim_forward.9} parent=71 // pred_check
        %p2635 = pneg %p370
      $region86: #{cmuim_forward.9} parent=71 // pred_check_branch
        %2637 = sbr.rel (%p2635) target = $region88
      $region87: #{cmuim_forward.9} parent=71 // pred_region
        _
      $region88: #{cmuim_forward.9} parent=71 // pred_fallthru
        _
    $region72: #{cmuim_forward.9} parent=5 // pred_fallthru
      _
    %p2638 = scmp.le.s32.totalorder 2, %s19
    // Predicated region
    $region89: #{cmuim_forward.9} parent=5 // pred_check
      %p2639 = pneg %p2638
    $region90: #{cmuim_forward.9} parent=5 // pred_check_branch
      %2641 = sbr.rel (%p2639) target = $region92
    $region91: #{cmuim_forward.9} parent=5 // pred_region
      %s2642 = ssub.s32 %s19, 2
    $region92: #{cmuim_forward.9} parent=5 // pred_fallthru
      _
  $region6: #{cmuim_forward.9} parent=0 // loop_footer
    %s23 = sadd.s32 1, %s19
  $region7: #{cmuim_forward.9} parent=0 // loop_footer_branch
    %18 = sbr.rel target = $region3
  $region8: #{cmuim_forward.9} parent=0 // loop_exit
    _

</llo_original>
